<compile_context>
chip_gen: v7x
topology: tpu7x:2x2x1
jax: 0.10.0
libtpu: 0.0.40
codegen_flags: <defaults>
</compile_context>

<pallas_src>
import functools

import jax
import jax.numpy as jnp
from jax import lax
from jax.experimental import pallas as pl
from jax.experimental.pallas import tpu as pltpu

# ---------------- problem sizes (small, consistent with the module) -----------
BATCH = 2
SEQ = 8
DIM = 32
HEADS = 4
MLP_RATIO = 4
HID = DIM * MLP_RATIO
EPS = 1e-5
INV_SQRT2 = 0.7071067811865476
NEG_INF = -1e9


# =========================== fused Pallas kernel ==============================

def rk4_fused_kernel(x_ref, slab_ref, w1_ref, w2_ref, ws_ref, o_ref,
                     *, batch, seq, heads):
    B, N, H = batch, seq, heads
    BN, D = x_ref.shape                     # (B*N, D)
    hd = D // H
    BHN = B * H * N
    hid = w1_ref.shape[1]
    scale = 1.0 / (D ** 0.5)                # full dim, matching the original module

    # quantum-surrogate scalar weights (SMEM): q, k, v, out, mlp
    wq, wk, wv, wout, wm = ws_ref[0], ws_ref[1], ws_ref[2], ws_ref[3], ws_ref[4]

    # packed small parameters: row 0 gamma | 1 beta | 2 fc2 bias | 3 fc1 bias
    gamma = slab_ref[0:1, 0:D]              # (1, D)
    beta = slab_ref[1:2, 0:D]               # (1, D)
    b2 = slab_ref[2:3, 0:D]                 # (1, D)
    b1 = slab_ref[3:4, :]                   # (1, hid)
    w1 = w1_ref[...]                        # (D, hid)
    w2 = w2_ref[...]                        # (hid, D)

    # -------- masks / stacking matrices: built in-kernel (no extra input DMAs), --------
    # -------- hoisted ONCE before the 4 RK4 stages.  Index math in f32 (exact    --------
    # -------- for these tiny ranges) to avoid vector integer div/rem lowering.   --------
    f32 = jnp.float32

    def fdiv(a, n):                          # floor(a / n) for small non-negative a
        return jnp.floor(a * (1.0 / n))

    r_qd = lax.broadcasted_iota(jnp.int32, (BHN, D), 0).astype(f32)
    c_qd = lax.broadcasted_iota(jnp.int32, (BHN, D), 1).astype(f32)
    row_head = fdiv(r_qd, N) - H * fdiv(r_qd, H * N)        # (r // N) % H
    qmask = (row_head == fdiv(c_qd, hd)).astype(f32)        # (BHN, D) per-head feature mask

    r_sc = lax.broadcasted_iota(jnp.int32, (BHN, BN), 0).astype(f32)
    c_sc = lax.broadcasted_iota(jnp.int32, (BHN, BN), 1).astype(f32)
    same_batch = fdiv(r_sc, H * N) == fdiv(c_sc, N)
    same_pos = (r_sc - N * fdiv(r_sc, N)) == (c_sc - N * fdiv(c_sc, N))
    Eq = jnp.where(same_batch & same_pos, scale, 0.0).astype(f32)   # (BHN, BN) q-stacking, scale folded
    bias = jnp.where(same_batch, 0.0, NEG_INF).astype(f32)          # block-diag batch mask

    r_rc = lax.broadcasted_iota(jnp.int32, (BN, BHN), 0).astype(f32)
    c_rc = lax.broadcasted_iota(jnp.int32, (BN, BHN), 1).astype(f32)
    rec_batch = fdiv(r_rc, N) == fdiv(c_rc, H * N)
    rec_pos = (r_rc - N * fdiv(r_rc, N)) == (c_rc - N * fdiv(c_rc, N))
    R = jnp.where(rec_batch & rec_pos, 1.0, 0.0).astype(f32)        # (BN, BHN) head recombine

    # ------------- LayerNorm (ln1), biased variance as in PyTorch --------------
    x = x_ref[...].astype(f32)              # (BN, D)
    mean = jnp.mean(x, axis=-1, keepdims=True)
    xc = x - mean
    var = jnp.mean(xc * xc, axis=-1, keepdims=True)
    xn = xc * lax.rsqrt(var + EPS) * gamma + beta

    def attn(z):
        # TODO(synk): PennyLane QuantumLayer q/k/v/out projections replaced by the
        # deterministic surrogate <Z_i> = cos(x_i + w); the circuit itself has no
        # Pallas equivalent.
        q = jnp.cos(z + wq)
        k = jnp.cos(z + wk)
        v = jnp.cos(z + wv)
        # head-stacked, pre-scaled queries via one small 2-D matmul (no batched dot)
        qs = jnp.dot(Eq, q, preferred_element_type=f32) * qmask          # (BHN, D)
        s = lax.dot_general(qs, k, (((1,), (1,)), ((), ())),
                            preferred_element_type=f32) + bias           # (BHN, BN)
        # no max-shift: |valid scores| <= hd/sqrt(D) ~ 1.41; masked scores -> exp == 0
        e = jnp.exp(s)
        p = e * pl.reciprocal(jnp.sum(e, axis=-1, keepdims=True), approx=False)
        c = jnp.dot(p, v, preferred_element_type=f32)                    # (BHN, D)
        ctx = jnp.dot(R, c * qmask, preferred_element_type=f32)          # (BN, D)
        return jnp.cos(ctx + wout)           # output quantum surrogate

    def mlp(z):
        h = jnp.dot(z, w1, preferred_element_type=f32) + b1              # fc1
        h = jnp.cos(h + wm)                                              # quantum surrogate
        h = 0.5 * h * (1.0 + lax.erf(h * INV_SQRT2))                     # exact GELU
        return jnp.dot(h, w2, preferred_element_type=f32) + b2           # fc2

    # -------- RK4-style stages; residual sums stay on vregs (no HBM trips) --------
    a1 = attn(xn); y1 = mlp(xn); s1 = xn + a1 + y1
    a2 = attn(s1); y2 = mlp(s1); s2 = xn + a2 + y2
    a3 = attn(s2); y3 = mlp(s2); s3 = xn + a3 + y3
    a4 = attn(s3); y4 = mlp(s3)

    o_ref[...] = (xn + a1 + y1 + a4 + y4).astype(o_ref.dtype)   # single final store


# ============================ block forward ===================================

def rk4_enh_block(x, p):
    B, N, D = x.shape
    hid = p["w1"].shape[1]
    x2d = x.reshape(B * N, D)

    # pack the four small per-feature vectors into one zero-padded slab (1 DMA)
    slab = jnp.zeros((4, hid), jnp.float32)
    slab = slab.at[0, :D].set(p["ln_g"])
    slab = slab.at[1, :D].set(p["ln_b"])
    slab = slab.at[2, :D].set(p["b2"])
    slab = slab.at[3, :].set(p["b1"])

    # pack the 5 scalar quantum weights into one SMEM vector
    wscal = jnp.concatenate([p["w_attn"], p["wm"]]).astype(jnp.float32)   # (5,)

    kern = functools.partial(rk4_fused_kernel, batch=B, seq=N, heads=HEADS)
    out2d = pl.pallas_call(
        kern,
        out_shape=jax.ShapeDtypeStruct((B * N, D), x.dtype),
        grid=(1,),
        in_specs=[
            pl.BlockSpec((B * N, D), lambda i: (0, 0)),              # x (flattened)
            pl.BlockSpec((4, hid), lambda i: (0, 0)),                # packed gamma/beta/b2/b1
            pl.BlockSpec((D, hid), lambda i: (0, 0)),                # fc1 weight
            pl.BlockSpec((hid, D), lambda i: (0, 0)),                # fc2 weight
            pl.BlockSpec(memory_space=pltpu.MemorySpace.SMEM),       # scalar quantum weights (5,)
        ],
        out_specs=pl.BlockSpec((B * N, D), lambda i: (0, 0)),
    )(x2d, slab, p["w1"], p["w2"], wscal)
    return out2d.reshape(B, N, D)


# ============================ pure-JAX reference ==============================

def ref_forward(x, p):
    def ln(z):
        m = z.mean(-1, keepdims=True)
        v = ((z - m) ** 2).mean(-1, keepdims=True)
        return (z - m) / jnp.sqrt(v + EPS) * p["ln_g"] + p["ln_b"]

    def attn(z):
        B, N, D = z.shape
        hd = D // HEADS
        q = jnp.cos(z + p["w_attn"][0])
        k = jnp.cos(z + p["w_attn"][1])
        v = jnp.cos(z + p["w_attn"][2])
        split = lambda t: t.reshape(B, N, HEADS, hd).transpose(0, 2, 1, 3)
        q, k, v = split(q), split(k), split(v)
        dot = jnp.einsum("bhid,bhjd->bhij", q, k) * (1.0 / D ** 0.5)
        a = jax.nn.softmax(dot, axis=-1)
        ctx = jnp.einsum("bhij,bhjd->bhid", a, v).transpose(0, 2, 1, 3).reshape(B, N, D)
        return jnp.cos(ctx + p["w_attn"][3])

    def mlp(z):
        h = z @ p["w1"] + p["b1"]
        h = jnp.cos(h + p["wm"][0])
        h = 0.5 * h * (1.0 + lax.erf(h * INV_SQRT2))
        return h @ p["w2"] + p["b2"]

    xn = ln(x)
    a1 = attn(xn); y1 = mlp(xn); s1 = xn + a1 + y1
    a2 = attn(s1); y2 = mlp(s1); s2 = xn + a2 + y2
    a3 = attn(s2); y3 = mlp(s2); s3 = xn + a3 + y3
    a4 = attn(s3); y4 = mlp(s3)
    return xn + a1 + y1 + a4 + y4


# ================================= main =======================================

if __name__ == "__main__":
    key = jax.random.PRNGKey(0)
    kx, k1, k2, k3, k4, k5, k6, k7, k8 = jax.random.split(key, 9)

    params = {
        "ln_g":  1.0 + 0.02 * jax.random.normal(k1, (DIM,), jnp.float32),
        "ln_b":  0.02 * jax.random.normal(k2, (DIM,), jnp.float32),
        "w_attn": 0.1 * jax.random.normal(k3, (4,), jnp.float32),   # q, k, v, out quantum weights
        "w1":    jax.random.normal(k4, (DIM, HID), jnp.float32) / (DIM ** 0.5),
        "b1":    0.01 * jax.random.normal(k5, (HID,), jnp.float32),
        "w2":    jax.random.normal(k6, (HID, DIM), jnp.float32) / (HID ** 0.5),
        "b2":    0.01 * jax.random.normal(k7, (DIM,), jnp.float32),
        "wm":    0.1 * jax.random.normal(k8, (1,), jnp.float32),    # MLP quantum weight
    }

    x = jax.random.normal(kx, (BATCH, SEQ, DIM), jnp.float32)

    out = jax.jit(rk4_enh_block)(x, params)
    out = jax.block_until_ready(out)

    ref = ref_forward(x, params)
    assert out.shape == (BATCH, SEQ, DIM)
    assert jnp.allclose(out, ref, atol=2e-3, rtol=2e-3), float(jnp.max(jnp.abs(out - ref)))

    print("KERNEL_OK")
</pallas_src>

<mosaic_0001>
module attributes {stable_mosaic.version = 11 : i64} {
  func.func @rk4_fused_kernel(%arg0: i32, %arg1: memref<16x32xf32, #tpu.memory_space<vmem>>, %arg2: memref<4x128xf32, #tpu.memory_space<vmem>>, %arg3: memref<32x128xf32, #tpu.memory_space<vmem>>, %arg4: memref<128x32xf32, #tpu.memory_space<vmem>>, %arg5: memref<5xf32, #tpu.memory_space<smem>>, %arg6: memref<16x32xf32, #tpu.memory_space<vmem>>) attributes {dimension_semantics = [#tpu.dimension_semantics<arbitrary>], iteration_bounds = array<i64: 1>, scalar_prefetch = 0 : i64, scratch_operands = 0 : i64, tpu.core_type = #tpu.core_type<tc>, window_params = [{pipeline_mode = #tpu.pipeline_mode<synchronous>, transform_indices = @transform_0, window_bounds = array<i64: 16, 32>}, {pipeline_mode = #tpu.pipeline_mode<synchronous>, transform_indices = @transform_1, window_bounds = array<i64: 4, 128>}, {pipeline_mode = #tpu.pipeline_mode<synchronous>, transform_indices = @transform_2, window_bounds = array<i64: 32, 128>}, {pipeline_mode = #tpu.pipeline_mode<synchronous>, transform_indices = @transform_3, window_bounds = array<i64: 128, 32>}, {transform_indices = @transform_4, window_bounds = array<i64: 5>}, {pipeline_mode = #tpu.pipeline_mode<synchronous>, transform_indices = @transform_5, window_bounds = array<i64: 16, 32>}]} {
    %c0 = arith.constant 0 : index
    %0 = memref.load %arg5[%c0] : memref<5xf32, #tpu.memory_space<smem>>
    %c1 = arith.constant 1 : index
    %1 = memref.load %arg5[%c1] : memref<5xf32, #tpu.memory_space<smem>>
    %c2 = arith.constant 2 : index
    %2 = memref.load %arg5[%c2] : memref<5xf32, #tpu.memory_space<smem>>
    %c3 = arith.constant 3 : index
    %3 = memref.load %arg5[%c3] : memref<5xf32, #tpu.memory_space<smem>>
    %c4 = arith.constant 4 : index
    %4 = memref.load %arg5[%c4] : memref<5xf32, #tpu.memory_space<smem>>
    %c0_0 = arith.constant 0 : index
    %c0_1 = arith.constant 0 : index
    %5 = vector.load %arg2[%c0_0, %c0_1] : memref<4x128xf32, #tpu.memory_space<vmem>>, vector<1x32xf32>
    %c1_2 = arith.constant 1 : index
    %c0_3 = arith.constant 0 : index
    %6 = vector.load %arg2[%c1_2, %c0_3] : memref<4x128xf32, #tpu.memory_space<vmem>>, vector<1x32xf32>
    %c2_4 = arith.constant 2 : index
    %c0_5 = arith.constant 0 : index
    %7 = vector.load %arg2[%c2_4, %c0_5] : memref<4x128xf32, #tpu.memory_space<vmem>>, vector<1x32xf32>
    %c3_6 = arith.constant 3 : index
    %c0_7 = arith.constant 0 : index
    %8 = vector.load %arg2[%c3_6, %c0_7] : memref<4x128xf32, #tpu.memory_space<vmem>>, vector<1x128xf32>
    %c0_8 = arith.constant 0 : index
    %c0_9 = arith.constant 0 : index
    %9 = vector.load %arg3[%c0_8, %c0_9] : memref<32x128xf32, #tpu.memory_space<vmem>>, vector<32x128xf32>
    %c0_10 = arith.constant 0 : index
    %c0_11 = arith.constant 0 : index
    %10 = vector.load %arg4[%c0_10, %c0_11] : memref<128x32xf32, #tpu.memory_space<vmem>>, vector<128x32xf32>
    %11 = tpu.iota {dimensions = array<i32: 0>} : vector<64x32xi32>
    %12 = arith.sitofp %11 : vector<64x32xi32> to vector<64x32xf32>
    %13 = tpu.iota {dimensions = array<i32: 1>} : vector<64x32xi32>
    %14 = arith.sitofp %13 : vector<64x32xi32> to vector<64x32xf32>
    %cst = arith.constant 1.250000e-01 : f32
    %15 = vector.broadcast %cst : f32 to vector<64x32xf32>
    %16 = arith.mulf %12, %15 : vector<64x32xf32>
    %17 = math.floor %16 : vector<64x32xf32>
    %cst_12 = arith.constant 3.125000e-02 : f32
    %18 = vector.broadcast %cst_12 : f32 to vector<64x32xf32>
    %19 = arith.mulf %12, %18 : vector<64x32xf32>
    %20 = math.floor %19 : vector<64x32xf32>
    %cst_13 = arith.constant 4.000000e+00 : f32
    %21 = vector.broadcast %cst_13 : f32 to vector<64x32xf32>
    %22 = arith.mulf %21, %20 : vector<64x32xf32>
    %23 = arith.subf %17, %22 : vector<64x32xf32>
    %cst_14 = arith.constant 1.250000e-01 : f32
    %24 = vector.broadcast %cst_14 : f32 to vector<64x32xf32>
    %25 = arith.mulf %14, %24 : vector<64x32xf32>
    %26 = math.floor %25 : vector<64x32xf32>
    %27 = arith.cmpf oeq, %23, %26 : vector<64x32xf32>
    %28 = arith.extui %27 : vector<64x32xi1> to vector<64x32xi32>
    %29 = arith.sitofp %28 : vector<64x32xi32> to vector<64x32xf32>
    %30 = tpu.iota {dimensions = array<i32: 0>} : vector<64x16xi32>
    %31 = arith.sitofp %30 : vector<64x16xi32> to vector<64x16xf32>
    %32 = tpu.iota {dimensions = array<i32: 1>} : vector<64x16xi32>
    %33 = arith.sitofp %32 : vector<64x16xi32> to vector<64x16xf32>
    %cst_15 = arith.constant 3.125000e-02 : f32
    %34 = vector.broadcast %cst_15 : f32 to vector<64x16xf32>
    %35 = arith.mulf %31, %34 : vector<64x16xf32>
    %36 = math.floor %35 : vector<64x16xf32>
    %cst_16 = arith.constant 1.250000e-01 : f32
    %37 = vector.broadcast %cst_16 : f32 to vector<64x16xf32>
    %38 = arith.mulf %33, %37 : vector<64x16xf32>
    %39 = math.floor %38 : vector<64x16xf32>
    %40 = arith.cmpf oeq, %36, %39 : vector<64x16xf32>
    %cst_17 = arith.constant 1.250000e-01 : f32
    %41 = vector.broadcast %cst_17 : f32 to vector<64x16xf32>
    %42 = arith.mulf %31, %41 : vector<64x16xf32>
    %43 = math.floor %42 : vector<64x16xf32>
    %cst_18 = arith.constant 8.000000e+00 : f32
    %44 = vector.broadcast %cst_18 : f32 to vector<64x16xf32>
    %45 = arith.mulf %44, %43 : vector<64x16xf32>
    %46 = arith.subf %31, %45 : vector<64x16xf32>
    %cst_19 = arith.constant 1.250000e-01 : f32
    %47 = vector.broadcast %cst_19 : f32 to vector<64x16xf32>
    %48 = arith.mulf %33, %47 : vector<64x16xf32>
    %49 = math.floor %48 : vector<64x16xf32>
    %cst_20 = arith.constant 8.000000e+00 : f32
    %50 = vector.broadcast %cst_20 : f32 to vector<64x16xf32>
    %51 = arith.mulf %50, %49 : vector<64x16xf32>
    %52 = arith.subf %33, %51 : vector<64x16xf32>
    %53 = arith.cmpf oeq, %46, %52 : vector<64x16xf32>
    %54 = arith.andi %40, %53 : vector<64x16xi1>
    %cst_21 = arith.constant 0.176776692 : f32
    %cst_22 = arith.constant 0.000000e+00 : f32
    %55 = vector.broadcast %cst_21 : f32 to vector<64x16xf32>
    %56 = vector.broadcast %cst_22 : f32 to vector<64x16xf32>
    %57 = arith.select %54, %55, %56 : vector<64x16xi1>, vector<64x16xf32>
    %cst_23 = arith.constant 0.000000e+00 : f32
    %cst_24 = arith.constant -1.000000e+09 : f32
    %58 = vector.broadcast %cst_23 : f32 to vector<64x16xf32>
    %59 = vector.broadcast %cst_24 : f32 to vector<64x16xf32>
    %60 = arith.select %40, %58, %59 : vector<64x16xi1>, vector<64x16xf32>
    %61 = tpu.iota {dimensions = array<i32: 0>} : vector<16x64xi32>
    %62 = arith.sitofp %61 : vector<16x64xi32> to vector<16x64xf32>
    %63 = tpu.iota {dimensions = array<i32: 1>} : vector<16x64xi32>
    %64 = arith.sitofp %63 : vector<16x64xi32> to vector<16x64xf32>
    %cst_25 = arith.constant 1.250000e-01 : f32
    %65 = vector.broadcast %cst_25 : f32 to vector<16x64xf32>
    %66 = arith.mulf %62, %65 : vector<16x64xf32>
    %67 = math.floor %66 : vector<16x64xf32>
    %cst_26 = arith.constant 3.125000e-02 : f32
    %68 = vector.broadcast %cst_26 : f32 to vector<16x64xf32>
    %69 = arith.mulf %64, %68 : vector<16x64xf32>
    %70 = math.floor %69 : vector<16x64xf32>
    %71 = arith.cmpf oeq, %67, %70 : vector<16x64xf32>
    %cst_27 = arith.constant 1.250000e-01 : f32
    %72 = vector.broadcast %cst_27 : f32 to vector<16x64xf32>
    %73 = arith.mulf %62, %72 : vector<16x64xf32>
    %74 = math.floor %73 : vector<16x64xf32>
    %cst_28 = arith.constant 8.000000e+00 : f32
    %75 = vector.broadcast %cst_28 : f32 to vector<16x64xf32>
    %76 = arith.mulf %75, %74 : vector<16x64xf32>
    %77 = arith.subf %62, %76 : vector<16x64xf32>
    %cst_29 = arith.constant 1.250000e-01 : f32
    %78 = vector.broadcast %cst_29 : f32 to vector<16x64xf32>
    %79 = arith.mulf %64, %78 : vector<16x64xf32>
    %80 = math.floor %79 : vector<16x64xf32>
    %cst_30 = arith.constant 8.000000e+00 : f32
    %81 = vector.broadcast %cst_30 : f32 to vector<16x64xf32>
    %82 = arith.mulf %81, %80 : vector<16x64xf32>
    %83 = arith.subf %64, %82 : vector<16x64xf32>
    %84 = arith.cmpf oeq, %77, %83 : vector<16x64xf32>
    %85 = arith.andi %71, %84 : vector<16x64xi1>
    %cst_31 = arith.constant 1.000000e+00 : f32
    %cst_32 = arith.constant 0.000000e+00 : f32
    %86 = vector.broadcast %cst_31 : f32 to vector<16x64xf32>
    %87 = vector.broadcast %cst_32 : f32 to vector<16x64xf32>
    %88 = arith.select %85, %86, %87 : vector<16x64xi1>, vector<16x64xf32>
    %c0_33 = arith.constant 0 : index
    %c0_34 = arith.constant 0 : index
    %89 = vector.load %arg1[%c0_33, %c0_34] : memref<16x32xf32, #tpu.memory_space<vmem>>, vector<16x32xf32>
    %cst_35 = arith.constant dense<0.000000e+00> : vector<16xf32>
    %90 = vector.multi_reduction <add>, %89, %cst_35 [1] : vector<16x32xf32> to vector<16xf32>
    %91 = vector.shape_cast %90 : vector<16xf32> to vector<16x1xf32>
    %cst_36 = arith.constant 3.200000e+01 : f32
    %92 = vector.broadcast %cst_36 : f32 to vector<16x1xf32>
    %93 = arith.divf %91, %92 : vector<16x1xf32>
    %94 = vector.broadcast %93 : vector<16x1xf32> to vector<16x32xf32>
    %95 = arith.subf %89, %94 : vector<16x32xf32>
    %96 = arith.mulf %95, %95 : vector<16x32xf32>
    %cst_37 = arith.constant dense<0.000000e+00> : vector<16xf32>
    %97 = vector.multi_reduction <add>, %96, %cst_37 [1] : vector<16x32xf32> to vector<16xf32>
    %98 = vector.shape_cast %97 : vector<16xf32> to vector<16x1xf32>
    %cst_38 = arith.constant 3.200000e+01 : f32
    %99 = vector.broadcast %cst_38 : f32 to vector<16x1xf32>
    %100 = arith.divf %98, %99 : vector<16x1xf32>
    %cst_39 = arith.constant 9.99999974E-6 : f32
    %101 = vector.broadcast %cst_39 : f32 to vector<16x1xf32>
    %102 = arith.addf %100, %101 : vector<16x1xf32>
    %103 = math.rsqrt %102 : vector<16x1xf32>
    %104 = vector.broadcast %103 : vector<16x1xf32> to vector<16x32xf32>
    %105 = arith.mulf %95, %104 : vector<16x32xf32>
    %106 = vector.broadcast %5 : vector<1x32xf32> to vector<16x32xf32>
    %107 = arith.mulf %105, %106 : vector<16x32xf32>
    %108 = vector.broadcast %6 : vector<1x32xf32> to vector<16x32xf32>
    %109 = arith.addf %107, %108 : vector<16x32xf32>
    %110 = vector.broadcast %0 : f32 to vector<16x32xf32>
    %111 = arith.addf %109, %110 : vector<16x32xf32>
    %112 = math.cos %111 : vector<16x32xf32>
    %113 = vector.broadcast %1 : f32 to vector<16x32xf32>
    %114 = arith.addf %109, %113 : vector<16x32xf32>
    %115 = math.cos %114 : vector<16x32xf32>
    %116 = vector.broadcast %2 : f32 to vector<16x32xf32>
    %117 = arith.addf %109, %116 : vector<16x32xf32>
    %118 = math.cos %117 : vector<16x32xf32>
    %cst_40 = arith.constant dense<0.000000e+00> : vector<64x32xf32>
    %119 = tpu.matmul %57, %112, %cst_40 {dimension_numbers = #tpu.dot_dimension_numbers<[1], [0], [0], [1], [0, 0, 1, 1], [], []>} : vector<64x16xf32>, vector<16x32xf32>, vector<64x32xf32> -> vector<64x32xf32>
    %120 = arith.mulf %119, %29 : vector<64x32xf32>
    %cst_41 = arith.constant dense<0.000000e+00> : vector<64x16xf32>
    %121 = tpu.matmul %120, %115, %cst_41 {dimension_numbers = #tpu.dot_dimension_numbers<[1], [1], [0], [0], [0, 0, 1, 0], [], []>} : vector<64x32xf32>, vector<16x32xf32>, vector<64x16xf32> -> vector<64x16xf32>
    %122 = arith.addf %121, %60 : vector<64x16xf32>
    %123 = math.exp %122 : vector<64x16xf32>
    %cst_42 = arith.constant dense<0.000000e+00> : vector<64xf32>
    %124 = vector.multi_reduction <add>, %123, %cst_42 [1] : vector<64x16xf32> to vector<64xf32>
    %125 = vector.shape_cast %124 : vector<64xf32> to vector<64x1xf32>
    %126 = tpu.reciprocal %125 : vector<64x1xf32> -> vector<64x1xf32>
    %127 = vector.broadcast %126 : vector<64x1xf32> to vector<64x16xf32>
    %128 = arith.mulf %123, %127 : vector<64x16xf32>
    %cst_43 = arith.constant dense<0.000000e+00> : vector<64x32xf32>
    %129 = tpu.matmul %128, %118, %cst_43 {dimension_numbers = #tpu.dot_dimension_numbers<[1], [0], [0], [1], [0, 0, 1, 1], [], []>} : vector<64x16xf32>, vector<16x32xf32>, vector<64x32xf32> -> vector<64x32xf32>
    %130 = arith.mulf %129, %29 : vector<64x32xf32>
    %cst_44 = arith.constant dense<0.000000e+00> : vector<16x32xf32>
    %131 = tpu.matmul %88, %130, %cst_44 {dimension_numbers = #tpu.dot_dimension_numbers<[1], [0], [0], [1], [0, 0, 1, 1], [], []>} : vector<16x64xf32>, vector<64x32xf32>, vector<16x32xf32> -> vector<16x32xf32>
    %132 = vector.broadcast %3 : f32 to vector<16x32xf32>
    %133 = arith.addf %131, %132 : vector<16x32xf32>
    %134 = math.cos %133 : vector<16x32xf32>
    %cst_45 = arith.constant dense<0.000000e+00> : vector<16x128xf32>
    %135 = tpu.matmul %109, %9, %cst_45 {dimension_numbers = #tpu.dot_dimension_numbers<[1], [0], [0], [1], [0, 0, 1, 1], [], []>} : vector<16x32xf32>, vector<32x128xf32>, vector<16x128xf32> -> vector<16x128xf32>
    %136 = vector.broadcast %8 : vector<1x128xf32> to vector<16x128xf32>
    %137 = arith.addf %135, %136 : vector<16x128xf32>
    %138 = vector.broadcast %4 : f32 to vector<16x128xf32>
    %139 = arith.addf %137, %138 : vector<16x128xf32>
    %140 = math.cos %139 : vector<16x128xf32>
    %cst_46 = arith.constant 5.000000e-01 : f32
    %141 = vector.broadcast %cst_46 : f32 to vector<16x128xf32>
    %142 = arith.mulf %141, %140 : vector<16x128xf32>
    %cst_47 = arith.constant 0.707106769 : f32
    %143 = vector.broadcast %cst_47 : f32 to vector<16x128xf32>
    %144 = arith.mulf %140, %143 : vector<16x128xf32>
    %145 = math.erf %144 : vector<16x128xf32>
    %cst_48 = arith.constant 1.000000e+00 : f32
    %146 = vector.broadcast %cst_48 : f32 to vector<16x128xf32>
    %147 = arith.addf %146, %145 : vector<16x128xf32>
    %148 = arith.mulf %142, %147 : vector<16x128xf32>
    %cst_49 = arith.constant dense<0.000000e+00> : vector<16x32xf32>
    %149 = tpu.matmul %148, %10, %cst_49 {dimension_numbers = #tpu.dot_dimension_numbers<[1], [0], [0], [1], [0, 0, 1, 1], [], []>} : vector<16x128xf32>, vector<128x32xf32>, vector<16x32xf32> -> vector<16x32xf32>
    %150 = vector.broadcast %7 : vector<1x32xf32> to vector<16x32xf32>
    %151 = arith.addf %149, %150 : vector<16x32xf32>
    %152 = arith.addf %109, %134 : vector<16x32xf32>
    %153 = arith.addf %152, %151 : vector<16x32xf32>
    %154 = vector.broadcast %0 : f32 to vector<16x32xf32>
    %155 = arith.addf %153, %154 : vector<16x32xf32>
    %156 = math.cos %155 : vector<16x32xf32>
    %157 = vector.broadcast %1 : f32 to vector<16x32xf32>
    %158 = arith.addf %153, %157 : vector<16x32xf32>
    %159 = math.cos %158 : vector<16x32xf32>
    %160 = vector.broadcast %2 : f32 to vector<16x32xf32>
    %161 = arith.addf %153, %160 : vector<16x32xf32>
    %162 = math.cos %161 : vector<16x32xf32>
    %cst_50 = arith.constant dense<0.000000e+00> : vector<64x32xf32>
    %163 = tpu.matmul %57, %156, %cst_50 {dimension_numbers = #tpu.dot_dimension_numbers<[1], [0], [0], [1], [0, 0, 1, 1], [], []>} : vector<64x16xf32>, vector<16x32xf32>, vector<64x32xf32> -> vector<64x32xf32>
    %164 = arith.mulf %163, %29 : vector<64x32xf32>
    %cst_51 = arith.constant dense<0.000000e+00> : vector<64x16xf32>
    %165 = tpu.matmul %164, %159, %cst_51 {dimension_numbers = #tpu.dot_dimension_numbers<[1], [1], [0], [0], [0, 0, 1, 0], [], []>} : vector<64x32xf32>, vector<16x32xf32>, vector<64x16xf32> -> vector<64x16xf32>
    %166 = arith.addf %165, %60 : vector<64x16xf32>
    %167 = math.exp %166 : vector<64x16xf32>
    %cst_52 = arith.constant dense<0.000000e+00> : vector<64xf32>
    %168 = vector.multi_reduction <add>, %167, %cst_52 [1] : vector<64x16xf32> to vector<64xf32>
    %169 = vector.shape_cast %168 : vector<64xf32> to vector<64x1xf32>
    %170 = tpu.reciprocal %169 : vector<64x1xf32> -> vector<64x1xf32>
    %171 = vector.broadcast %170 : vector<64x1xf32> to vector<64x16xf32>
    %172 = arith.mulf %167, %171 : vector<64x16xf32>
    %cst_53 = arith.constant dense<0.000000e+00> : vector<64x32xf32>
    %173 = tpu.matmul %172, %162, %cst_53 {dimension_numbers = #tpu.dot_dimension_numbers<[1], [0], [0], [1], [0, 0, 1, 1], [], []>} : vector<64x16xf32>, vector<16x32xf32>, vector<64x32xf32> -> vector<64x32xf32>
    %174 = arith.mulf %173, %29 : vector<64x32xf32>
    %cst_54 = arith.constant dense<0.000000e+00> : vector<16x32xf32>
    %175 = tpu.matmul %88, %174, %cst_54 {dimension_numbers = #tpu.dot_dimension_numbers<[1], [0], [0], [1], [0, 0, 1, 1], [], []>} : vector<16x64xf32>, vector<64x32xf32>, vector<16x32xf32> -> vector<16x32xf32>
    %176 = vector.broadcast %3 : f32 to vector<16x32xf32>
    %177 = arith.addf %175, %176 : vector<16x32xf32>
    %178 = math.cos %177 : vector<16x32xf32>
    %cst_55 = arith.constant dense<0.000000e+00> : vector<16x128xf32>
    %179 = tpu.matmul %153, %9, %cst_55 {dimension_numbers = #tpu.dot_dimension_numbers<[1], [0], [0], [1], [0, 0, 1, 1], [], []>} : vector<16x32xf32>, vector<32x128xf32>, vector<16x128xf32> -> vector<16x128xf32>
    %180 = vector.broadcast %8 : vector<1x128xf32> to vector<16x128xf32>
    %181 = arith.addf %179, %180 : vector<16x128xf32>
    %182 = vector.broadcast %4 : f32 to vector<16x128xf32>
    %183 = arith.addf %181, %182 : vector<16x128xf32>
    %184 = math.cos %183 : vector<16x128xf32>
    %cst_56 = arith.constant 5.000000e-01 : f32
    %185 = vector.broadcast %cst_56 : f32 to vector<16x128xf32>
    %186 = arith.mulf %185, %184 : vector<16x128xf32>
    %cst_57 = arith.constant 0.707106769 : f32
    %187 = vector.broadcast %cst_57 : f32 to vector<16x128xf32>
    %188 = arith.mulf %184, %187 : vector<16x128xf32>
    %189 = math.erf %188 : vector<16x128xf32>
    %cst_58 = arith.constant 1.000000e+00 : f32
    %190 = vector.broadcast %cst_58 : f32 to vector<16x128xf32>
    %191 = arith.addf %190, %189 : vector<16x128xf32>
    %192 = arith.mulf %186, %191 : vector<16x128xf32>
    %cst_59 = arith.constant dense<0.000000e+00> : vector<16x32xf32>
    %193 = tpu.matmul %192, %10, %cst_59 {dimension_numbers = #tpu.dot_dimension_numbers<[1], [0], [0], [1], [0, 0, 1, 1], [], []>} : vector<16x128xf32>, vector<128x32xf32>, vector<16x32xf32> -> vector<16x32xf32>
    %194 = vector.broadcast %7 : vector<1x32xf32> to vector<16x32xf32>
    %195 = arith.addf %193, %194 : vector<16x32xf32>
    %196 = arith.addf %109, %178 : vector<16x32xf32>
    %197 = arith.addf %196, %195 : vector<16x32xf32>
    %198 = vector.broadcast %0 : f32 to vector<16x32xf32>
    %199 = arith.addf %197, %198 : vector<16x32xf32>
    %200 = math.cos %199 : vector<16x32xf32>
    %201 = vector.broadcast %1 : f32 to vector<16x32xf32>
    %202 = arith.addf %197, %201 : vector<16x32xf32>
    %203 = math.cos %202 : vector<16x32xf32>
    %204 = vector.broadcast %2 : f32 to vector<16x32xf32>
    %205 = arith.addf %197, %204 : vector<16x32xf32>
    %206 = math.cos %205 : vector<16x32xf32>
    %cst_60 = arith.constant dense<0.000000e+00> : vector<64x32xf32>
    %207 = tpu.matmul %57, %200, %cst_60 {dimension_numbers = #tpu.dot_dimension_numbers<[1], [0], [0], [1], [0, 0, 1, 1], [], []>} : vector<64x16xf32>, vector<16x32xf32>, vector<64x32xf32> -> vector<64x32xf32>
    %208 = arith.mulf %207, %29 : vector<64x32xf32>
    %cst_61 = arith.constant dense<0.000000e+00> : vector<64x16xf32>
    %209 = tpu.matmul %208, %203, %cst_61 {dimension_numbers = #tpu.dot_dimension_numbers<[1], [1], [0], [0], [0, 0, 1, 0], [], []>} : vector<64x32xf32>, vector<16x32xf32>, vector<64x16xf32> -> vector<64x16xf32>
    %210 = arith.addf %209, %60 : vector<64x16xf32>
    %211 = math.exp %210 : vector<64x16xf32>
    %cst_62 = arith.constant dense<0.000000e+00> : vector<64xf32>
    %212 = vector.multi_reduction <add>, %211, %cst_62 [1] : vector<64x16xf32> to vector<64xf32>
    %213 = vector.shape_cast %212 : vector<64xf32> to vector<64x1xf32>
    %214 = tpu.reciprocal %213 : vector<64x1xf32> -> vector<64x1xf32>
    %215 = vector.broadcast %214 : vector<64x1xf32> to vector<64x16xf32>
    %216 = arith.mulf %211, %215 : vector<64x16xf32>
    %cst_63 = arith.constant dense<0.000000e+00> : vector<64x32xf32>
    %217 = tpu.matmul %216, %206, %cst_63 {dimension_numbers = #tpu.dot_dimension_numbers<[1], [0], [0], [1], [0, 0, 1, 1], [], []>} : vector<64x16xf32>, vector<16x32xf32>, vector<64x32xf32> -> vector<64x32xf32>
    %218 = arith.mulf %217, %29 : vector<64x32xf32>
    %cst_64 = arith.constant dense<0.000000e+00> : vector<16x32xf32>
    %219 = tpu.matmul %88, %218, %cst_64 {dimension_numbers = #tpu.dot_dimension_numbers<[1], [0], [0], [1], [0, 0, 1, 1], [], []>} : vector<16x64xf32>, vector<64x32xf32>, vector<16x32xf32> -> vector<16x32xf32>
    %220 = vector.broadcast %3 : f32 to vector<16x32xf32>
    %221 = arith.addf %219, %220 : vector<16x32xf32>
    %222 = math.cos %221 : vector<16x32xf32>
    %cst_65 = arith.constant dense<0.000000e+00> : vector<16x128xf32>
    %223 = tpu.matmul %197, %9, %cst_65 {dimension_numbers = #tpu.dot_dimension_numbers<[1], [0], [0], [1], [0, 0, 1, 1], [], []>} : vector<16x32xf32>, vector<32x128xf32>, vector<16x128xf32> -> vector<16x128xf32>
    %224 = vector.broadcast %8 : vector<1x128xf32> to vector<16x128xf32>
    %225 = arith.addf %223, %224 : vector<16x128xf32>
    %226 = vector.broadcast %4 : f32 to vector<16x128xf32>
    %227 = arith.addf %225, %226 : vector<16x128xf32>
    %228 = math.cos %227 : vector<16x128xf32>
    %cst_66 = arith.constant 5.000000e-01 : f32
    %229 = vector.broadcast %cst_66 : f32 to vector<16x128xf32>
    %230 = arith.mulf %229, %228 : vector<16x128xf32>
    %cst_67 = arith.constant 0.707106769 : f32
    %231 = vector.broadcast %cst_67 : f32 to vector<16x128xf32>
    %232 = arith.mulf %228, %231 : vector<16x128xf32>
    %233 = math.erf %232 : vector<16x128xf32>
    %cst_68 = arith.constant 1.000000e+00 : f32
    %234 = vector.broadcast %cst_68 : f32 to vector<16x128xf32>
    %235 = arith.addf %234, %233 : vector<16x128xf32>
    %236 = arith.mulf %230, %235 : vector<16x128xf32>
    %cst_69 = arith.constant dense<0.000000e+00> : vector<16x32xf32>
    %237 = tpu.matmul %236, %10, %cst_69 {dimension_numbers = #tpu.dot_dimension_numbers<[1], [0], [0], [1], [0, 0, 1, 1], [], []>} : vector<16x128xf32>, vector<128x32xf32>, vector<16x32xf32> -> vector<16x32xf32>
    %238 = vector.broadcast %7 : vector<1x32xf32> to vector<16x32xf32>
    %239 = arith.addf %237, %238 : vector<16x32xf32>
    %240 = arith.addf %109, %222 : vector<16x32xf32>
    %241 = arith.addf %240, %239 : vector<16x32xf32>
    %242 = vector.broadcast %0 : f32 to vector<16x32xf32>
    %243 = arith.addf %241, %242 : vector<16x32xf32>
    %244 = math.cos %243 : vector<16x32xf32>
    %245 = vector.broadcast %1 : f32 to vector<16x32xf32>
    %246 = arith.addf %241, %245 : vector<16x32xf32>
    %247 = math.cos %246 : vector<16x32xf32>
    %248 = vector.broadcast %2 : f32 to vector<16x32xf32>
    %249 = arith.addf %241, %248 : vector<16x32xf32>
    %250 = math.cos %249 : vector<16x32xf32>
    %cst_70 = arith.constant dense<0.000000e+00> : vector<64x32xf32>
    %251 = tpu.matmul %57, %244, %cst_70 {dimension_numbers = #tpu.dot_dimension_numbers<[1], [0], [0], [1], [0, 0, 1, 1], [], []>} : vector<64x16xf32>, vector<16x32xf32>, vector<64x32xf32> -> vector<64x32xf32>
    %252 = arith.mulf %251, %29 : vector<64x32xf32>
    %cst_71 = arith.constant dense<0.000000e+00> : vector<64x16xf32>
    %253 = tpu.matmul %252, %247, %cst_71 {dimension_numbers = #tpu.dot_dimension_numbers<[1], [1], [0], [0], [0, 0, 1, 0], [], []>} : vector<64x32xf32>, vector<16x32xf32>, vector<64x16xf32> -> vector<64x16xf32>
    %254 = arith.addf %253, %60 : vector<64x16xf32>
    %255 = math.exp %254 : vector<64x16xf32>
    %cst_72 = arith.constant dense<0.000000e+00> : vector<64xf32>
    %256 = vector.multi_reduction <add>, %255, %cst_72 [1] : vector<64x16xf32> to vector<64xf32>
    %257 = vector.shape_cast %256 : vector<64xf32> to vector<64x1xf32>
    %258 = tpu.reciprocal %257 : vector<64x1xf32> -> vector<64x1xf32>
    %259 = vector.broadcast %258 : vector<64x1xf32> to vector<64x16xf32>
    %260 = arith.mulf %255, %259 : vector<64x16xf32>
    %cst_73 = arith.constant dense<0.000000e+00> : vector<64x32xf32>
    %261 = tpu.matmul %260, %250, %cst_73 {dimension_numbers = #tpu.dot_dimension_numbers<[1], [0], [0], [1], [0, 0, 1, 1], [], []>} : vector<64x16xf32>, vector<16x32xf32>, vector<64x32xf32> -> vector<64x32xf32>
    %262 = arith.mulf %261, %29 : vector<64x32xf32>
    %cst_74 = arith.constant dense<0.000000e+00> : vector<16x32xf32>
    %263 = tpu.matmul %88, %262, %cst_74 {dimension_numbers = #tpu.dot_dimension_numbers<[1], [0], [0], [1], [0, 0, 1, 1], [], []>} : vector<16x64xf32>, vector<64x32xf32>, vector<16x32xf32> -> vector<16x32xf32>
    %264 = vector.broadcast %3 : f32 to vector<16x32xf32>
    %265 = arith.addf %263, %264 : vector<16x32xf32>
    %266 = math.cos %265 : vector<16x32xf32>
    %cst_75 = arith.constant dense<0.000000e+00> : vector<16x128xf32>
    %267 = tpu.matmul %241, %9, %cst_75 {dimension_numbers = #tpu.dot_dimension_numbers<[1], [0], [0], [1], [0, 0, 1, 1], [], []>} : vector<16x32xf32>, vector<32x128xf32>, vector<16x128xf32> -> vector<16x128xf32>
    %268 = vector.broadcast %8 : vector<1x128xf32> to vector<16x128xf32>
    %269 = arith.addf %267, %268 : vector<16x128xf32>
    %270 = vector.broadcast %4 : f32 to vector<16x128xf32>
    %271 = arith.addf %269, %270 : vector<16x128xf32>
    %272 = math.cos %271 : vector<16x128xf32>
    %cst_76 = arith.constant 5.000000e-01 : f32
    %273 = vector.broadcast %cst_76 : f32 to vector<16x128xf32>
    %274 = arith.mulf %273, %272 : vector<16x128xf32>
    %cst_77 = arith.constant 0.707106769 : f32
    %275 = vector.broadcast %cst_77 : f32 to vector<16x128xf32>
    %276 = arith.mulf %272, %275 : vector<16x128xf32>
    %277 = math.erf %276 : vector<16x128xf32>
    %cst_78 = arith.constant 1.000000e+00 : f32
    %278 = vector.broadcast %cst_78 : f32 to vector<16x128xf32>
    %279 = arith.addf %278, %277 : vector<16x128xf32>
    %280 = arith.mulf %274, %279 : vector<16x128xf32>
    %cst_79 = arith.constant dense<0.000000e+00> : vector<16x32xf32>
    %281 = tpu.matmul %280, %10, %cst_79 {dimension_numbers = #tpu.dot_dimension_numbers<[1], [0], [0], [1], [0, 0, 1, 1], [], []>} : vector<16x128xf32>, vector<128x32xf32>, vector<16x32xf32> -> vector<16x32xf32>
    %282 = vector.broadcast %7 : vector<1x32xf32> to vector<16x32xf32>
    %283 = arith.addf %281, %282 : vector<16x32xf32>
    %284 = arith.addf %109, %134 : vector<16x32xf32>
    %285 = arith.addf %284, %151 : vector<16x32xf32>
    %286 = arith.addf %285, %266 : vector<16x32xf32>
    %287 = arith.addf %286, %283 : vector<16x32xf32>
    %c0_80 = arith.constant 0 : index
    %c0_81 = arith.constant 0 : index
    %288 = vector.load %arg6[%c0_80, %c0_81] : memref<16x32xf32, #tpu.memory_space<vmem>>, vector<16x32xf32>
    tpu.vector_store %arg6[%c0_80, %c0_81], %287 {strides = array<i32>} : memref<16x32xf32, #tpu.memory_space<vmem>>, vector<16x32xf32>,
    return
  }
  func.func @transform_0(%arg0: i32) -> (i32, i32) {
    %c0_i32 = arith.constant 0 : i32
    %c0_i32_0 = arith.constant 0 : i32
    %c0_i32_1 = arith.constant 0 : i32
    return %c0_i32, %c0_i32_0 : i32, i32
  }
  func.func @transform_1(%arg0: i32) -> (i32, i32) {
    %c0_i32 = arith.constant 0 : i32
    %c0_i32_0 = arith.constant 0 : i32
    %c0_i32_1 = arith.constant 0 : i32
    return %c0_i32, %c0_i32_0 : i32, i32
  }
  func.func @transform_2(%arg0: i32) -> (i32, i32) {
    %c0_i32 = arith.constant 0 : i32
    %c0_i32_0 = arith.constant 0 : i32
    %c0_i32_1 = arith.constant 0 : i32
    return %c0_i32, %c0_i32_0 : i32, i32
  }
  func.func @transform_3(%arg0: i32) -> (i32, i32) {
    %c0_i32 = arith.constant 0 : i32
    %c0_i32_0 = arith.constant 0 : i32
    %c0_i32_1 = arith.constant 0 : i32
    return %c0_i32, %c0_i32_0 : i32, i32
  }
  func.func @transform_4(%arg0: i32) -> i32 {
    %c0_i32 = arith.constant 0 : i32
    %c0_i32_0 = arith.constant 0 : i32
    return %c0_i32 : i32
  }
  func.func @transform_5(%arg0: i32) -> (i32, i32) {
    %c0_i32 = arith.constant 0 : i32
    %c0_i32_0 = arith.constant 0 : i32
    %c0_i32_1 = arith.constant 0 : i32
    return %c0_i32, %c0_i32_0 : i32, i32
  }
}

</mosaic_0001>

<llo_original>
// kernel: rk4_enh_block.1
$region0: #{rk4_enh_block.1}
  #allocation0 [shape = 'u32[]', space=smem, size = 0x4, offset = 0x4, fixed_abs, tag = 'smem constant byte address 0x4 - core index']
  #allocation1 [shape = 'u32[144,128]{1,0:T(1,128)}', space=vmem, size = 0x12000, scoped, tag = 'internal scratch']
  %s0 = inlined_call_operand.vmem [shape: f32[16,32], index: 0, kind: input, shape index: {}]
  %s1 = inlined_call_operand.vmem [shape: f32[4,128], index: 1, kind: input, shape index: {}]
  %s2 = inlined_call_operand.vmem [shape: f32[32,128], index: 2, kind: input, shape index: {}]
  %s3 = inlined_call_operand.vmem [shape: f32[128,32], index: 3, kind: input, shape index: {}]
  %s4 = inlined_call_operand.vmem [shape: f32[5], index: 4, kind: input, shape index: {}]
  %s5 = inlined_call_operand.hbm [shape: f32[16,32], index: 5, kind: output, shape index: {}]
  %s6 = sld [smem:[#allocation0]]
  $region34: #{rk4_enh_block.1} parent=0
    _
  %s8 = ssub.s32 1, %s6
  %s9 = scalar_select 0, %s8, %s6
  $region1: #{rk4_enh_block.1} parent=0
    #allocation2 [shape = 'u8[512]{0}', space=smem, size = 0x200, scoped, tag = 'input window, operand 4, single buffered']
    #allocation3 [shape = 's32[1]{0}', space=sflag, size = 0x4, scoped, tag = 'scoped memory for rk4_enh_block.1']
    #allocation4 [shape = 's32[1]{0}', space=sflag, size = 0x4, scoped, tag = 'scoped memory for rk4_enh_block.1']
    #allocation5 [shape = 'u8[8192]{0}', space=vmem, size = 0x2000, scoped, tag = 'output window, operand 0, single buffered']
    %10 = vsyncpa [#allocation4], 0
    %11 = vsyncpa [#allocation3], 0
    // Predicated region
    $region2: #{rk4_enh_block.1} parent=1 // pred_check
      _
    $region3: #{rk4_enh_block.1} parent=1 // pred_check_branch
      %13 = sbr.rel (0) target = $region5
    $region4: #{rk4_enh_block.1} parent=1 // pred_region
      _
    $region5: #{rk4_enh_block.1} parent=1 // pred_fallthru
      _
    // Predicated region
    $region6: #{rk4_enh_block.1} parent=1 // pred_check
      _
    $region7: #{rk4_enh_block.1} parent=1 // pred_check_branch
      %15 = sbr.rel (0) target = $region9
    $region8: #{rk4_enh_block.1} parent=1 // pred_region
      _
    $region9: #{rk4_enh_block.1} parent=1 // pred_fallthru
      _
    // Predicated region
    $region10: #{rk4_enh_block.1} parent=1 // pred_check
      _
    $region11: #{rk4_enh_block.1} parent=1 // pred_check_branch
      %17 = sbr.rel (0) target = $region13
    $region12: #{rk4_enh_block.1} parent=1 // pred_region
      _
    $region13: #{rk4_enh_block.1} parent=1 // pred_fallthru
      _
    // Predicated region
    $region14: #{rk4_enh_block.1} parent=1 // pred_check
      _
    $region15: #{rk4_enh_block.1} parent=1 // pred_check_branch
      %19 = sbr.rel (0) target = $region17
    $region16: #{rk4_enh_block.1} parent=1 // pred_region
      _
    $region17: #{rk4_enh_block.1} parent=1 // pred_fallthru
      _
    // Predicated region
    $region18: #{rk4_enh_block.1} parent=1 // pred_check
      _
    $region19: #{rk4_enh_block.1} parent=1 // pred_check_branch
      %21 = sbr.rel (0) target = $region21
    $region20: #{rk4_enh_block.1} parent=1 // pred_region
      %s23 = ssub.s32 16, 16
      %24 = vsyncadd [#allocation4], %s23
      %s26 = sshll.u32 %s4, 4
      %s27 = int_to_ptr.vmem [resolvable:$true] %s26
      %29 = dma.vmem_to_smem %s27, 16, [#allocation2], [#allocation4]
    $region21: #{rk4_enh_block.1} parent=1 // pred_fallthru
      _
    // Predicated region
    $region22: #{rk4_enh_block.1} parent=1 // pred_check
      _
    $region23: #{rk4_enh_block.1} parent=1 // pred_check_branch
      %31 = sbr.rel (0) target = $region25
    $region24: #{rk4_enh_block.1} parent=1 // pred_region
      %32 = dma.done [#allocation4], 16
    $region25: #{rk4_enh_block.1} parent=1 // pred_fallthru
      _
    %33 = sfence
    %s34 = sld [smem:[#allocation2]]
    %s35 = sld [smem:[#allocation2 + $0x1]]
    %s36 = sld [smem:[#allocation2 + $0x2]]
    %s37 = sld [smem:[#allocation2 + $0x3]]
    %s38 = sld [smem:[#allocation2 + $0x4]]
    %v39 = vld [vmem:[%s1] sm:$0x1]
    %v40 = vld [vmem:[%s1 + $0x1] sm:$0x1]
    %v41 = vld [vmem:[%s1 + $0x2] sm:$0x1]
    %v42 = vld [vmem:[%s1 + $0x3] sm:$0x1]
    %v43 = vld [vmem:[%s2] sm:$0xff]
    %v44 = vld [vmem:[%s2 + $0x8] sm:$0xff]
    %v45 = vld [vmem:[%s2 + $0x10] sm:$0xff]
    %v46 = vld [vmem:[%s2 + $0x18] sm:$0xff]
    %v47 = vld [vmem:[%s3] sm:$0xff]
    %v48 = vld [vmem:[%s3 + $0x8] sm:$0xff]
    %v49 = vld [vmem:[%s3 + $0x10] sm:$0xff]
    %v50 = vld [vmem:[%s3 + $0x18] sm:$0xff]
    %v51 = vld [vmem:[%s3 + $0x20] sm:$0xff]
    %v52 = vld [vmem:[%s3 + $0x28] sm:$0xff]
    %v53 = vld [vmem:[%s3 + $0x30] sm:$0xff]
    %v54 = vld [vmem:[%s3 + $0x38] sm:$0xff]
    %v55 = vld [vmem:[%s3 + $0x40] sm:$0xff]
    %v56 = vld [vmem:[%s3 + $0x48] sm:$0xff]
    %v57 = vld [vmem:[%s3 + $0x50] sm:$0xff]
    %v58 = vld [vmem:[%s3 + $0x58] sm:$0xff]
    %v59 = vld [vmem:[%s3 + $0x60] sm:$0xff]
    %v60 = vld [vmem:[%s3 + $0x68] sm:$0xff]
    %v61 = vld [vmem:[%s3 + $0x70] sm:$0xff]
    %v62 = vld [vmem:[%s3 + $0x78] sm:$0xff]
    %v63 = vlaneseq
    %v64 = vshrl.u32 %v63, 7
    %v65 = vadd.s32 %v64, 8
    %v66 = vadd.s32 %v64, 16
    %v67 = vadd.s32 %v64, 24
    %v68 = vadd.s32 %v64, 32
    %v69 = vadd.s32 %v64, 40
    %v70 = vadd.s32 %v64, 48
    %v71 = vadd.s32 %v64, 56
    %v72 = vcvt.s32.f32 %v64
    %v73 = vcvt.s32.f32 %v65
    %v74 = vcvt.s32.f32 %v66
    %v75 = vcvt.s32.f32 %v67
    %v76 = vcvt.s32.f32 %v68
    %v77 = vcvt.s32.f32 %v69
    %v78 = vcvt.s32.f32 %v70
    %v79 = vcvt.s32.f32 %v71
    %v80 = vlaneseq
    %v81 = vand.u32 %v80, 127
    %v82 = vcvt.s32.f32 %v81
    %v83 = vmul.f32 %v72, 0.125
    %v84 = vmul.f32 %v73, 0.125
    %v85 = vmul.f32 %v74, 0.125
    %v86 = vmul.f32 %v75, 0.125
    %v87 = vmul.f32 %v76, 0.125
    %v88 = vmul.f32 %v77, 0.125
    %v89 = vmul.f32 %v78, 0.125
    %v90 = vmul.f32 %v79, 0.125
    %v91 = vfloor.f32 %v83
    %v92 = vfloor.f32 %v84
    %v93 = vfloor.f32 %v85
    %v94 = vfloor.f32 %v86
    %v95 = vfloor.f32 %v87
    %v96 = vfloor.f32 %v88
    %v97 = vfloor.f32 %v89
    %v98 = vfloor.f32 %v90
    %v99 = vmul.f32 %v72, 0.03125
    %v100 = vmul.f32 %v73, 0.03125
    %v101 = vmul.f32 %v74, 0.03125
    %v102 = vmul.f32 %v75, 0.03125
    %v103 = vmul.f32 %v76, 0.03125
    %v104 = vmul.f32 %v77, 0.03125
    %v105 = vmul.f32 %v78, 0.03125
    %v106 = vmul.f32 %v79, 0.03125
    %v107 = vfloor.f32 %v99
    %v108 = vfloor.f32 %v100
    %v109 = vfloor.f32 %v101
    %v110 = vfloor.f32 %v102
    %v111 = vfloor.f32 %v103
    %v112 = vfloor.f32 %v104
    %v113 = vfloor.f32 %v105
    %v114 = vfloor.f32 %v106
    %v115 = vmul.f32 %v107, 4.0
    %v116 = vmul.f32 %v108, 4.0
    %v117 = vmul.f32 %v109, 4.0
    %v118 = vmul.f32 %v110, 4.0
    %v119 = vmul.f32 %v111, 4.0
    %v120 = vmul.f32 %v112, 4.0
    %v121 = vmul.f32 %v113, 4.0
    %v122 = vmul.f32 %v114, 4.0
    %v123 = vsub.f32 %v91, %v115
    %v124 = vsub.f32 %v92, %v116
    %v125 = vsub.f32 %v93, %v117
    %v126 = vsub.f32 %v94, %v118
    %v127 = vsub.f32 %v95, %v119
    %v128 = vsub.f32 %v96, %v120
    %v129 = vsub.f32 %v97, %v121
    %v130 = vsub.f32 %v98, %v122
    %v131 = vmul.f32 %v82, 0.125
    %v132 = vfloor.f32 %v131
    %vm133 = vcmp.eq.f32.partialorder %v123, %v132
    %vm134 = vcmp.eq.f32.partialorder %v124, %v132
    %vm135 = vcmp.eq.f32.partialorder %v125, %v132
    %vm136 = vcmp.eq.f32.partialorder %v126, %v132
    %vm137 = vcmp.eq.f32.partialorder %v127, %v132
    %vm138 = vcmp.eq.f32.partialorder %v128, %v132
    %vm139 = vcmp.eq.f32.partialorder %v129, %v132
    %vm140 = vcmp.eq.f32.partialorder %v130, %v132
    %v141 = vsel %vm133, 1, 0
    %v142 = vsel %vm134, 1, 0
    %v143 = vsel %vm135, 1, 0
    %v144 = vsel %vm136, 1, 0
    %v145 = vsel %vm137, 1, 0
    %v146 = vsel %vm138, 1, 0
    %v147 = vsel %vm139, 1, 0
    %v148 = vsel %vm140, 1, 0
    %v149 = vcvt.s32.f32 %v141
    %v150 = vcvt.s32.f32 %v142
    %v151 = vcvt.s32.f32 %v143
    %v152 = vcvt.s32.f32 %v144
    %v153 = vcvt.s32.f32 %v145
    %v154 = vcvt.s32.f32 %v146
    %v155 = vcvt.s32.f32 %v147
    %v156 = vcvt.s32.f32 %v148
    %vm157 = vcmp.eq.f32.partialorder %v107, %v132
    %vm158 = vcmp.eq.f32.partialorder %v108, %v132
    %vm159 = vcmp.eq.f32.partialorder %v109, %v132
    %vm160 = vcmp.eq.f32.partialorder %v110, %v132
    %vm161 = vcmp.eq.f32.partialorder %v111, %v132
    %vm162 = vcmp.eq.f32.partialorder %v112, %v132
    %vm163 = vcmp.eq.f32.partialorder %v113, %v132
    %vm164 = vcmp.eq.f32.partialorder %v114, %v132
    %v165 = vmul.f32 %v91, 8.0
    %v166 = vmul.f32 %v92, 8.0
    %v167 = vmul.f32 %v93, 8.0
    %v168 = vmul.f32 %v94, 8.0
    %v169 = vmul.f32 %v95, 8.0
    %v170 = vmul.f32 %v96, 8.0
    %v171 = vmul.f32 %v97, 8.0
    %v172 = vmul.f32 %v98, 8.0
    %v173 = vsub.f32 %v72, %v165
    %v174 = vsub.f32 %v73, %v166
    %v175 = vsub.f32 %v74, %v167
    %v176 = vsub.f32 %v75, %v168
    %v177 = vsub.f32 %v76, %v169
    %v178 = vsub.f32 %v77, %v170
    %v179 = vsub.f32 %v78, %v171
    %v180 = vsub.f32 %v79, %v172
    %v181 = vmul.f32 %v132, 8.0
    %v182 = vsub.f32 %v82, %v181
    %vm183 = vcmp.eq.f32.partialorder %v173, %v182
    %vm184 = vcmp.eq.f32.partialorder %v174, %v182
    %vm185 = vcmp.eq.f32.partialorder %v175, %v182
    %vm186 = vcmp.eq.f32.partialorder %v176, %v182
    %vm187 = vcmp.eq.f32.partialorder %v177, %v182
    %vm188 = vcmp.eq.f32.partialorder %v178, %v182
    %vm189 = vcmp.eq.f32.partialorder %v179, %v182
    %vm190 = vcmp.eq.f32.partialorder %v180, %v182
    %vm191 = vmand %vm157, %vm183
    %vm192 = vmand %vm158, %vm184
    %vm193 = vmand %vm159, %vm185
    %vm194 = vmand %vm160, %vm186
    %vm195 = vmand %vm161, %vm187
    %vm196 = vmand %vm162, %vm188
    %vm197 = vmand %vm163, %vm189
    %vm198 = vmand %vm164, %vm190
    %v199 = vsel %vm191, 0.17677669, 0.0
    %v200 = vsel %vm192, 0.17677669, 0.0
    %v201 = vsel %vm193, 0.17677669, 0.0
    %v202 = vsel %vm194, 0.17677669, 0.0
    %v203 = vsel %vm195, 0.17677669, 0.0
    %v204 = vsel %vm196, 0.17677669, 0.0
    %v205 = vsel %vm197, 0.17677669, 0.0
    %v206 = vsel %vm198, 0.17677669, 0.0
    %v207 = vsel %vm157, 0.0, -1e+09
    %v208 = vsel %vm158, 0.0, -1e+09
    %v209 = vsel %vm159, 0.0, -1e+09
    %v210 = vsel %vm160, 0.0, -1e+09
    %v211 = vsel %vm161, 0.0, -1e+09
    %v212 = vsel %vm162, 0.0, -1e+09
    %v213 = vsel %vm163, 0.0, -1e+09
    %v214 = vsel %vm164, 0.0, -1e+09
    %v215 = vmul.f32 %v82, 0.03125
    %v216 = vfloor.f32 %v215
    %vm217 = vcmp.eq.f32.partialorder %v91, %v216
    %vm218 = vcmp.eq.f32.partialorder %v92, %v216
    %vm219 = vmand %vm217, %vm183
    %vm220 = vmand %vm218, %vm184
    %v221 = vsel %vm219, 1.0, 0.0
    %v222 = vsel %vm220, 1.0, 0.0
    %v223 = vld [vmem:[%s0] sm:$0xff]
    %v224 = vld [vmem:[%s0 + $0x8] sm:$0xff]
    %vm225 = vcmask 261120
    %v226 = vsel %vm225, %v223, 0.0
    %227 = vadd.xlane.f32.xlu0 %v226
    %v228 = vpop.xlane.xlu0 %227
    %v229 = vsel %vm225, %v224, 0.0
    %230 = vadd.xlane.f32.xlu0 %v229
    %v231 = vpop.xlane.xlu0 %230
    %v232 = vrcp.pop 32.0
    %v233 = vmul.f32 %v228, %v232
    %v234 = vmul.f32 %v231, %v232
    %v235 = vsub.f32 %v223, %v233
    %v236 = vsub.f32 %v224, %v234
    %v237 = vmul.f32 %v235, %v235
    %v238 = vmul.f32 %v236, %v236
    %v239 = vsel %vm225, %v237, 0.0
    %240 = vadd.xlane.f32.xlu0 %v239
    %v241 = vpop.xlane.xlu0 %240
    %v242 = vsel %vm225, %v238, 0.0
    %243 = vadd.xlane.f32.xlu0 %v242
    %v244 = vpop.xlane.xlu0 %243
    %v245 = vmul.f32 %v241, %v232
    %v246 = vmul.f32 %v244, %v232
    %v247 = vadd.f32 %v245, 1e-05
    %v248 = vadd.f32 %v246, 1e-05
    %v249 = vrsqrt.pop %v247
    %v250 = vrsqrt.pop %v248
    %v251 = vmul.f32 %v235, %v249
    %v252 = vmul.f32 %v236, %v250
    %v253 = vlaneseq
    %v254 = vshrl.u32 %v253, 7
    %v255 = vsub.s32 0, %v254
    %v256 = vrot.slane %v39, %v255
    %v257 = vmul.f32 %v251, %v256
    %v258 = vmul.f32 %v252, %v256
    %v259 = vlaneseq
    %v260 = vshrl.u32 %v259, 7
    %v261 = vsub.s32 0, %v260
    %v262 = vrot.slane %v40, %v261
    %v263 = vadd.f32 %v257, %v262
    %v264 = vadd.f32 %v258, %v262
    %v265 = vstv %s34
    %v266 = vadd.f32 %v263, %v265
    %v267 = vadd.f32 %v264, %v265
    %v268 = vand.u32 2147483647, %v266
    %vm269 = vcmp.le.f32.partialorder %v268, 0.7853982
    %vm270 = vcmp.lt.s32.totalorder %v266, 0
    %v271 = vand.u32 %v266, 2139095040
    %v272 = vshrl.u32 %v271, 23
    %v273 = vsub.s32 %v272, 127
    %v274 = vand.u32 2147483647, %v266
    %v275 = vand.u32 %v274, 8388607
    %v276 = vor.u32 %v275, 8388608
    %v277 = vsub.s32 0, %v276
    %v278 = vadd.s32 %v273, 1
    %vm279 = vcmp.gt.s32.totalorder %v278, 0
    %v280 = vsel %vm279, %v278, 0
    %v281 = vshrl.u32 %v280, 5
    %v282 = vand.u32 %v280, 31
    %v283 = vsub.s32 32, %v282
    %v284 = vshrl.u32 683565275, %v283
    %v285 = vshll.u32 683565275, %v282
    %v286 = vshrl.u32 2475754826, %v283
    %v287 = vor.u32 %v285, %v286
    %v288 = vshll.u32 2475754826, %v282
    %v289 = vshrl.u32 2131351028, %v283
    %v290 = vor.u32 %v288, %v289
    %v291 = vshll.u32 2131351028, %v282
    %v292 = vshrl.u32 2102212464, %v283
    %v293 = vor.u32 %v291, %v292
    %v294 = vshll.u32 2102212464, %v282
    %v295 = vshrl.u32 920167782, %v283
    %v296 = vor.u32 %v294, %v295
    %v297 = vshll.u32 920167782, %v282
    %v298 = vshrl.u32 1326507024, %v283
    %v299 = vor.u32 %v297, %v298
    %vm300 = vcmp.lt.s32.totalorder %v281, 1
    %vm301 = vcmp.lt.s32.totalorder %v281, 2
    %vm302 = vcmp.lt.s32.totalorder %v281, 3
    %vm303 = vcmp.lt.s32.totalorder %v281, 4
    %v304 = vsel %vm300, %v284, %v287
    %v305 = vsel %vm303, %v293, 2102212464
    %v306 = vsel %vm302, %v290, %v305
    %v307 = vsel %vm301, %v304, %v306
    %v308 = vsel %vm300, %v287, %v290
    %v309 = vsel %vm303, %v296, 920167782
    %v310 = vsel %vm302, %v293, %v309
    %v311 = vsel %vm301, %v308, %v310
    %v312 = vsel %vm300, %v290, %v293
    %v313 = vsel %vm303, %v299, 1326507024
    %v314 = vsel %vm302, %v296, %v313
    %v315 = vsel %vm301, %v312, %v314
    %v316 = vshll.u32 %v276, 8
    %v317 = vmul.u32.u64.compose %v316, %v315
    %v318 = vextract.low.u32 %v317
    %v319 = vextract.high.u32 %v317
    %v320 = vmul.u32.u64.compose %v316, %v311
    %v321 = vextract.low.u32 %v320
    %v322 = vextract.high.u32 %v320
    %v323 = vmul.u32 %v316, %v307
    %v324 = vadd.s32 %v319, %v321
    %vm325 = vc.u32 %v319, %v321
    %v326 = vadd.s32 %v322, 1
    %v327 = vsel %vm325, %v326, %v322
    %v328 = vadd.s32 %v323, %v327
    %v329 = vadd.s32 %v328, 536870912
    %v330 = vshrl.u32 %v329, 30
    %v331 = vshll.u32 %v330, 30
    %v332 = vsub.s32 %v328, %v331
    %vm333 = vcmp.lt.s32.totalorder %v332, 0
    %v334 = vsub.s32 0, %v332
    %v335 = vsel %vm333, %v334, %v332
    %v336 = vclz %v335
    %v337 = vsub.s32 %v336, 2
    %vm338 = vcmp.gt.s32.totalorder 0, %v337
    %v339 = vsel %vm338, 0, %v337
    %v340 = vsub.s32 32, %v339
    %v341 = vshll.u32 %v332, %v339
    %v342 = vshrl.u32 %v324, %v340
    %v343 = vor.u32 %v341, %v342
    %v344 = vsub.s32 4294967266, %v339
    %v345 = vadd.s32 %v344, 127
    %v346 = vshll.u32 %v345, 23
    %v347 = vor.u32 4788187, %v346
    %v348 = vand.u32 2147483647, %v347
    %v350 = vcvt.s32.f32 %v343
    %v351 = vmul.f32 %v350, %v348
    %v352 = vxor.u32 %v351, 2147483648
    %v353 = vsel %vm270, %v352, %v351
    %v354 = vsub.s32 4, %v330
    %v355 = vsel %vm270, %v354, %v330
    %v356 = vsel %vm269, %v266, %v353
    %v357 = vsel %vm269, 0, %v355
    %v358 = vcosq.f32.pop %v356
    %v359 = vsinq.f32.pop %v356
    %vm360 = vweird.f32 %v266
    %v361 = vand.u32 %v357, 3
    %vm362 = vcmp.lt.s32.totalorder %v361, 2
    %vm363 = vcmp.eq.s32.totalorder %v361, 0
    %v364 = vxor.u32 %v359, 2147483648
    %v365 = vsel %vm363, %v358, %v364
    %vm366 = vcmp.eq.s32.totalorder %v361, 2
    %v367 = vxor.u32 %v358, 2147483648
    %v368 = vsel %vm366, %v367, %v359
    %v369 = vsel %vm362, %v365, %v368
    %v370 = vsel %vm360, nan, %v369
    %v371 = vand.u32 2147483647, %v267
    %vm372 = vcmp.le.f32.partialorder %v371, 0.7853982
    %vm373 = vcmp.lt.s32.totalorder %v267, 0
    %v374 = vand.u32 %v267, 2139095040
    %v375 = vshrl.u32 %v374, 23
    %v376 = vsub.s32 %v375, 127
    %v377 = vand.u32 2147483647, %v267
    %v378 = vand.u32 %v377, 8388607
    %v379 = vor.u32 %v378, 8388608
    %v380 = vsub.s32 0, %v379
    %v381 = vadd.s32 %v376, 1
    %vm382 = vcmp.gt.s32.totalorder %v381, 0
    %v383 = vsel %vm382, %v381, 0
    %v384 = vshrl.u32 %v383, 5
    %v385 = vand.u32 %v383, 31
    %v386 = vsub.s32 32, %v385
    %v387 = vshrl.u32 683565275, %v386
    %v388 = vshll.u32 683565275, %v385
    %v389 = vshrl.u32 2475754826, %v386
    %v390 = vor.u32 %v388, %v389
    %v391 = vshll.u32 2475754826, %v385
    %v392 = vshrl.u32 2131351028, %v386
    %v393 = vor.u32 %v391, %v392
    %v394 = vshll.u32 2131351028, %v385
    %v395 = vshrl.u32 2102212464, %v386
    %v396 = vor.u32 %v394, %v395
    %v397 = vshll.u32 2102212464, %v385
    %v398 = vshrl.u32 920167782, %v386
    %v399 = vor.u32 %v397, %v398
    %v400 = vshll.u32 920167782, %v385
    %v401 = vshrl.u32 1326507024, %v386
    %v402 = vor.u32 %v400, %v401
    %vm403 = vcmp.lt.s32.totalorder %v384, 1
    %vm404 = vcmp.lt.s32.totalorder %v384, 2
    %vm405 = vcmp.lt.s32.totalorder %v384, 3
    %vm406 = vcmp.lt.s32.totalorder %v384, 4
    %v407 = vsel %vm403, %v387, %v390
    %v408 = vsel %vm406, %v396, 2102212464
    %v409 = vsel %vm405, %v393, %v408
    %v410 = vsel %vm404, %v407, %v409
    %v411 = vsel %vm403, %v390, %v393
    %v412 = vsel %vm406, %v399, 920167782
    %v413 = vsel %vm405, %v396, %v412
    %v414 = vsel %vm404, %v411, %v413
    %v415 = vsel %vm403, %v393, %v396
    %v416 = vsel %vm406, %v402, 1326507024
    %v417 = vsel %vm405, %v399, %v416
    %v418 = vsel %vm404, %v415, %v417
    %v419 = vshll.u32 %v379, 8
    %v420 = vmul.u32.u64.compose %v419, %v418
    %v421 = vextract.low.u32 %v420
    %v422 = vextract.high.u32 %v420
    %v423 = vmul.u32.u64.compose %v419, %v414
    %v424 = vextract.low.u32 %v423
    %v425 = vextract.high.u32 %v423
    %v426 = vmul.u32 %v419, %v410
    %v427 = vadd.s32 %v422, %v424
    %vm428 = vc.u32 %v422, %v424
    %v429 = vadd.s32 %v425, 1
    %v430 = vsel %vm428, %v429, %v425
    %v431 = vadd.s32 %v426, %v430
    %v432 = vadd.s32 %v431, 536870912
    %v433 = vshrl.u32 %v432, 30
    %v434 = vshll.u32 %v433, 30
    %v435 = vsub.s32 %v431, %v434
    %vm436 = vcmp.lt.s32.totalorder %v435, 0
    %v437 = vsub.s32 0, %v435
    %v438 = vsel %vm436, %v437, %v435
    %v439 = vclz %v438
    %v440 = vsub.s32 %v439, 2
    %vm441 = vcmp.gt.s32.totalorder 0, %v440
    %v442 = vsel %vm441, 0, %v440
    %v443 = vsub.s32 32, %v442
    %v444 = vshll.u32 %v435, %v442
    %v445 = vshrl.u32 %v427, %v443
    %v446 = vor.u32 %v444, %v445
    %v447 = vsub.s32 4294967266, %v442
    %v448 = vadd.s32 %v447, 127
    %v449 = vshll.u32 %v448, 23
    %v450 = vor.u32 4788187, %v449
    %v451 = vand.u32 2147483647, %v450
    %v453 = vcvt.s32.f32 %v446
    %v454 = vmul.f32 %v453, %v451
    %v455 = vxor.u32 %v454, 2147483648
    %v456 = vsel %vm373, %v455, %v454
    %v457 = vsub.s32 4, %v433
    %v458 = vsel %vm373, %v457, %v433
    %v459 = vsel %vm372, %v267, %v456
    %v460 = vsel %vm372, 0, %v458
    %v461 = vcosq.f32.pop %v459
    %v462 = vsinq.f32.pop %v459
    %vm463 = vweird.f32 %v267
    %v464 = vand.u32 %v460, 3
    %vm465 = vcmp.lt.s32.totalorder %v464, 2
    %vm466 = vcmp.eq.s32.totalorder %v464, 0
    %v467 = vxor.u32 %v462, 2147483648
    %v468 = vsel %vm466, %v461, %v467
    %vm469 = vcmp.eq.s32.totalorder %v464, 2
    %v470 = vxor.u32 %v461, 2147483648
    %v471 = vsel %vm469, %v470, %v462
    %v472 = vsel %vm465, %v468, %v471
    %v473 = vsel %vm463, nan, %v472
    %v474 = vstv %s35
    %v475 = vadd.f32 %v263, %v474
    %v476 = vadd.f32 %v264, %v474
    %v477 = vand.u32 2147483647, %v475
    %vm478 = vcmp.le.f32.partialorder %v477, 0.7853982
    %vm479 = vcmp.lt.s32.totalorder %v475, 0
    %v480 = vand.u32 %v475, 2139095040
    %v481 = vshrl.u32 %v480, 23
    %v482 = vsub.s32 %v481, 127
    %v483 = vand.u32 2147483647, %v475
    %v484 = vand.u32 %v483, 8388607
    %v485 = vor.u32 %v484, 8388608
    %v486 = vsub.s32 0, %v485
    %v487 = vadd.s32 %v482, 1
    %vm488 = vcmp.gt.s32.totalorder %v487, 0
    %v489 = vsel %vm488, %v487, 0
    %v490 = vshrl.u32 %v489, 5
    %v491 = vand.u32 %v489, 31
    %v492 = vsub.s32 32, %v491
    %v493 = vshrl.u32 683565275, %v492
    %v494 = vshll.u32 683565275, %v491
    %v495 = vshrl.u32 2475754826, %v492
    %v496 = vor.u32 %v494, %v495
    %v497 = vshll.u32 2475754826, %v491
    %v498 = vshrl.u32 2131351028, %v492
    %v499 = vor.u32 %v497, %v498
    %v500 = vshll.u32 2131351028, %v491
    %v501 = vshrl.u32 2102212464, %v492
    %v502 = vor.u32 %v500, %v501
    %v503 = vshll.u32 2102212464, %v491
    %v504 = vshrl.u32 920167782, %v492
    %v505 = vor.u32 %v503, %v504
    %v506 = vshll.u32 920167782, %v491
    %v507 = vshrl.u32 1326507024, %v492
    %v508 = vor.u32 %v506, %v507
    %vm509 = vcmp.lt.s32.totalorder %v490, 1
    %vm510 = vcmp.lt.s32.totalorder %v490, 2
    %vm511 = vcmp.lt.s32.totalorder %v490, 3
    %vm512 = vcmp.lt.s32.totalorder %v490, 4
    %v513 = vsel %vm509, %v493, %v496
    %v514 = vsel %vm512, %v502, 2102212464
    %v515 = vsel %vm511, %v499, %v514
    %v516 = vsel %vm510, %v513, %v515
    %v517 = vsel %vm509, %v496, %v499
    %v518 = vsel %vm512, %v505, 920167782
    %v519 = vsel %vm511, %v502, %v518
    %v520 = vsel %vm510, %v517, %v519
    %v521 = vsel %vm509, %v499, %v502
    %v522 = vsel %vm512, %v508, 1326507024
    %v523 = vsel %vm511, %v505, %v522
    %v524 = vsel %vm510, %v521, %v523
    %v525 = vshll.u32 %v485, 8
    %v526 = vmul.u32.u64.compose %v525, %v524
    %v527 = vextract.low.u32 %v526
    %v528 = vextract.high.u32 %v526
    %v529 = vmul.u32.u64.compose %v525, %v520
    %v530 = vextract.low.u32 %v529
    %v531 = vextract.high.u32 %v529
    %v532 = vmul.u32 %v525, %v516
    %v533 = vadd.s32 %v528, %v530
    %vm534 = vc.u32 %v528, %v530
    %v535 = vadd.s32 %v531, 1
    %v536 = vsel %vm534, %v535, %v531
    %v537 = vadd.s32 %v532, %v536
    %v538 = vadd.s32 %v537, 536870912
    %v539 = vshrl.u32 %v538, 30
    %v540 = vshll.u32 %v539, 30
    %v541 = vsub.s32 %v537, %v540
    %vm542 = vcmp.lt.s32.totalorder %v541, 0
    %v543 = vsub.s32 0, %v541
    %v544 = vsel %vm542, %v543, %v541
    %v545 = vclz %v544
    %v546 = vsub.s32 %v545, 2
    %vm547 = vcmp.gt.s32.totalorder 0, %v546
    %v548 = vsel %vm547, 0, %v546
    %v549 = vsub.s32 32, %v548
    %v550 = vshll.u32 %v541, %v548
    %v551 = vshrl.u32 %v533, %v549
    %v552 = vor.u32 %v550, %v551
    %v553 = vsub.s32 4294967266, %v548
    %v554 = vadd.s32 %v553, 127
    %v555 = vshll.u32 %v554, 23
    %v556 = vor.u32 4788187, %v555
    %v557 = vand.u32 2147483647, %v556
    %v559 = vcvt.s32.f32 %v552
    %v560 = vmul.f32 %v559, %v557
    %v561 = vxor.u32 %v560, 2147483648
    %v562 = vsel %vm479, %v561, %v560
    %v563 = vsub.s32 4, %v539
    %v564 = vsel %vm479, %v563, %v539
    %v565 = vsel %vm478, %v475, %v562
    %v566 = vsel %vm478, 0, %v564
    %v567 = vcosq.f32.pop %v565
    %v568 = vsinq.f32.pop %v565
    %vm569 = vweird.f32 %v475
    %v570 = vand.u32 %v566, 3
    %vm571 = vcmp.lt.s32.totalorder %v570, 2
    %vm572 = vcmp.eq.s32.totalorder %v570, 0
    %v573 = vxor.u32 %v568, 2147483648
    %v574 = vsel %vm572, %v567, %v573
    %vm575 = vcmp.eq.s32.totalorder %v570, 2
    %v576 = vxor.u32 %v567, 2147483648
    %v577 = vsel %vm575, %v576, %v568
    %v578 = vsel %vm571, %v574, %v577
    %v579 = vsel %vm569, nan, %v578
    %v580 = vand.u32 2147483647, %v476
    %vm581 = vcmp.le.f32.partialorder %v580, 0.7853982
    %vm582 = vcmp.lt.s32.totalorder %v476, 0
    %v583 = vand.u32 %v476, 2139095040
    %v584 = vshrl.u32 %v583, 23
    %v585 = vsub.s32 %v584, 127
    %v586 = vand.u32 2147483647, %v476
    %v587 = vand.u32 %v586, 8388607
    %v588 = vor.u32 %v587, 8388608
    %v589 = vsub.s32 0, %v588
    %v590 = vadd.s32 %v585, 1
    %vm591 = vcmp.gt.s32.totalorder %v590, 0
    %v592 = vsel %vm591, %v590, 0
    %v593 = vshrl.u32 %v592, 5
    %v594 = vand.u32 %v592, 31
    %v595 = vsub.s32 32, %v594
    %v596 = vshrl.u32 683565275, %v595
    %v597 = vshll.u32 683565275, %v594
    %v598 = vshrl.u32 2475754826, %v595
    %v599 = vor.u32 %v597, %v598
    %v600 = vshll.u32 2475754826, %v594
    %v601 = vshrl.u32 2131351028, %v595
    %v602 = vor.u32 %v600, %v601
    %v603 = vshll.u32 2131351028, %v594
    %v604 = vshrl.u32 2102212464, %v595
    %v605 = vor.u32 %v603, %v604
    %v606 = vshll.u32 2102212464, %v594
    %v607 = vshrl.u32 920167782, %v595
    %v608 = vor.u32 %v606, %v607
    %v609 = vshll.u32 920167782, %v594
    %v610 = vshrl.u32 1326507024, %v595
    %v611 = vor.u32 %v609, %v610
    %vm612 = vcmp.lt.s32.totalorder %v593, 1
    %vm613 = vcmp.lt.s32.totalorder %v593, 2
    %vm614 = vcmp.lt.s32.totalorder %v593, 3
    %vm615 = vcmp.lt.s32.totalorder %v593, 4
    %v616 = vsel %vm612, %v596, %v599
    %v617 = vsel %vm615, %v605, 2102212464
    %v618 = vsel %vm614, %v602, %v617
    %v619 = vsel %vm613, %v616, %v618
    %v620 = vsel %vm612, %v599, %v602
    %v621 = vsel %vm615, %v608, 920167782
    %v622 = vsel %vm614, %v605, %v621
    %v623 = vsel %vm613, %v620, %v622
    %v624 = vsel %vm612, %v602, %v605
    %v625 = vsel %vm615, %v611, 1326507024
    %v626 = vsel %vm614, %v608, %v625
    %v627 = vsel %vm613, %v624, %v626
    %v628 = vshll.u32 %v588, 8
    %v629 = vmul.u32.u64.compose %v628, %v627
    %v630 = vextract.low.u32 %v629
    %v631 = vextract.high.u32 %v629
    %v632 = vmul.u32.u64.compose %v628, %v623
    %v633 = vextract.low.u32 %v632
    %v634 = vextract.high.u32 %v632
    %v635 = vmul.u32 %v628, %v619
    %v636 = vadd.s32 %v631, %v633
    %vm637 = vc.u32 %v631, %v633
    %v638 = vadd.s32 %v634, 1
    %v639 = vsel %vm637, %v638, %v634
    %v640 = vadd.s32 %v635, %v639
    %v641 = vadd.s32 %v640, 536870912
    %v642 = vshrl.u32 %v641, 30
    %v643 = vshll.u32 %v642, 30
    %v644 = vsub.s32 %v640, %v643
    %vm645 = vcmp.lt.s32.totalorder %v644, 0
    %v646 = vsub.s32 0, %v644
    %v647 = vsel %vm645, %v646, %v644
    %v648 = vclz %v647
    %v649 = vsub.s32 %v648, 2
    %vm650 = vcmp.gt.s32.totalorder 0, %v649
    %v651 = vsel %vm650, 0, %v649
    %v652 = vsub.s32 32, %v651
    %v653 = vshll.u32 %v644, %v651
    %v654 = vshrl.u32 %v636, %v652
    %v655 = vor.u32 %v653, %v654
    %v656 = vsub.s32 4294967266, %v651
    %v657 = vadd.s32 %v656, 127
    %v658 = vshll.u32 %v657, 23
    %v659 = vor.u32 4788187, %v658
    %v660 = vand.u32 2147483647, %v659
    %v662 = vcvt.s32.f32 %v655
    %v663 = vmul.f32 %v662, %v660
    %v664 = vxor.u32 %v663, 2147483648
    %v665 = vsel %vm582, %v664, %v663
    %v666 = vsub.s32 4, %v642
    %v667 = vsel %vm582, %v666, %v642
    %v668 = vsel %vm581, %v476, %v665
    %v669 = vsel %vm581, 0, %v667
    %v670 = vcosq.f32.pop %v668
    %v671 = vsinq.f32.pop %v668
    %vm672 = vweird.f32 %v476
    %v673 = vand.u32 %v669, 3
    %vm674 = vcmp.lt.s32.totalorder %v673, 2
    %vm675 = vcmp.eq.s32.totalorder %v673, 0
    %v676 = vxor.u32 %v671, 2147483648
    %v677 = vsel %vm675, %v670, %v676
    %vm678 = vcmp.eq.s32.totalorder %v673, 2
    %v679 = vxor.u32 %v670, 2147483648
    %v680 = vsel %vm678, %v679, %v671
    %v681 = vsel %vm674, %v677, %v680
    %v682 = vsel %vm672, nan, %v681
    %v683 = vstv %s36
    %v684 = vadd.f32 %v263, %v683
    %v685 = vadd.f32 %v264, %v683
    %v686 = vand.u32 2147483647, %v684
    %vm687 = vcmp.le.f32.partialorder %v686, 0.7853982
    %vm688 = vcmp.lt.s32.totalorder %v684, 0
    %v689 = vand.u32 %v684, 2139095040
    %v690 = vshrl.u32 %v689, 23
    %v691 = vsub.s32 %v690, 127
    %v692 = vand.u32 2147483647, %v684
    %v693 = vand.u32 %v692, 8388607
    %v694 = vor.u32 %v693, 8388608
    %v695 = vsub.s32 0, %v694
    %v696 = vadd.s32 %v691, 1
    %vm697 = vcmp.gt.s32.totalorder %v696, 0
    %v698 = vsel %vm697, %v696, 0
    %v699 = vshrl.u32 %v698, 5
    %v700 = vand.u32 %v698, 31
    %v701 = vsub.s32 32, %v700
    %v702 = vshrl.u32 683565275, %v701
    %v703 = vshll.u32 683565275, %v700
    %v704 = vshrl.u32 2475754826, %v701
    %v705 = vor.u32 %v703, %v704
    %v706 = vshll.u32 2475754826, %v700
    %v707 = vshrl.u32 2131351028, %v701
    %v708 = vor.u32 %v706, %v707
    %v709 = vshll.u32 2131351028, %v700
    %v710 = vshrl.u32 2102212464, %v701
    %v711 = vor.u32 %v709, %v710
    %v712 = vshll.u32 2102212464, %v700
    %v713 = vshrl.u32 920167782, %v701
    %v714 = vor.u32 %v712, %v713
    %v715 = vshll.u32 920167782, %v700
    %v716 = vshrl.u32 1326507024, %v701
    %v717 = vor.u32 %v715, %v716
    %vm718 = vcmp.lt.s32.totalorder %v699, 1
    %vm719 = vcmp.lt.s32.totalorder %v699, 2
    %vm720 = vcmp.lt.s32.totalorder %v699, 3
    %vm721 = vcmp.lt.s32.totalorder %v699, 4
    %v722 = vsel %vm718, %v702, %v705
    %v723 = vsel %vm721, %v711, 2102212464
    %v724 = vsel %vm720, %v708, %v723
    %v725 = vsel %vm719, %v722, %v724
    %v726 = vsel %vm718, %v705, %v708
    %v727 = vsel %vm721, %v714, 920167782
    %v728 = vsel %vm720, %v711, %v727
    %v729 = vsel %vm719, %v726, %v728
    %v730 = vsel %vm718, %v708, %v711
    %v731 = vsel %vm721, %v717, 1326507024
    %v732 = vsel %vm720, %v714, %v731
    %v733 = vsel %vm719, %v730, %v732
    %v734 = vshll.u32 %v694, 8
    %v735 = vmul.u32.u64.compose %v734, %v733
    %v736 = vextract.low.u32 %v735
    %v737 = vextract.high.u32 %v735
    %v738 = vmul.u32.u64.compose %v734, %v729
    %v739 = vextract.low.u32 %v738
    %v740 = vextract.high.u32 %v738
    %v741 = vmul.u32 %v734, %v725
    %v742 = vadd.s32 %v737, %v739
    %vm743 = vc.u32 %v737, %v739
    %v744 = vadd.s32 %v740, 1
    %v745 = vsel %vm743, %v744, %v740
    %v746 = vadd.s32 %v741, %v745
    %v747 = vadd.s32 %v746, 536870912
    %v748 = vshrl.u32 %v747, 30
    %v749 = vshll.u32 %v748, 30
    %v750 = vsub.s32 %v746, %v749
    %vm751 = vcmp.lt.s32.totalorder %v750, 0
    %v752 = vsub.s32 0, %v750
    %v753 = vsel %vm751, %v752, %v750
    %v754 = vclz %v753
    %v755 = vsub.s32 %v754, 2
    %vm756 = vcmp.gt.s32.totalorder 0, %v755
    %v757 = vsel %vm756, 0, %v755
    %v758 = vsub.s32 32, %v757
    %v759 = vshll.u32 %v750, %v757
    %v760 = vshrl.u32 %v742, %v758
    %v761 = vor.u32 %v759, %v760
    %v762 = vsub.s32 4294967266, %v757
    %v763 = vadd.s32 %v762, 127
    %v764 = vshll.u32 %v763, 23
    %v765 = vor.u32 4788187, %v764
    %v766 = vand.u32 2147483647, %v765
    %v768 = vcvt.s32.f32 %v761
    %v769 = vmul.f32 %v768, %v766
    %v770 = vxor.u32 %v769, 2147483648
    %v771 = vsel %vm688, %v770, %v769
    %v772 = vsub.s32 4, %v748
    %v773 = vsel %vm688, %v772, %v748
    %v774 = vsel %vm687, %v684, %v771
    %v775 = vsel %vm687, 0, %v773
    %v776 = vcosq.f32.pop %v774
    %v777 = vsinq.f32.pop %v774
    %vm778 = vweird.f32 %v684
    %v779 = vand.u32 %v775, 3
    %vm780 = vcmp.lt.s32.totalorder %v779, 2
    %vm781 = vcmp.eq.s32.totalorder %v779, 0
    %v782 = vxor.u32 %v777, 2147483648
    %v783 = vsel %vm781, %v776, %v782
    %vm784 = vcmp.eq.s32.totalorder %v779, 2
    %v785 = vxor.u32 %v776, 2147483648
    %v786 = vsel %vm784, %v785, %v777
    %v787 = vsel %vm780, %v783, %v786
    %v788 = vsel %vm778, nan, %v787
    %v789 = vand.u32 2147483647, %v685
    %vm790 = vcmp.le.f32.partialorder %v789, 0.7853982
    %vm791 = vcmp.lt.s32.totalorder %v685, 0
    %v792 = vand.u32 %v685, 2139095040
    %v793 = vshrl.u32 %v792, 23
    %v794 = vsub.s32 %v793, 127
    %v795 = vand.u32 2147483647, %v685
    %v796 = vand.u32 %v795, 8388607
    %v797 = vor.u32 %v796, 8388608
    %v798 = vsub.s32 0, %v797
    %v799 = vadd.s32 %v794, 1
    %vm800 = vcmp.gt.s32.totalorder %v799, 0
    %v801 = vsel %vm800, %v799, 0
    %v802 = vshrl.u32 %v801, 5
    %v803 = vand.u32 %v801, 31
    %v804 = vsub.s32 32, %v803
    %v805 = vshrl.u32 683565275, %v804
    %v806 = vshll.u32 683565275, %v803
    %v807 = vshrl.u32 2475754826, %v804
    %v808 = vor.u32 %v806, %v807
    %v809 = vshll.u32 2475754826, %v803
    %v810 = vshrl.u32 2131351028, %v804
    %v811 = vor.u32 %v809, %v810
    %v812 = vshll.u32 2131351028, %v803
    %v813 = vshrl.u32 2102212464, %v804
    %v814 = vor.u32 %v812, %v813
    %v815 = vshll.u32 2102212464, %v803
    %v816 = vshrl.u32 920167782, %v804
    %v817 = vor.u32 %v815, %v816
    %v818 = vshll.u32 920167782, %v803
    %v819 = vshrl.u32 1326507024, %v804
    %v820 = vor.u32 %v818, %v819
    %vm821 = vcmp.lt.s32.totalorder %v802, 1
    %vm822 = vcmp.lt.s32.totalorder %v802, 2
    %vm823 = vcmp.lt.s32.totalorder %v802, 3
    %vm824 = vcmp.lt.s32.totalorder %v802, 4
    %v825 = vsel %vm821, %v805, %v808
    %v826 = vsel %vm824, %v814, 2102212464
    %v827 = vsel %vm823, %v811, %v826
    %v828 = vsel %vm822, %v825, %v827
    %v829 = vsel %vm821, %v808, %v811
    %v830 = vsel %vm824, %v817, 920167782
    %v831 = vsel %vm823, %v814, %v830
    %v832 = vsel %vm822, %v829, %v831
    %v833 = vsel %vm821, %v811, %v814
    %v834 = vsel %vm824, %v820, 1326507024
    %v835 = vsel %vm823, %v817, %v834
    %v836 = vsel %vm822, %v833, %v835
    %v837 = vshll.u32 %v797, 8
    %v838 = vmul.u32.u64.compose %v837, %v836
    %v839 = vextract.low.u32 %v838
    %v840 = vextract.high.u32 %v838
    %v841 = vmul.u32.u64.compose %v837, %v832
    %v842 = vextract.low.u32 %v841
    %v843 = vextract.high.u32 %v841
    %v844 = vmul.u32 %v837, %v828
    %v845 = vadd.s32 %v840, %v842
    %vm846 = vc.u32 %v840, %v842
    %v847 = vadd.s32 %v843, 1
    %v848 = vsel %vm846, %v847, %v843
    %v849 = vadd.s32 %v844, %v848
    %v850 = vadd.s32 %v849, 536870912
    %v851 = vshrl.u32 %v850, 30
    %v852 = vshll.u32 %v851, 30
    %v853 = vsub.s32 %v849, %v852
    %vm854 = vcmp.lt.s32.totalorder %v853, 0
    %v855 = vsub.s32 0, %v853
    %v856 = vsel %vm854, %v855, %v853
    %v857 = vclz %v856
    %v858 = vsub.s32 %v857, 2
    %vm859 = vcmp.gt.s32.totalorder 0, %v858
    %v860 = vsel %vm859, 0, %v858
    %v861 = vsub.s32 32, %v860
    %v862 = vshll.u32 %v853, %v860
    %v863 = vshrl.u32 %v845, %v861
    %v864 = vor.u32 %v862, %v863
    %v865 = vsub.s32 4294967266, %v860
    %v866 = vadd.s32 %v865, 127
    %v867 = vshll.u32 %v866, 23
    %v868 = vor.u32 4788187, %v867
    %v869 = vand.u32 2147483647, %v868
    %v871 = vcvt.s32.f32 %v864
    %v872 = vmul.f32 %v871, %v869
    %v873 = vxor.u32 %v872, 2147483648
    %v874 = vsel %vm791, %v873, %v872
    %v875 = vsub.s32 4, %v851
    %v876 = vsel %vm791, %v875, %v851
    %v877 = vsel %vm790, %v685, %v874
    %v878 = vsel %vm790, 0, %v876
    %v879 = vcosq.f32.pop %v877
    %v880 = vsinq.f32.pop %v877
    %vm881 = vweird.f32 %v685
    %v882 = vand.u32 %v878, 3
    %vm883 = vcmp.lt.s32.totalorder %v882, 2
    %vm884 = vcmp.eq.s32.totalorder %v882, 0
    %v885 = vxor.u32 %v880, 2147483648
    %v886 = vsel %vm884, %v879, %v885
    %vm887 = vcmp.eq.s32.totalorder %v882, 2
    %v888 = vxor.u32 %v879, 2147483648
    %v889 = vsel %vm887, %v888, %v880
    %v890 = vsel %vm883, %v886, %v889
    %v891 = vsel %vm881, nan, %v890
    %vm892 = vcmask 130048
    %v894 = vsel %vm892, %v199, 0
    %v897 = vsel %vm892, %v200, 0
    %v900 = vsel %vm892, %v201, 0
    %v903 = vsel %vm892, %v202, 0
    %v906 = vsel %vm892, %v203, 0
    %v909 = vsel %vm892, %v204, 0
    %v912 = vsel %vm892, %v205, 0
    %v915 = vsel %vm892, %v206, 0
    %917 = vmatprep.subr.mxu0 0.0
    %918 = vmatpush1.msra.mxu0 %v370
    %919 = vmatprep.subr.mxu0 0.0
    %920 = vmatpush1.msra.mxu0 %v473
    %921 = vmatprep.subr.mxu0 0.0
    %922 = vmatpush1.msra.mxu0 0.0
    %923 = vmatprep.subr.mxu0 0.0
    %924 = vmatpush1.msra.mxu0 0.0
    %925 = vmatprep.subr.mxu0 0.0
    %926 = vmatpush1.msra.mxu0 0.0
    %927 = vmatprep.subr.mxu0 0.0
    %928 = vmatpush1.msra.mxu0 0.0
    %929 = vmatprep.subr.mxu0 0.0
    %930 = vmatpush1.msra.mxu0 0.0
    %931 = vmatprep.subr.mxu0 0.0
    %932 = vmatpush1.msra.mxu0 0.0
    %933 = vmatprep.subr.mxu0 0.0
    %934 = vmatpush1.msra.mxu0 0.0
    %935 = vmatprep.subr.mxu0 0.0
    %936 = vmatpush1.msra.mxu0 0.0
    %937 = vmatprep.subr.mxu0 0.0
    %938 = vmatpush1.msra.mxu0 0.0
    %939 = vmatprep.subr.mxu0 0.0
    %940 = vmatpush1.msra.mxu0 0.0
    %941 = vmatprep.subr.mxu0 0.0
    %942 = vmatpush1.msra.mxu0 0.0
    %943 = vmatprep.subr.mxu0 0.0
    %944 = vmatpush1.msra.mxu0 0.0
    %945 = vmatprep.subr.mxu0 0.0
    %946 = vmatpush1.msra.mxu0 0.0
    %947 = vmatprep.subr.mxu0 0.0
    %948 = vmatpush1.msra.mxu0 0.0
    %949 = vmatprep.subr.mxu0 0.0
    %950 = vmatpush1.msra.mxu0 0.0
    %951 = vmatprep.subr.mxu0 0.0
    %952 = vmatpush1.msra.mxu0 0.0
    %953 = vmatprep.subr.mxu0 0.0
    %954 = vmatpush1.msra.mxu0 0.0
    %955 = vmatprep.subr.mxu0 0.0
    %956 = vmatpush1.msra.mxu0 0.0
    %957 = vmatprep.subr.mxu0 0.0
    %958 = vmatpush1.msra.mxu0 0.0
    %959 = vmatprep.subr.mxu0 0.0
    %960 = vmatpush1.msra.mxu0 0.0
    %961 = vmatprep.subr.mxu0 0.0
    %962 = vmatpush1.msra.mxu0 0.0
    %963 = vmatprep.subr.mxu0 0.0
    %964 = vmatpush1.msra.mxu0 0.0
    %965 = vmatprep.subr.mxu0 0.0
    %966 = vmatpush1.msra.mxu0 0.0
    %967 = vmatprep.subr.mxu0 0.0
    %968 = vmatpush1.msra.mxu0 0.0
    %969 = vmatprep.subr.mxu0 0.0
    %970 = vmatpush1.msra.mxu0 0.0
    %971 = vmatprep.subr.mxu0 0.0
    %972 = vmatpush1.msra.mxu0 0.0
    %973 = vmatprep.subr.mxu0 0.0
    %974 = vmatpush1.msra.mxu0 0.0
    %975 = vmatprep.subr.mxu0 0.0
    %976 = vmatpush1.msra.mxu0 0.0
    %977 = vmatprep.subr.mxu0 0.0
    %978 = vmatpush1.msra.mxu0 0.0
    %979 = vmatprep.subr.mxu0 0.0
    %980 = vmatpush1.msra.mxu0 0.0
    %981 = vmatprep.mubr.f32.mxu0 0.0
    %982 = vmatmul.mubr.f32.gmra.mrb[0].mxu0 %v894
    %v983 = vpop.f32.mrb[0].mxu0
    %v984 = vadd.f32 0.0, %v983
    %v985 = vpop.f32.mrb[0].mxu0
    %986 = vmatprep.mubr.f32.mxu0 0.0
    %987 = vmatmul.mubr.f32.gmra.mrb[0].mxu0 %v897
    %v988 = vpop.f32.mrb[0].mxu0
    %v989 = vadd.f32 0.0, %v988
    %v990 = vpop.f32.mrb[0].mxu0
    %991 = vmatprep.mubr.f32.mxu0 0.0
    %992 = vmatmul.mubr.f32.gmra.mrb[0].mxu0 %v900
    %v993 = vpop.f32.mrb[0].mxu0
    %v994 = vadd.f32 0.0, %v993
    %v995 = vpop.f32.mrb[0].mxu0
    %996 = vmatprep.mubr.f32.mxu0 0.0
    %997 = vmatmul.mubr.f32.gmra.mrb[0].mxu0 %v903
    %v998 = vpop.f32.mrb[0].mxu0
    %v999 = vadd.f32 0.0, %v998
    %v1000 = vpop.f32.mrb[0].mxu0
    %1001 = vmatprep.mubr.f32.mxu0 0.0
    %1002 = vmatmul.mubr.f32.gmra.mrb[0].mxu0 %v906
    %v1003 = vpop.f32.mrb[0].mxu0
    %v1004 = vadd.f32 0.0, %v1003
    %v1005 = vpop.f32.mrb[0].mxu0
    %1006 = vmatprep.mubr.f32.mxu0 0.0
    %1007 = vmatmul.mubr.f32.gmra.mrb[0].mxu0 %v909
    %v1008 = vpop.f32.mrb[0].mxu0
    %v1009 = vadd.f32 0.0, %v1008
    %v1010 = vpop.f32.mrb[0].mxu0
    %1011 = vmatprep.mubr.f32.mxu0 0.0
    %1012 = vmatmul.mubr.f32.gmra.mrb[0].mxu0 %v912
    %v1013 = vpop.f32.mrb[0].mxu0
    %v1014 = vadd.f32 0.0, %v1013
    %v1015 = vpop.f32.mrb[0].mxu0
    %1016 = vmatprep.mubr.f32.mxu0 0.0
    %1017 = vmatmul.mubr.f32.gmra.mrb[0].mxu0 %v915
    %v1018 = vpop.f32.mrb[0].mxu0
    %v1019 = vadd.f32 0.0, %v1018
    %v1020 = vpop.f32.mrb[0].mxu0
    %1021 = vdwg.mxu0
    %v1022 = vmul.f32 %v984, %v149
    %v1023 = vmul.f32 %v989, %v150
    %v1024 = vmul.f32 %v994, %v151
    %v1025 = vmul.f32 %v999, %v152
    %v1026 = vmul.f32 %v1004, %v153
    %v1027 = vmul.f32 %v1009, %v154
    %v1028 = vmul.f32 %v1014, %v155
    %v1029 = vmul.f32 %v1019, %v156
    %v1031 = vsel %vm225, %v1022, 0
    %v1034 = vsel %vm225, %v1023, 0
    %v1037 = vsel %vm225, %v1024, 0
    %v1040 = vsel %vm225, %v1025, 0
    %v1043 = vsel %vm225, %v1026, 0
    %v1046 = vsel %vm225, %v1027, 0
    %v1049 = vsel %vm225, %v1028, 0
    %v1052 = vsel %vm225, %v1029, 0
    %v1055 = vsel %vm225, %v579, 0
    %v1058 = vsel %vm225, %v682, 0
    %1060 = vmatprep.subr.mxu0 0.0
    %1061 = vmatpush1.xpose.msra.mxu0 %v1055
    %1062 = vmatprep.subr.mxu0 0.0
    %1063 = vmatpush1.xpose.msra.mxu0 %v1058
    %1064 = vmatprep.subr.mxu0 0.0
    %1065 = vmatpush1.xpose.msra.mxu0 0.0
    %1066 = vmatprep.subr.mxu0 0.0
    %1067 = vmatpush1.xpose.msra.mxu0 0.0
    %1068 = vmatprep.subr.mxu0 0.0
    %1069 = vmatpush1.xpose.msra.mxu0 0.0
    %1070 = vmatprep.subr.mxu0 0.0
    %1071 = vmatpush1.xpose.msra.mxu0 0.0
    %1072 = vmatprep.subr.mxu0 0.0
    %1073 = vmatpush1.xpose.msra.mxu0 0.0
    %1074 = vmatprep.subr.mxu0 0.0
    %1075 = vmatpush1.xpose.msra.mxu0 0.0
    %1076 = vmatprep.subr.mxu0 0.0
    %1077 = vmatpush1.xpose.msra.mxu0 0.0
    %1078 = vmatprep.subr.mxu0 0.0
    %1079 = vmatpush1.xpose.msra.mxu0 0.0
    %1080 = vmatprep.subr.mxu0 0.0
    %1081 = vmatpush1.xpose.msra.mxu0 0.0
    %1082 = vmatprep.subr.mxu0 0.0
    %1083 = vmatpush1.xpose.msra.mxu0 0.0
    %1084 = vmatprep.subr.mxu0 0.0
    %1085 = vmatpush1.xpose.msra.mxu0 0.0
    %1086 = vmatprep.subr.mxu0 0.0
    %1087 = vmatpush1.xpose.msra.mxu0 0.0
    %1088 = vmatprep.subr.mxu0 0.0
    %1089 = vmatpush1.xpose.msra.mxu0 0.0
    %1090 = vmatprep.subr.mxu0 0.0
    %1091 = vmatpush1.xpose.msra.mxu0 0.0
    %1092 = vmatprep.subr.mxu0 0.0
    %1093 = vmatpush1.xpose.msra.mxu0 0.0
    %1094 = vmatprep.subr.mxu0 0.0
    %1095 = vmatpush1.xpose.msra.mxu0 0.0
    %1096 = vmatprep.subr.mxu0 0.0
    %1097 = vmatpush1.xpose.msra.mxu0 0.0
    %1098 = vmatprep.subr.mxu0 0.0
    %1099 = vmatpush1.xpose.msra.mxu0 0.0
    %1100 = vmatprep.subr.mxu0 0.0
    %1101 = vmatpush1.xpose.msra.mxu0 0.0
    %1102 = vmatprep.subr.mxu0 0.0
    %1103 = vmatpush1.xpose.msra.mxu0 0.0
    %1104 = vmatprep.subr.mxu0 0.0
    %1105 = vmatpush1.xpose.msra.mxu0 0.0
    %1106 = vmatprep.subr.mxu0 0.0
    %1107 = vmatpush1.xpose.msra.mxu0 0.0
    %1108 = vmatprep.subr.mxu0 0.0
    %1109 = vmatpush1.xpose.msra.mxu0 0.0
    %1110 = vmatprep.subr.mxu0 0.0
    %1111 = vmatpush1.xpose.msra.mxu0 0.0
    %1112 = vmatprep.subr.mxu0 0.0
    %1113 = vmatpush1.xpose.msra.mxu0 0.0
    %1114 = vmatprep.subr.mxu0 0.0
    %1115 = vmatpush1.xpose.msra.mxu0 0.0
    %1116 = vmatprep.subr.mxu0 0.0
    %1117 = vmatpush1.xpose.msra.mxu0 0.0
    %1118 = vmatprep.subr.mxu0 0.0
    %1119 = vmatpush1.xpose.msra.mxu0 0.0
    %1120 = vmatprep.subr.mxu0 0.0
    %1121 = vmatpush1.xpose.msra.mxu0 0.0
    %1122 = vmatprep.subr.mxu0 0.0
    %1123 = vmatpush1.xpose.msra.mxu0 0.0
    %1124 = vmatprep.mubr.f32.mxu0 0.0
    %1125 = vmatmul.mubr.f32.gmra.mrb[0].mxu0 %v1031
    %v1126 = vpop.f32.mrb[0].mxu0
    %v1127 = vadd.f32 %v207, %v1126
    %v1128 = vpop.f32.mrb[0].mxu0
    %1129 = vmatprep.mubr.f32.mxu0 0.0
    %1130 = vmatmul.mubr.f32.gmra.mrb[0].mxu0 %v1034
    %v1131 = vpop.f32.mrb[0].mxu0
    %v1132 = vadd.f32 %v208, %v1131
    %v1133 = vpop.f32.mrb[0].mxu0
    %1134 = vmatprep.mubr.f32.mxu0 0.0
    %1135 = vmatmul.mubr.f32.gmra.mrb[0].mxu0 %v1037
    %v1136 = vpop.f32.mrb[0].mxu0
    %v1137 = vadd.f32 %v209, %v1136
    %v1138 = vpop.f32.mrb[0].mxu0
    %1139 = vmatprep.mubr.f32.mxu0 0.0
    %1140 = vmatmul.mubr.f32.gmra.mrb[0].mxu0 %v1040
    %v1141 = vpop.f32.mrb[0].mxu0
    %v1142 = vadd.f32 %v210, %v1141
    %v1143 = vpop.f32.mrb[0].mxu0
    %1144 = vmatprep.mubr.f32.mxu0 0.0
    %1145 = vmatmul.mubr.f32.gmra.mrb[0].mxu0 %v1043
    %v1146 = vpop.f32.mrb[0].mxu0
    %v1147 = vadd.f32 %v211, %v1146
    %v1148 = vpop.f32.mrb[0].mxu0
    %1149 = vmatprep.mubr.f32.mxu0 0.0
    %1150 = vmatmul.mubr.f32.gmra.mrb[0].mxu0 %v1046
    %v1151 = vpop.f32.mrb[0].mxu0
    %v1152 = vadd.f32 %v212, %v1151
    %v1153 = vpop.f32.mrb[0].mxu0
    %1154 = vmatprep.mubr.f32.mxu0 0.0
    %1155 = vmatmul.mubr.f32.gmra.mrb[0].mxu0 %v1049
    %v1156 = vpop.f32.mrb[0].mxu0
    %v1157 = vadd.f32 %v213, %v1156
    %v1158 = vpop.f32.mrb[0].mxu0
    %1159 = vmatprep.mubr.f32.mxu0 0.0
    %1160 = vmatmul.mubr.f32.gmra.mrb[0].mxu0 %v1052
    %v1161 = vpop.f32.mrb[0].mxu0
    %v1162 = vadd.f32 %v214, %v1161
    %v1163 = vpop.f32.mrb[0].mxu0
    %1164 = vdwg.mxu0
    %v1165 = vmul.f32 %v1127, 1.442695
    %v1166 = vpow.pop %v1165
    %v1167 = vmul.f32 %v1132, 1.442695
    %v1168 = vpow.pop %v1167
    %v1169 = vmul.f32 %v1137, 1.442695
    %v1170 = vpow.pop %v1169
    %v1171 = vmul.f32 %v1142, 1.442695
    %v1172 = vpow.pop %v1171
    %v1173 = vmul.f32 %v1147, 1.442695
    %v1174 = vpow.pop %v1173
    %v1175 = vmul.f32 %v1152, 1.442695
    %v1176 = vpow.pop %v1175
    %v1177 = vmul.f32 %v1157, 1.442695
    %v1178 = vpow.pop %v1177
    %v1179 = vmul.f32 %v1162, 1.442695
    %v1180 = vpow.pop %v1179
    %v1181 = vsel %vm892, %v1166, 0.0
    %1182 = vadd.xlane.f32.xlu0 %v1181
    %v1183 = vpop.xlane.xlu0 %1182
    %v1184 = vsel %vm892, %v1168, 0.0
    %1185 = vadd.xlane.f32.xlu0 %v1184
    %v1186 = vpop.xlane.xlu0 %1185
    %v1187 = vsel %vm892, %v1170, 0.0
    %1188 = vadd.xlane.f32.xlu0 %v1187
    %v1189 = vpop.xlane.xlu0 %1188
    %v1190 = vsel %vm892, %v1172, 0.0
    %1191 = vadd.xlane.f32.xlu0 %v1190
    %v1192 = vpop.xlane.xlu0 %1191
    %v1193 = vsel %vm892, %v1174, 0.0
    %1194 = vadd.xlane.f32.xlu0 %v1193
    %v1195 = vpop.xlane.xlu0 %1194
    %v1196 = vsel %vm892, %v1176, 0.0
    %1197 = vadd.xlane.f32.xlu0 %v1196
    %v1198 = vpop.xlane.xlu0 %1197
    %v1199 = vsel %vm892, %v1178, 0.0
    %1200 = vadd.xlane.f32.xlu0 %v1199
    %v1201 = vpop.xlane.xlu0 %1200
    %v1202 = vsel %vm892, %v1180, 0.0
    %1203 = vadd.xlane.f32.xlu0 %v1202
    %v1204 = vpop.xlane.xlu0 %1203
    %v1205 = vrcp.pop %v1183
    %v1206 = vrcp.pop %v1186
    %v1207 = vrcp.pop %v1189
    %v1208 = vrcp.pop %v1192
    %v1209 = vrcp.pop %v1195
    %v1210 = vrcp.pop %v1198
    %v1211 = vrcp.pop %v1201
    %v1212 = vrcp.pop %v1204
    %v1213 = vmul.f32 %v1166, %v1205
    %v1214 = vmul.f32 %v1168, %v1206
    %v1215 = vmul.f32 %v1170, %v1207
    %v1216 = vmul.f32 %v1172, %v1208
    %v1217 = vmul.f32 %v1174, %v1209
    %v1218 = vmul.f32 %v1176, %v1210
    %v1219 = vmul.f32 %v1178, %v1211
    %v1220 = vmul.f32 %v1180, %v1212
    %v1222 = vsel %vm892, %v1213, 0
    %v1225 = vsel %vm892, %v1214, 0
    %v1228 = vsel %vm892, %v1215, 0
    %v1231 = vsel %vm892, %v1216, 0
    %v1234 = vsel %vm892, %v1217, 0
    %v1237 = vsel %vm892, %v1218, 0
    %v1240 = vsel %vm892, %v1219, 0
    %v1243 = vsel %vm892, %v1220, 0
    %1245 = vmatprep.subr.mxu0 0.0
    %1246 = vmatpush1.msra.mxu0 %v788
    %1247 = vmatprep.subr.mxu0 0.0
    %1248 = vmatpush1.msra.mxu0 %v891
    %1249 = vmatprep.subr.mxu0 0.0
    %1250 = vmatpush1.msra.mxu0 0.0
    %1251 = vmatprep.subr.mxu0 0.0
    %1252 = vmatpush1.msra.mxu0 0.0
    %1253 = vmatprep.subr.mxu0 0.0
    %1254 = vmatpush1.msra.mxu0 0.0
    %1255 = vmatprep.subr.mxu0 0.0
    %1256 = vmatpush1.msra.mxu0 0.0
    %1257 = vmatprep.subr.mxu0 0.0
    %1258 = vmatpush1.msra.mxu0 0.0
    %1259 = vmatprep.subr.mxu0 0.0
    %1260 = vmatpush1.msra.mxu0 0.0
    %1261 = vmatprep.subr.mxu0 0.0
    %1262 = vmatpush1.msra.mxu0 0.0
    %1263 = vmatprep.subr.mxu0 0.0
    %1264 = vmatpush1.msra.mxu0 0.0
    %1265 = vmatprep.subr.mxu0 0.0
    %1266 = vmatpush1.msra.mxu0 0.0
    %1267 = vmatprep.subr.mxu0 0.0
    %1268 = vmatpush1.msra.mxu0 0.0
    %1269 = vmatprep.subr.mxu0 0.0
    %1270 = vmatpush1.msra.mxu0 0.0
    %1271 = vmatprep.subr.mxu0 0.0
    %1272 = vmatpush1.msra.mxu0 0.0
    %1273 = vmatprep.subr.mxu0 0.0
    %1274 = vmatpush1.msra.mxu0 0.0
    %1275 = vmatprep.subr.mxu0 0.0
    %1276 = vmatpush1.msra.mxu0 0.0
    %1277 = vmatprep.subr.mxu0 0.0
    %1278 = vmatpush1.msra.mxu0 0.0
    %1279 = vmatprep.subr.mxu0 0.0
    %1280 = vmatpush1.msra.mxu0 0.0
    %1281 = vmatprep.subr.mxu0 0.0
    %1282 = vmatpush1.msra.mxu0 0.0
    %1283 = vmatprep.subr.mxu0 0.0
    %1284 = vmatpush1.msra.mxu0 0.0
    %1285 = vmatprep.subr.mxu0 0.0
    %1286 = vmatpush1.msra.mxu0 0.0
    %1287 = vmatprep.subr.mxu0 0.0
    %1288 = vmatpush1.msra.mxu0 0.0
    %1289 = vmatprep.subr.mxu0 0.0
    %1290 = vmatpush1.msra.mxu0 0.0
    %1291 = vmatprep.subr.mxu0 0.0
    %1292 = vmatpush1.msra.mxu0 0.0
    %1293 = vmatprep.subr.mxu0 0.0
    %1294 = vmatpush1.msra.mxu0 0.0
    %1295 = vmatprep.subr.mxu0 0.0
    %1296 = vmatpush1.msra.mxu0 0.0
    %1297 = vmatprep.subr.mxu0 0.0
    %1298 = vmatpush1.msra.mxu0 0.0
    %1299 = vmatprep.subr.mxu0 0.0
    %1300 = vmatpush1.msra.mxu0 0.0
    %1301 = vmatprep.subr.mxu0 0.0
    %1302 = vmatpush1.msra.mxu0 0.0
    %1303 = vmatprep.subr.mxu0 0.0
    %1304 = vmatpush1.msra.mxu0 0.0
    %1305 = vmatprep.subr.mxu0 0.0
    %1306 = vmatpush1.msra.mxu0 0.0
    %1307 = vmatprep.subr.mxu0 0.0
    %1308 = vmatpush1.msra.mxu0 0.0
    %1309 = vmatprep.mubr.f32.mxu0 0.0
    %1310 = vmatmul.mubr.f32.gmra.mrb[0].mxu0 %v1222
    %v1311 = vpop.f32.mrb[0].mxu0
    %v1312 = vadd.f32 0.0, %v1311
    %v1313 = vpop.f32.mrb[0].mxu0
    %1314 = vmatprep.mubr.f32.mxu0 0.0
    %1315 = vmatmul.mubr.f32.gmra.mrb[0].mxu0 %v1225
    %v1316 = vpop.f32.mrb[0].mxu0
    %v1317 = vadd.f32 0.0, %v1316
    %v1318 = vpop.f32.mrb[0].mxu0
    %1319 = vmatprep.mubr.f32.mxu0 0.0
    %1320 = vmatmul.mubr.f32.gmra.mrb[0].mxu0 %v1228
    %v1321 = vpop.f32.mrb[0].mxu0
    %v1322 = vadd.f32 0.0, %v1321
    %v1323 = vpop.f32.mrb[0].mxu0
    %1324 = vmatprep.mubr.f32.mxu0 0.0
    %1325 = vmatmul.mubr.f32.gmra.mrb[0].mxu0 %v1231
    %v1326 = vpop.f32.mrb[0].mxu0
    %v1327 = vadd.f32 0.0, %v1326
    %v1328 = vpop.f32.mrb[0].mxu0
    %1329 = vmatprep.mubr.f32.mxu0 0.0
    %1330 = vmatmul.mubr.f32.gmra.mrb[0].mxu0 %v1234
    %v1331 = vpop.f32.mrb[0].mxu0
    %v1332 = vadd.f32 0.0, %v1331
    %v1333 = vpop.f32.mrb[0].mxu0
    %1334 = vmatprep.mubr.f32.mxu0 0.0
    %1335 = vmatmul.mubr.f32.gmra.mrb[0].mxu0 %v1237
    %v1336 = vpop.f32.mrb[0].mxu0
    %v1337 = vadd.f32 0.0, %v1336
    %v1338 = vpop.f32.mrb[0].mxu0
    %1339 = vmatprep.mubr.f32.mxu0 0.0
    %1340 = vmatmul.mubr.f32.gmra.mrb[0].mxu0 %v1240
    %v1341 = vpop.f32.mrb[0].mxu0
    %v1342 = vadd.f32 0.0, %v1341
    %v1343 = vpop.f32.mrb[0].mxu0
    %1344 = vmatprep.mubr.f32.mxu0 0.0
    %1345 = vmatmul.mubr.f32.gmra.mrb[0].mxu0 %v1243
    %v1346 = vpop.f32.mrb[0].mxu0
    %v1347 = vadd.f32 0.0, %v1346
    %v1348 = vpop.f32.mrb[0].mxu0
    %1349 = vdwg.mxu0
    %v1350 = vmul.f32 %v1312, %v149
    %v1351 = vmul.f32 %v1317, %v150
    %v1352 = vmul.f32 %v1322, %v151
    %v1353 = vmul.f32 %v1327, %v152
    %v1354 = vmul.f32 %v1332, %v153
    %v1355 = vmul.f32 %v1337, %v154
    %v1356 = vmul.f32 %v1342, %v155
    %v1357 = vmul.f32 %v1347, %v156
    %v1358 = vstv %s37
    %vm1359 = vcmask 523264
    %v1361 = vsel %vm1359, %v221, 0
    %v1364 = vsel %vm1359, %v222, 0
    %1366 = vmatprep.subr.mxu0 0.0
    %1367 = vmatpush1.msra.mxu0 %v1350
    %1368 = vmatprep.subr.mxu0 0.0
    %1369 = vmatpush1.msra.mxu0 %v1351
    %1370 = vmatprep.subr.mxu0 0.0
    %1371 = vmatpush1.msra.mxu0 %v1352
    %1372 = vmatprep.subr.mxu0 0.0
    %1373 = vmatpush1.msra.mxu0 %v1353
    %1374 = vmatprep.subr.mxu0 0.0
    %1375 = vmatpush1.msra.mxu0 %v1354
    %1376 = vmatprep.subr.mxu0 0.0
    %1377 = vmatpush1.msra.mxu0 %v1355
    %1378 = vmatprep.subr.mxu0 0.0
    %1379 = vmatpush1.msra.mxu0 %v1356
    %1380 = vmatprep.subr.mxu0 0.0
    %1381 = vmatpush1.msra.mxu0 %v1357
    %1382 = vmatprep.subr.mxu0 0.0
    %1383 = vmatpush1.msra.mxu0 0.0
    %1384 = vmatprep.subr.mxu0 0.0
    %1385 = vmatpush1.msra.mxu0 0.0
    %1386 = vmatprep.subr.mxu0 0.0
    %1387 = vmatpush1.msra.mxu0 0.0
    %1388 = vmatprep.subr.mxu0 0.0
    %1389 = vmatpush1.msra.mxu0 0.0
    %1390 = vmatprep.subr.mxu0 0.0
    %1391 = vmatpush1.msra.mxu0 0.0
    %1392 = vmatprep.subr.mxu0 0.0
    %1393 = vmatpush1.msra.mxu0 0.0
    %1394 = vmatprep.subr.mxu0 0.0
    %1395 = vmatpush1.msra.mxu0 0.0
    %1396 = vmatprep.subr.mxu0 0.0
    %1397 = vmatpush1.msra.mxu0 0.0
    %1398 = vmatprep.subr.mxu0 0.0
    %1399 = vmatpush1.msra.mxu0 0.0
    %1400 = vmatprep.subr.mxu0 0.0
    %1401 = vmatpush1.msra.mxu0 0.0
    %1402 = vmatprep.subr.mxu0 0.0
    %1403 = vmatpush1.msra.mxu0 0.0
    %1404 = vmatprep.subr.mxu0 0.0
    %1405 = vmatpush1.msra.mxu0 0.0
    %1406 = vmatprep.subr.mxu0 0.0
    %1407 = vmatpush1.msra.mxu0 0.0
    %1408 = vmatprep.subr.mxu0 0.0
    %1409 = vmatpush1.msra.mxu0 0.0
    %1410 = vmatprep.subr.mxu0 0.0
    %1411 = vmatpush1.msra.mxu0 0.0
    %1412 = vmatprep.subr.mxu0 0.0
    %1413 = vmatpush1.msra.mxu0 0.0
    %1414 = vmatprep.subr.mxu0 0.0
    %1415 = vmatpush1.msra.mxu0 0.0
    %1416 = vmatprep.subr.mxu0 0.0
    %1417 = vmatpush1.msra.mxu0 0.0
    %1418 = vmatprep.subr.mxu0 0.0
    %1419 = vmatpush1.msra.mxu0 0.0
    %1420 = vmatprep.subr.mxu0 0.0
    %1421 = vmatpush1.msra.mxu0 0.0
    %1422 = vmatprep.subr.mxu0 0.0
    %1423 = vmatpush1.msra.mxu0 0.0
    %1424 = vmatprep.subr.mxu0 0.0
    %1425 = vmatpush1.msra.mxu0 0.0
    %1426 = vmatprep.subr.mxu0 0.0
    %1427 = vmatpush1.msra.mxu0 0.0
    %1428 = vmatprep.subr.mxu0 0.0
    %1429 = vmatpush1.msra.mxu0 0.0
    %1430 = vmatprep.mubr.f32.mxu0 0.0
    %1431 = vmatmul.mubr.f32.gmra.mrb[0].mxu0 %v1361
    %v1432 = vpop.f32.mrb[0].mxu0
    %v1433 = vadd.f32 %v1358, %v1432
    %v1434 = vpop.f32.mrb[0].mxu0
    %1435 = vmatprep.mubr.f32.mxu0 0.0
    %1436 = vmatmul.mubr.f32.gmra.mrb[0].mxu0 %v1364
    %v1437 = vpop.f32.mrb[0].mxu0
    %v1438 = vadd.f32 %v1358, %v1437
    %v1439 = vpop.f32.mrb[0].mxu0
    %1440 = vdwg.mxu0
    %v1441 = vand.u32 2147483647, %v1433
    %vm1442 = vcmp.le.f32.partialorder %v1441, 0.7853982
    %vm1443 = vcmp.lt.s32.totalorder %v1433, 0
    %v1444 = vand.u32 %v1433, 2139095040
    %v1445 = vshrl.u32 %v1444, 23
    %v1446 = vsub.s32 %v1445, 127
    %v1447 = vand.u32 2147483647, %v1433
    %v1448 = vand.u32 %v1447, 8388607
    %v1449 = vor.u32 %v1448, 8388608
    %v1450 = vsub.s32 0, %v1449
    %v1451 = vadd.s32 %v1446, 1
    %vm1452 = vcmp.gt.s32.totalorder %v1451, 0
    %v1453 = vsel %vm1452, %v1451, 0
    %v1454 = vshrl.u32 %v1453, 5
    %v1455 = vand.u32 %v1453, 31
    %v1456 = vsub.s32 32, %v1455
    %v1457 = vshrl.u32 683565275, %v1456
    %v1458 = vshll.u32 683565275, %v1455
    %v1459 = vshrl.u32 2475754826, %v1456
    %v1460 = vor.u32 %v1458, %v1459
    %v1461 = vshll.u32 2475754826, %v1455
    %v1462 = vshrl.u32 2131351028, %v1456
    %v1463 = vor.u32 %v1461, %v1462
    %v1464 = vshll.u32 2131351028, %v1455
    %v1465 = vshrl.u32 2102212464, %v1456
    %v1466 = vor.u32 %v1464, %v1465
    %v1467 = vshll.u32 2102212464, %v1455
    %v1468 = vshrl.u32 920167782, %v1456
    %v1469 = vor.u32 %v1467, %v1468
    %v1470 = vshll.u32 920167782, %v1455
    %v1471 = vshrl.u32 1326507024, %v1456
    %v1472 = vor.u32 %v1470, %v1471
    %vm1473 = vcmp.lt.s32.totalorder %v1454, 1
    %vm1474 = vcmp.lt.s32.totalorder %v1454, 2
    %vm1475 = vcmp.lt.s32.totalorder %v1454, 3
    %vm1476 = vcmp.lt.s32.totalorder %v1454, 4
    %v1477 = vsel %vm1473, %v1457, %v1460
    %v1478 = vsel %vm1476, %v1466, 2102212464
    %v1479 = vsel %vm1475, %v1463, %v1478
    %v1480 = vsel %vm1474, %v1477, %v1479
    %v1481 = vsel %vm1473, %v1460, %v1463
    %v1482 = vsel %vm1476, %v1469, 920167782
    %v1483 = vsel %vm1475, %v1466, %v1482
    %v1484 = vsel %vm1474, %v1481, %v1483
    %v1485 = vsel %vm1473, %v1463, %v1466
    %v1486 = vsel %vm1476, %v1472, 1326507024
    %v1487 = vsel %vm1475, %v1469, %v1486
    %v1488 = vsel %vm1474, %v1485, %v1487
    %v1489 = vshll.u32 %v1449, 8
    %v1490 = vmul.u32.u64.compose %v1489, %v1488
    %v1491 = vextract.low.u32 %v1490
    %v1492 = vextract.high.u32 %v1490
    %v1493 = vmul.u32.u64.compose %v1489, %v1484
    %v1494 = vextract.low.u32 %v1493
    %v1495 = vextract.high.u32 %v1493
    %v1496 = vmul.u32 %v1489, %v1480
    %v1497 = vadd.s32 %v1492, %v1494
    %vm1498 = vc.u32 %v1492, %v1494
    %v1499 = vadd.s32 %v1495, 1
    %v1500 = vsel %vm1498, %v1499, %v1495
    %v1501 = vadd.s32 %v1496, %v1500
    %v1502 = vadd.s32 %v1501, 536870912
    %v1503 = vshrl.u32 %v1502, 30
    %v1504 = vshll.u32 %v1503, 30
    %v1505 = vsub.s32 %v1501, %v1504
    %vm1506 = vcmp.lt.s32.totalorder %v1505, 0
    %v1507 = vsub.s32 0, %v1505
    %v1508 = vsel %vm1506, %v1507, %v1505
    %v1509 = vclz %v1508
    %v1510 = vsub.s32 %v1509, 2
    %vm1511 = vcmp.gt.s32.totalorder 0, %v1510
    %v1512 = vsel %vm1511, 0, %v1510
    %v1513 = vsub.s32 32, %v1512
    %v1514 = vshll.u32 %v1505, %v1512
    %v1515 = vshrl.u32 %v1497, %v1513
    %v1516 = vor.u32 %v1514, %v1515
    %v1517 = vsub.s32 4294967266, %v1512
    %v1518 = vadd.s32 %v1517, 127
    %v1519 = vshll.u32 %v1518, 23
    %v1520 = vor.u32 4788187, %v1519
    %v1521 = vand.u32 2147483647, %v1520
    %v1523 = vcvt.s32.f32 %v1516
    %v1524 = vmul.f32 %v1523, %v1521
    %v1525 = vxor.u32 %v1524, 2147483648
    %v1526 = vsel %vm1443, %v1525, %v1524
    %v1527 = vsub.s32 4, %v1503
    %v1528 = vsel %vm1443, %v1527, %v1503
    %v1529 = vsel %vm1442, %v1433, %v1526
    %v1530 = vsel %vm1442, 0, %v1528
    %v1531 = vcosq.f32.pop %v1529
    %v1532 = vsinq.f32.pop %v1529
    %vm1533 = vweird.f32 %v1433
    %v1534 = vand.u32 %v1530, 3
    %vm1535 = vcmp.lt.s32.totalorder %v1534, 2
    %vm1536 = vcmp.eq.s32.totalorder %v1534, 0
    %v1537 = vxor.u32 %v1532, 2147483648
    %v1538 = vsel %vm1536, %v1531, %v1537
    %vm1539 = vcmp.eq.s32.totalorder %v1534, 2
    %v1540 = vxor.u32 %v1531, 2147483648
    %v1541 = vsel %vm1539, %v1540, %v1532
    %v1542 = vsel %vm1535, %v1538, %v1541
    %v1543 = vsel %vm1533, nan, %v1542
    %v1544 = vand.u32 2147483647, %v1438
    %vm1545 = vcmp.le.f32.partialorder %v1544, 0.7853982
    %vm1546 = vcmp.lt.s32.totalorder %v1438, 0
    %v1547 = vand.u32 %v1438, 2139095040
    %v1548 = vshrl.u32 %v1547, 23
    %v1549 = vsub.s32 %v1548, 127
    %v1550 = vand.u32 2147483647, %v1438
    %v1551 = vand.u32 %v1550, 8388607
    %v1552 = vor.u32 %v1551, 8388608
    %v1553 = vsub.s32 0, %v1552
    %v1554 = vadd.s32 %v1549, 1
    %vm1555 = vcmp.gt.s32.totalorder %v1554, 0
    %v1556 = vsel %vm1555, %v1554, 0
    %v1557 = vshrl.u32 %v1556, 5
    %v1558 = vand.u32 %v1556, 31
    %v1559 = vsub.s32 32, %v1558
    %v1560 = vshrl.u32 683565275, %v1559
    %v1561 = vshll.u32 683565275, %v1558
    %v1562 = vshrl.u32 2475754826, %v1559
    %v1563 = vor.u32 %v1561, %v1562
    %v1564 = vshll.u32 2475754826, %v1558
    %v1565 = vshrl.u32 2131351028, %v1559
    %v1566 = vor.u32 %v1564, %v1565
    %v1567 = vshll.u32 2131351028, %v1558
    %v1568 = vshrl.u32 2102212464, %v1559
    %v1569 = vor.u32 %v1567, %v1568
    %v1570 = vshll.u32 2102212464, %v1558
    %v1571 = vshrl.u32 920167782, %v1559
    %v1572 = vor.u32 %v1570, %v1571
    %v1573 = vshll.u32 920167782, %v1558
    %v1574 = vshrl.u32 1326507024, %v1559
    %v1575 = vor.u32 %v1573, %v1574
    %vm1576 = vcmp.lt.s32.totalorder %v1557, 1
    %vm1577 = vcmp.lt.s32.totalorder %v1557, 2
    %vm1578 = vcmp.lt.s32.totalorder %v1557, 3
    %vm1579 = vcmp.lt.s32.totalorder %v1557, 4
    %v1580 = vsel %vm1576, %v1560, %v1563
    %v1581 = vsel %vm1579, %v1569, 2102212464
    %v1582 = vsel %vm1578, %v1566, %v1581
    %v1583 = vsel %vm1577, %v1580, %v1582
    %v1584 = vsel %vm1576, %v1563, %v1566
    %v1585 = vsel %vm1579, %v1572, 920167782
    %v1586 = vsel %vm1578, %v1569, %v1585
    %v1587 = vsel %vm1577, %v1584, %v1586
    %v1588 = vsel %vm1576, %v1566, %v1569
    %v1589 = vsel %vm1579, %v1575, 1326507024
    %v1590 = vsel %vm1578, %v1572, %v1589
    %v1591 = vsel %vm1577, %v1588, %v1590
    %v1592 = vshll.u32 %v1552, 8
    %v1593 = vmul.u32.u64.compose %v1592, %v1591
    %v1594 = vextract.low.u32 %v1593
    %v1595 = vextract.high.u32 %v1593
    %v1596 = vmul.u32.u64.compose %v1592, %v1587
    %v1597 = vextract.low.u32 %v1596
    %v1598 = vextract.high.u32 %v1596
    %v1599 = vmul.u32 %v1592, %v1583
    %v1600 = vadd.s32 %v1595, %v1597
    %vm1601 = vc.u32 %v1595, %v1597
    %v1602 = vadd.s32 %v1598, 1
    %v1603 = vsel %vm1601, %v1602, %v1598
    %v1604 = vadd.s32 %v1599, %v1603
    %v1605 = vadd.s32 %v1604, 536870912
    %v1606 = vshrl.u32 %v1605, 30
    %v1607 = vshll.u32 %v1606, 30
    %v1608 = vsub.s32 %v1604, %v1607
    %vm1609 = vcmp.lt.s32.totalorder %v1608, 0
    %v1610 = vsub.s32 0, %v1608
    %v1611 = vsel %vm1609, %v1610, %v1608
    %v1612 = vclz %v1611
    %v1613 = vsub.s32 %v1612, 2
    %vm1614 = vcmp.gt.s32.totalorder 0, %v1613
    %v1615 = vsel %vm1614, 0, %v1613
    %v1616 = vsub.s32 32, %v1615
    %v1617 = vshll.u32 %v1608, %v1615
    %v1618 = vshrl.u32 %v1600, %v1616
    %v1619 = vor.u32 %v1617, %v1618
    %v1620 = vsub.s32 4294967266, %v1615
    %v1621 = vadd.s32 %v1620, 127
    %v1622 = vshll.u32 %v1621, 23
    %v1623 = vor.u32 4788187, %v1622
    %v1624 = vand.u32 2147483647, %v1623
    %v1626 = vcvt.s32.f32 %v1619
    %v1627 = vmul.f32 %v1626, %v1624
    %v1628 = vxor.u32 %v1627, 2147483648
    %v1629 = vsel %vm1546, %v1628, %v1627
    %v1630 = vsub.s32 4, %v1606
    %v1631 = vsel %vm1546, %v1630, %v1606
    %v1632 = vsel %vm1545, %v1438, %v1629
    %v1633 = vsel %vm1545, 0, %v1631
    %v1634 = vcosq.f32.pop %v1632
    %v1635 = vsinq.f32.pop %v1632
    %vm1636 = vweird.f32 %v1438
    %v1637 = vand.u32 %v1633, 3
    %vm1638 = vcmp.lt.s32.totalorder %v1637, 2
    %vm1639 = vcmp.eq.s32.totalorder %v1637, 0
    %v1640 = vxor.u32 %v1635, 2147483648
    %v1641 = vsel %vm1639, %v1634, %v1640
    %vm1642 = vcmp.eq.s32.totalorder %v1637, 2
    %v1643 = vxor.u32 %v1634, 2147483648
    %v1644 = vsel %vm1642, %v1643, %v1635
    %v1645 = vsel %vm1638, %v1641, %v1644
    %v1646 = vsel %vm1636, nan, %v1645
    %v1647 = vlaneseq
    %v1648 = vshrl.u32 %v1647, 7
    %v1649 = vsub.s32 0, %v1648
    %v1650 = vrot.slane %v42, %v1649
    %v1652 = vsel %vm225, %v263, 0
    %v1655 = vsel %vm225, %v264, 0
    %1657 = vmatprep.subr.mxu0 0.0
    %1658 = vmatpush1.msra.mxu0 %v43
    %1659 = vmatprep.subr.mxu0 0.0
    %1660 = vmatpush1.msra.mxu0 %v44
    %1661 = vmatprep.subr.mxu0 0.0
    %1662 = vmatpush1.msra.mxu0 %v45
    %1663 = vmatprep.subr.mxu0 0.0
    %1664 = vmatpush1.msra.mxu0 %v46
    %1665 = vmatprep.subr.mxu0 0.0
    %1666 = vmatpush1.msra.mxu0 0.0
    %1667 = vmatprep.subr.mxu0 0.0
    %1668 = vmatpush1.msra.mxu0 0.0
    %1669 = vmatprep.subr.mxu0 0.0
    %1670 = vmatpush1.msra.mxu0 0.0
    %1671 = vmatprep.subr.mxu0 0.0
    %1672 = vmatpush1.msra.mxu0 0.0
    %1673 = vmatprep.subr.mxu0 0.0
    %1674 = vmatpush1.msra.mxu0 0.0
    %1675 = vmatprep.subr.mxu0 0.0
    %1676 = vmatpush1.msra.mxu0 0.0
    %1677 = vmatprep.subr.mxu0 0.0
    %1678 = vmatpush1.msra.mxu0 0.0
    %1679 = vmatprep.subr.mxu0 0.0
    %1680 = vmatpush1.msra.mxu0 0.0
    %1681 = vmatprep.subr.mxu0 0.0
    %1682 = vmatpush1.msra.mxu0 0.0
    %1683 = vmatprep.subr.mxu0 0.0
    %1684 = vmatpush1.msra.mxu0 0.0
    %1685 = vmatprep.subr.mxu0 0.0
    %1686 = vmatpush1.msra.mxu0 0.0
    %1687 = vmatprep.subr.mxu0 0.0
    %1688 = vmatpush1.msra.mxu0 0.0
    %1689 = vmatprep.subr.mxu0 0.0
    %1690 = vmatpush1.msra.mxu0 0.0
    %1691 = vmatprep.subr.mxu0 0.0
    %1692 = vmatpush1.msra.mxu0 0.0
    %1693 = vmatprep.subr.mxu0 0.0
    %1694 = vmatpush1.msra.mxu0 0.0
    %1695 = vmatprep.subr.mxu0 0.0
    %1696 = vmatpush1.msra.mxu0 0.0
    %1697 = vmatprep.subr.mxu0 0.0
    %1698 = vmatpush1.msra.mxu0 0.0
    %1699 = vmatprep.subr.mxu0 0.0
    %1700 = vmatpush1.msra.mxu0 0.0
    %1701 = vmatprep.subr.mxu0 0.0
    %1702 = vmatpush1.msra.mxu0 0.0
    %1703 = vmatprep.subr.mxu0 0.0
    %1704 = vmatpush1.msra.mxu0 0.0
    %1705 = vmatprep.subr.mxu0 0.0
    %1706 = vmatpush1.msra.mxu0 0.0
    %1707 = vmatprep.subr.mxu0 0.0
    %1708 = vmatpush1.msra.mxu0 0.0
    %1709 = vmatprep.subr.mxu0 0.0
    %1710 = vmatpush1.msra.mxu0 0.0
    %1711 = vmatprep.subr.mxu0 0.0
    %1712 = vmatpush1.msra.mxu0 0.0
    %1713 = vmatprep.subr.mxu0 0.0
    %1714 = vmatpush1.msra.mxu0 0.0
    %1715 = vmatprep.subr.mxu0 0.0
    %1716 = vmatpush1.msra.mxu0 0.0
    %1717 = vmatprep.subr.mxu0 0.0
    %1718 = vmatpush1.msra.mxu0 0.0
    %1719 = vmatprep.subr.mxu0 0.0
    %1720 = vmatpush1.msra.mxu0 0.0
    %1721 = vmatprep.mubr.f32.mxu0 0.0
    %1722 = vmatmul.mubr.f32.gmra.mrb[0].mxu0 %v1652
    %v1723 = vpop.f32.mrb[0].mxu0
    %v1724 = vadd.f32 %v1650, %v1723
    %v1725 = vpop.f32.mrb[0].mxu0
    %1726 = vmatprep.mubr.f32.mxu0 0.0
    %1727 = vmatmul.mubr.f32.gmra.mrb[0].mxu0 %v1655
    %v1728 = vpop.f32.mrb[0].mxu0
    %v1729 = vadd.f32 %v1650, %v1728
    %v1730 = vpop.f32.mrb[0].mxu0
    %1731 = vdwg.mxu0
    %v1732 = vstv %s38
    %v1733 = vadd.f32 %v1724, %v1732
    %v1734 = vadd.f32 %v1729, %v1732
    %v1735 = vand.u32 2147483647, %v1733
    %vm1736 = vcmp.le.f32.partialorder %v1735, 0.7853982
    %vm1737 = vcmp.lt.s32.totalorder %v1733, 0
    %v1738 = vand.u32 %v1733, 2139095040
    %v1739 = vshrl.u32 %v1738, 23
    %v1740 = vsub.s32 %v1739, 127
    %v1741 = vand.u32 2147483647, %v1733
    %v1742 = vand.u32 %v1741, 8388607
    %v1743 = vor.u32 %v1742, 8388608
    %v1744 = vsub.s32 0, %v1743
    %v1745 = vadd.s32 %v1740, 1
    %vm1746 = vcmp.gt.s32.totalorder %v1745, 0
    %v1747 = vsel %vm1746, %v1745, 0
    %v1748 = vshrl.u32 %v1747, 5
    %v1749 = vand.u32 %v1747, 31
    %v1750 = vsub.s32 32, %v1749
    %v1751 = vshrl.u32 683565275, %v1750
    %v1752 = vshll.u32 683565275, %v1749
    %v1753 = vshrl.u32 2475754826, %v1750
    %v1754 = vor.u32 %v1752, %v1753
    %v1755 = vshll.u32 2475754826, %v1749
    %v1756 = vshrl.u32 2131351028, %v1750
    %v1757 = vor.u32 %v1755, %v1756
    %v1758 = vshll.u32 2131351028, %v1749
    %v1759 = vshrl.u32 2102212464, %v1750
    %v1760 = vor.u32 %v1758, %v1759
    %v1761 = vshll.u32 2102212464, %v1749
    %v1762 = vshrl.u32 920167782, %v1750
    %v1763 = vor.u32 %v1761, %v1762
    %v1764 = vshll.u32 920167782, %v1749
    %v1765 = vshrl.u32 1326507024, %v1750
    %v1766 = vor.u32 %v1764, %v1765
    %vm1767 = vcmp.lt.s32.totalorder %v1748, 1
    %vm1768 = vcmp.lt.s32.totalorder %v1748, 2
    %vm1769 = vcmp.lt.s32.totalorder %v1748, 3
    %vm1770 = vcmp.lt.s32.totalorder %v1748, 4
    %v1771 = vsel %vm1767, %v1751, %v1754
    %v1772 = vsel %vm1770, %v1760, 2102212464
    %v1773 = vsel %vm1769, %v1757, %v1772
    %v1774 = vsel %vm1768, %v1771, %v1773
    %v1775 = vsel %vm1767, %v1754, %v1757
    %v1776 = vsel %vm1770, %v1763, 920167782
    %v1777 = vsel %vm1769, %v1760, %v1776
    %v1778 = vsel %vm1768, %v1775, %v1777
    %v1779 = vsel %vm1767, %v1757, %v1760
    %v1780 = vsel %vm1770, %v1766, 1326507024
    %v1781 = vsel %vm1769, %v1763, %v1780
    %v1782 = vsel %vm1768, %v1779, %v1781
    %v1783 = vshll.u32 %v1743, 8
    %v1784 = vmul.u32.u64.compose %v1783, %v1782
    %v1785 = vextract.low.u32 %v1784
    %v1786 = vextract.high.u32 %v1784
    %v1787 = vmul.u32.u64.compose %v1783, %v1778
    %v1788 = vextract.low.u32 %v1787
    %v1789 = vextract.high.u32 %v1787
    %v1790 = vmul.u32 %v1783, %v1774
    %v1791 = vadd.s32 %v1786, %v1788
    %vm1792 = vc.u32 %v1786, %v1788
    %v1793 = vadd.s32 %v1789, 1
    %v1794 = vsel %vm1792, %v1793, %v1789
    %v1795 = vadd.s32 %v1790, %v1794
    %v1796 = vadd.s32 %v1795, 536870912
    %v1797 = vshrl.u32 %v1796, 30
    %v1798 = vshll.u32 %v1797, 30
    %v1799 = vsub.s32 %v1795, %v1798
    %vm1800 = vcmp.lt.s32.totalorder %v1799, 0
    %v1801 = vsub.s32 0, %v1799
    %v1802 = vsel %vm1800, %v1801, %v1799
    %v1803 = vclz %v1802
    %v1804 = vsub.s32 %v1803, 2
    %vm1805 = vcmp.gt.s32.totalorder 0, %v1804
    %v1806 = vsel %vm1805, 0, %v1804
    %v1807 = vsub.s32 32, %v1806
    %v1808 = vshll.u32 %v1799, %v1806
    %v1809 = vshrl.u32 %v1791, %v1807
    %v1810 = vor.u32 %v1808, %v1809
    %v1811 = vsub.s32 4294967266, %v1806
    %v1812 = vadd.s32 %v1811, 127
    %v1813 = vshll.u32 %v1812, 23
    %v1814 = vor.u32 4788187, %v1813
    %v1815 = vand.u32 2147483647, %v1814
    %v1817 = vcvt.s32.f32 %v1810
    %v1818 = vmul.f32 %v1817, %v1815
    %v1819 = vxor.u32 %v1818, 2147483648
    %v1820 = vsel %vm1737, %v1819, %v1818
    %v1821 = vsub.s32 4, %v1797
    %v1822 = vsel %vm1737, %v1821, %v1797
    %v1823 = vsel %vm1736, %v1733, %v1820
    %v1824 = vsel %vm1736, 0, %v1822
    %v1825 = vcosq.f32.pop %v1823
    %v1826 = vsinq.f32.pop %v1823
    %vm1827 = vweird.f32 %v1733
    %v1828 = vand.u32 %v1824, 3
    %vm1829 = vcmp.lt.s32.totalorder %v1828, 2
    %vm1830 = vcmp.eq.s32.totalorder %v1828, 0
    %v1831 = vxor.u32 %v1826, 2147483648
    %v1832 = vsel %vm1830, %v1825, %v1831
    %vm1833 = vcmp.eq.s32.totalorder %v1828, 2
    %v1834 = vxor.u32 %v1825, 2147483648
    %v1835 = vsel %vm1833, %v1834, %v1826
    %v1836 = vsel %vm1829, %v1832, %v1835
    %v1837 = vsel %vm1827, nan, %v1836
    %v1838 = vand.u32 2147483647, %v1734
    %vm1839 = vcmp.le.f32.partialorder %v1838, 0.7853982
    %vm1840 = vcmp.lt.s32.totalorder %v1734, 0
    %v1841 = vand.u32 %v1734, 2139095040
    %v1842 = vshrl.u32 %v1841, 23
    %v1843 = vsub.s32 %v1842, 127
    %v1844 = vand.u32 2147483647, %v1734
    %v1845 = vand.u32 %v1844, 8388607
    %v1846 = vor.u32 %v1845, 8388608
    %v1847 = vsub.s32 0, %v1846
    %v1848 = vadd.s32 %v1843, 1
    %vm1849 = vcmp.gt.s32.totalorder %v1848, 0
    %v1850 = vsel %vm1849, %v1848, 0
    %v1851 = vshrl.u32 %v1850, 5
    %v1852 = vand.u32 %v1850, 31
    %v1853 = vsub.s32 32, %v1852
    %v1854 = vshrl.u32 683565275, %v1853
    %v1855 = vshll.u32 683565275, %v1852
    %v1856 = vshrl.u32 2475754826, %v1853
    %v1857 = vor.u32 %v1855, %v1856
    %v1858 = vshll.u32 2475754826, %v1852
    %v1859 = vshrl.u32 2131351028, %v1853
    %v1860 = vor.u32 %v1858, %v1859
    %v1861 = vshll.u32 2131351028, %v1852
    %v1862 = vshrl.u32 2102212464, %v1853
    %v1863 = vor.u32 %v1861, %v1862
    %v1864 = vshll.u32 2102212464, %v1852
    %v1865 = vshrl.u32 920167782, %v1853
    %v1866 = vor.u32 %v1864, %v1865
    %v1867 = vshll.u32 920167782, %v1852
    %v1868 = vshrl.u32 1326507024, %v1853
    %v1869 = vor.u32 %v1867, %v1868
    %vm1870 = vcmp.lt.s32.totalorder %v1851, 1
    %vm1871 = vcmp.lt.s32.totalorder %v1851, 2
    %vm1872 = vcmp.lt.s32.totalorder %v1851, 3
    %vm1873 = vcmp.lt.s32.totalorder %v1851, 4
    %v1874 = vsel %vm1870, %v1854, %v1857
    %v1875 = vsel %vm1873, %v1863, 2102212464
    %v1876 = vsel %vm1872, %v1860, %v1875
    %v1877 = vsel %vm1871, %v1874, %v1876
    %v1878 = vsel %vm1870, %v1857, %v1860
    %v1879 = vsel %vm1873, %v1866, 920167782
    %v1880 = vsel %vm1872, %v1863, %v1879
    %v1881 = vsel %vm1871, %v1878, %v1880
    %v1882 = vsel %vm1870, %v1860, %v1863
    %v1883 = vsel %vm1873, %v1869, 1326507024
    %v1884 = vsel %vm1872, %v1866, %v1883
    %v1885 = vsel %vm1871, %v1882, %v1884
    %v1886 = vshll.u32 %v1846, 8
    %v1887 = vmul.u32.u64.compose %v1886, %v1885
    %v1888 = vextract.low.u32 %v1887
    %v1889 = vextract.high.u32 %v1887
    %v1890 = vmul.u32.u64.compose %v1886, %v1881
    %v1891 = vextract.low.u32 %v1890
    %v1892 = vextract.high.u32 %v1890
    %v1893 = vmul.u32 %v1886, %v1877
    %v1894 = vadd.s32 %v1889, %v1891
    %vm1895 = vc.u32 %v1889, %v1891
    %v1896 = vadd.s32 %v1892, 1
    %v1897 = vsel %vm1895, %v1896, %v1892
    %v1898 = vadd.s32 %v1893, %v1897
    %v1899 = vadd.s32 %v1898, 536870912
    %v1900 = vshrl.u32 %v1899, 30
    %v1901 = vshll.u32 %v1900, 30
    %v1902 = vsub.s32 %v1898, %v1901
    %vm1903 = vcmp.lt.s32.totalorder %v1902, 0
    %v1904 = vsub.s32 0, %v1902
    %v1905 = vsel %vm1903, %v1904, %v1902
    %v1906 = vclz %v1905
    %v1907 = vsub.s32 %v1906, 2
    %vm1908 = vcmp.gt.s32.totalorder 0, %v1907
    %v1909 = vsel %vm1908, 0, %v1907
    %v1910 = vsub.s32 32, %v1909
    %v1911 = vshll.u32 %v1902, %v1909
    %v1912 = vshrl.u32 %v1894, %v1910
    %v1913 = vor.u32 %v1911, %v1912
    %v1914 = vsub.s32 4294967266, %v1909
    %v1915 = vadd.s32 %v1914, 127
    %v1916 = vshll.u32 %v1915, 23
    %v1917 = vor.u32 4788187, %v1916
    %v1918 = vand.u32 2147483647, %v1917
    %v1920 = vcvt.s32.f32 %v1913
    %v1921 = vmul.f32 %v1920, %v1918
    %v1922 = vxor.u32 %v1921, 2147483648
    %v1923 = vsel %vm1840, %v1922, %v1921
    %v1924 = vsub.s32 4, %v1900
    %v1925 = vsel %vm1840, %v1924, %v1900
    %v1926 = vsel %vm1839, %v1734, %v1923
    %v1927 = vsel %vm1839, 0, %v1925
    %v1928 = vcosq.f32.pop %v1926
    %v1929 = vsinq.f32.pop %v1926
    %vm1930 = vweird.f32 %v1734
    %v1931 = vand.u32 %v1927, 3
    %vm1932 = vcmp.lt.s32.totalorder %v1931, 2
    %vm1933 = vcmp.eq.s32.totalorder %v1931, 0
    %v1934 = vxor.u32 %v1929, 2147483648
    %v1935 = vsel %vm1933, %v1928, %v1934
    %vm1936 = vcmp.eq.s32.totalorder %v1931, 2
    %v1937 = vxor.u32 %v1928, 2147483648
    %v1938 = vsel %vm1936, %v1937, %v1929
    %v1939 = vsel %vm1932, %v1935, %v1938
    %v1940 = vsel %vm1930, nan, %v1939
    %v1941 = vmul.f32 %v1837, 0.5
    %v1942 = vmul.f32 %v1940, 0.5
    %v1943 = vmul.f32 %v1837, 0.70710677
    %v1944 = vmul.f32 %v1940, 0.70710677
    %v1945 = verf.f32.pop %v1943
    %v1946 = verf.f32.pop %v1944
    %v1947 = vadd.f32 %v1945, 1.0
    %v1948 = vadd.f32 %v1946, 1.0
    %v1949 = vmul.f32 %v1941, %v1947
    %v1950 = vmul.f32 %v1942, %v1948
    %v1951 = vlaneseq
    %v1952 = vshrl.u32 %v1951, 7
    %v1953 = vsub.s32 0, %v1952
    %v1954 = vrot.slane %v41, %v1953
    %1955 = vmatprep.subr.mxu0 0.0
    %1956 = vmatpush1.msra.mxu0 %v47
    %1957 = vmatprep.subr.mxu0 0.0
    %1958 = vmatpush1.msra.mxu0 %v48
    %1959 = vmatprep.subr.mxu0 0.0
    %1960 = vmatpush1.msra.mxu0 %v49
    %1961 = vmatprep.subr.mxu0 0.0
    %1962 = vmatpush1.msra.mxu0 %v50
    %1963 = vmatprep.subr.mxu0 0.0
    %1964 = vmatpush1.msra.mxu0 %v51
    %1965 = vmatprep.subr.mxu0 0.0
    %1966 = vmatpush1.msra.mxu0 %v52
    %1967 = vmatprep.subr.mxu0 0.0
    %1968 = vmatpush1.msra.mxu0 %v53
    %1969 = vmatprep.subr.mxu0 0.0
    %1970 = vmatpush1.msra.mxu0 %v54
    %1971 = vmatprep.subr.mxu0 0.0
    %1972 = vmatpush1.msra.mxu0 %v55
    %1973 = vmatprep.subr.mxu0 0.0
    %1974 = vmatpush1.msra.mxu0 %v56
    %1975 = vmatprep.subr.mxu0 0.0
    %1976 = vmatpush1.msra.mxu0 %v57
    %1977 = vmatprep.subr.mxu0 0.0
    %1978 = vmatpush1.msra.mxu0 %v58
    %1979 = vmatprep.subr.mxu0 0.0
    %1980 = vmatpush1.msra.mxu0 %v59
    %1981 = vmatprep.subr.mxu0 0.0
    %1982 = vmatpush1.msra.mxu0 %v60
    %1983 = vmatprep.subr.mxu0 0.0
    %1984 = vmatpush1.msra.mxu0 %v61
    %1985 = vmatprep.subr.mxu0 0.0
    %1986 = vmatpush1.msra.mxu0 %v62
    %1987 = vmatprep.subr.mxu0 0.0
    %1988 = vmatpush1.msra.mxu0 0.0
    %1989 = vmatprep.subr.mxu0 0.0
    %1990 = vmatpush1.msra.mxu0 0.0
    %1991 = vmatprep.subr.mxu0 0.0
    %1992 = vmatpush1.msra.mxu0 0.0
    %1993 = vmatprep.subr.mxu0 0.0
    %1994 = vmatpush1.msra.mxu0 0.0
    %1995 = vmatprep.subr.mxu0 0.0
    %1996 = vmatpush1.msra.mxu0 0.0
    %1997 = vmatprep.subr.mxu0 0.0
    %1998 = vmatpush1.msra.mxu0 0.0
    %1999 = vmatprep.subr.mxu0 0.0
    %2000 = vmatpush1.msra.mxu0 0.0
    %2001 = vmatprep.subr.mxu0 0.0
    %2002 = vmatpush1.msra.mxu0 0.0
    %2003 = vmatprep.subr.mxu0 0.0
    %2004 = vmatpush1.msra.mxu0 0.0
    %2005 = vmatprep.subr.mxu0 0.0
    %2006 = vmatpush1.msra.mxu0 0.0
    %2007 = vmatprep.subr.mxu0 0.0
    %2008 = vmatpush1.msra.mxu0 0.0
    %2009 = vmatprep.subr.mxu0 0.0
    %2010 = vmatpush1.msra.mxu0 0.0
    %2011 = vmatprep.subr.mxu0 0.0
    %2012 = vmatpush1.msra.mxu0 0.0
    %2013 = vmatprep.subr.mxu0 0.0
    %2014 = vmatpush1.msra.mxu0 0.0
    %2015 = vmatprep.subr.mxu0 0.0
    %2016 = vmatpush1.msra.mxu0 0.0
    %2017 = vmatprep.subr.mxu0 0.0
    %2018 = vmatpush1.msra.mxu0 0.0
    %2019 = vmatprep.mubr.f32.mxu0 0.0
    %2020 = vmatmul.mubr.f32.gmra.mrb[0].mxu0 %v1949
    %v2021 = vpop.f32.mrb[0].mxu0
    %v2022 = vadd.f32 %v1954, %v2021
    %v2023 = vpop.f32.mrb[0].mxu0
    %2024 = vmatprep.mubr.f32.mxu0 0.0
    %2025 = vmatmul.mubr.f32.gmra.mrb[0].mxu0 %v1950
    %v2026 = vpop.f32.mrb[0].mxu0
    %v2027 = vadd.f32 %v1954, %v2026
    %v2028 = vpop.f32.mrb[0].mxu0
    %2029 = vdwg.mxu0
    %v2030 = vadd.f32 %v263, %v1543
    %v2031 = vadd.f32 %v264, %v1646
    %v2032 = vadd.f32 %v2030, %v2022
    %v2033 = vadd.f32 %v2031, %v2027
    %v2034 = vadd.f32 %v2032, %v265
    %v2035 = vadd.f32 %v2033, %v265
    %v2036 = vand.u32 2147483647, %v2034
    %vm2037 = vcmp.le.f32.partialorder %v2036, 0.7853982
    %vm2038 = vcmp.lt.s32.totalorder %v2034, 0
    %v2039 = vand.u32 %v2034, 2139095040
    %v2040 = vshrl.u32 %v2039, 23
    %v2041 = vsub.s32 %v2040, 127
    %v2042 = vand.u32 2147483647, %v2034
    %v2043 = vand.u32 %v2042, 8388607
    %v2044 = vor.u32 %v2043, 8388608
    %v2045 = vsub.s32 0, %v2044
    %v2046 = vadd.s32 %v2041, 1
    %vm2047 = vcmp.gt.s32.totalorder %v2046, 0
    %v2048 = vsel %vm2047, %v2046, 0
    %v2049 = vshrl.u32 %v2048, 5
    %v2050 = vand.u32 %v2048, 31
    %v2051 = vsub.s32 32, %v2050
    %v2052 = vshrl.u32 683565275, %v2051
    %v2053 = vshll.u32 683565275, %v2050
    %v2054 = vshrl.u32 2475754826, %v2051
    %v2055 = vor.u32 %v2053, %v2054
    %v2056 = vshll.u32 2475754826, %v2050
    %v2057 = vshrl.u32 2131351028, %v2051
    %v2058 = vor.u32 %v2056, %v2057
    %v2059 = vshll.u32 2131351028, %v2050
    %v2060 = vshrl.u32 2102212464, %v2051
    %v2061 = vor.u32 %v2059, %v2060
    %v2062 = vshll.u32 2102212464, %v2050
    %v2063 = vshrl.u32 920167782, %v2051
    %v2064 = vor.u32 %v2062, %v2063
    %v2065 = vshll.u32 920167782, %v2050
    %v2066 = vshrl.u32 1326507024, %v2051
    %v2067 = vor.u32 %v2065, %v2066
    %vm2068 = vcmp.lt.s32.totalorder %v2049, 1
    %vm2069 = vcmp.lt.s32.totalorder %v2049, 2
    %vm2070 = vcmp.lt.s32.totalorder %v2049, 3
    %vm2071 = vcmp.lt.s32.totalorder %v2049, 4
    %v2072 = vsel %vm2068, %v2052, %v2055
    %v2073 = vsel %vm2071, %v2061, 2102212464
    %v2074 = vsel %vm2070, %v2058, %v2073
    %v2075 = vsel %vm2069, %v2072, %v2074
    %v2076 = vsel %vm2068, %v2055, %v2058
    %v2077 = vsel %vm2071, %v2064, 920167782
    %v2078 = vsel %vm2070, %v2061, %v2077
    %v2079 = vsel %vm2069, %v2076, %v2078
    %v2080 = vsel %vm2068, %v2058, %v2061
    %v2081 = vsel %vm2071, %v2067, 1326507024
    %v2082 = vsel %vm2070, %v2064, %v2081
    %v2083 = vsel %vm2069, %v2080, %v2082
    %v2084 = vshll.u32 %v2044, 8
    %v2085 = vmul.u32.u64.compose %v2084, %v2083
    %v2086 = vextract.low.u32 %v2085
    %v2087 = vextract.high.u32 %v2085
    %v2088 = vmul.u32.u64.compose %v2084, %v2079
    %v2089 = vextract.low.u32 %v2088
    %v2090 = vextract.high.u32 %v2088
    %v2091 = vmul.u32 %v2084, %v2075
    %v2092 = vadd.s32 %v2087, %v2089
    %vm2093 = vc.u32 %v2087, %v2089
    %v2094 = vadd.s32 %v2090, 1
    %v2095 = vsel %vm2093, %v2094, %v2090
    %v2096 = vadd.s32 %v2091, %v2095
    %v2097 = vadd.s32 %v2096, 536870912
    %v2098 = vshrl.u32 %v2097, 30
    %v2099 = vshll.u32 %v2098, 30
    %v2100 = vsub.s32 %v2096, %v2099
    %vm2101 = vcmp.lt.s32.totalorder %v2100, 0
    %v2102 = vsub.s32 0, %v2100
    %v2103 = vsel %vm2101, %v2102, %v2100
    %v2104 = vclz %v2103
    %v2105 = vsub.s32 %v2104, 2
    %vm2106 = vcmp.gt.s32.totalorder 0, %v2105
    %v2107 = vsel %vm2106, 0, %v2105
    %v2108 = vsub.s32 32, %v2107
    %v2109 = vshll.u32 %v2100, %v2107
    %v2110 = vshrl.u32 %v2092, %v2108
    %v2111 = vor.u32 %v2109, %v2110
    %v2112 = vsub.s32 4294967266, %v2107
    %v2113 = vadd.s32 %v2112, 127
    %v2114 = vshll.u32 %v2113, 23
    %v2115 = vor.u32 4788187, %v2114
    %v2116 = vand.u32 2147483647, %v2115
    %v2118 = vcvt.s32.f32 %v2111
    %v2119 = vmul.f32 %v2118, %v2116
    %v2120 = vxor.u32 %v2119, 2147483648
    %v2121 = vsel %vm2038, %v2120, %v2119
    %v2122 = vsub.s32 4, %v2098
    %v2123 = vsel %vm2038, %v2122, %v2098
    %v2124 = vsel %vm2037, %v2034, %v2121
    %v2125 = vsel %vm2037, 0, %v2123
    %v2126 = vcosq.f32.pop %v2124
    %v2127 = vsinq.f32.pop %v2124
    %vm2128 = vweird.f32 %v2034
    %v2129 = vand.u32 %v2125, 3
    %vm2130 = vcmp.lt.s32.totalorder %v2129, 2
    %vm2131 = vcmp.eq.s32.totalorder %v2129, 0
    %v2132 = vxor.u32 %v2127, 2147483648
    %v2133 = vsel %vm2131, %v2126, %v2132
    %vm2134 = vcmp.eq.s32.totalorder %v2129, 2
    %v2135 = vxor.u32 %v2126, 2147483648
    %v2136 = vsel %vm2134, %v2135, %v2127
    %v2137 = vsel %vm2130, %v2133, %v2136
    %v2138 = vsel %vm2128, nan, %v2137
    %v2139 = vand.u32 2147483647, %v2035
    %vm2140 = vcmp.le.f32.partialorder %v2139, 0.7853982
    %vm2141 = vcmp.lt.s32.totalorder %v2035, 0
    %v2142 = vand.u32 %v2035, 2139095040
    %v2143 = vshrl.u32 %v2142, 23
    %v2144 = vsub.s32 %v2143, 127
    %v2145 = vand.u32 2147483647, %v2035
    %v2146 = vand.u32 %v2145, 8388607
    %v2147 = vor.u32 %v2146, 8388608
    %v2148 = vsub.s32 0, %v2147
    %v2149 = vadd.s32 %v2144, 1
    %vm2150 = vcmp.gt.s32.totalorder %v2149, 0
    %v2151 = vsel %vm2150, %v2149, 0
    %v2152 = vshrl.u32 %v2151, 5
    %v2153 = vand.u32 %v2151, 31
    %v2154 = vsub.s32 32, %v2153
    %v2155 = vshrl.u32 683565275, %v2154
    %v2156 = vshll.u32 683565275, %v2153
    %v2157 = vshrl.u32 2475754826, %v2154
    %v2158 = vor.u32 %v2156, %v2157
    %v2159 = vshll.u32 2475754826, %v2153
    %v2160 = vshrl.u32 2131351028, %v2154
    %v2161 = vor.u32 %v2159, %v2160
    %v2162 = vshll.u32 2131351028, %v2153
    %v2163 = vshrl.u32 2102212464, %v2154
    %v2164 = vor.u32 %v2162, %v2163
    %v2165 = vshll.u32 2102212464, %v2153
    %v2166 = vshrl.u32 920167782, %v2154
    %v2167 = vor.u32 %v2165, %v2166
    %v2168 = vshll.u32 920167782, %v2153
    %v2169 = vshrl.u32 1326507024, %v2154
    %v2170 = vor.u32 %v2168, %v2169
    %vm2171 = vcmp.lt.s32.totalorder %v2152, 1
    %vm2172 = vcmp.lt.s32.totalorder %v2152, 2
    %vm2173 = vcmp.lt.s32.totalorder %v2152, 3
    %vm2174 = vcmp.lt.s32.totalorder %v2152, 4
    %v2175 = vsel %vm2171, %v2155, %v2158
    %v2176 = vsel %vm2174, %v2164, 2102212464
    %v2177 = vsel %vm2173, %v2161, %v2176
    %v2178 = vsel %vm2172, %v2175, %v2177
    %v2179 = vsel %vm2171, %v2158, %v2161
    %v2180 = vsel %vm2174, %v2167, 920167782
    %v2181 = vsel %vm2173, %v2164, %v2180
    %v2182 = vsel %vm2172, %v2179, %v2181
    %v2183 = vsel %vm2171, %v2161, %v2164
    %v2184 = vsel %vm2174, %v2170, 1326507024
    %v2185 = vsel %vm2173, %v2167, %v2184
    %v2186 = vsel %vm2172, %v2183, %v2185
    %v2187 = vshll.u32 %v2147, 8
    %v2188 = vmul.u32.u64.compose %v2187, %v2186
    %v2189 = vextract.low.u32 %v2188
    %v2190 = vextract.high.u32 %v2188
    %v2191 = vmul.u32.u64.compose %v2187, %v2182
    %v2192 = vextract.low.u32 %v2191
    %v2193 = vextract.high.u32 %v2191
    %v2194 = vmul.u32 %v2187, %v2178
    %v2195 = vadd.s32 %v2190, %v2192
    %vm2196 = vc.u32 %v2190, %v2192
    %v2197 = vadd.s32 %v2193, 1
    %v2198 = vsel %vm2196, %v2197, %v2193
    %v2199 = vadd.s32 %v2194, %v2198
    %v2200 = vadd.s32 %v2199, 536870912
    %v2201 = vshrl.u32 %v2200, 30
    %v2202 = vshll.u32 %v2201, 30
    %v2203 = vsub.s32 %v2199, %v2202
    %vm2204 = vcmp.lt.s32.totalorder %v2203, 0
    %v2205 = vsub.s32 0, %v2203
    %v2206 = vsel %vm2204, %v2205, %v2203
    %v2207 = vclz %v2206
    %v2208 = vsub.s32 %v2207, 2
    %vm2209 = vcmp.gt.s32.totalorder 0, %v2208
    %v2210 = vsel %vm2209, 0, %v2208
    %v2211 = vsub.s32 32, %v2210
    %v2212 = vshll.u32 %v2203, %v2210
    %v2213 = vshrl.u32 %v2195, %v2211
    %v2214 = vor.u32 %v2212, %v2213
    %v2215 = vsub.s32 4294967266, %v2210
    %v2216 = vadd.s32 %v2215, 127
    %v2217 = vshll.u32 %v2216, 23
    %v2218 = vor.u32 4788187, %v2217
    %v2219 = vand.u32 2147483647, %v2218
    %v2221 = vcvt.s32.f32 %v2214
    %v2222 = vmul.f32 %v2221, %v2219
    %v2223 = vxor.u32 %v2222, 2147483648
    %v2224 = vsel %vm2141, %v2223, %v2222
    %v2225 = vsub.s32 4, %v2201
    %v2226 = vsel %vm2141, %v2225, %v2201
    %v2227 = vsel %vm2140, %v2035, %v2224
    %v2228 = vsel %vm2140, 0, %v2226
    %v2229 = vcosq.f32.pop %v2227
    %v2230 = vsinq.f32.pop %v2227
    %vm2231 = vweird.f32 %v2035
    %v2232 = vand.u32 %v2228, 3
    %vm2233 = vcmp.lt.s32.totalorder %v2232, 2
    %vm2234 = vcmp.eq.s32.totalorder %v2232, 0
    %v2235 = vxor.u32 %v2230, 2147483648
    %v2236 = vsel %vm2234, %v2229, %v2235
    %vm2237 = vcmp.eq.s32.totalorder %v2232, 2
    %v2238 = vxor.u32 %v2229, 2147483648
    %v2239 = vsel %vm2237, %v2238, %v2230
    %v2240 = vsel %vm2233, %v2236, %v2239
    %v2241 = vsel %vm2231, nan, %v2240
    %v2242 = vadd.f32 %v2032, %v474
    %v2243 = vadd.f32 %v2033, %v474
    %v2244 = vand.u32 2147483647, %v2242
    %vm2245 = vcmp.le.f32.partialorder %v2244, 0.7853982
    %vm2246 = vcmp.lt.s32.totalorder %v2242, 0
    %v2247 = vand.u32 %v2242, 2139095040
    %v2248 = vshrl.u32 %v2247, 23
    %v2249 = vsub.s32 %v2248, 127
    %v2250 = vand.u32 2147483647, %v2242
    %v2251 = vand.u32 %v2250, 8388607
    %v2252 = vor.u32 %v2251, 8388608
    %v2253 = vsub.s32 0, %v2252
    %v2254 = vadd.s32 %v2249, 1
    %vm2255 = vcmp.gt.s32.totalorder %v2254, 0
    %v2256 = vsel %vm2255, %v2254, 0
    %v2257 = vshrl.u32 %v2256, 5
    %v2258 = vand.u32 %v2256, 31
    %v2259 = vsub.s32 32, %v2258
    %v2260 = vshrl.u32 683565275, %v2259
    %v2261 = vshll.u32 683565275, %v2258
    %v2262 = vshrl.u32 2475754826, %v2259
    %v2263 = vor.u32 %v2261, %v2262
    %v2264 = vshll.u32 2475754826, %v2258
    %v2265 = vshrl.u32 2131351028, %v2259
    %v2266 = vor.u32 %v2264, %v2265
    %v2267 = vshll.u32 2131351028, %v2258
    %v2268 = vshrl.u32 2102212464, %v2259
    %v2269 = vor.u32 %v2267, %v2268
    %v2270 = vshll.u32 2102212464, %v2258
    %v2271 = vshrl.u32 920167782, %v2259
    %v2272 = vor.u32 %v2270, %v2271
    %v2273 = vshll.u32 920167782, %v2258
    %v2274 = vshrl.u32 1326507024, %v2259
    %v2275 = vor.u32 %v2273, %v2274
    %vm2276 = vcmp.lt.s32.totalorder %v2257, 1
    %vm2277 = vcmp.lt.s32.totalorder %v2257, 2
    %vm2278 = vcmp.lt.s32.totalorder %v2257, 3
    %vm2279 = vcmp.lt.s32.totalorder %v2257, 4
    %v2280 = vsel %vm2276, %v2260, %v2263
    %v2281 = vsel %vm2279, %v2269, 2102212464
    %v2282 = vsel %vm2278, %v2266, %v2281
    %v2283 = vsel %vm2277, %v2280, %v2282
    %v2284 = vsel %vm2276, %v2263, %v2266
    %v2285 = vsel %vm2279, %v2272, 920167782
    %v2286 = vsel %vm2278, %v2269, %v2285
    %v2287 = vsel %vm2277, %v2284, %v2286
    %v2288 = vsel %vm2276, %v2266, %v2269
    %v2289 = vsel %vm2279, %v2275, 1326507024
    %v2290 = vsel %vm2278, %v2272, %v2289
    %v2291 = vsel %vm2277, %v2288, %v2290
    %v2292 = vshll.u32 %v2252, 8
    %v2293 = vmul.u32.u64.compose %v2292, %v2291
    %v2294 = vextract.low.u32 %v2293
    %v2295 = vextract.high.u32 %v2293
    %v2296 = vmul.u32.u64.compose %v2292, %v2287
    %v2297 = vextract.low.u32 %v2296
    %v2298 = vextract.high.u32 %v2296
    %v2299 = vmul.u32 %v2292, %v2283
    %v2300 = vadd.s32 %v2295, %v2297
    %vm2301 = vc.u32 %v2295, %v2297
    %v2302 = vadd.s32 %v2298, 1
    %v2303 = vsel %vm2301, %v2302, %v2298
    %v2304 = vadd.s32 %v2299, %v2303
    %v2305 = vadd.s32 %v2304, 536870912
    %v2306 = vshrl.u32 %v2305, 30
    %v2307 = vshll.u32 %v2306, 30
    %v2308 = vsub.s32 %v2304, %v2307
    %vm2309 = vcmp.lt.s32.totalorder %v2308, 0
    %v2310 = vsub.s32 0, %v2308
    %v2311 = vsel %vm2309, %v2310, %v2308
    %v2312 = vclz %v2311
    %v2313 = vsub.s32 %v2312, 2
    %vm2314 = vcmp.gt.s32.totalorder 0, %v2313
    %v2315 = vsel %vm2314, 0, %v2313
    %v2316 = vsub.s32 32, %v2315
    %v2317 = vshll.u32 %v2308, %v2315
    %v2318 = vshrl.u32 %v2300, %v2316
    %v2319 = vor.u32 %v2317, %v2318
    %v2320 = vsub.s32 4294967266, %v2315
    %v2321 = vadd.s32 %v2320, 127
    %v2322 = vshll.u32 %v2321, 23
    %v2323 = vor.u32 4788187, %v2322
    %v2324 = vand.u32 2147483647, %v2323
    %v2326 = vcvt.s32.f32 %v2319
    %v2327 = vmul.f32 %v2326, %v2324
    %v2328 = vxor.u32 %v2327, 2147483648
    %v2329 = vsel %vm2246, %v2328, %v2327
    %v2330 = vsub.s32 4, %v2306
    %v2331 = vsel %vm2246, %v2330, %v2306
    %v2332 = vsel %vm2245, %v2242, %v2329
    %v2333 = vsel %vm2245, 0, %v2331
    %v2334 = vcosq.f32.pop %v2332
    %v2335 = vsinq.f32.pop %v2332
    %vm2336 = vweird.f32 %v2242
    %v2337 = vand.u32 %v2333, 3
    %vm2338 = vcmp.lt.s32.totalorder %v2337, 2
    %vm2339 = vcmp.eq.s32.totalorder %v2337, 0
    %v2340 = vxor.u32 %v2335, 2147483648
    %v2341 = vsel %vm2339, %v2334, %v2340
    %vm2342 = vcmp.eq.s32.totalorder %v2337, 2
    %v2343 = vxor.u32 %v2334, 2147483648
    %v2344 = vsel %vm2342, %v2343, %v2335
    %v2345 = vsel %vm2338, %v2341, %v2344
    %v2346 = vsel %vm2336, nan, %v2345
    %v2347 = vand.u32 2147483647, %v2243
    %vm2348 = vcmp.le.f32.partialorder %v2347, 0.7853982
    %vm2349 = vcmp.lt.s32.totalorder %v2243, 0
    %v2350 = vand.u32 %v2243, 2139095040
    %v2351 = vshrl.u32 %v2350, 23
    %v2352 = vsub.s32 %v2351, 127
    %v2353 = vand.u32 2147483647, %v2243
    %v2354 = vand.u32 %v2353, 8388607
    %v2355 = vor.u32 %v2354, 8388608
    %v2356 = vsub.s32 0, %v2355
    %v2357 = vadd.s32 %v2352, 1
    %vm2358 = vcmp.gt.s32.totalorder %v2357, 0
    %v2359 = vsel %vm2358, %v2357, 0
    %v2360 = vshrl.u32 %v2359, 5
    %v2361 = vand.u32 %v2359, 31
    %v2362 = vsub.s32 32, %v2361
    %v2363 = vshrl.u32 683565275, %v2362
    %v2364 = vshll.u32 683565275, %v2361
    %v2365 = vshrl.u32 2475754826, %v2362
    %v2366 = vor.u32 %v2364, %v2365
    %v2367 = vshll.u32 2475754826, %v2361
    %v2368 = vshrl.u32 2131351028, %v2362
    %v2369 = vor.u32 %v2367, %v2368
    %v2370 = vshll.u32 2131351028, %v2361
    %v2371 = vshrl.u32 2102212464, %v2362
    %v2372 = vor.u32 %v2370, %v2371
    %v2373 = vshll.u32 2102212464, %v2361
    %v2374 = vshrl.u32 920167782, %v2362
    %v2375 = vor.u32 %v2373, %v2374
    %v2376 = vshll.u32 920167782, %v2361
    %v2377 = vshrl.u32 1326507024, %v2362
    %v2378 = vor.u32 %v2376, %v2377
    %vm2379 = vcmp.lt.s32.totalorder %v2360, 1
    %vm2380 = vcmp.lt.s32.totalorder %v2360, 2
    %vm2381 = vcmp.lt.s32.totalorder %v2360, 3
    %vm2382 = vcmp.lt.s32.totalorder %v2360, 4
    %v2383 = vsel %vm2379, %v2363, %v2366
    %v2384 = vsel %vm2382, %v2372, 2102212464
    %v2385 = vsel %vm2381, %v2369, %v2384
    %v2386 = vsel %vm2380, %v2383, %v2385
    %v2387 = vsel %vm2379, %v2366, %v2369
    %v2388 = vsel %vm2382, %v2375, 920167782
    %v2389 = vsel %vm2381, %v2372, %v2388
    %v2390 = vsel %vm2380, %v2387, %v2389
    %v2391 = vsel %vm2379, %v2369, %v2372
    %v2392 = vsel %vm2382, %v2378, 1326507024
    %v2393 = vsel %vm2381, %v2375, %v2392
    %v2394 = vsel %vm2380, %v2391, %v2393
    %v2395 = vshll.u32 %v2355, 8
    %v2396 = vmul.u32.u64.compose %v2395, %v2394
    %v2397 = vextract.low.u32 %v2396
    %v2398 = vextract.high.u32 %v2396
    %v2399 = vmul.u32.u64.compose %v2395, %v2390
    %v2400 = vextract.low.u32 %v2399
    %v2401 = vextract.high.u32 %v2399
    %v2402 = vmul.u32 %v2395, %v2386
    %v2403 = vadd.s32 %v2398, %v2400
    %vm2404 = vc.u32 %v2398, %v2400
    %v2405 = vadd.s32 %v2401, 1
    %v2406 = vsel %vm2404, %v2405, %v2401
    %v2407 = vadd.s32 %v2402, %v2406
    %v2408 = vadd.s32 %v2407, 536870912
    %v2409 = vshrl.u32 %v2408, 30
    %v2410 = vshll.u32 %v2409, 30
    %v2411 = vsub.s32 %v2407, %v2410
    %vm2412 = vcmp.lt.s32.totalorder %v2411, 0
    %v2413 = vsub.s32 0, %v2411
    %v2414 = vsel %vm2412, %v2413, %v2411
    %v2415 = vclz %v2414
    %v2416 = vsub.s32 %v2415, 2
    %vm2417 = vcmp.gt.s32.totalorder 0, %v2416
    %v2418 = vsel %vm2417, 0, %v2416
    %v2419 = vsub.s32 32, %v2418
    %v2420 = vshll.u32 %v2411, %v2418
    %v2421 = vshrl.u32 %v2403, %v2419
    %v2422 = vor.u32 %v2420, %v2421
    %v2423 = vsub.s32 4294967266, %v2418
    %v2424 = vadd.s32 %v2423, 127
    %v2425 = vshll.u32 %v2424, 23
    %v2426 = vor.u32 4788187, %v2425
    %v2427 = vand.u32 2147483647, %v2426
    %v2429 = vcvt.s32.f32 %v2422
    %v2430 = vmul.f32 %v2429, %v2427
    %v2431 = vxor.u32 %v2430, 2147483648
    %v2432 = vsel %vm2349, %v2431, %v2430
    %v2433 = vsub.s32 4, %v2409
    %v2434 = vsel %vm2349, %v2433, %v2409
    %v2435 = vsel %vm2348, %v2243, %v2432
    %v2436 = vsel %vm2348, 0, %v2434
    %v2437 = vcosq.f32.pop %v2435
    %v2438 = vsinq.f32.pop %v2435
    %vm2439 = vweird.f32 %v2243
    %v2440 = vand.u32 %v2436, 3
    %vm2441 = vcmp.lt.s32.totalorder %v2440, 2
    %vm2442 = vcmp.eq.s32.totalorder %v2440, 0
    %v2443 = vxor.u32 %v2438, 2147483648
    %v2444 = vsel %vm2442, %v2437, %v2443
    %vm2445 = vcmp.eq.s32.totalorder %v2440, 2
    %v2446 = vxor.u32 %v2437, 2147483648
    %v2447 = vsel %vm2445, %v2446, %v2438
    %v2448 = vsel %vm2441, %v2444, %v2447
    %v2449 = vsel %vm2439, nan, %v2448
    %v2450 = vadd.f32 %v2032, %v683
    %v2451 = vadd.f32 %v2033, %v683
    %v2452 = vand.u32 2147483647, %v2450
    %vm2453 = vcmp.le.f32.partialorder %v2452, 0.7853982
    %vm2454 = vcmp.lt.s32.totalorder %v2450, 0
    %v2455 = vand.u32 %v2450, 2139095040
    %v2456 = vshrl.u32 %v2455, 23
    %v2457 = vsub.s32 %v2456, 127
    %v2458 = vand.u32 2147483647, %v2450
    %v2459 = vand.u32 %v2458, 8388607
    %v2460 = vor.u32 %v2459, 8388608
    %v2461 = vsub.s32 0, %v2460
    %v2462 = vadd.s32 %v2457, 1
    %vm2463 = vcmp.gt.s32.totalorder %v2462, 0
    %v2464 = vsel %vm2463, %v2462, 0
    %v2465 = vshrl.u32 %v2464, 5
    %v2466 = vand.u32 %v2464, 31
    %v2467 = vsub.s32 32, %v2466
    %v2468 = vshrl.u32 683565275, %v2467
    %v2469 = vshll.u32 683565275, %v2466
    %v2470 = vshrl.u32 2475754826, %v2467
    %v2471 = vor.u32 %v2469, %v2470
    %v2472 = vshll.u32 2475754826, %v2466
    %v2473 = vshrl.u32 2131351028, %v2467
    %v2474 = vor.u32 %v2472, %v2473
    %v2475 = vshll.u32 2131351028, %v2466
    %v2476 = vshrl.u32 2102212464, %v2467
    %v2477 = vor.u32 %v2475, %v2476
    %v2478 = vshll.u32 2102212464, %v2466
    %v2479 = vshrl.u32 920167782, %v2467
    %v2480 = vor.u32 %v2478, %v2479
    %v2481 = vshll.u32 920167782, %v2466
    %v2482 = vshrl.u32 1326507024, %v2467
    %v2483 = vor.u32 %v2481, %v2482
    %vm2484 = vcmp.lt.s32.totalorder %v2465, 1
    %vm2485 = vcmp.lt.s32.totalorder %v2465, 2
    %vm2486 = vcmp.lt.s32.totalorder %v2465, 3
    %vm2487 = vcmp.lt.s32.totalorder %v2465, 4
    %v2488 = vsel %vm2484, %v2468, %v2471
    %v2489 = vsel %vm2487, %v2477, 2102212464
    %v2490 = vsel %vm2486, %v2474, %v2489
    %v2491 = vsel %vm2485, %v2488, %v2490
    %v2492 = vsel %vm2484, %v2471, %v2474
    %v2493 = vsel %vm2487, %v2480, 920167782
    %v2494 = vsel %vm2486, %v2477, %v2493
    %v2495 = vsel %vm2485, %v2492, %v2494
    %v2496 = vsel %vm2484, %v2474, %v2477
    %v2497 = vsel %vm2487, %v2483, 1326507024
    %v2498 = vsel %vm2486, %v2480, %v2497
    %v2499 = vsel %vm2485, %v2496, %v2498
    %v2500 = vshll.u32 %v2460, 8
    %v2501 = vmul.u32.u64.compose %v2500, %v2499
    %v2502 = vextract.low.u32 %v2501
    %v2503 = vextract.high.u32 %v2501
    %v2504 = vmul.u32.u64.compose %v2500, %v2495
    %v2505 = vextract.low.u32 %v2504
    %v2506 = vextract.high.u32 %v2504
    %v2507 = vmul.u32 %v2500, %v2491
    %v2508 = vadd.s32 %v2503, %v2505
    %vm2509 = vc.u32 %v2503, %v2505
    %v2510 = vadd.s32 %v2506, 1
    %v2511 = vsel %vm2509, %v2510, %v2506
    %v2512 = vadd.s32 %v2507, %v2511
    %v2513 = vadd.s32 %v2512, 536870912
    %v2514 = vshrl.u32 %v2513, 30
    %v2515 = vshll.u32 %v2514, 30
    %v2516 = vsub.s32 %v2512, %v2515
    %vm2517 = vcmp.lt.s32.totalorder %v2516, 0
    %v2518 = vsub.s32 0, %v2516
    %v2519 = vsel %vm2517, %v2518, %v2516
    %v2520 = vclz %v2519
    %v2521 = vsub.s32 %v2520, 2
    %vm2522 = vcmp.gt.s32.totalorder 0, %v2521
    %v2523 = vsel %vm2522, 0, %v2521
    %v2524 = vsub.s32 32, %v2523
    %v2525 = vshll.u32 %v2516, %v2523
    %v2526 = vshrl.u32 %v2508, %v2524
    %v2527 = vor.u32 %v2525, %v2526
    %v2528 = vsub.s32 4294967266, %v2523
    %v2529 = vadd.s32 %v2528, 127
    %v2530 = vshll.u32 %v2529, 23
    %v2531 = vor.u32 4788187, %v2530
    %v2532 = vand.u32 2147483647, %v2531
    %v2534 = vcvt.s32.f32 %v2527
    %v2535 = vmul.f32 %v2534, %v2532
    %v2536 = vxor.u32 %v2535, 2147483648
    %v2537 = vsel %vm2454, %v2536, %v2535
    %v2538 = vsub.s32 4, %v2514
    %v2539 = vsel %vm2454, %v2538, %v2514
    %v2540 = vsel %vm2453, %v2450, %v2537
    %v2541 = vsel %vm2453, 0, %v2539
    %v2542 = vcosq.f32.pop %v2540
    %v2543 = vsinq.f32.pop %v2540
    %vm2544 = vweird.f32 %v2450
    %v2545 = vand.u32 %v2541, 3
    %vm2546 = vcmp.lt.s32.totalorder %v2545, 2
    %vm2547 = vcmp.eq.s32.totalorder %v2545, 0
    %v2548 = vxor.u32 %v2543, 2147483648
    %v2549 = vsel %vm2547, %v2542, %v2548
    %vm2550 = vcmp.eq.s32.totalorder %v2545, 2
    %v2551 = vxor.u32 %v2542, 2147483648
    %v2552 = vsel %vm2550, %v2551, %v2543
    %v2553 = vsel %vm2546, %v2549, %v2552
    %v2554 = vsel %vm2544, nan, %v2553
    %v2555 = vand.u32 2147483647, %v2451
    %vm2556 = vcmp.le.f32.partialorder %v2555, 0.7853982
    %vm2557 = vcmp.lt.s32.totalorder %v2451, 0
    %v2558 = vand.u32 %v2451, 2139095040
    %v2559 = vshrl.u32 %v2558, 23
    %v2560 = vsub.s32 %v2559, 127
    %v2561 = vand.u32 2147483647, %v2451
    %v2562 = vand.u32 %v2561, 8388607
    %v2563 = vor.u32 %v2562, 8388608
    %v2564 = vsub.s32 0, %v2563
    %v2565 = vadd.s32 %v2560, 1
    %vm2566 = vcmp.gt.s32.totalorder %v2565, 0
    %v2567 = vsel %vm2566, %v2565, 0
    %v2568 = vshrl.u32 %v2567, 5
    %v2569 = vand.u32 %v2567, 31
    %v2570 = vsub.s32 32, %v2569
    %v2571 = vshrl.u32 683565275, %v2570
    %v2572 = vshll.u32 683565275, %v2569
    %v2573 = vshrl.u32 2475754826, %v2570
    %v2574 = vor.u32 %v2572, %v2573
    %v2575 = vshll.u32 2475754826, %v2569
    %v2576 = vshrl.u32 2131351028, %v2570
    %v2577 = vor.u32 %v2575, %v2576
    %v2578 = vshll.u32 2131351028, %v2569
    %v2579 = vshrl.u32 2102212464, %v2570
    %v2580 = vor.u32 %v2578, %v2579
    %v2581 = vshll.u32 2102212464, %v2569
    %v2582 = vshrl.u32 920167782, %v2570
    %v2583 = vor.u32 %v2581, %v2582
    %v2584 = vshll.u32 920167782, %v2569
    %v2585 = vshrl.u32 1326507024, %v2570
    %v2586 = vor.u32 %v2584, %v2585
    %vm2587 = vcmp.lt.s32.totalorder %v2568, 1
    %vm2588 = vcmp.lt.s32.totalorder %v2568, 2
    %vm2589 = vcmp.lt.s32.totalorder %v2568, 3
    %vm2590 = vcmp.lt.s32.totalorder %v2568, 4
    %v2591 = vsel %vm2587, %v2571, %v2574
    %v2592 = vsel %vm2590, %v2580, 2102212464
    %v2593 = vsel %vm2589, %v2577, %v2592
    %v2594 = vsel %vm2588, %v2591, %v2593
    %v2595 = vsel %vm2587, %v2574, %v2577
    %v2596 = vsel %vm2590, %v2583, 920167782
    %v2597 = vsel %vm2589, %v2580, %v2596
    %v2598 = vsel %vm2588, %v2595, %v2597
    %v2599 = vsel %vm2587, %v2577, %v2580
    %v2600 = vsel %vm2590, %v2586, 1326507024
    %v2601 = vsel %vm2589, %v2583, %v2600
    %v2602 = vsel %vm2588, %v2599, %v2601
    %v2603 = vshll.u32 %v2563, 8
    %v2604 = vmul.u32.u64.compose %v2603, %v2602
    %v2605 = vextract.low.u32 %v2604
    %v2606 = vextract.high.u32 %v2604
    %v2607 = vmul.u32.u64.compose %v2603, %v2598
    %v2608 = vextract.low.u32 %v2607
    %v2609 = vextract.high.u32 %v2607
    %v2610 = vmul.u32 %v2603, %v2594
    %v2611 = vadd.s32 %v2606, %v2608
    %vm2612 = vc.u32 %v2606, %v2608
    %v2613 = vadd.s32 %v2609, 1
    %v2614 = vsel %vm2612, %v2613, %v2609
    %v2615 = vadd.s32 %v2610, %v2614
    %v2616 = vadd.s32 %v2615, 536870912
    %v2617 = vshrl.u32 %v2616, 30
    %v2618 = vshll.u32 %v2617, 30
    %v2619 = vsub.s32 %v2615, %v2618
    %vm2620 = vcmp.lt.s32.totalorder %v2619, 0
    %v2621 = vsub.s32 0, %v2619
    %v2622 = vsel %vm2620, %v2621, %v2619
    %v2623 = vclz %v2622
    %v2624 = vsub.s32 %v2623, 2
    %vm2625 = vcmp.gt.s32.totalorder 0, %v2624
    %v2626 = vsel %vm2625, 0, %v2624
    %v2627 = vsub.s32 32, %v2626
    %v2628 = vshll.u32 %v2619, %v2626
    %v2629 = vshrl.u32 %v2611, %v2627
    %v2630 = vor.u32 %v2628, %v2629
    %v2631 = vsub.s32 4294967266, %v2626
    %v2632 = vadd.s32 %v2631, 127
    %v2633 = vshll.u32 %v2632, 23
    %v2634 = vor.u32 4788187, %v2633
    %v2635 = vand.u32 2147483647, %v2634
    %v2637 = vcvt.s32.f32 %v2630
    %v2638 = vmul.f32 %v2637, %v2635
    %v2639 = vxor.u32 %v2638, 2147483648
    %v2640 = vsel %vm2557, %v2639, %v2638
    %v2641 = vsub.s32 4, %v2617
    %v2642 = vsel %vm2557, %v2641, %v2617
    %v2643 = vsel %vm2556, %v2451, %v2640
    %v2644 = vsel %vm2556, 0, %v2642
    %v2645 = vcosq.f32.pop %v2643
    %v2646 = vsinq.f32.pop %v2643
    %vm2647 = vweird.f32 %v2451
    %v2648 = vand.u32 %v2644, 3
    %vm2649 = vcmp.lt.s32.totalorder %v2648, 2
    %vm2650 = vcmp.eq.s32.totalorder %v2648, 0
    %v2651 = vxor.u32 %v2646, 2147483648
    %v2652 = vsel %vm2650, %v2645, %v2651
    %vm2653 = vcmp.eq.s32.totalorder %v2648, 2
    %v2654 = vxor.u32 %v2645, 2147483648
    %v2655 = vsel %vm2653, %v2654, %v2646
    %v2656 = vsel %vm2649, %v2652, %v2655
    %v2657 = vsel %vm2647, nan, %v2656
    %2658 = vmatprep.subr.mxu0 0.0
    %2659 = vmatpush1.msra.mxu0 %v2138
    %2660 = vmatprep.subr.mxu0 0.0
    %2661 = vmatpush1.msra.mxu0 %v2241
    %2662 = vmatprep.subr.mxu0 0.0
    %2663 = vmatpush1.msra.mxu0 0.0
    %2664 = vmatprep.subr.mxu0 0.0
    %2665 = vmatpush1.msra.mxu0 0.0
    %2666 = vmatprep.subr.mxu0 0.0
    %2667 = vmatpush1.msra.mxu0 0.0
    %2668 = vmatprep.subr.mxu0 0.0
    %2669 = vmatpush1.msra.mxu0 0.0
    %2670 = vmatprep.subr.mxu0 0.0
    %2671 = vmatpush1.msra.mxu0 0.0
    %2672 = vmatprep.subr.mxu0 0.0
    %2673 = vmatpush1.msra.mxu0 0.0
    %2674 = vmatprep.subr.mxu0 0.0
    %2675 = vmatpush1.msra.mxu0 0.0
    %2676 = vmatprep.subr.mxu0 0.0
    %2677 = vmatpush1.msra.mxu0 0.0
    %2678 = vmatprep.subr.mxu0 0.0
    %2679 = vmatpush1.msra.mxu0 0.0
    %2680 = vmatprep.subr.mxu0 0.0
    %2681 = vmatpush1.msra.mxu0 0.0
    %2682 = vmatprep.subr.mxu0 0.0
    %2683 = vmatpush1.msra.mxu0 0.0
    %2684 = vmatprep.subr.mxu0 0.0
    %2685 = vmatpush1.msra.mxu0 0.0
    %2686 = vmatprep.subr.mxu0 0.0
    %2687 = vmatpush1.msra.mxu0 0.0
    %2688 = vmatprep.subr.mxu0 0.0
    %2689 = vmatpush1.msra.mxu0 0.0
    %2690 = vmatprep.subr.mxu0 0.0
    %2691 = vmatpush1.msra.mxu0 0.0
    %2692 = vmatprep.subr.mxu0 0.0
    %2693 = vmatpush1.msra.mxu0 0.0
    %2694 = vmatprep.subr.mxu0 0.0
    %2695 = vmatpush1.msra.mxu0 0.0
    %2696 = vmatprep.subr.mxu0 0.0
    %2697 = vmatpush1.msra.mxu0 0.0
    %2698 = vmatprep.subr.mxu0 0.0
    %2699 = vmatpush1.msra.mxu0 0.0
    %2700 = vmatprep.subr.mxu0 0.0
    %2701 = vmatpush1.msra.mxu0 0.0
    %2702 = vmatprep.subr.mxu0 0.0
    %2703 = vmatpush1.msra.mxu0 0.0
    %2704 = vmatprep.subr.mxu0 0.0
    %2705 = vmatpush1.msra.mxu0 0.0
    %2706 = vmatprep.subr.mxu0 0.0
    %2707 = vmatpush1.msra.mxu0 0.0
    %2708 = vmatprep.subr.mxu0 0.0
    %2709 = vmatpush1.msra.mxu0 0.0
    %2710 = vmatprep.subr.mxu0 0.0
    %2711 = vmatpush1.msra.mxu0 0.0
    %2712 = vmatprep.subr.mxu0 0.0
    %2713 = vmatpush1.msra.mxu0 0.0
    %2714 = vmatprep.subr.mxu0 0.0
    %2715 = vmatpush1.msra.mxu0 0.0
    %2716 = vmatprep.subr.mxu0 0.0
    %2717 = vmatpush1.msra.mxu0 0.0
    %2718 = vmatprep.subr.mxu0 0.0
    %2719 = vmatpush1.msra.mxu0 0.0
    %2720 = vmatprep.subr.mxu0 0.0
    %2721 = vmatpush1.msra.mxu0 0.0
    %2722 = vmatprep.mubr.f32.mxu0 0.0
    %2723 = vmatmul.mubr.f32.gmra.mrb[0].mxu0 %v894
    %v2724 = vpop.f32.mrb[0].mxu0
    %v2725 = vadd.f32 0.0, %v2724
    %v2726 = vpop.f32.mrb[0].mxu0
    %2727 = vmatprep.mubr.f32.mxu0 0.0
    %2728 = vmatmul.mubr.f32.gmra.mrb[0].mxu0 %v897
    %v2729 = vpop.f32.mrb[0].mxu0
    %v2730 = vadd.f32 0.0, %v2729
    %v2731 = vpop.f32.mrb[0].mxu0
    %2732 = vmatprep.mubr.f32.mxu0 0.0
    %2733 = vmatmul.mubr.f32.gmra.mrb[0].mxu0 %v900
    %v2734 = vpop.f32.mrb[0].mxu0
    %v2735 = vadd.f32 0.0, %v2734
    %v2736 = vpop.f32.mrb[0].mxu0
    %2737 = vmatprep.mubr.f32.mxu0 0.0
    %2738 = vmatmul.mubr.f32.gmra.mrb[0].mxu0 %v903
    %v2739 = vpop.f32.mrb[0].mxu0
    %v2740 = vadd.f32 0.0, %v2739
    %v2741 = vpop.f32.mrb[0].mxu0
    %2742 = vmatprep.mubr.f32.mxu0 0.0
    %2743 = vmatmul.mubr.f32.gmra.mrb[0].mxu0 %v906
    %v2744 = vpop.f32.mrb[0].mxu0
    %v2745 = vadd.f32 0.0, %v2744
    %v2746 = vpop.f32.mrb[0].mxu0
    %2747 = vmatprep.mubr.f32.mxu0 0.0
    %2748 = vmatmul.mubr.f32.gmra.mrb[0].mxu0 %v909
    %v2749 = vpop.f32.mrb[0].mxu0
    %v2750 = vadd.f32 0.0, %v2749
    %v2751 = vpop.f32.mrb[0].mxu0
    %2752 = vmatprep.mubr.f32.mxu0 0.0
    %2753 = vmatmul.mubr.f32.gmra.mrb[0].mxu0 %v912
    %v2754 = vpop.f32.mrb[0].mxu0
    %v2755 = vadd.f32 0.0, %v2754
    %v2756 = vpop.f32.mrb[0].mxu0
    %2757 = vmatprep.mubr.f32.mxu0 0.0
    %2758 = vmatmul.mubr.f32.gmra.mrb[0].mxu0 %v915
    %v2759 = vpop.f32.mrb[0].mxu0
    %v2760 = vadd.f32 0.0, %v2759
    %v2761 = vpop.f32.mrb[0].mxu0
    %2762 = vdwg.mxu0
    %v2763 = vmul.f32 %v2725, %v149
    %v2764 = vmul.f32 %v2730, %v150
    %v2765 = vmul.f32 %v2735, %v151
    %v2766 = vmul.f32 %v2740, %v152
    %v2767 = vmul.f32 %v2745, %v153
    %v2768 = vmul.f32 %v2750, %v154
    %v2769 = vmul.f32 %v2755, %v155
    %v2770 = vmul.f32 %v2760, %v156
    %v2772 = vsel %vm225, %v2763, 0
    %v2775 = vsel %vm225, %v2764, 0
    %v2778 = vsel %vm225, %v2765, 0
    %v2781 = vsel %vm225, %v2766, 0
    %v2784 = vsel %vm225, %v2767, 0
    %v2787 = vsel %vm225, %v2768, 0
    %v2790 = vsel %vm225, %v2769, 0
    %v2793 = vsel %vm225, %v2770, 0
    %v2796 = vsel %vm225, %v2346, 0
    %v2799 = vsel %vm225, %v2449, 0
    %2801 = vmatprep.subr.mxu0 0.0
    %2802 = vmatpush1.xpose.msra.mxu0 %v2796
    %2803 = vmatprep.subr.mxu0 0.0
    %2804 = vmatpush1.xpose.msra.mxu0 %v2799
    %2805 = vmatprep.subr.mxu0 0.0
    %2806 = vmatpush1.xpose.msra.mxu0 0.0
    %2807 = vmatprep.subr.mxu0 0.0
    %2808 = vmatpush1.xpose.msra.mxu0 0.0
    %2809 = vmatprep.subr.mxu0 0.0
    %2810 = vmatpush1.xpose.msra.mxu0 0.0
    %2811 = vmatprep.subr.mxu0 0.0
    %2812 = vmatpush1.xpose.msra.mxu0 0.0
    %2813 = vmatprep.subr.mxu0 0.0
    %2814 = vmatpush1.xpose.msra.mxu0 0.0
    %2815 = vmatprep.subr.mxu0 0.0
    %2816 = vmatpush1.xpose.msra.mxu0 0.0
    %2817 = vmatprep.subr.mxu0 0.0
    %2818 = vmatpush1.xpose.msra.mxu0 0.0
    %2819 = vmatprep.subr.mxu0 0.0
    %2820 = vmatpush1.xpose.msra.mxu0 0.0
    %2821 = vmatprep.subr.mxu0 0.0
    %2822 = vmatpush1.xpose.msra.mxu0 0.0
    %2823 = vmatprep.subr.mxu0 0.0
    %2824 = vmatpush1.xpose.msra.mxu0 0.0
    %2825 = vmatprep.subr.mxu0 0.0
    %2826 = vmatpush1.xpose.msra.mxu0 0.0
    %2827 = vmatprep.subr.mxu0 0.0
    %2828 = vmatpush1.xpose.msra.mxu0 0.0
    %2829 = vmatprep.subr.mxu0 0.0
    %2830 = vmatpush1.xpose.msra.mxu0 0.0
    %2831 = vmatprep.subr.mxu0 0.0
    %2832 = vmatpush1.xpose.msra.mxu0 0.0
    %2833 = vmatprep.subr.mxu0 0.0
    %2834 = vmatpush1.xpose.msra.mxu0 0.0
    %2835 = vmatprep.subr.mxu0 0.0
    %2836 = vmatpush1.xpose.msra.mxu0 0.0
    %2837 = vmatprep.subr.mxu0 0.0
    %2838 = vmatpush1.xpose.msra.mxu0 0.0
    %2839 = vmatprep.subr.mxu0 0.0
    %2840 = vmatpush1.xpose.msra.mxu0 0.0
    %2841 = vmatprep.subr.mxu0 0.0
    %2842 = vmatpush1.xpose.msra.mxu0 0.0
    %2843 = vmatprep.subr.mxu0 0.0
    %2844 = vmatpush1.xpose.msra.mxu0 0.0
    %2845 = vmatprep.subr.mxu0 0.0
    %2846 = vmatpush1.xpose.msra.mxu0 0.0
    %2847 = vmatprep.subr.mxu0 0.0
    %2848 = vmatpush1.xpose.msra.mxu0 0.0
    %2849 = vmatprep.subr.mxu0 0.0
    %2850 = vmatpush1.xpose.msra.mxu0 0.0
    %2851 = vmatprep.subr.mxu0 0.0
    %2852 = vmatpush1.xpose.msra.mxu0 0.0
    %2853 = vmatprep.subr.mxu0 0.0
    %2854 = vmatpush1.xpose.msra.mxu0 0.0
    %2855 = vmatprep.subr.mxu0 0.0
    %2856 = vmatpush1.xpose.msra.mxu0 0.0
    %2857 = vmatprep.subr.mxu0 0.0
    %2858 = vmatpush1.xpose.msra.mxu0 0.0
    %2859 = vmatprep.subr.mxu0 0.0
    %2860 = vmatpush1.xpose.msra.mxu0 0.0
    %2861 = vmatprep.subr.mxu0 0.0
    %2862 = vmatpush1.xpose.msra.mxu0 0.0
    %2863 = vmatprep.subr.mxu0 0.0
    %2864 = vmatpush1.xpose.msra.mxu0 0.0
    %2865 = vmatprep.mubr.f32.mxu0 0.0
    %2866 = vmatmul.mubr.f32.gmra.mrb[0].mxu0 %v2772
    %v2867 = vpop.f32.mrb[0].mxu0
    %v2868 = vadd.f32 %v207, %v2867
    %v2869 = vpop.f32.mrb[0].mxu0
    %2870 = vmatprep.mubr.f32.mxu0 0.0
    %2871 = vmatmul.mubr.f32.gmra.mrb[0].mxu0 %v2775
    %v2872 = vpop.f32.mrb[0].mxu0
    %v2873 = vadd.f32 %v208, %v2872
    %v2874 = vpop.f32.mrb[0].mxu0
    %2875 = vmatprep.mubr.f32.mxu0 0.0
    %2876 = vmatmul.mubr.f32.gmra.mrb[0].mxu0 %v2778
    %v2877 = vpop.f32.mrb[0].mxu0
    %v2878 = vadd.f32 %v209, %v2877
    %v2879 = vpop.f32.mrb[0].mxu0
    %2880 = vmatprep.mubr.f32.mxu0 0.0
    %2881 = vmatmul.mubr.f32.gmra.mrb[0].mxu0 %v2781
    %v2882 = vpop.f32.mrb[0].mxu0
    %v2883 = vadd.f32 %v210, %v2882
    %v2884 = vpop.f32.mrb[0].mxu0
    %2885 = vmatprep.mubr.f32.mxu0 0.0
    %2886 = vmatmul.mubr.f32.gmra.mrb[0].mxu0 %v2784
    %v2887 = vpop.f32.mrb[0].mxu0
    %v2888 = vadd.f32 %v211, %v2887
    %v2889 = vpop.f32.mrb[0].mxu0
    %2890 = vmatprep.mubr.f32.mxu0 0.0
    %2891 = vmatmul.mubr.f32.gmra.mrb[0].mxu0 %v2787
    %v2892 = vpop.f32.mrb[0].mxu0
    %v2893 = vadd.f32 %v212, %v2892
    %v2894 = vpop.f32.mrb[0].mxu0
    %2895 = vmatprep.mubr.f32.mxu0 0.0
    %2896 = vmatmul.mubr.f32.gmra.mrb[0].mxu0 %v2790
    %v2897 = vpop.f32.mrb[0].mxu0
    %v2898 = vadd.f32 %v213, %v2897
    %v2899 = vpop.f32.mrb[0].mxu0
    %2900 = vmatprep.mubr.f32.mxu0 0.0
    %2901 = vmatmul.mubr.f32.gmra.mrb[0].mxu0 %v2793
    %v2902 = vpop.f32.mrb[0].mxu0
    %v2903 = vadd.f32 %v214, %v2902
    %v2904 = vpop.f32.mrb[0].mxu0
    %2905 = vdwg.mxu0
    %v2906 = vmul.f32 %v2868, 1.442695
    %v2907 = vpow.pop %v2906
    %v2908 = vmul.f32 %v2873, 1.442695
    %v2909 = vpow.pop %v2908
    %v2910 = vmul.f32 %v2878, 1.442695
    %v2911 = vpow.pop %v2910
    %v2912 = vmul.f32 %v2883, 1.442695
    %v2913 = vpow.pop %v2912
    %v2914 = vmul.f32 %v2888, 1.442695
    %v2915 = vpow.pop %v2914
    %v2916 = vmul.f32 %v2893, 1.442695
    %v2917 = vpow.pop %v2916
    %v2918 = vmul.f32 %v2898, 1.442695
    %v2919 = vpow.pop %v2918
    %v2920 = vmul.f32 %v2903, 1.442695
    %v2921 = vpow.pop %v2920
    %v2922 = vsel %vm892, %v2907, 0.0
    %2923 = vadd.xlane.f32.xlu0 %v2922
    %v2924 = vpop.xlane.xlu0 %2923
    %v2925 = vsel %vm892, %v2909, 0.0
    %2926 = vadd.xlane.f32.xlu0 %v2925
    %v2927 = vpop.xlane.xlu0 %2926
    %v2928 = vsel %vm892, %v2911, 0.0
    %2929 = vadd.xlane.f32.xlu0 %v2928
    %v2930 = vpop.xlane.xlu0 %2929
    %v2931 = vsel %vm892, %v2913, 0.0
    %2932 = vadd.xlane.f32.xlu0 %v2931
    %v2933 = vpop.xlane.xlu0 %2932
    %v2934 = vsel %vm892, %v2915, 0.0
    %2935 = vadd.xlane.f32.xlu0 %v2934
    %v2936 = vpop.xlane.xlu0 %2935
    %v2937 = vsel %vm892, %v2917, 0.0
    %2938 = vadd.xlane.f32.xlu0 %v2937
    %v2939 = vpop.xlane.xlu0 %2938
    %v2940 = vsel %vm892, %v2919, 0.0
    %2941 = vadd.xlane.f32.xlu0 %v2940
    %v2942 = vpop.xlane.xlu0 %2941
    %v2943 = vsel %vm892, %v2921, 0.0
    %2944 = vadd.xlane.f32.xlu0 %v2943
    %v2945 = vpop.xlane.xlu0 %2944
    %v2946 = vrcp.pop %v2924
    %v2947 = vrcp.pop %v2927
    %v2948 = vrcp.pop %v2930
    %v2949 = vrcp.pop %v2933
    %v2950 = vrcp.pop %v2936
    %v2951 = vrcp.pop %v2939
    %v2952 = vrcp.pop %v2942
    %v2953 = vrcp.pop %v2945
    %v2954 = vmul.f32 %v2907, %v2946
    %v2955 = vmul.f32 %v2909, %v2947
    %v2956 = vmul.f32 %v2911, %v2948
    %v2957 = vmul.f32 %v2913, %v2949
    %v2958 = vmul.f32 %v2915, %v2950
    %v2959 = vmul.f32 %v2917, %v2951
    %v2960 = vmul.f32 %v2919, %v2952
    %v2961 = vmul.f32 %v2921, %v2953
    %v2963 = vsel %vm892, %v2954, 0
    %v2966 = vsel %vm892, %v2955, 0
    %v2969 = vsel %vm892, %v2956, 0
    %v2972 = vsel %vm892, %v2957, 0
    %v2975 = vsel %vm892, %v2958, 0
    %v2978 = vsel %vm892, %v2959, 0
    %v2981 = vsel %vm892, %v2960, 0
    %v2984 = vsel %vm892, %v2961, 0
    %2986 = vmatprep.subr.mxu0 0.0
    %2987 = vmatpush1.msra.mxu0 %v2554
    %2988 = vmatprep.subr.mxu0 0.0
    %2989 = vmatpush1.msra.mxu0 %v2657
    %2990 = vmatprep.subr.mxu0 0.0
    %2991 = vmatpush1.msra.mxu0 0.0
    %2992 = vmatprep.subr.mxu0 0.0
    %2993 = vmatpush1.msra.mxu0 0.0
    %2994 = vmatprep.subr.mxu0 0.0
    %2995 = vmatpush1.msra.mxu0 0.0
    %2996 = vmatprep.subr.mxu0 0.0
    %2997 = vmatpush1.msra.mxu0 0.0
    %2998 = vmatprep.subr.mxu0 0.0
    %2999 = vmatpush1.msra.mxu0 0.0
    %3000 = vmatprep.subr.mxu0 0.0
    %3001 = vmatpush1.msra.mxu0 0.0
    %3002 = vmatprep.subr.mxu0 0.0
    %3003 = vmatpush1.msra.mxu0 0.0
    %3004 = vmatprep.subr.mxu0 0.0
    %3005 = vmatpush1.msra.mxu0 0.0
    %3006 = vmatprep.subr.mxu0 0.0
    %3007 = vmatpush1.msra.mxu0 0.0
    %3008 = vmatprep.subr.mxu0 0.0
    %3009 = vmatpush1.msra.mxu0 0.0
    %3010 = vmatprep.subr.mxu0 0.0
    %3011 = vmatpush1.msra.mxu0 0.0
    %3012 = vmatprep.subr.mxu0 0.0
    %3013 = vmatpush1.msra.mxu0 0.0
    %3014 = vmatprep.subr.mxu0 0.0
    %3015 = vmatpush1.msra.mxu0 0.0
    %3016 = vmatprep.subr.mxu0 0.0
    %3017 = vmatpush1.msra.mxu0 0.0
    %3018 = vmatprep.subr.mxu0 0.0
    %3019 = vmatpush1.msra.mxu0 0.0
    %3020 = vmatprep.subr.mxu0 0.0
    %3021 = vmatpush1.msra.mxu0 0.0
    %3022 = vmatprep.subr.mxu0 0.0
    %3023 = vmatpush1.msra.mxu0 0.0
    %3024 = vmatprep.subr.mxu0 0.0
    %3025 = vmatpush1.msra.mxu0 0.0
    %3026 = vmatprep.subr.mxu0 0.0
    %3027 = vmatpush1.msra.mxu0 0.0
    %3028 = vmatprep.subr.mxu0 0.0
    %3029 = vmatpush1.msra.mxu0 0.0
    %3030 = vmatprep.subr.mxu0 0.0
    %3031 = vmatpush1.msra.mxu0 0.0
    %3032 = vmatprep.subr.mxu0 0.0
    %3033 = vmatpush1.msra.mxu0 0.0
    %3034 = vmatprep.subr.mxu0 0.0
    %3035 = vmatpush1.msra.mxu0 0.0
    %3036 = vmatprep.subr.mxu0 0.0
    %3037 = vmatpush1.msra.mxu0 0.0
    %3038 = vmatprep.subr.mxu0 0.0
    %3039 = vmatpush1.msra.mxu0 0.0
    %3040 = vmatprep.subr.mxu0 0.0
    %3041 = vmatpush1.msra.mxu0 0.0
    %3042 = vmatprep.subr.mxu0 0.0
    %3043 = vmatpush1.msra.mxu0 0.0
    %3044 = vmatprep.subr.mxu0 0.0
    %3045 = vmatpush1.msra.mxu0 0.0
    %3046 = vmatprep.subr.mxu0 0.0
    %3047 = vmatpush1.msra.mxu0 0.0
    %3048 = vmatprep.subr.mxu0 0.0
    %3049 = vmatpush1.msra.mxu0 0.0
    %3050 = vmatprep.mubr.f32.mxu0 0.0
    %3051 = vmatmul.mubr.f32.gmra.mrb[0].mxu0 %v2963
    %v3052 = vpop.f32.mrb[0].mxu0
    %v3053 = vadd.f32 0.0, %v3052
    %v3054 = vpop.f32.mrb[0].mxu0
    %3055 = vmatprep.mubr.f32.mxu0 0.0
    %3056 = vmatmul.mubr.f32.gmra.mrb[0].mxu0 %v2966
    %v3057 = vpop.f32.mrb[0].mxu0
    %v3058 = vadd.f32 0.0, %v3057
    %v3059 = vpop.f32.mrb[0].mxu0
    %3060 = vmatprep.mubr.f32.mxu0 0.0
    %3061 = vmatmul.mubr.f32.gmra.mrb[0].mxu0 %v2969
    %v3062 = vpop.f32.mrb[0].mxu0
    %v3063 = vadd.f32 0.0, %v3062
    %v3064 = vpop.f32.mrb[0].mxu0
    %3065 = vmatprep.mubr.f32.mxu0 0.0
    %3066 = vmatmul.mubr.f32.gmra.mrb[0].mxu0 %v2972
    %v3067 = vpop.f32.mrb[0].mxu0
    %v3068 = vadd.f32 0.0, %v3067
    %v3069 = vpop.f32.mrb[0].mxu0
    %3070 = vmatprep.mubr.f32.mxu0 0.0
    %3071 = vmatmul.mubr.f32.gmra.mrb[0].mxu0 %v2975
    %v3072 = vpop.f32.mrb[0].mxu0
    %v3073 = vadd.f32 0.0, %v3072
    %v3074 = vpop.f32.mrb[0].mxu0
    %3075 = vmatprep.mubr.f32.mxu0 0.0
    %3076 = vmatmul.mubr.f32.gmra.mrb[0].mxu0 %v2978
    %v3077 = vpop.f32.mrb[0].mxu0
    %v3078 = vadd.f32 0.0, %v3077
    %v3079 = vpop.f32.mrb[0].mxu0
    %3080 = vmatprep.mubr.f32.mxu0 0.0
    %3081 = vmatmul.mubr.f32.gmra.mrb[0].mxu0 %v2981
    %v3082 = vpop.f32.mrb[0].mxu0
    %v3083 = vadd.f32 0.0, %v3082
    %v3084 = vpop.f32.mrb[0].mxu0
    %3085 = vmatprep.mubr.f32.mxu0 0.0
    %3086 = vmatmul.mubr.f32.gmra.mrb[0].mxu0 %v2984
    %v3087 = vpop.f32.mrb[0].mxu0
    %v3088 = vadd.f32 0.0, %v3087
    %v3089 = vpop.f32.mrb[0].mxu0
    %3090 = vdwg.mxu0
    %v3091 = vmul.f32 %v3053, %v149
    %v3092 = vmul.f32 %v3058, %v150
    %v3093 = vmul.f32 %v3063, %v151
    %v3094 = vmul.f32 %v3068, %v152
    %v3095 = vmul.f32 %v3073, %v153
    %v3096 = vmul.f32 %v3078, %v154
    %v3097 = vmul.f32 %v3083, %v155
    %v3098 = vmul.f32 %v3088, %v156
    %3099 = vmatprep.subr.mxu0 0.0
    %3100 = vmatpush1.msra.mxu0 %v3091
    %3101 = vmatprep.subr.mxu0 0.0
    %3102 = vmatpush1.msra.mxu0 %v3092
    %3103 = vmatprep.subr.mxu0 0.0
    %3104 = vmatpush1.msra.mxu0 %v3093
    %3105 = vmatprep.subr.mxu0 0.0
    %3106 = vmatpush1.msra.mxu0 %v3094
    %3107 = vmatprep.subr.mxu0 0.0
    %3108 = vmatpush1.msra.mxu0 %v3095
    %3109 = vmatprep.subr.mxu0 0.0
    %3110 = vmatpush1.msra.mxu0 %v3096
    %3111 = vmatprep.subr.mxu0 0.0
    %3112 = vmatpush1.msra.mxu0 %v3097
    %3113 = vmatprep.subr.mxu0 0.0
    %3114 = vmatpush1.msra.mxu0 %v3098
    %3115 = vmatprep.subr.mxu0 0.0
    %3116 = vmatpush1.msra.mxu0 0.0
    %3117 = vmatprep.subr.mxu0 0.0
    %3118 = vmatpush1.msra.mxu0 0.0
    %3119 = vmatprep.subr.mxu0 0.0
    %3120 = vmatpush1.msra.mxu0 0.0
    %3121 = vmatprep.subr.mxu0 0.0
    %3122 = vmatpush1.msra.mxu0 0.0
    %3123 = vmatprep.subr.mxu0 0.0
    %3124 = vmatpush1.msra.mxu0 0.0
    %3125 = vmatprep.subr.mxu0 0.0
    %3126 = vmatpush1.msra.mxu0 0.0
    %3127 = vmatprep.subr.mxu0 0.0
    %3128 = vmatpush1.msra.mxu0 0.0
    %3129 = vmatprep.subr.mxu0 0.0
    %3130 = vmatpush1.msra.mxu0 0.0
    %3131 = vmatprep.subr.mxu0 0.0
    %3132 = vmatpush1.msra.mxu0 0.0
    %3133 = vmatprep.subr.mxu0 0.0
    %3134 = vmatpush1.msra.mxu0 0.0
    %3135 = vmatprep.subr.mxu0 0.0
    %3136 = vmatpush1.msra.mxu0 0.0
    %3137 = vmatprep.subr.mxu0 0.0
    %3138 = vmatpush1.msra.mxu0 0.0
    %3139 = vmatprep.subr.mxu0 0.0
    %3140 = vmatpush1.msra.mxu0 0.0
    %3141 = vmatprep.subr.mxu0 0.0
    %3142 = vmatpush1.msra.mxu0 0.0
    %3143 = vmatprep.subr.mxu0 0.0
    %3144 = vmatpush1.msra.mxu0 0.0
    %3145 = vmatprep.subr.mxu0 0.0
    %3146 = vmatpush1.msra.mxu0 0.0
    %3147 = vmatprep.subr.mxu0 0.0
    %3148 = vmatpush1.msra.mxu0 0.0
    %3149 = vmatprep.subr.mxu0 0.0
    %3150 = vmatpush1.msra.mxu0 0.0
    %3151 = vmatprep.subr.mxu0 0.0
    %3152 = vmatpush1.msra.mxu0 0.0
    %3153 = vmatprep.subr.mxu0 0.0
    %3154 = vmatpush1.msra.mxu0 0.0
    %3155 = vmatprep.subr.mxu0 0.0
    %3156 = vmatpush1.msra.mxu0 0.0
    %3157 = vmatprep.subr.mxu0 0.0
    %3158 = vmatpush1.msra.mxu0 0.0
    %3159 = vmatprep.subr.mxu0 0.0
    %3160 = vmatpush1.msra.mxu0 0.0
    %3161 = vmatprep.subr.mxu0 0.0
    %3162 = vmatpush1.msra.mxu0 0.0
    %3163 = vmatprep.mubr.f32.mxu0 0.0
    %3164 = vmatmul.mubr.f32.gmra.mrb[0].mxu0 %v1361
    %v3165 = vpop.f32.mrb[0].mxu0
    %v3166 = vadd.f32 %v1358, %v3165
    %v3167 = vpop.f32.mrb[0].mxu0
    %3168 = vmatprep.mubr.f32.mxu0 0.0
    %3169 = vmatmul.mubr.f32.gmra.mrb[0].mxu0 %v1364
    %v3170 = vpop.f32.mrb[0].mxu0
    %v3171 = vadd.f32 %v1358, %v3170
    %v3172 = vpop.f32.mrb[0].mxu0
    %3173 = vdwg.mxu0
    %v3174 = vand.u32 2147483647, %v3166
    %vm3175 = vcmp.le.f32.partialorder %v3174, 0.7853982
    %vm3176 = vcmp.lt.s32.totalorder %v3166, 0
    %v3177 = vand.u32 %v3166, 2139095040
    %v3178 = vshrl.u32 %v3177, 23
    %v3179 = vsub.s32 %v3178, 127
    %v3180 = vand.u32 2147483647, %v3166
    %v3181 = vand.u32 %v3180, 8388607
    %v3182 = vor.u32 %v3181, 8388608
    %v3183 = vsub.s32 0, %v3182
    %v3184 = vadd.s32 %v3179, 1
    %vm3185 = vcmp.gt.s32.totalorder %v3184, 0
    %v3186 = vsel %vm3185, %v3184, 0
    %v3187 = vshrl.u32 %v3186, 5
    %v3188 = vand.u32 %v3186, 31
    %v3189 = vsub.s32 32, %v3188
    %v3190 = vshrl.u32 683565275, %v3189
    %v3191 = vshll.u32 683565275, %v3188
    %v3192 = vshrl.u32 2475754826, %v3189
    %v3193 = vor.u32 %v3191, %v3192
    %v3194 = vshll.u32 2475754826, %v3188
    %v3195 = vshrl.u32 2131351028, %v3189
    %v3196 = vor.u32 %v3194, %v3195
    %v3197 = vshll.u32 2131351028, %v3188
    %v3198 = vshrl.u32 2102212464, %v3189
    %v3199 = vor.u32 %v3197, %v3198
    %v3200 = vshll.u32 2102212464, %v3188
    %v3201 = vshrl.u32 920167782, %v3189
    %v3202 = vor.u32 %v3200, %v3201
    %v3203 = vshll.u32 920167782, %v3188
    %v3204 = vshrl.u32 1326507024, %v3189
    %v3205 = vor.u32 %v3203, %v3204
    %vm3206 = vcmp.lt.s32.totalorder %v3187, 1
    %vm3207 = vcmp.lt.s32.totalorder %v3187, 2
    %vm3208 = vcmp.lt.s32.totalorder %v3187, 3
    %vm3209 = vcmp.lt.s32.totalorder %v3187, 4
    %v3210 = vsel %vm3206, %v3190, %v3193
    %v3211 = vsel %vm3209, %v3199, 2102212464
    %v3212 = vsel %vm3208, %v3196, %v3211
    %v3213 = vsel %vm3207, %v3210, %v3212
    %v3214 = vsel %vm3206, %v3193, %v3196
    %v3215 = vsel %vm3209, %v3202, 920167782
    %v3216 = vsel %vm3208, %v3199, %v3215
    %v3217 = vsel %vm3207, %v3214, %v3216
    %v3218 = vsel %vm3206, %v3196, %v3199
    %v3219 = vsel %vm3209, %v3205, 1326507024
    %v3220 = vsel %vm3208, %v3202, %v3219
    %v3221 = vsel %vm3207, %v3218, %v3220
    %v3222 = vshll.u32 %v3182, 8
    %v3223 = vmul.u32.u64.compose %v3222, %v3221
    %v3224 = vextract.low.u32 %v3223
    %v3225 = vextract.high.u32 %v3223
    %v3226 = vmul.u32.u64.compose %v3222, %v3217
    %v3227 = vextract.low.u32 %v3226
    %v3228 = vextract.high.u32 %v3226
    %v3229 = vmul.u32 %v3222, %v3213
    %v3230 = vadd.s32 %v3225, %v3227
    %vm3231 = vc.u32 %v3225, %v3227
    %v3232 = vadd.s32 %v3228, 1
    %v3233 = vsel %vm3231, %v3232, %v3228
    %v3234 = vadd.s32 %v3229, %v3233
    %v3235 = vadd.s32 %v3234, 536870912
    %v3236 = vshrl.u32 %v3235, 30
    %v3237 = vshll.u32 %v3236, 30
    %v3238 = vsub.s32 %v3234, %v3237
    %vm3239 = vcmp.lt.s32.totalorder %v3238, 0
    %v3240 = vsub.s32 0, %v3238
    %v3241 = vsel %vm3239, %v3240, %v3238
    %v3242 = vclz %v3241
    %v3243 = vsub.s32 %v3242, 2
    %vm3244 = vcmp.gt.s32.totalorder 0, %v3243
    %v3245 = vsel %vm3244, 0, %v3243
    %v3246 = vsub.s32 32, %v3245
    %v3247 = vshll.u32 %v3238, %v3245
    %v3248 = vshrl.u32 %v3230, %v3246
    %v3249 = vor.u32 %v3247, %v3248
    %v3250 = vsub.s32 4294967266, %v3245
    %v3251 = vadd.s32 %v3250, 127
    %v3252 = vshll.u32 %v3251, 23
    %v3253 = vor.u32 4788187, %v3252
    %v3254 = vand.u32 2147483647, %v3253
    %v3256 = vcvt.s32.f32 %v3249
    %v3257 = vmul.f32 %v3256, %v3254
    %v3258 = vxor.u32 %v3257, 2147483648
    %v3259 = vsel %vm3176, %v3258, %v3257
    %v3260 = vsub.s32 4, %v3236
    %v3261 = vsel %vm3176, %v3260, %v3236
    %v3262 = vsel %vm3175, %v3166, %v3259
    %v3263 = vsel %vm3175, 0, %v3261
    %v3264 = vcosq.f32.pop %v3262
    %v3265 = vsinq.f32.pop %v3262
    %vm3266 = vweird.f32 %v3166
    %v3267 = vand.u32 %v3263, 3
    %vm3268 = vcmp.lt.s32.totalorder %v3267, 2
    %vm3269 = vcmp.eq.s32.totalorder %v3267, 0
    %v3270 = vxor.u32 %v3265, 2147483648
    %v3271 = vsel %vm3269, %v3264, %v3270
    %vm3272 = vcmp.eq.s32.totalorder %v3267, 2
    %v3273 = vxor.u32 %v3264, 2147483648
    %v3274 = vsel %vm3272, %v3273, %v3265
    %v3275 = vsel %vm3268, %v3271, %v3274
    %v3276 = vsel %vm3266, nan, %v3275
    %v3277 = vand.u32 2147483647, %v3171
    %vm3278 = vcmp.le.f32.partialorder %v3277, 0.7853982
    %vm3279 = vcmp.lt.s32.totalorder %v3171, 0
    %v3280 = vand.u32 %v3171, 2139095040
    %v3281 = vshrl.u32 %v3280, 23
    %v3282 = vsub.s32 %v3281, 127
    %v3283 = vand.u32 2147483647, %v3171
    %v3284 = vand.u32 %v3283, 8388607
    %v3285 = vor.u32 %v3284, 8388608
    %v3286 = vsub.s32 0, %v3285
    %v3287 = vadd.s32 %v3282, 1
    %vm3288 = vcmp.gt.s32.totalorder %v3287, 0
    %v3289 = vsel %vm3288, %v3287, 0
    %v3290 = vshrl.u32 %v3289, 5
    %v3291 = vand.u32 %v3289, 31
    %v3292 = vsub.s32 32, %v3291
    %v3293 = vshrl.u32 683565275, %v3292
    %v3294 = vshll.u32 683565275, %v3291
    %v3295 = vshrl.u32 2475754826, %v3292
    %v3296 = vor.u32 %v3294, %v3295
    %v3297 = vshll.u32 2475754826, %v3291
    %v3298 = vshrl.u32 2131351028, %v3292
    %v3299 = vor.u32 %v3297, %v3298
    %v3300 = vshll.u32 2131351028, %v3291
    %v3301 = vshrl.u32 2102212464, %v3292
    %v3302 = vor.u32 %v3300, %v3301
    %v3303 = vshll.u32 2102212464, %v3291
    %v3304 = vshrl.u32 920167782, %v3292
    %v3305 = vor.u32 %v3303, %v3304
    %v3306 = vshll.u32 920167782, %v3291
    %v3307 = vshrl.u32 1326507024, %v3292
    %v3308 = vor.u32 %v3306, %v3307
    %vm3309 = vcmp.lt.s32.totalorder %v3290, 1
    %vm3310 = vcmp.lt.s32.totalorder %v3290, 2
    %vm3311 = vcmp.lt.s32.totalorder %v3290, 3
    %vm3312 = vcmp.lt.s32.totalorder %v3290, 4
    %v3313 = vsel %vm3309, %v3293, %v3296
    %v3314 = vsel %vm3312, %v3302, 2102212464
    %v3315 = vsel %vm3311, %v3299, %v3314
    %v3316 = vsel %vm3310, %v3313, %v3315
    %v3317 = vsel %vm3309, %v3296, %v3299
    %v3318 = vsel %vm3312, %v3305, 920167782
    %v3319 = vsel %vm3311, %v3302, %v3318
    %v3320 = vsel %vm3310, %v3317, %v3319
    %v3321 = vsel %vm3309, %v3299, %v3302
    %v3322 = vsel %vm3312, %v3308, 1326507024
    %v3323 = vsel %vm3311, %v3305, %v3322
    %v3324 = vsel %vm3310, %v3321, %v3323
    %v3325 = vshll.u32 %v3285, 8
    %v3326 = vmul.u32.u64.compose %v3325, %v3324
    %v3327 = vextract.low.u32 %v3326
    %v3328 = vextract.high.u32 %v3326
    %v3329 = vmul.u32.u64.compose %v3325, %v3320
    %v3330 = vextract.low.u32 %v3329
    %v3331 = vextract.high.u32 %v3329
    %v3332 = vmul.u32 %v3325, %v3316
    %v3333 = vadd.s32 %v3328, %v3330
    %vm3334 = vc.u32 %v3328, %v3330
    %v3335 = vadd.s32 %v3331, 1
    %v3336 = vsel %vm3334, %v3335, %v3331
    %v3337 = vadd.s32 %v3332, %v3336
    %v3338 = vadd.s32 %v3337, 536870912
    %v3339 = vshrl.u32 %v3338, 30
    %v3340 = vshll.u32 %v3339, 30
    %v3341 = vsub.s32 %v3337, %v3340
    %vm3342 = vcmp.lt.s32.totalorder %v3341, 0
    %v3343 = vsub.s32 0, %v3341
    %v3344 = vsel %vm3342, %v3343, %v3341
    %v3345 = vclz %v3344
    %v3346 = vsub.s32 %v3345, 2
    %vm3347 = vcmp.gt.s32.totalorder 0, %v3346
    %v3348 = vsel %vm3347, 0, %v3346
    %v3349 = vsub.s32 32, %v3348
    %v3350 = vshll.u32 %v3341, %v3348
    %v3351 = vshrl.u32 %v3333, %v3349
    %v3352 = vor.u32 %v3350, %v3351
    %v3353 = vsub.s32 4294967266, %v3348
    %v3354 = vadd.s32 %v3353, 127
    %v3355 = vshll.u32 %v3354, 23
    %v3356 = vor.u32 4788187, %v3355
    %v3357 = vand.u32 2147483647, %v3356
    %v3359 = vcvt.s32.f32 %v3352
    %v3360 = vmul.f32 %v3359, %v3357
    %v3361 = vxor.u32 %v3360, 2147483648
    %v3362 = vsel %vm3279, %v3361, %v3360
    %v3363 = vsub.s32 4, %v3339
    %v3364 = vsel %vm3279, %v3363, %v3339
    %v3365 = vsel %vm3278, %v3171, %v3362
    %v3366 = vsel %vm3278, 0, %v3364
    %v3367 = vcosq.f32.pop %v3365
    %v3368 = vsinq.f32.pop %v3365
    %vm3369 = vweird.f32 %v3171
    %v3370 = vand.u32 %v3366, 3
    %vm3371 = vcmp.lt.s32.totalorder %v3370, 2
    %vm3372 = vcmp.eq.s32.totalorder %v3370, 0
    %v3373 = vxor.u32 %v3368, 2147483648
    %v3374 = vsel %vm3372, %v3367, %v3373
    %vm3375 = vcmp.eq.s32.totalorder %v3370, 2
    %v3376 = vxor.u32 %v3367, 2147483648
    %v3377 = vsel %vm3375, %v3376, %v3368
    %v3378 = vsel %vm3371, %v3374, %v3377
    %v3379 = vsel %vm3369, nan, %v3378
    %v3381 = vsel %vm225, %v2032, 0
    %v3384 = vsel %vm225, %v2033, 0
    %3386 = vmatprep.subr.mxu0 0.0
    %3387 = vmatpush1.msra.mxu0 %v43
    %3388 = vmatprep.subr.mxu0 0.0
    %3389 = vmatpush1.msra.mxu0 %v44
    %3390 = vmatprep.subr.mxu0 0.0
    %3391 = vmatpush1.msra.mxu0 %v45
    %3392 = vmatprep.subr.mxu0 0.0
    %3393 = vmatpush1.msra.mxu0 %v46
    %3394 = vmatprep.subr.mxu0 0.0
    %3395 = vmatpush1.msra.mxu0 0.0
    %3396 = vmatprep.subr.mxu0 0.0
    %3397 = vmatpush1.msra.mxu0 0.0
    %3398 = vmatprep.subr.mxu0 0.0
    %3399 = vmatpush1.msra.mxu0 0.0
    %3400 = vmatprep.subr.mxu0 0.0
    %3401 = vmatpush1.msra.mxu0 0.0
    %3402 = vmatprep.subr.mxu0 0.0
    %3403 = vmatpush1.msra.mxu0 0.0
    %3404 = vmatprep.subr.mxu0 0.0
    %3405 = vmatpush1.msra.mxu0 0.0
    %3406 = vmatprep.subr.mxu0 0.0
    %3407 = vmatpush1.msra.mxu0 0.0
    %3408 = vmatprep.subr.mxu0 0.0
    %3409 = vmatpush1.msra.mxu0 0.0
    %3410 = vmatprep.subr.mxu0 0.0
    %3411 = vmatpush1.msra.mxu0 0.0
    %3412 = vmatprep.subr.mxu0 0.0
    %3413 = vmatpush1.msra.mxu0 0.0
    %3414 = vmatprep.subr.mxu0 0.0
    %3415 = vmatpush1.msra.mxu0 0.0
    %3416 = vmatprep.subr.mxu0 0.0
    %3417 = vmatpush1.msra.mxu0 0.0
    %3418 = vmatprep.subr.mxu0 0.0
    %3419 = vmatpush1.msra.mxu0 0.0
    %3420 = vmatprep.subr.mxu0 0.0
    %3421 = vmatpush1.msra.mxu0 0.0
    %3422 = vmatprep.subr.mxu0 0.0
    %3423 = vmatpush1.msra.mxu0 0.0
    %3424 = vmatprep.subr.mxu0 0.0
    %3425 = vmatpush1.msra.mxu0 0.0
    %3426 = vmatprep.subr.mxu0 0.0
    %3427 = vmatpush1.msra.mxu0 0.0
    %3428 = vmatprep.subr.mxu0 0.0
    %3429 = vmatpush1.msra.mxu0 0.0
    %3430 = vmatprep.subr.mxu0 0.0
    %3431 = vmatpush1.msra.mxu0 0.0
    %3432 = vmatprep.subr.mxu0 0.0
    %3433 = vmatpush1.msra.mxu0 0.0
    %3434 = vmatprep.subr.mxu0 0.0
    %3435 = vmatpush1.msra.mxu0 0.0
    %3436 = vmatprep.subr.mxu0 0.0
    %3437 = vmatpush1.msra.mxu0 0.0
    %3438 = vmatprep.subr.mxu0 0.0
    %3439 = vmatpush1.msra.mxu0 0.0
    %3440 = vmatprep.subr.mxu0 0.0
    %3441 = vmatpush1.msra.mxu0 0.0
    %3442 = vmatprep.subr.mxu0 0.0
    %3443 = vmatpush1.msra.mxu0 0.0
    %3444 = vmatprep.subr.mxu0 0.0
    %3445 = vmatpush1.msra.mxu0 0.0
    %3446 = vmatprep.subr.mxu0 0.0
    %3447 = vmatpush1.msra.mxu0 0.0
    %3448 = vmatprep.subr.mxu0 0.0
    %3449 = vmatpush1.msra.mxu0 0.0
    %3450 = vmatprep.mubr.f32.mxu0 0.0
    %3451 = vmatmul.mubr.f32.gmra.mrb[0].mxu0 %v3381
    %v3452 = vpop.f32.mrb[0].mxu0
    %v3453 = vadd.f32 %v1650, %v3452
    %v3454 = vpop.f32.mrb[0].mxu0
    %3455 = vmatprep.mubr.f32.mxu0 0.0
    %3456 = vmatmul.mubr.f32.gmra.mrb[0].mxu0 %v3384
    %v3457 = vpop.f32.mrb[0].mxu0
    %v3458 = vadd.f32 %v1650, %v3457
    %v3459 = vpop.f32.mrb[0].mxu0
    %3460 = vdwg.mxu0
    %v3461 = vadd.f32 %v3453, %v1732
    %v3462 = vadd.f32 %v3458, %v1732
    %v3463 = vand.u32 2147483647, %v3461
    %vm3464 = vcmp.le.f32.partialorder %v3463, 0.7853982
    %vm3465 = vcmp.lt.s32.totalorder %v3461, 0
    %v3466 = vand.u32 %v3461, 2139095040
    %v3467 = vshrl.u32 %v3466, 23
    %v3468 = vsub.s32 %v3467, 127
    %v3469 = vand.u32 2147483647, %v3461
    %v3470 = vand.u32 %v3469, 8388607
    %v3471 = vor.u32 %v3470, 8388608
    %v3472 = vsub.s32 0, %v3471
    %v3473 = vadd.s32 %v3468, 1
    %vm3474 = vcmp.gt.s32.totalorder %v3473, 0
    %v3475 = vsel %vm3474, %v3473, 0
    %v3476 = vshrl.u32 %v3475, 5
    %v3477 = vand.u32 %v3475, 31
    %v3478 = vsub.s32 32, %v3477
    %v3479 = vshrl.u32 683565275, %v3478
    %v3480 = vshll.u32 683565275, %v3477
    %v3481 = vshrl.u32 2475754826, %v3478
    %v3482 = vor.u32 %v3480, %v3481
    %v3483 = vshll.u32 2475754826, %v3477
    %v3484 = vshrl.u32 2131351028, %v3478
    %v3485 = vor.u32 %v3483, %v3484
    %v3486 = vshll.u32 2131351028, %v3477
    %v3487 = vshrl.u32 2102212464, %v3478
    %v3488 = vor.u32 %v3486, %v3487
    %v3489 = vshll.u32 2102212464, %v3477
    %v3490 = vshrl.u32 920167782, %v3478
    %v3491 = vor.u32 %v3489, %v3490
    %v3492 = vshll.u32 920167782, %v3477
    %v3493 = vshrl.u32 1326507024, %v3478
    %v3494 = vor.u32 %v3492, %v3493
    %vm3495 = vcmp.lt.s32.totalorder %v3476, 1
    %vm3496 = vcmp.lt.s32.totalorder %v3476, 2
    %vm3497 = vcmp.lt.s32.totalorder %v3476, 3
    %vm3498 = vcmp.lt.s32.totalorder %v3476, 4
    %v3499 = vsel %vm3495, %v3479, %v3482
    %v3500 = vsel %vm3498, %v3488, 2102212464
    %v3501 = vsel %vm3497, %v3485, %v3500
    %v3502 = vsel %vm3496, %v3499, %v3501
    %v3503 = vsel %vm3495, %v3482, %v3485
    %v3504 = vsel %vm3498, %v3491, 920167782
    %v3505 = vsel %vm3497, %v3488, %v3504
    %v3506 = vsel %vm3496, %v3503, %v3505
    %v3507 = vsel %vm3495, %v3485, %v3488
    %v3508 = vsel %vm3498, %v3494, 1326507024
    %v3509 = vsel %vm3497, %v3491, %v3508
    %v3510 = vsel %vm3496, %v3507, %v3509
    %v3511 = vshll.u32 %v3471, 8
    %v3512 = vmul.u32.u64.compose %v3511, %v3510
    %v3513 = vextract.low.u32 %v3512
    %v3514 = vextract.high.u32 %v3512
    %v3515 = vmul.u32.u64.compose %v3511, %v3506
    %v3516 = vextract.low.u32 %v3515
    %v3517 = vextract.high.u32 %v3515
    %v3518 = vmul.u32 %v3511, %v3502
    %v3519 = vadd.s32 %v3514, %v3516
    %vm3520 = vc.u32 %v3514, %v3516
    %v3521 = vadd.s32 %v3517, 1
    %v3522 = vsel %vm3520, %v3521, %v3517
    %v3523 = vadd.s32 %v3518, %v3522
    %v3524 = vadd.s32 %v3523, 536870912
    %v3525 = vshrl.u32 %v3524, 30
    %v3526 = vshll.u32 %v3525, 30
    %v3527 = vsub.s32 %v3523, %v3526
    %vm3528 = vcmp.lt.s32.totalorder %v3527, 0
    %v3529 = vsub.s32 0, %v3527
    %v3530 = vsel %vm3528, %v3529, %v3527
    %v3531 = vclz %v3530
    %v3532 = vsub.s32 %v3531, 2
    %vm3533 = vcmp.gt.s32.totalorder 0, %v3532
    %v3534 = vsel %vm3533, 0, %v3532
    %v3535 = vsub.s32 32, %v3534
    %v3536 = vshll.u32 %v3527, %v3534
    %v3537 = vshrl.u32 %v3519, %v3535
    %v3538 = vor.u32 %v3536, %v3537
    %v3539 = vsub.s32 4294967266, %v3534
    %v3540 = vadd.s32 %v3539, 127
    %v3541 = vshll.u32 %v3540, 23
    %v3542 = vor.u32 4788187, %v3541
    %v3543 = vand.u32 2147483647, %v3542
    %v3545 = vcvt.s32.f32 %v3538
    %v3546 = vmul.f32 %v3545, %v3543
    %v3547 = vxor.u32 %v3546, 2147483648
    %v3548 = vsel %vm3465, %v3547, %v3546
    %v3549 = vsub.s32 4, %v3525
    %v3550 = vsel %vm3465, %v3549, %v3525
    %v3551 = vsel %vm3464, %v3461, %v3548
    %v3552 = vsel %vm3464, 0, %v3550
    %v3553 = vcosq.f32.pop %v3551
    %v3554 = vsinq.f32.pop %v3551
    %vm3555 = vweird.f32 %v3461
    %v3556 = vand.u32 %v3552, 3
    %vm3557 = vcmp.lt.s32.totalorder %v3556, 2
    %vm3558 = vcmp.eq.s32.totalorder %v3556, 0
    %v3559 = vxor.u32 %v3554, 2147483648
    %v3560 = vsel %vm3558, %v3553, %v3559
    %vm3561 = vcmp.eq.s32.totalorder %v3556, 2
    %v3562 = vxor.u32 %v3553, 2147483648
    %v3563 = vsel %vm3561, %v3562, %v3554
    %v3564 = vsel %vm3557, %v3560, %v3563
    %v3565 = vsel %vm3555, nan, %v3564
    %v3566 = vand.u32 2147483647, %v3462
    %vm3567 = vcmp.le.f32.partialorder %v3566, 0.7853982
    %vm3568 = vcmp.lt.s32.totalorder %v3462, 0
    %v3569 = vand.u32 %v3462, 2139095040
    %v3570 = vshrl.u32 %v3569, 23
    %v3571 = vsub.s32 %v3570, 127
    %v3572 = vand.u32 2147483647, %v3462
    %v3573 = vand.u32 %v3572, 8388607
    %v3574 = vor.u32 %v3573, 8388608
    %v3575 = vsub.s32 0, %v3574
    %v3576 = vadd.s32 %v3571, 1
    %vm3577 = vcmp.gt.s32.totalorder %v3576, 0
    %v3578 = vsel %vm3577, %v3576, 0
    %v3579 = vshrl.u32 %v3578, 5
    %v3580 = vand.u32 %v3578, 31
    %v3581 = vsub.s32 32, %v3580
    %v3582 = vshrl.u32 683565275, %v3581
    %v3583 = vshll.u32 683565275, %v3580
    %v3584 = vshrl.u32 2475754826, %v3581
    %v3585 = vor.u32 %v3583, %v3584
    %v3586 = vshll.u32 2475754826, %v3580
    %v3587 = vshrl.u32 2131351028, %v3581
    %v3588 = vor.u32 %v3586, %v3587
    %v3589 = vshll.u32 2131351028, %v3580
    %v3590 = vshrl.u32 2102212464, %v3581
    %v3591 = vor.u32 %v3589, %v3590
    %v3592 = vshll.u32 2102212464, %v3580
    %v3593 = vshrl.u32 920167782, %v3581
    %v3594 = vor.u32 %v3592, %v3593
    %v3595 = vshll.u32 920167782, %v3580
    %v3596 = vshrl.u32 1326507024, %v3581
    %v3597 = vor.u32 %v3595, %v3596
    %vm3598 = vcmp.lt.s32.totalorder %v3579, 1
    %vm3599 = vcmp.lt.s32.totalorder %v3579, 2
    %vm3600 = vcmp.lt.s32.totalorder %v3579, 3
    %vm3601 = vcmp.lt.s32.totalorder %v3579, 4
    %v3602 = vsel %vm3598, %v3582, %v3585
    %v3603 = vsel %vm3601, %v3591, 2102212464
    %v3604 = vsel %vm3600, %v3588, %v3603
    %v3605 = vsel %vm3599, %v3602, %v3604
    %v3606 = vsel %vm3598, %v3585, %v3588
    %v3607 = vsel %vm3601, %v3594, 920167782
    %v3608 = vsel %vm3600, %v3591, %v3607
    %v3609 = vsel %vm3599, %v3606, %v3608
    %v3610 = vsel %vm3598, %v3588, %v3591
    %v3611 = vsel %vm3601, %v3597, 1326507024
    %v3612 = vsel %vm3600, %v3594, %v3611
    %v3613 = vsel %vm3599, %v3610, %v3612
    %v3614 = vshll.u32 %v3574, 8
    %v3615 = vmul.u32.u64.compose %v3614, %v3613
    %v3616 = vextract.low.u32 %v3615
    %v3617 = vextract.high.u32 %v3615
    %v3618 = vmul.u32.u64.compose %v3614, %v3609
    %v3619 = vextract.low.u32 %v3618
    %v3620 = vextract.high.u32 %v3618
    %v3621 = vmul.u32 %v3614, %v3605
    %v3622 = vadd.s32 %v3617, %v3619
    %vm3623 = vc.u32 %v3617, %v3619
    %v3624 = vadd.s32 %v3620, 1
    %v3625 = vsel %vm3623, %v3624, %v3620
    %v3626 = vadd.s32 %v3621, %v3625
    %v3627 = vadd.s32 %v3626, 536870912
    %v3628 = vshrl.u32 %v3627, 30
    %v3629 = vshll.u32 %v3628, 30
    %v3630 = vsub.s32 %v3626, %v3629
    %vm3631 = vcmp.lt.s32.totalorder %v3630, 0
    %v3632 = vsub.s32 0, %v3630
    %v3633 = vsel %vm3631, %v3632, %v3630
    %v3634 = vclz %v3633
    %v3635 = vsub.s32 %v3634, 2
    %vm3636 = vcmp.gt.s32.totalorder 0, %v3635
    %v3637 = vsel %vm3636, 0, %v3635
    %v3638 = vsub.s32 32, %v3637
    %v3639 = vshll.u32 %v3630, %v3637
    %v3640 = vshrl.u32 %v3622, %v3638
    %v3641 = vor.u32 %v3639, %v3640
    %v3642 = vsub.s32 4294967266, %v3637
    %v3643 = vadd.s32 %v3642, 127
    %v3644 = vshll.u32 %v3643, 23
    %v3645 = vor.u32 4788187, %v3644
    %v3646 = vand.u32 2147483647, %v3645
    %v3648 = vcvt.s32.f32 %v3641
    %v3649 = vmul.f32 %v3648, %v3646
    %v3650 = vxor.u32 %v3649, 2147483648
    %v3651 = vsel %vm3568, %v3650, %v3649
    %v3652 = vsub.s32 4, %v3628
    %v3653 = vsel %vm3568, %v3652, %v3628
    %v3654 = vsel %vm3567, %v3462, %v3651
    %v3655 = vsel %vm3567, 0, %v3653
    %v3656 = vcosq.f32.pop %v3654
    %v3657 = vsinq.f32.pop %v3654
    %vm3658 = vweird.f32 %v3462
    %v3659 = vand.u32 %v3655, 3
    %vm3660 = vcmp.lt.s32.totalorder %v3659, 2
    %vm3661 = vcmp.eq.s32.totalorder %v3659, 0
    %v3662 = vxor.u32 %v3657, 2147483648
    %v3663 = vsel %vm3661, %v3656, %v3662
    %vm3664 = vcmp.eq.s32.totalorder %v3659, 2
    %v3665 = vxor.u32 %v3656, 2147483648
    %v3666 = vsel %vm3664, %v3665, %v3657
    %v3667 = vsel %vm3660, %v3663, %v3666
    %v3668 = vsel %vm3658, nan, %v3667
    %v3669 = vmul.f32 %v3565, 0.5
    %v3670 = vmul.f32 %v3668, 0.5
    %v3671 = vmul.f32 %v3565, 0.70710677
    %v3672 = vmul.f32 %v3668, 0.70710677
    %v3673 = verf.f32.pop %v3671
    %v3674 = verf.f32.pop %v3672
    %v3675 = vadd.f32 %v3673, 1.0
    %v3676 = vadd.f32 %v3674, 1.0
    %v3677 = vmul.f32 %v3669, %v3675
    %v3678 = vmul.f32 %v3670, %v3676
    %3679 = vmatprep.subr.mxu0 0.0
    %3680 = vmatpush1.msra.mxu0 %v47
    %3681 = vmatprep.subr.mxu0 0.0
    %3682 = vmatpush1.msra.mxu0 %v48
    %3683 = vmatprep.subr.mxu0 0.0
    %3684 = vmatpush1.msra.mxu0 %v49
    %3685 = vmatprep.subr.mxu0 0.0
    %3686 = vmatpush1.msra.mxu0 %v50
    %3687 = vmatprep.subr.mxu0 0.0
    %3688 = vmatpush1.msra.mxu0 %v51
    %3689 = vmatprep.subr.mxu0 0.0
    %3690 = vmatpush1.msra.mxu0 %v52
    %3691 = vmatprep.subr.mxu0 0.0
    %3692 = vmatpush1.msra.mxu0 %v53
    %3693 = vmatprep.subr.mxu0 0.0
    %3694 = vmatpush1.msra.mxu0 %v54
    %3695 = vmatprep.subr.mxu0 0.0
    %3696 = vmatpush1.msra.mxu0 %v55
    %3697 = vmatprep.subr.mxu0 0.0
    %3698 = vmatpush1.msra.mxu0 %v56
    %3699 = vmatprep.subr.mxu0 0.0
    %3700 = vmatpush1.msra.mxu0 %v57
    %3701 = vmatprep.subr.mxu0 0.0
    %3702 = vmatpush1.msra.mxu0 %v58
    %3703 = vmatprep.subr.mxu0 0.0
    %3704 = vmatpush1.msra.mxu0 %v59
    %3705 = vmatprep.subr.mxu0 0.0
    %3706 = vmatpush1.msra.mxu0 %v60
    %3707 = vmatprep.subr.mxu0 0.0
    %3708 = vmatpush1.msra.mxu0 %v61
    %3709 = vmatprep.subr.mxu0 0.0
    %3710 = vmatpush1.msra.mxu0 %v62
    %3711 = vmatprep.subr.mxu0 0.0
    %3712 = vmatpush1.msra.mxu0 0.0
    %3713 = vmatprep.subr.mxu0 0.0
    %3714 = vmatpush1.msra.mxu0 0.0
    %3715 = vmatprep.subr.mxu0 0.0
    %3716 = vmatpush1.msra.mxu0 0.0
    %3717 = vmatprep.subr.mxu0 0.0
    %3718 = vmatpush1.msra.mxu0 0.0
    %3719 = vmatprep.subr.mxu0 0.0
    %3720 = vmatpush1.msra.mxu0 0.0
    %3721 = vmatprep.subr.mxu0 0.0
    %3722 = vmatpush1.msra.mxu0 0.0
    %3723 = vmatprep.subr.mxu0 0.0
    %3724 = vmatpush1.msra.mxu0 0.0
    %3725 = vmatprep.subr.mxu0 0.0
    %3726 = vmatpush1.msra.mxu0 0.0
    %3727 = vmatprep.subr.mxu0 0.0
    %3728 = vmatpush1.msra.mxu0 0.0
    %3729 = vmatprep.subr.mxu0 0.0
    %3730 = vmatpush1.msra.mxu0 0.0
    %3731 = vmatprep.subr.mxu0 0.0
    %3732 = vmatpush1.msra.mxu0 0.0
    %3733 = vmatprep.subr.mxu0 0.0
    %3734 = vmatpush1.msra.mxu0 0.0
    %3735 = vmatprep.subr.mxu0 0.0
    %3736 = vmatpush1.msra.mxu0 0.0
    %3737 = vmatprep.subr.mxu0 0.0
    %3738 = vmatpush1.msra.mxu0 0.0
    %3739 = vmatprep.subr.mxu0 0.0
    %3740 = vmatpush1.msra.mxu0 0.0
    %3741 = vmatprep.subr.mxu0 0.0
    %3742 = vmatpush1.msra.mxu0 0.0
    %3743 = vmatprep.mubr.f32.mxu0 0.0
    %3744 = vmatmul.mubr.f32.gmra.mrb[0].mxu0 %v3677
    %v3745 = vpop.f32.mrb[0].mxu0
    %v3746 = vadd.f32 %v1954, %v3745
    %v3747 = vpop.f32.mrb[0].mxu0
    %3748 = vmatprep.mubr.f32.mxu0 0.0
    %3749 = vmatmul.mubr.f32.gmra.mrb[0].mxu0 %v3678
    %v3750 = vpop.f32.mrb[0].mxu0
    %v3751 = vadd.f32 %v1954, %v3750
    %v3752 = vpop.f32.mrb[0].mxu0
    %3753 = vdwg.mxu0
    %v3754 = vadd.f32 %v263, %v3276
    %v3755 = vadd.f32 %v264, %v3379
    %v3756 = vadd.f32 %v3754, %v3746
    %v3757 = vadd.f32 %v3755, %v3751
    %v3758 = vadd.f32 %v3756, %v265
    %v3759 = vadd.f32 %v3757, %v265
    %v3760 = vand.u32 2147483647, %v3758
    %vm3761 = vcmp.le.f32.partialorder %v3760, 0.7853982
    %vm3762 = vcmp.lt.s32.totalorder %v3758, 0
    %v3763 = vand.u32 %v3758, 2139095040
    %v3764 = vshrl.u32 %v3763, 23
    %v3765 = vsub.s32 %v3764, 127
    %v3766 = vand.u32 2147483647, %v3758
    %v3767 = vand.u32 %v3766, 8388607
    %v3768 = vor.u32 %v3767, 8388608
    %v3769 = vsub.s32 0, %v3768
    %v3770 = vadd.s32 %v3765, 1
    %vm3771 = vcmp.gt.s32.totalorder %v3770, 0
    %v3772 = vsel %vm3771, %v3770, 0
    %v3773 = vshrl.u32 %v3772, 5
    %v3774 = vand.u32 %v3772, 31
    %v3775 = vsub.s32 32, %v3774
    %v3776 = vshrl.u32 683565275, %v3775
    %v3777 = vshll.u32 683565275, %v3774
    %v3778 = vshrl.u32 2475754826, %v3775
    %v3779 = vor.u32 %v3777, %v3778
    %v3780 = vshll.u32 2475754826, %v3774
    %v3781 = vshrl.u32 2131351028, %v3775
    %v3782 = vor.u32 %v3780, %v3781
    %v3783 = vshll.u32 2131351028, %v3774
    %v3784 = vshrl.u32 2102212464, %v3775
    %v3785 = vor.u32 %v3783, %v3784
    %v3786 = vshll.u32 2102212464, %v3774
    %v3787 = vshrl.u32 920167782, %v3775
    %v3788 = vor.u32 %v3786, %v3787
    %v3789 = vshll.u32 920167782, %v3774
    %v3790 = vshrl.u32 1326507024, %v3775
    %v3791 = vor.u32 %v3789, %v3790
    %vm3792 = vcmp.lt.s32.totalorder %v3773, 1
    %vm3793 = vcmp.lt.s32.totalorder %v3773, 2
    %vm3794 = vcmp.lt.s32.totalorder %v3773, 3
    %vm3795 = vcmp.lt.s32.totalorder %v3773, 4
    %v3796 = vsel %vm3792, %v3776, %v3779
    %v3797 = vsel %vm3795, %v3785, 2102212464
    %v3798 = vsel %vm3794, %v3782, %v3797
    %v3799 = vsel %vm3793, %v3796, %v3798
    %v3800 = vsel %vm3792, %v3779, %v3782
    %v3801 = vsel %vm3795, %v3788, 920167782
    %v3802 = vsel %vm3794, %v3785, %v3801
    %v3803 = vsel %vm3793, %v3800, %v3802
    %v3804 = vsel %vm3792, %v3782, %v3785
    %v3805 = vsel %vm3795, %v3791, 1326507024
    %v3806 = vsel %vm3794, %v3788, %v3805
    %v3807 = vsel %vm3793, %v3804, %v3806
    %v3808 = vshll.u32 %v3768, 8
    %v3809 = vmul.u32.u64.compose %v3808, %v3807
    %v3810 = vextract.low.u32 %v3809
    %v3811 = vextract.high.u32 %v3809
    %v3812 = vmul.u32.u64.compose %v3808, %v3803
    %v3813 = vextract.low.u32 %v3812
    %v3814 = vextract.high.u32 %v3812
    %v3815 = vmul.u32 %v3808, %v3799
    %v3816 = vadd.s32 %v3811, %v3813
    %vm3817 = vc.u32 %v3811, %v3813
    %v3818 = vadd.s32 %v3814, 1
    %v3819 = vsel %vm3817, %v3818, %v3814
    %v3820 = vadd.s32 %v3815, %v3819
    %v3821 = vadd.s32 %v3820, 536870912
    %v3822 = vshrl.u32 %v3821, 30
    %v3823 = vshll.u32 %v3822, 30
    %v3824 = vsub.s32 %v3820, %v3823
    %vm3825 = vcmp.lt.s32.totalorder %v3824, 0
    %v3826 = vsub.s32 0, %v3824
    %v3827 = vsel %vm3825, %v3826, %v3824
    %v3828 = vclz %v3827
    %v3829 = vsub.s32 %v3828, 2
    %vm3830 = vcmp.gt.s32.totalorder 0, %v3829
    %v3831 = vsel %vm3830, 0, %v3829
    %v3832 = vsub.s32 32, %v3831
    %v3833 = vshll.u32 %v3824, %v3831
    %v3834 = vshrl.u32 %v3816, %v3832
    %v3835 = vor.u32 %v3833, %v3834
    %v3836 = vsub.s32 4294967266, %v3831
    %v3837 = vadd.s32 %v3836, 127
    %v3838 = vshll.u32 %v3837, 23
    %v3839 = vor.u32 4788187, %v3838
    %v3840 = vand.u32 2147483647, %v3839
    %v3842 = vcvt.s32.f32 %v3835
    %v3843 = vmul.f32 %v3842, %v3840
    %v3844 = vxor.u32 %v3843, 2147483648
    %v3845 = vsel %vm3762, %v3844, %v3843
    %v3846 = vsub.s32 4, %v3822
    %v3847 = vsel %vm3762, %v3846, %v3822
    %v3848 = vsel %vm3761, %v3758, %v3845
    %v3849 = vsel %vm3761, 0, %v3847
    %v3850 = vcosq.f32.pop %v3848
    %v3851 = vsinq.f32.pop %v3848
    %vm3852 = vweird.f32 %v3758
    %v3853 = vand.u32 %v3849, 3
    %vm3854 = vcmp.lt.s32.totalorder %v3853, 2
    %vm3855 = vcmp.eq.s32.totalorder %v3853, 0
    %v3856 = vxor.u32 %v3851, 2147483648
    %v3857 = vsel %vm3855, %v3850, %v3856
    %vm3858 = vcmp.eq.s32.totalorder %v3853, 2
    %v3859 = vxor.u32 %v3850, 2147483648
    %v3860 = vsel %vm3858, %v3859, %v3851
    %v3861 = vsel %vm3854, %v3857, %v3860
    %v3862 = vsel %vm3852, nan, %v3861
    %v3863 = vand.u32 2147483647, %v3759
    %vm3864 = vcmp.le.f32.partialorder %v3863, 0.7853982
    %vm3865 = vcmp.lt.s32.totalorder %v3759, 0
    %v3866 = vand.u32 %v3759, 2139095040
    %v3867 = vshrl.u32 %v3866, 23
    %v3868 = vsub.s32 %v3867, 127
    %v3869 = vand.u32 2147483647, %v3759
    %v3870 = vand.u32 %v3869, 8388607
    %v3871 = vor.u32 %v3870, 8388608
    %v3872 = vsub.s32 0, %v3871
    %v3873 = vadd.s32 %v3868, 1
    %vm3874 = vcmp.gt.s32.totalorder %v3873, 0
    %v3875 = vsel %vm3874, %v3873, 0
    %v3876 = vshrl.u32 %v3875, 5
    %v3877 = vand.u32 %v3875, 31
    %v3878 = vsub.s32 32, %v3877
    %v3879 = vshrl.u32 683565275, %v3878
    %v3880 = vshll.u32 683565275, %v3877
    %v3881 = vshrl.u32 2475754826, %v3878
    %v3882 = vor.u32 %v3880, %v3881
    %v3883 = vshll.u32 2475754826, %v3877
    %v3884 = vshrl.u32 2131351028, %v3878
    %v3885 = vor.u32 %v3883, %v3884
    %v3886 = vshll.u32 2131351028, %v3877
    %v3887 = vshrl.u32 2102212464, %v3878
    %v3888 = vor.u32 %v3886, %v3887
    %v3889 = vshll.u32 2102212464, %v3877
    %v3890 = vshrl.u32 920167782, %v3878
    %v3891 = vor.u32 %v3889, %v3890
    %v3892 = vshll.u32 920167782, %v3877
    %v3893 = vshrl.u32 1326507024, %v3878
    %v3894 = vor.u32 %v3892, %v3893
    %vm3895 = vcmp.lt.s32.totalorder %v3876, 1
    %vm3896 = vcmp.lt.s32.totalorder %v3876, 2
    %vm3897 = vcmp.lt.s32.totalorder %v3876, 3
    %vm3898 = vcmp.lt.s32.totalorder %v3876, 4
    %v3899 = vsel %vm3895, %v3879, %v3882
    %v3900 = vsel %vm3898, %v3888, 2102212464
    %v3901 = vsel %vm3897, %v3885, %v3900
    %v3902 = vsel %vm3896, %v3899, %v3901
    %v3903 = vsel %vm3895, %v3882, %v3885
    %v3904 = vsel %vm3898, %v3891, 920167782
    %v3905 = vsel %vm3897, %v3888, %v3904
    %v3906 = vsel %vm3896, %v3903, %v3905
    %v3907 = vsel %vm3895, %v3885, %v3888
    %v3908 = vsel %vm3898, %v3894, 1326507024
    %v3909 = vsel %vm3897, %v3891, %v3908
    %v3910 = vsel %vm3896, %v3907, %v3909
    %v3911 = vshll.u32 %v3871, 8
    %v3912 = vmul.u32.u64.compose %v3911, %v3910
    %v3913 = vextract.low.u32 %v3912
    %v3914 = vextract.high.u32 %v3912
    %v3915 = vmul.u32.u64.compose %v3911, %v3906
    %v3916 = vextract.low.u32 %v3915
    %v3917 = vextract.high.u32 %v3915
    %v3918 = vmul.u32 %v3911, %v3902
    %v3919 = vadd.s32 %v3914, %v3916
    %vm3920 = vc.u32 %v3914, %v3916
    %v3921 = vadd.s32 %v3917, 1
    %v3922 = vsel %vm3920, %v3921, %v3917
    %v3923 = vadd.s32 %v3918, %v3922
    %v3924 = vadd.s32 %v3923, 536870912
    %v3925 = vshrl.u32 %v3924, 30
    %v3926 = vshll.u32 %v3925, 30
    %v3927 = vsub.s32 %v3923, %v3926
    %vm3928 = vcmp.lt.s32.totalorder %v3927, 0
    %v3929 = vsub.s32 0, %v3927
    %v3930 = vsel %vm3928, %v3929, %v3927
    %v3931 = vclz %v3930
    %v3932 = vsub.s32 %v3931, 2
    %vm3933 = vcmp.gt.s32.totalorder 0, %v3932
    %v3934 = vsel %vm3933, 0, %v3932
    %v3935 = vsub.s32 32, %v3934
    %v3936 = vshll.u32 %v3927, %v3934
    %v3937 = vshrl.u32 %v3919, %v3935
    %v3938 = vor.u32 %v3936, %v3937
    %v3939 = vsub.s32 4294967266, %v3934
    %v3940 = vadd.s32 %v3939, 127
    %v3941 = vshll.u32 %v3940, 23
    %v3942 = vor.u32 4788187, %v3941
    %v3943 = vand.u32 2147483647, %v3942
    %v3945 = vcvt.s32.f32 %v3938
    %v3946 = vmul.f32 %v3945, %v3943
    %v3947 = vxor.u32 %v3946, 2147483648
    %v3948 = vsel %vm3865, %v3947, %v3946
    %v3949 = vsub.s32 4, %v3925
    %v3950 = vsel %vm3865, %v3949, %v3925
    %v3951 = vsel %vm3864, %v3759, %v3948
    %v3952 = vsel %vm3864, 0, %v3950
    %v3953 = vcosq.f32.pop %v3951
    %v3954 = vsinq.f32.pop %v3951
    %vm3955 = vweird.f32 %v3759
    %v3956 = vand.u32 %v3952, 3
    %vm3957 = vcmp.lt.s32.totalorder %v3956, 2
    %vm3958 = vcmp.eq.s32.totalorder %v3956, 0
    %v3959 = vxor.u32 %v3954, 2147483648
    %v3960 = vsel %vm3958, %v3953, %v3959
    %vm3961 = vcmp.eq.s32.totalorder %v3956, 2
    %v3962 = vxor.u32 %v3953, 2147483648
    %v3963 = vsel %vm3961, %v3962, %v3954
    %v3964 = vsel %vm3957, %v3960, %v3963
    %v3965 = vsel %vm3955, nan, %v3964
    %v3966 = vadd.f32 %v3756, %v474
    %v3967 = vadd.f32 %v3757, %v474
    %v3968 = vand.u32 2147483647, %v3966
    %vm3969 = vcmp.le.f32.partialorder %v3968, 0.7853982
    %vm3970 = vcmp.lt.s32.totalorder %v3966, 0
    %v3971 = vand.u32 %v3966, 2139095040
    %v3972 = vshrl.u32 %v3971, 23
    %v3973 = vsub.s32 %v3972, 127
    %v3974 = vand.u32 2147483647, %v3966
    %v3975 = vand.u32 %v3974, 8388607
    %v3976 = vor.u32 %v3975, 8388608
    %v3977 = vsub.s32 0, %v3976
    %v3978 = vadd.s32 %v3973, 1
    %vm3979 = vcmp.gt.s32.totalorder %v3978, 0
    %v3980 = vsel %vm3979, %v3978, 0
    %v3981 = vshrl.u32 %v3980, 5
    %v3982 = vand.u32 %v3980, 31
    %v3983 = vsub.s32 32, %v3982
    %v3984 = vshrl.u32 683565275, %v3983
    %v3985 = vshll.u32 683565275, %v3982
    %v3986 = vshrl.u32 2475754826, %v3983
    %v3987 = vor.u32 %v3985, %v3986
    %v3988 = vshll.u32 2475754826, %v3982
    %v3989 = vshrl.u32 2131351028, %v3983
    %v3990 = vor.u32 %v3988, %v3989
    %v3991 = vshll.u32 2131351028, %v3982
    %v3992 = vshrl.u32 2102212464, %v3983
    %v3993 = vor.u32 %v3991, %v3992
    %v3994 = vshll.u32 2102212464, %v3982
    %v3995 = vshrl.u32 920167782, %v3983
    %v3996 = vor.u32 %v3994, %v3995
    %v3997 = vshll.u32 920167782, %v3982
    %v3998 = vshrl.u32 1326507024, %v3983
    %v3999 = vor.u32 %v3997, %v3998
    %vm4000 = vcmp.lt.s32.totalorder %v3981, 1
    %vm4001 = vcmp.lt.s32.totalorder %v3981, 2
    %vm4002 = vcmp.lt.s32.totalorder %v3981, 3
    %vm4003 = vcmp.lt.s32.totalorder %v3981, 4
    %v4004 = vsel %vm4000, %v3984, %v3987
    %v4005 = vsel %vm4003, %v3993, 2102212464
    %v4006 = vsel %vm4002, %v3990, %v4005
    %v4007 = vsel %vm4001, %v4004, %v4006
    %v4008 = vsel %vm4000, %v3987, %v3990
    %v4009 = vsel %vm4003, %v3996, 920167782
    %v4010 = vsel %vm4002, %v3993, %v4009
    %v4011 = vsel %vm4001, %v4008, %v4010
    %v4012 = vsel %vm4000, %v3990, %v3993
    %v4013 = vsel %vm4003, %v3999, 1326507024
    %v4014 = vsel %vm4002, %v3996, %v4013
    %v4015 = vsel %vm4001, %v4012, %v4014
    %v4016 = vshll.u32 %v3976, 8
    %v4017 = vmul.u32.u64.compose %v4016, %v4015
    %v4018 = vextract.low.u32 %v4017
    %v4019 = vextract.high.u32 %v4017
    %v4020 = vmul.u32.u64.compose %v4016, %v4011
    %v4021 = vextract.low.u32 %v4020
    %v4022 = vextract.high.u32 %v4020
    %v4023 = vmul.u32 %v4016, %v4007
    %v4024 = vadd.s32 %v4019, %v4021
    %vm4025 = vc.u32 %v4019, %v4021
    %v4026 = vadd.s32 %v4022, 1
    %v4027 = vsel %vm4025, %v4026, %v4022
    %v4028 = vadd.s32 %v4023, %v4027
    %v4029 = vadd.s32 %v4028, 536870912
    %v4030 = vshrl.u32 %v4029, 30
    %v4031 = vshll.u32 %v4030, 30
    %v4032 = vsub.s32 %v4028, %v4031
    %vm4033 = vcmp.lt.s32.totalorder %v4032, 0
    %v4034 = vsub.s32 0, %v4032
    %v4035 = vsel %vm4033, %v4034, %v4032
    %v4036 = vclz %v4035
    %v4037 = vsub.s32 %v4036, 2
    %vm4038 = vcmp.gt.s32.totalorder 0, %v4037
    %v4039 = vsel %vm4038, 0, %v4037
    %v4040 = vsub.s32 32, %v4039
    %v4041 = vshll.u32 %v4032, %v4039
    %v4042 = vshrl.u32 %v4024, %v4040
    %v4043 = vor.u32 %v4041, %v4042
    %v4044 = vsub.s32 4294967266, %v4039
    %v4045 = vadd.s32 %v4044, 127
    %v4046 = vshll.u32 %v4045, 23
    %v4047 = vor.u32 4788187, %v4046
    %v4048 = vand.u32 2147483647, %v4047
    %v4050 = vcvt.s32.f32 %v4043
    %v4051 = vmul.f32 %v4050, %v4048
    %v4052 = vxor.u32 %v4051, 2147483648
    %v4053 = vsel %vm3970, %v4052, %v4051
    %v4054 = vsub.s32 4, %v4030
    %v4055 = vsel %vm3970, %v4054, %v4030
    %v4056 = vsel %vm3969, %v3966, %v4053
    %v4057 = vsel %vm3969, 0, %v4055
    %v4058 = vcosq.f32.pop %v4056
    %v4059 = vsinq.f32.pop %v4056
    %vm4060 = vweird.f32 %v3966
    %v4061 = vand.u32 %v4057, 3
    %vm4062 = vcmp.lt.s32.totalorder %v4061, 2
    %vm4063 = vcmp.eq.s32.totalorder %v4061, 0
    %v4064 = vxor.u32 %v4059, 2147483648
    %v4065 = vsel %vm4063, %v4058, %v4064
    %vm4066 = vcmp.eq.s32.totalorder %v4061, 2
    %v4067 = vxor.u32 %v4058, 2147483648
    %v4068 = vsel %vm4066, %v4067, %v4059
    %v4069 = vsel %vm4062, %v4065, %v4068
    %v4070 = vsel %vm4060, nan, %v4069
    %v4071 = vand.u32 2147483647, %v3967
    %vm4072 = vcmp.le.f32.partialorder %v4071, 0.7853982
    %vm4073 = vcmp.lt.s32.totalorder %v3967, 0
    %v4074 = vand.u32 %v3967, 2139095040
    %v4075 = vshrl.u32 %v4074, 23
    %v4076 = vsub.s32 %v4075, 127
    %v4077 = vand.u32 2147483647, %v3967
    %v4078 = vand.u32 %v4077, 8388607
    %v4079 = vor.u32 %v4078, 8388608
    %v4080 = vsub.s32 0, %v4079
    %v4081 = vadd.s32 %v4076, 1
    %vm4082 = vcmp.gt.s32.totalorder %v4081, 0
    %v4083 = vsel %vm4082, %v4081, 0
    %v4084 = vshrl.u32 %v4083, 5
    %v4085 = vand.u32 %v4083, 31
    %v4086 = vsub.s32 32, %v4085
    %v4087 = vshrl.u32 683565275, %v4086
    %v4088 = vshll.u32 683565275, %v4085
    %v4089 = vshrl.u32 2475754826, %v4086
    %v4090 = vor.u32 %v4088, %v4089
    %v4091 = vshll.u32 2475754826, %v4085
    %v4092 = vshrl.u32 2131351028, %v4086
    %v4093 = vor.u32 %v4091, %v4092
    %v4094 = vshll.u32 2131351028, %v4085
    %v4095 = vshrl.u32 2102212464, %v4086
    %v4096 = vor.u32 %v4094, %v4095
    %v4097 = vshll.u32 2102212464, %v4085
    %v4098 = vshrl.u32 920167782, %v4086
    %v4099 = vor.u32 %v4097, %v4098
    %v4100 = vshll.u32 920167782, %v4085
    %v4101 = vshrl.u32 1326507024, %v4086
    %v4102 = vor.u32 %v4100, %v4101
    %vm4103 = vcmp.lt.s32.totalorder %v4084, 1
    %vm4104 = vcmp.lt.s32.totalorder %v4084, 2
    %vm4105 = vcmp.lt.s32.totalorder %v4084, 3
    %vm4106 = vcmp.lt.s32.totalorder %v4084, 4
    %v4107 = vsel %vm4103, %v4087, %v4090
    %v4108 = vsel %vm4106, %v4096, 2102212464
    %v4109 = vsel %vm4105, %v4093, %v4108
    %v4110 = vsel %vm4104, %v4107, %v4109
    %v4111 = vsel %vm4103, %v4090, %v4093
    %v4112 = vsel %vm4106, %v4099, 920167782
    %v4113 = vsel %vm4105, %v4096, %v4112
    %v4114 = vsel %vm4104, %v4111, %v4113
    %v4115 = vsel %vm4103, %v4093, %v4096
    %v4116 = vsel %vm4106, %v4102, 1326507024
    %v4117 = vsel %vm4105, %v4099, %v4116
    %v4118 = vsel %vm4104, %v4115, %v4117
    %v4119 = vshll.u32 %v4079, 8
    %v4120 = vmul.u32.u64.compose %v4119, %v4118
    %v4121 = vextract.low.u32 %v4120
    %v4122 = vextract.high.u32 %v4120
    %v4123 = vmul.u32.u64.compose %v4119, %v4114
    %v4124 = vextract.low.u32 %v4123
    %v4125 = vextract.high.u32 %v4123
    %v4126 = vmul.u32 %v4119, %v4110
    %v4127 = vadd.s32 %v4122, %v4124
    %vm4128 = vc.u32 %v4122, %v4124
    %v4129 = vadd.s32 %v4125, 1
    %v4130 = vsel %vm4128, %v4129, %v4125
    %v4131 = vadd.s32 %v4126, %v4130
    %v4132 = vadd.s32 %v4131, 536870912
    %v4133 = vshrl.u32 %v4132, 30
    %v4134 = vshll.u32 %v4133, 30
    %v4135 = vsub.s32 %v4131, %v4134
    %vm4136 = vcmp.lt.s32.totalorder %v4135, 0
    %v4137 = vsub.s32 0, %v4135
    %v4138 = vsel %vm4136, %v4137, %v4135
    %v4139 = vclz %v4138
    %v4140 = vsub.s32 %v4139, 2
    %vm4141 = vcmp.gt.s32.totalorder 0, %v4140
    %v4142 = vsel %vm4141, 0, %v4140
    %v4143 = vsub.s32 32, %v4142
    %v4144 = vshll.u32 %v4135, %v4142
    %v4145 = vshrl.u32 %v4127, %v4143
    %v4146 = vor.u32 %v4144, %v4145
    %v4147 = vsub.s32 4294967266, %v4142
    %v4148 = vadd.s32 %v4147, 127
    %v4149 = vshll.u32 %v4148, 23
    %v4150 = vor.u32 4788187, %v4149
    %v4151 = vand.u32 2147483647, %v4150
    %v4153 = vcvt.s32.f32 %v4146
    %v4154 = vmul.f32 %v4153, %v4151
    %v4155 = vxor.u32 %v4154, 2147483648
    %v4156 = vsel %vm4073, %v4155, %v4154
    %v4157 = vsub.s32 4, %v4133
    %v4158 = vsel %vm4073, %v4157, %v4133
    %v4159 = vsel %vm4072, %v3967, %v4156
    %v4160 = vsel %vm4072, 0, %v4158
    %v4161 = vcosq.f32.pop %v4159
    %v4162 = vsinq.f32.pop %v4159
    %vm4163 = vweird.f32 %v3967
    %v4164 = vand.u32 %v4160, 3
    %vm4165 = vcmp.lt.s32.totalorder %v4164, 2
    %vm4166 = vcmp.eq.s32.totalorder %v4164, 0
    %v4167 = vxor.u32 %v4162, 2147483648
    %v4168 = vsel %vm4166, %v4161, %v4167
    %vm4169 = vcmp.eq.s32.totalorder %v4164, 2
    %v4170 = vxor.u32 %v4161, 2147483648
    %v4171 = vsel %vm4169, %v4170, %v4162
    %v4172 = vsel %vm4165, %v4168, %v4171
    %v4173 = vsel %vm4163, nan, %v4172
    %v4174 = vadd.f32 %v3756, %v683
    %v4175 = vadd.f32 %v3757, %v683
    %v4176 = vand.u32 2147483647, %v4174
    %vm4177 = vcmp.le.f32.partialorder %v4176, 0.7853982
    %vm4178 = vcmp.lt.s32.totalorder %v4174, 0
    %v4179 = vand.u32 %v4174, 2139095040
    %v4180 = vshrl.u32 %v4179, 23
    %v4181 = vsub.s32 %v4180, 127
    %v4182 = vand.u32 2147483647, %v4174
    %v4183 = vand.u32 %v4182, 8388607
    %v4184 = vor.u32 %v4183, 8388608
    %v4185 = vsub.s32 0, %v4184
    %v4186 = vadd.s32 %v4181, 1
    %vm4187 = vcmp.gt.s32.totalorder %v4186, 0
    %v4188 = vsel %vm4187, %v4186, 0
    %v4189 = vshrl.u32 %v4188, 5
    %v4190 = vand.u32 %v4188, 31
    %v4191 = vsub.s32 32, %v4190
    %v4192 = vshrl.u32 683565275, %v4191
    %v4193 = vshll.u32 683565275, %v4190
    %v4194 = vshrl.u32 2475754826, %v4191
    %v4195 = vor.u32 %v4193, %v4194
    %v4196 = vshll.u32 2475754826, %v4190
    %v4197 = vshrl.u32 2131351028, %v4191
    %v4198 = vor.u32 %v4196, %v4197
    %v4199 = vshll.u32 2131351028, %v4190
    %v4200 = vshrl.u32 2102212464, %v4191
    %v4201 = vor.u32 %v4199, %v4200
    %v4202 = vshll.u32 2102212464, %v4190
    %v4203 = vshrl.u32 920167782, %v4191
    %v4204 = vor.u32 %v4202, %v4203
    %v4205 = vshll.u32 920167782, %v4190
    %v4206 = vshrl.u32 1326507024, %v4191
    %v4207 = vor.u32 %v4205, %v4206
    %vm4208 = vcmp.lt.s32.totalorder %v4189, 1
    %vm4209 = vcmp.lt.s32.totalorder %v4189, 2
    %vm4210 = vcmp.lt.s32.totalorder %v4189, 3
    %vm4211 = vcmp.lt.s32.totalorder %v4189, 4
    %v4212 = vsel %vm4208, %v4192, %v4195
    %v4213 = vsel %vm4211, %v4201, 2102212464
    %v4214 = vsel %vm4210, %v4198, %v4213
    %v4215 = vsel %vm4209, %v4212, %v4214
    %v4216 = vsel %vm4208, %v4195, %v4198
    %v4217 = vsel %vm4211, %v4204, 920167782
    %v4218 = vsel %vm4210, %v4201, %v4217
    %v4219 = vsel %vm4209, %v4216, %v4218
    %v4220 = vsel %vm4208, %v4198, %v4201
    %v4221 = vsel %vm4211, %v4207, 1326507024
    %v4222 = vsel %vm4210, %v4204, %v4221
    %v4223 = vsel %vm4209, %v4220, %v4222
    %v4224 = vshll.u32 %v4184, 8
    %v4225 = vmul.u32.u64.compose %v4224, %v4223
    %v4226 = vextract.low.u32 %v4225
    %v4227 = vextract.high.u32 %v4225
    %v4228 = vmul.u32.u64.compose %v4224, %v4219
    %v4229 = vextract.low.u32 %v4228
    %v4230 = vextract.high.u32 %v4228
    %v4231 = vmul.u32 %v4224, %v4215
    %v4232 = vadd.s32 %v4227, %v4229
    %vm4233 = vc.u32 %v4227, %v4229
    %v4234 = vadd.s32 %v4230, 1
    %v4235 = vsel %vm4233, %v4234, %v4230
    %v4236 = vadd.s32 %v4231, %v4235
    %v4237 = vadd.s32 %v4236, 536870912
    %v4238 = vshrl.u32 %v4237, 30
    %v4239 = vshll.u32 %v4238, 30
    %v4240 = vsub.s32 %v4236, %v4239
    %vm4241 = vcmp.lt.s32.totalorder %v4240, 0
    %v4242 = vsub.s32 0, %v4240
    %v4243 = vsel %vm4241, %v4242, %v4240
    %v4244 = vclz %v4243
    %v4245 = vsub.s32 %v4244, 2
    %vm4246 = vcmp.gt.s32.totalorder 0, %v4245
    %v4247 = vsel %vm4246, 0, %v4245
    %v4248 = vsub.s32 32, %v4247
    %v4249 = vshll.u32 %v4240, %v4247
    %v4250 = vshrl.u32 %v4232, %v4248
    %v4251 = vor.u32 %v4249, %v4250
    %v4252 = vsub.s32 4294967266, %v4247
    %v4253 = vadd.s32 %v4252, 127
    %v4254 = vshll.u32 %v4253, 23
    %v4255 = vor.u32 4788187, %v4254
    %v4256 = vand.u32 2147483647, %v4255
    %v4258 = vcvt.s32.f32 %v4251
    %v4259 = vmul.f32 %v4258, %v4256
    %v4260 = vxor.u32 %v4259, 2147483648
    %v4261 = vsel %vm4178, %v4260, %v4259
    %v4262 = vsub.s32 4, %v4238
    %v4263 = vsel %vm4178, %v4262, %v4238
    %v4264 = vsel %vm4177, %v4174, %v4261
    %v4265 = vsel %vm4177, 0, %v4263
    %v4266 = vcosq.f32.pop %v4264
    %v4267 = vsinq.f32.pop %v4264
    %vm4268 = vweird.f32 %v4174
    %v4269 = vand.u32 %v4265, 3
    %vm4270 = vcmp.lt.s32.totalorder %v4269, 2
    %vm4271 = vcmp.eq.s32.totalorder %v4269, 0
    %v4272 = vxor.u32 %v4267, 2147483648
    %v4273 = vsel %vm4271, %v4266, %v4272
    %vm4274 = vcmp.eq.s32.totalorder %v4269, 2
    %v4275 = vxor.u32 %v4266, 2147483648
    %v4276 = vsel %vm4274, %v4275, %v4267
    %v4277 = vsel %vm4270, %v4273, %v4276
    %v4278 = vsel %vm4268, nan, %v4277
    %v4279 = vand.u32 2147483647, %v4175
    %vm4280 = vcmp.le.f32.partialorder %v4279, 0.7853982
    %vm4281 = vcmp.lt.s32.totalorder %v4175, 0
    %v4282 = vand.u32 %v4175, 2139095040
    %v4283 = vshrl.u32 %v4282, 23
    %v4284 = vsub.s32 %v4283, 127
    %v4285 = vand.u32 2147483647, %v4175
    %v4286 = vand.u32 %v4285, 8388607
    %v4287 = vor.u32 %v4286, 8388608
    %v4288 = vsub.s32 0, %v4287
    %v4289 = vadd.s32 %v4284, 1
    %vm4290 = vcmp.gt.s32.totalorder %v4289, 0
    %v4291 = vsel %vm4290, %v4289, 0
    %v4292 = vshrl.u32 %v4291, 5
    %v4293 = vand.u32 %v4291, 31
    %v4294 = vsub.s32 32, %v4293
    %v4295 = vshrl.u32 683565275, %v4294
    %v4296 = vshll.u32 683565275, %v4293
    %v4297 = vshrl.u32 2475754826, %v4294
    %v4298 = vor.u32 %v4296, %v4297
    %v4299 = vshll.u32 2475754826, %v4293
    %v4300 = vshrl.u32 2131351028, %v4294
    %v4301 = vor.u32 %v4299, %v4300
    %v4302 = vshll.u32 2131351028, %v4293
    %v4303 = vshrl.u32 2102212464, %v4294
    %v4304 = vor.u32 %v4302, %v4303
    %v4305 = vshll.u32 2102212464, %v4293
    %v4306 = vshrl.u32 920167782, %v4294
    %v4307 = vor.u32 %v4305, %v4306
    %v4308 = vshll.u32 920167782, %v4293
    %v4309 = vshrl.u32 1326507024, %v4294
    %v4310 = vor.u32 %v4308, %v4309
    %vm4311 = vcmp.lt.s32.totalorder %v4292, 1
    %vm4312 = vcmp.lt.s32.totalorder %v4292, 2
    %vm4313 = vcmp.lt.s32.totalorder %v4292, 3
    %vm4314 = vcmp.lt.s32.totalorder %v4292, 4
    %v4315 = vsel %vm4311, %v4295, %v4298
    %v4316 = vsel %vm4314, %v4304, 2102212464
    %v4317 = vsel %vm4313, %v4301, %v4316
    %v4318 = vsel %vm4312, %v4315, %v4317
    %v4319 = vsel %vm4311, %v4298, %v4301
    %v4320 = vsel %vm4314, %v4307, 920167782
    %v4321 = vsel %vm4313, %v4304, %v4320
    %v4322 = vsel %vm4312, %v4319, %v4321
    %v4323 = vsel %vm4311, %v4301, %v4304
    %v4324 = vsel %vm4314, %v4310, 1326507024
    %v4325 = vsel %vm4313, %v4307, %v4324
    %v4326 = vsel %vm4312, %v4323, %v4325
    %v4327 = vshll.u32 %v4287, 8
    %v4328 = vmul.u32.u64.compose %v4327, %v4326
    %v4329 = vextract.low.u32 %v4328
    %v4330 = vextract.high.u32 %v4328
    %v4331 = vmul.u32.u64.compose %v4327, %v4322
    %v4332 = vextract.low.u32 %v4331
    %v4333 = vextract.high.u32 %v4331
    %v4334 = vmul.u32 %v4327, %v4318
    %v4335 = vadd.s32 %v4330, %v4332
    %vm4336 = vc.u32 %v4330, %v4332
    %v4337 = vadd.s32 %v4333, 1
    %v4338 = vsel %vm4336, %v4337, %v4333
    %v4339 = vadd.s32 %v4334, %v4338
    %v4340 = vadd.s32 %v4339, 536870912
    %v4341 = vshrl.u32 %v4340, 30
    %v4342 = vshll.u32 %v4341, 30
    %v4343 = vsub.s32 %v4339, %v4342
    %vm4344 = vcmp.lt.s32.totalorder %v4343, 0
    %v4345 = vsub.s32 0, %v4343
    %v4346 = vsel %vm4344, %v4345, %v4343
    %v4347 = vclz %v4346
    %v4348 = vsub.s32 %v4347, 2
    %vm4349 = vcmp.gt.s32.totalorder 0, %v4348
    %v4350 = vsel %vm4349, 0, %v4348
    %v4351 = vsub.s32 32, %v4350
    %v4352 = vshll.u32 %v4343, %v4350
    %v4353 = vshrl.u32 %v4335, %v4351
    %v4354 = vor.u32 %v4352, %v4353
    %v4355 = vsub.s32 4294967266, %v4350
    %v4356 = vadd.s32 %v4355, 127
    %v4357 = vshll.u32 %v4356, 23
    %v4358 = vor.u32 4788187, %v4357
    %v4359 = vand.u32 2147483647, %v4358
    %v4361 = vcvt.s32.f32 %v4354
    %v4362 = vmul.f32 %v4361, %v4359
    %v4363 = vxor.u32 %v4362, 2147483648
    %v4364 = vsel %vm4281, %v4363, %v4362
    %v4365 = vsub.s32 4, %v4341
    %v4366 = vsel %vm4281, %v4365, %v4341
    %v4367 = vsel %vm4280, %v4175, %v4364
    %v4368 = vsel %vm4280, 0, %v4366
    %v4369 = vcosq.f32.pop %v4367
    %v4370 = vsinq.f32.pop %v4367
    %vm4371 = vweird.f32 %v4175
    %v4372 = vand.u32 %v4368, 3
    %vm4373 = vcmp.lt.s32.totalorder %v4372, 2
    %vm4374 = vcmp.eq.s32.totalorder %v4372, 0
    %v4375 = vxor.u32 %v4370, 2147483648
    %v4376 = vsel %vm4374, %v4369, %v4375
    %vm4377 = vcmp.eq.s32.totalorder %v4372, 2
    %v4378 = vxor.u32 %v4369, 2147483648
    %v4379 = vsel %vm4377, %v4378, %v4370
    %v4380 = vsel %vm4373, %v4376, %v4379
    %v4381 = vsel %vm4371, nan, %v4380
    %4382 = vmatprep.subr.mxu0 0.0
    %4383 = vmatpush1.msra.mxu0 %v3862
    %4384 = vmatprep.subr.mxu0 0.0
    %4385 = vmatpush1.msra.mxu0 %v3965
    %4386 = vmatprep.subr.mxu0 0.0
    %4387 = vmatpush1.msra.mxu0 0.0
    %4388 = vmatprep.subr.mxu0 0.0
    %4389 = vmatpush1.msra.mxu0 0.0
    %4390 = vmatprep.subr.mxu0 0.0
    %4391 = vmatpush1.msra.mxu0 0.0
    %4392 = vmatprep.subr.mxu0 0.0
    %4393 = vmatpush1.msra.mxu0 0.0
    %4394 = vmatprep.subr.mxu0 0.0
    %4395 = vmatpush1.msra.mxu0 0.0
    %4396 = vmatprep.subr.mxu0 0.0
    %4397 = vmatpush1.msra.mxu0 0.0
    %4398 = vmatprep.subr.mxu0 0.0
    %4399 = vmatpush1.msra.mxu0 0.0
    %4400 = vmatprep.subr.mxu0 0.0
    %4401 = vmatpush1.msra.mxu0 0.0
    %4402 = vmatprep.subr.mxu0 0.0
    %4403 = vmatpush1.msra.mxu0 0.0
    %4404 = vmatprep.subr.mxu0 0.0
    %4405 = vmatpush1.msra.mxu0 0.0
    %4406 = vmatprep.subr.mxu0 0.0
    %4407 = vmatpush1.msra.mxu0 0.0
    %4408 = vmatprep.subr.mxu0 0.0
    %4409 = vmatpush1.msra.mxu0 0.0
    %4410 = vmatprep.subr.mxu0 0.0
    %4411 = vmatpush1.msra.mxu0 0.0
    %4412 = vmatprep.subr.mxu0 0.0
    %4413 = vmatpush1.msra.mxu0 0.0
    %4414 = vmatprep.subr.mxu0 0.0
    %4415 = vmatpush1.msra.mxu0 0.0
    %4416 = vmatprep.subr.mxu0 0.0
    %4417 = vmatpush1.msra.mxu0 0.0
    %4418 = vmatprep.subr.mxu0 0.0
    %4419 = vmatpush1.msra.mxu0 0.0
    %4420 = vmatprep.subr.mxu0 0.0
    %4421 = vmatpush1.msra.mxu0 0.0
    %4422 = vmatprep.subr.mxu0 0.0
    %4423 = vmatpush1.msra.mxu0 0.0
    %4424 = vmatprep.subr.mxu0 0.0
    %4425 = vmatpush1.msra.mxu0 0.0
    %4426 = vmatprep.subr.mxu0 0.0
    %4427 = vmatpush1.msra.mxu0 0.0
    %4428 = vmatprep.subr.mxu0 0.0
    %4429 = vmatpush1.msra.mxu0 0.0
    %4430 = vmatprep.subr.mxu0 0.0
    %4431 = vmatpush1.msra.mxu0 0.0
    %4432 = vmatprep.subr.mxu0 0.0
    %4433 = vmatpush1.msra.mxu0 0.0
    %4434 = vmatprep.subr.mxu0 0.0
    %4435 = vmatpush1.msra.mxu0 0.0
    %4436 = vmatprep.subr.mxu0 0.0
    %4437 = vmatpush1.msra.mxu0 0.0
    %4438 = vmatprep.subr.mxu0 0.0
    %4439 = vmatpush1.msra.mxu0 0.0
    %4440 = vmatprep.subr.mxu0 0.0
    %4441 = vmatpush1.msra.mxu0 0.0
    %4442 = vmatprep.subr.mxu0 0.0
    %4443 = vmatpush1.msra.mxu0 0.0
    %4444 = vmatprep.subr.mxu0 0.0
    %4445 = vmatpush1.msra.mxu0 0.0
    %4446 = vmatprep.mubr.f32.mxu0 0.0
    %4447 = vmatmul.mubr.f32.gmra.mrb[0].mxu0 %v894
    %v4448 = vpop.f32.mrb[0].mxu0
    %v4449 = vadd.f32 0.0, %v4448
    %v4450 = vpop.f32.mrb[0].mxu0
    %4451 = vmatprep.mubr.f32.mxu0 0.0
    %4452 = vmatmul.mubr.f32.gmra.mrb[0].mxu0 %v897
    %v4453 = vpop.f32.mrb[0].mxu0
    %v4454 = vadd.f32 0.0, %v4453
    %v4455 = vpop.f32.mrb[0].mxu0
    %4456 = vmatprep.mubr.f32.mxu0 0.0
    %4457 = vmatmul.mubr.f32.gmra.mrb[0].mxu0 %v900
    %v4458 = vpop.f32.mrb[0].mxu0
    %v4459 = vadd.f32 0.0, %v4458
    %v4460 = vpop.f32.mrb[0].mxu0
    %4461 = vmatprep.mubr.f32.mxu0 0.0
    %4462 = vmatmul.mubr.f32.gmra.mrb[0].mxu0 %v903
    %v4463 = vpop.f32.mrb[0].mxu0
    %v4464 = vadd.f32 0.0, %v4463
    %v4465 = vpop.f32.mrb[0].mxu0
    %4466 = vmatprep.mubr.f32.mxu0 0.0
    %4467 = vmatmul.mubr.f32.gmra.mrb[0].mxu0 %v906
    %v4468 = vpop.f32.mrb[0].mxu0
    %v4469 = vadd.f32 0.0, %v4468
    %v4470 = vpop.f32.mrb[0].mxu0
    %4471 = vmatprep.mubr.f32.mxu0 0.0
    %4472 = vmatmul.mubr.f32.gmra.mrb[0].mxu0 %v909
    %v4473 = vpop.f32.mrb[0].mxu0
    %v4474 = vadd.f32 0.0, %v4473
    %v4475 = vpop.f32.mrb[0].mxu0
    %4476 = vmatprep.mubr.f32.mxu0 0.0
    %4477 = vmatmul.mubr.f32.gmra.mrb[0].mxu0 %v912
    %v4478 = vpop.f32.mrb[0].mxu0
    %v4479 = vadd.f32 0.0, %v4478
    %v4480 = vpop.f32.mrb[0].mxu0
    %4481 = vmatprep.mubr.f32.mxu0 0.0
    %4482 = vmatmul.mubr.f32.gmra.mrb[0].mxu0 %v915
    %v4483 = vpop.f32.mrb[0].mxu0
    %v4484 = vadd.f32 0.0, %v4483
    %v4485 = vpop.f32.mrb[0].mxu0
    %4486 = vdwg.mxu0
    %v4487 = vmul.f32 %v4449, %v149
    %v4488 = vmul.f32 %v4454, %v150
    %v4489 = vmul.f32 %v4459, %v151
    %v4490 = vmul.f32 %v4464, %v152
    %v4491 = vmul.f32 %v4469, %v153
    %v4492 = vmul.f32 %v4474, %v154
    %v4493 = vmul.f32 %v4479, %v155
    %v4494 = vmul.f32 %v4484, %v156
    %v4496 = vsel %vm225, %v4487, 0
    %v4499 = vsel %vm225, %v4488, 0
    %v4502 = vsel %vm225, %v4489, 0
    %v4505 = vsel %vm225, %v4490, 0
    %v4508 = vsel %vm225, %v4491, 0
    %v4511 = vsel %vm225, %v4492, 0
    %v4514 = vsel %vm225, %v4493, 0
    %v4517 = vsel %vm225, %v4494, 0
    %v4520 = vsel %vm225, %v4070, 0
    %v4523 = vsel %vm225, %v4173, 0
    %4525 = vmatprep.subr.mxu0 0.0
    %4526 = vmatpush1.xpose.msra.mxu0 %v4520
    %4527 = vmatprep.subr.mxu0 0.0
    %4528 = vmatpush1.xpose.msra.mxu0 %v4523
    %4529 = vmatprep.subr.mxu0 0.0
    %4530 = vmatpush1.xpose.msra.mxu0 0.0
    %4531 = vmatprep.subr.mxu0 0.0
    %4532 = vmatpush1.xpose.msra.mxu0 0.0
    %4533 = vmatprep.subr.mxu0 0.0
    %4534 = vmatpush1.xpose.msra.mxu0 0.0
    %4535 = vmatprep.subr.mxu0 0.0
    %4536 = vmatpush1.xpose.msra.mxu0 0.0
    %4537 = vmatprep.subr.mxu0 0.0
    %4538 = vmatpush1.xpose.msra.mxu0 0.0
    %4539 = vmatprep.subr.mxu0 0.0
    %4540 = vmatpush1.xpose.msra.mxu0 0.0
    %4541 = vmatprep.subr.mxu0 0.0
    %4542 = vmatpush1.xpose.msra.mxu0 0.0
    %4543 = vmatprep.subr.mxu0 0.0
    %4544 = vmatpush1.xpose.msra.mxu0 0.0
    %4545 = vmatprep.subr.mxu0 0.0
    %4546 = vmatpush1.xpose.msra.mxu0 0.0
    %4547 = vmatprep.subr.mxu0 0.0
    %4548 = vmatpush1.xpose.msra.mxu0 0.0
    %4549 = vmatprep.subr.mxu0 0.0
    %4550 = vmatpush1.xpose.msra.mxu0 0.0
    %4551 = vmatprep.subr.mxu0 0.0
    %4552 = vmatpush1.xpose.msra.mxu0 0.0
    %4553 = vmatprep.subr.mxu0 0.0
    %4554 = vmatpush1.xpose.msra.mxu0 0.0
    %4555 = vmatprep.subr.mxu0 0.0
    %4556 = vmatpush1.xpose.msra.mxu0 0.0
    %4557 = vmatprep.subr.mxu0 0.0
    %4558 = vmatpush1.xpose.msra.mxu0 0.0
    %4559 = vmatprep.subr.mxu0 0.0
    %4560 = vmatpush1.xpose.msra.mxu0 0.0
    %4561 = vmatprep.subr.mxu0 0.0
    %4562 = vmatpush1.xpose.msra.mxu0 0.0
    %4563 = vmatprep.subr.mxu0 0.0
    %4564 = vmatpush1.xpose.msra.mxu0 0.0
    %4565 = vmatprep.subr.mxu0 0.0
    %4566 = vmatpush1.xpose.msra.mxu0 0.0
    %4567 = vmatprep.subr.mxu0 0.0
    %4568 = vmatpush1.xpose.msra.mxu0 0.0
    %4569 = vmatprep.subr.mxu0 0.0
    %4570 = vmatpush1.xpose.msra.mxu0 0.0
    %4571 = vmatprep.subr.mxu0 0.0
    %4572 = vmatpush1.xpose.msra.mxu0 0.0
    %4573 = vmatprep.subr.mxu0 0.0
    %4574 = vmatpush1.xpose.msra.mxu0 0.0
    %4575 = vmatprep.subr.mxu0 0.0
    %4576 = vmatpush1.xpose.msra.mxu0 0.0
    %4577 = vmatprep.subr.mxu0 0.0
    %4578 = vmatpush1.xpose.msra.mxu0 0.0
    %4579 = vmatprep.subr.mxu0 0.0
    %4580 = vmatpush1.xpose.msra.mxu0 0.0
    %4581 = vmatprep.subr.mxu0 0.0
    %4582 = vmatpush1.xpose.msra.mxu0 0.0
    %4583 = vmatprep.subr.mxu0 0.0
    %4584 = vmatpush1.xpose.msra.mxu0 0.0
    %4585 = vmatprep.subr.mxu0 0.0
    %4586 = vmatpush1.xpose.msra.mxu0 0.0
    %4587 = vmatprep.subr.mxu0 0.0
    %4588 = vmatpush1.xpose.msra.mxu0 0.0
    %4589 = vmatprep.mubr.f32.mxu0 0.0
    %4590 = vmatmul.mubr.f32.gmra.mrb[0].mxu0 %v4496
    %v4591 = vpop.f32.mrb[0].mxu0
    %v4592 = vadd.f32 %v207, %v4591
    %v4593 = vpop.f32.mrb[0].mxu0
    %4594 = vmatprep.mubr.f32.mxu0 0.0
    %4595 = vmatmul.mubr.f32.gmra.mrb[0].mxu0 %v4499
    %v4596 = vpop.f32.mrb[0].mxu0
    %v4597 = vadd.f32 %v208, %v4596
    %v4598 = vpop.f32.mrb[0].mxu0
    %4599 = vmatprep.mubr.f32.mxu0 0.0
    %4600 = vmatmul.mubr.f32.gmra.mrb[0].mxu0 %v4502
    %v4601 = vpop.f32.mrb[0].mxu0
    %v4602 = vadd.f32 %v209, %v4601
    %v4603 = vpop.f32.mrb[0].mxu0
    %4604 = vmatprep.mubr.f32.mxu0 0.0
    %4605 = vmatmul.mubr.f32.gmra.mrb[0].mxu0 %v4505
    %v4606 = vpop.f32.mrb[0].mxu0
    %v4607 = vadd.f32 %v210, %v4606
    %v4608 = vpop.f32.mrb[0].mxu0
    %4609 = vmatprep.mubr.f32.mxu0 0.0
    %4610 = vmatmul.mubr.f32.gmra.mrb[0].mxu0 %v4508
    %v4611 = vpop.f32.mrb[0].mxu0
    %v4612 = vadd.f32 %v211, %v4611
    %v4613 = vpop.f32.mrb[0].mxu0
    %4614 = vmatprep.mubr.f32.mxu0 0.0
    %4615 = vmatmul.mubr.f32.gmra.mrb[0].mxu0 %v4511
    %v4616 = vpop.f32.mrb[0].mxu0
    %v4617 = vadd.f32 %v212, %v4616
    %v4618 = vpop.f32.mrb[0].mxu0
    %4619 = vmatprep.mubr.f32.mxu0 0.0
    %4620 = vmatmul.mubr.f32.gmra.mrb[0].mxu0 %v4514
    %v4621 = vpop.f32.mrb[0].mxu0
    %v4622 = vadd.f32 %v213, %v4621
    %v4623 = vpop.f32.mrb[0].mxu0
    %4624 = vmatprep.mubr.f32.mxu0 0.0
    %4625 = vmatmul.mubr.f32.gmra.mrb[0].mxu0 %v4517
    %v4626 = vpop.f32.mrb[0].mxu0
    %v4627 = vadd.f32 %v214, %v4626
    %v4628 = vpop.f32.mrb[0].mxu0
    %4629 = vdwg.mxu0
    %v4630 = vmul.f32 %v4592, 1.442695
    %v4631 = vpow.pop %v4630
    %v4632 = vmul.f32 %v4597, 1.442695
    %v4633 = vpow.pop %v4632
    %v4634 = vmul.f32 %v4602, 1.442695
    %v4635 = vpow.pop %v4634
    %v4636 = vmul.f32 %v4607, 1.442695
    %v4637 = vpow.pop %v4636
    %v4638 = vmul.f32 %v4612, 1.442695
    %v4639 = vpow.pop %v4638
    %v4640 = vmul.f32 %v4617, 1.442695
    %v4641 = vpow.pop %v4640
    %v4642 = vmul.f32 %v4622, 1.442695
    %v4643 = vpow.pop %v4642
    %v4644 = vmul.f32 %v4627, 1.442695
    %v4645 = vpow.pop %v4644
    %v4646 = vsel %vm892, %v4631, 0.0
    %4647 = vadd.xlane.f32.xlu0 %v4646
    %v4648 = vpop.xlane.xlu0 %4647
    %v4649 = vsel %vm892, %v4633, 0.0
    %4650 = vadd.xlane.f32.xlu0 %v4649
    %v4651 = vpop.xlane.xlu0 %4650
    %v4652 = vsel %vm892, %v4635, 0.0
    %4653 = vadd.xlane.f32.xlu0 %v4652
    %v4654 = vpop.xlane.xlu0 %4653
    %v4655 = vsel %vm892, %v4637, 0.0
    %4656 = vadd.xlane.f32.xlu0 %v4655
    %v4657 = vpop.xlane.xlu0 %4656
    %v4658 = vsel %vm892, %v4639, 0.0
    %4659 = vadd.xlane.f32.xlu0 %v4658
    %v4660 = vpop.xlane.xlu0 %4659
    %v4661 = vsel %vm892, %v4641, 0.0
    %4662 = vadd.xlane.f32.xlu0 %v4661
    %v4663 = vpop.xlane.xlu0 %4662
    %v4664 = vsel %vm892, %v4643, 0.0
    %4665 = vadd.xlane.f32.xlu0 %v4664
    %v4666 = vpop.xlane.xlu0 %4665
    %v4667 = vsel %vm892, %v4645, 0.0
    %4668 = vadd.xlane.f32.xlu0 %v4667
    %v4669 = vpop.xlane.xlu0 %4668
    %v4670 = vrcp.pop %v4648
    %v4671 = vrcp.pop %v4651
    %v4672 = vrcp.pop %v4654
    %v4673 = vrcp.pop %v4657
    %v4674 = vrcp.pop %v4660
    %v4675 = vrcp.pop %v4663
    %v4676 = vrcp.pop %v4666
    %v4677 = vrcp.pop %v4669
    %v4678 = vmul.f32 %v4631, %v4670
    %v4679 = vmul.f32 %v4633, %v4671
    %v4680 = vmul.f32 %v4635, %v4672
    %v4681 = vmul.f32 %v4637, %v4673
    %v4682 = vmul.f32 %v4639, %v4674
    %v4683 = vmul.f32 %v4641, %v4675
    %v4684 = vmul.f32 %v4643, %v4676
    %v4685 = vmul.f32 %v4645, %v4677
    %v4687 = vsel %vm892, %v4678, 0
    %v4690 = vsel %vm892, %v4679, 0
    %v4693 = vsel %vm892, %v4680, 0
    %v4696 = vsel %vm892, %v4681, 0
    %v4699 = vsel %vm892, %v4682, 0
    %v4702 = vsel %vm892, %v4683, 0
    %v4705 = vsel %vm892, %v4684, 0
    %v4708 = vsel %vm892, %v4685, 0
    %4710 = vmatprep.subr.mxu0 0.0
    %4711 = vmatpush1.msra.mxu0 %v4278
    %4712 = vmatprep.subr.mxu0 0.0
    %4713 = vmatpush1.msra.mxu0 %v4381
    %4714 = vmatprep.subr.mxu0 0.0
    %4715 = vmatpush1.msra.mxu0 0.0
    %4716 = vmatprep.subr.mxu0 0.0
    %4717 = vmatpush1.msra.mxu0 0.0
    %4718 = vmatprep.subr.mxu0 0.0
    %4719 = vmatpush1.msra.mxu0 0.0
    %4720 = vmatprep.subr.mxu0 0.0
    %4721 = vmatpush1.msra.mxu0 0.0
    %4722 = vmatprep.subr.mxu0 0.0
    %4723 = vmatpush1.msra.mxu0 0.0
    %4724 = vmatprep.subr.mxu0 0.0
    %4725 = vmatpush1.msra.mxu0 0.0
    %4726 = vmatprep.subr.mxu0 0.0
    %4727 = vmatpush1.msra.mxu0 0.0
    %4728 = vmatprep.subr.mxu0 0.0
    %4729 = vmatpush1.msra.mxu0 0.0
    %4730 = vmatprep.subr.mxu0 0.0
    %4731 = vmatpush1.msra.mxu0 0.0
    %4732 = vmatprep.subr.mxu0 0.0
    %4733 = vmatpush1.msra.mxu0 0.0
    %4734 = vmatprep.subr.mxu0 0.0
    %4735 = vmatpush1.msra.mxu0 0.0
    %4736 = vmatprep.subr.mxu0 0.0
    %4737 = vmatpush1.msra.mxu0 0.0
    %4738 = vmatprep.subr.mxu0 0.0
    %4739 = vmatpush1.msra.mxu0 0.0
    %4740 = vmatprep.subr.mxu0 0.0
    %4741 = vmatpush1.msra.mxu0 0.0
    %4742 = vmatprep.subr.mxu0 0.0
    %4743 = vmatpush1.msra.mxu0 0.0
    %4744 = vmatprep.subr.mxu0 0.0
    %4745 = vmatpush1.msra.mxu0 0.0
    %4746 = vmatprep.subr.mxu0 0.0
    %4747 = vmatpush1.msra.mxu0 0.0
    %4748 = vmatprep.subr.mxu0 0.0
    %4749 = vmatpush1.msra.mxu0 0.0
    %4750 = vmatprep.subr.mxu0 0.0
    %4751 = vmatpush1.msra.mxu0 0.0
    %4752 = vmatprep.subr.mxu0 0.0
    %4753 = vmatpush1.msra.mxu0 0.0
    %4754 = vmatprep.subr.mxu0 0.0
    %4755 = vmatpush1.msra.mxu0 0.0
    %4756 = vmatprep.subr.mxu0 0.0
    %4757 = vmatpush1.msra.mxu0 0.0
    %4758 = vmatprep.subr.mxu0 0.0
    %4759 = vmatpush1.msra.mxu0 0.0
    %4760 = vmatprep.subr.mxu0 0.0
    %4761 = vmatpush1.msra.mxu0 0.0
    %4762 = vmatprep.subr.mxu0 0.0
    %4763 = vmatpush1.msra.mxu0 0.0
    %4764 = vmatprep.subr.mxu0 0.0
    %4765 = vmatpush1.msra.mxu0 0.0
    %4766 = vmatprep.subr.mxu0 0.0
    %4767 = vmatpush1.msra.mxu0 0.0
    %4768 = vmatprep.subr.mxu0 0.0
    %4769 = vmatpush1.msra.mxu0 0.0
    %4770 = vmatprep.subr.mxu0 0.0
    %4771 = vmatpush1.msra.mxu0 0.0
    %4772 = vmatprep.subr.mxu0 0.0
    %4773 = vmatpush1.msra.mxu0 0.0
    %4774 = vmatprep.mubr.f32.mxu0 0.0
    %4775 = vmatmul.mubr.f32.gmra.mrb[0].mxu0 %v4687
    %v4776 = vpop.f32.mrb[0].mxu0
    %v4777 = vadd.f32 0.0, %v4776
    %v4778 = vpop.f32.mrb[0].mxu0
    %4779 = vmatprep.mubr.f32.mxu0 0.0
    %4780 = vmatmul.mubr.f32.gmra.mrb[0].mxu0 %v4690
    %v4781 = vpop.f32.mrb[0].mxu0
    %v4782 = vadd.f32 0.0, %v4781
    %v4783 = vpop.f32.mrb[0].mxu0
    %4784 = vmatprep.mubr.f32.mxu0 0.0
    %4785 = vmatmul.mubr.f32.gmra.mrb[0].mxu0 %v4693
    %v4786 = vpop.f32.mrb[0].mxu0
    %v4787 = vadd.f32 0.0, %v4786
    %v4788 = vpop.f32.mrb[0].mxu0
    %4789 = vmatprep.mubr.f32.mxu0 0.0
    %4790 = vmatmul.mubr.f32.gmra.mrb[0].mxu0 %v4696
    %v4791 = vpop.f32.mrb[0].mxu0
    %v4792 = vadd.f32 0.0, %v4791
    %v4793 = vpop.f32.mrb[0].mxu0
    %4794 = vmatprep.mubr.f32.mxu0 0.0
    %4795 = vmatmul.mubr.f32.gmra.mrb[0].mxu0 %v4699
    %v4796 = vpop.f32.mrb[0].mxu0
    %v4797 = vadd.f32 0.0, %v4796
    %v4798 = vpop.f32.mrb[0].mxu0
    %4799 = vmatprep.mubr.f32.mxu0 0.0
    %4800 = vmatmul.mubr.f32.gmra.mrb[0].mxu0 %v4702
    %v4801 = vpop.f32.mrb[0].mxu0
    %v4802 = vadd.f32 0.0, %v4801
    %v4803 = vpop.f32.mrb[0].mxu0
    %4804 = vmatprep.mubr.f32.mxu0 0.0
    %4805 = vmatmul.mubr.f32.gmra.mrb[0].mxu0 %v4705
    %v4806 = vpop.f32.mrb[0].mxu0
    %v4807 = vadd.f32 0.0, %v4806
    %v4808 = vpop.f32.mrb[0].mxu0
    %4809 = vmatprep.mubr.f32.mxu0 0.0
    %4810 = vmatmul.mubr.f32.gmra.mrb[0].mxu0 %v4708
    %v4811 = vpop.f32.mrb[0].mxu0
    %v4812 = vadd.f32 0.0, %v4811
    %v4813 = vpop.f32.mrb[0].mxu0
    %4814 = vdwg.mxu0
    %v4815 = vmul.f32 %v4777, %v149
    %v4816 = vmul.f32 %v4782, %v150
    %v4817 = vmul.f32 %v4787, %v151
    %v4818 = vmul.f32 %v4792, %v152
    %v4819 = vmul.f32 %v4797, %v153
    %v4820 = vmul.f32 %v4802, %v154
    %v4821 = vmul.f32 %v4807, %v155
    %v4822 = vmul.f32 %v4812, %v156
    %4823 = vmatprep.subr.mxu0 0.0
    %4824 = vmatpush1.msra.mxu0 %v4815
    %4825 = vmatprep.subr.mxu0 0.0
    %4826 = vmatpush1.msra.mxu0 %v4816
    %4827 = vmatprep.subr.mxu0 0.0
    %4828 = vmatpush1.msra.mxu0 %v4817
    %4829 = vmatprep.subr.mxu0 0.0
    %4830 = vmatpush1.msra.mxu0 %v4818
    %4831 = vmatprep.subr.mxu0 0.0
    %4832 = vmatpush1.msra.mxu0 %v4819
    %4833 = vmatprep.subr.mxu0 0.0
    %4834 = vmatpush1.msra.mxu0 %v4820
    %4835 = vmatprep.subr.mxu0 0.0
    %4836 = vmatpush1.msra.mxu0 %v4821
    %4837 = vmatprep.subr.mxu0 0.0
    %4838 = vmatpush1.msra.mxu0 %v4822
    %4839 = vmatprep.subr.mxu0 0.0
    %4840 = vmatpush1.msra.mxu0 0.0
    %4841 = vmatprep.subr.mxu0 0.0
    %4842 = vmatpush1.msra.mxu0 0.0
    %4843 = vmatprep.subr.mxu0 0.0
    %4844 = vmatpush1.msra.mxu0 0.0
    %4845 = vmatprep.subr.mxu0 0.0
    %4846 = vmatpush1.msra.mxu0 0.0
    %4847 = vmatprep.subr.mxu0 0.0
    %4848 = vmatpush1.msra.mxu0 0.0
    %4849 = vmatprep.subr.mxu0 0.0
    %4850 = vmatpush1.msra.mxu0 0.0
    %4851 = vmatprep.subr.mxu0 0.0
    %4852 = vmatpush1.msra.mxu0 0.0
    %4853 = vmatprep.subr.mxu0 0.0
    %4854 = vmatpush1.msra.mxu0 0.0
    %4855 = vmatprep.subr.mxu0 0.0
    %4856 = vmatpush1.msra.mxu0 0.0
    %4857 = vmatprep.subr.mxu0 0.0
    %4858 = vmatpush1.msra.mxu0 0.0
    %4859 = vmatprep.subr.mxu0 0.0
    %4860 = vmatpush1.msra.mxu0 0.0
    %4861 = vmatprep.subr.mxu0 0.0
    %4862 = vmatpush1.msra.mxu0 0.0
    %4863 = vmatprep.subr.mxu0 0.0
    %4864 = vmatpush1.msra.mxu0 0.0
    %4865 = vmatprep.subr.mxu0 0.0
    %4866 = vmatpush1.msra.mxu0 0.0
    %4867 = vmatprep.subr.mxu0 0.0
    %4868 = vmatpush1.msra.mxu0 0.0
    %4869 = vmatprep.subr.mxu0 0.0
    %4870 = vmatpush1.msra.mxu0 0.0
    %4871 = vmatprep.subr.mxu0 0.0
    %4872 = vmatpush1.msra.mxu0 0.0
    %4873 = vmatprep.subr.mxu0 0.0
    %4874 = vmatpush1.msra.mxu0 0.0
    %4875 = vmatprep.subr.mxu0 0.0
    %4876 = vmatpush1.msra.mxu0 0.0
    %4877 = vmatprep.subr.mxu0 0.0
    %4878 = vmatpush1.msra.mxu0 0.0
    %4879 = vmatprep.subr.mxu0 0.0
    %4880 = vmatpush1.msra.mxu0 0.0
    %4881 = vmatprep.subr.mxu0 0.0
    %4882 = vmatpush1.msra.mxu0 0.0
    %4883 = vmatprep.subr.mxu0 0.0
    %4884 = vmatpush1.msra.mxu0 0.0
    %4885 = vmatprep.subr.mxu0 0.0
    %4886 = vmatpush1.msra.mxu0 0.0
    %4887 = vmatprep.mubr.f32.mxu0 0.0
    %4888 = vmatmul.mubr.f32.gmra.mrb[0].mxu0 %v1361
    %v4889 = vpop.f32.mrb[0].mxu0
    %v4890 = vadd.f32 %v1358, %v4889
    %v4891 = vpop.f32.mrb[0].mxu0
    %4892 = vmatprep.mubr.f32.mxu0 0.0
    %4893 = vmatmul.mubr.f32.gmra.mrb[0].mxu0 %v1364
    %v4894 = vpop.f32.mrb[0].mxu0
    %v4895 = vadd.f32 %v1358, %v4894
    %v4896 = vpop.f32.mrb[0].mxu0
    %4897 = vdwg.mxu0
    %v4898 = vand.u32 2147483647, %v4890
    %vm4899 = vcmp.le.f32.partialorder %v4898, 0.7853982
    %vm4900 = vcmp.lt.s32.totalorder %v4890, 0
    %v4901 = vand.u32 %v4890, 2139095040
    %v4902 = vshrl.u32 %v4901, 23
    %v4903 = vsub.s32 %v4902, 127
    %v4904 = vand.u32 2147483647, %v4890
    %v4905 = vand.u32 %v4904, 8388607
    %v4906 = vor.u32 %v4905, 8388608
    %v4907 = vsub.s32 0, %v4906
    %v4908 = vadd.s32 %v4903, 1
    %vm4909 = vcmp.gt.s32.totalorder %v4908, 0
    %v4910 = vsel %vm4909, %v4908, 0
    %v4911 = vshrl.u32 %v4910, 5
    %v4912 = vand.u32 %v4910, 31
    %v4913 = vsub.s32 32, %v4912
    %v4914 = vshrl.u32 683565275, %v4913
    %v4915 = vshll.u32 683565275, %v4912
    %v4916 = vshrl.u32 2475754826, %v4913
    %v4917 = vor.u32 %v4915, %v4916
    %v4918 = vshll.u32 2475754826, %v4912
    %v4919 = vshrl.u32 2131351028, %v4913
    %v4920 = vor.u32 %v4918, %v4919
    %v4921 = vshll.u32 2131351028, %v4912
    %v4922 = vshrl.u32 2102212464, %v4913
    %v4923 = vor.u32 %v4921, %v4922
    %v4924 = vshll.u32 2102212464, %v4912
    %v4925 = vshrl.u32 920167782, %v4913
    %v4926 = vor.u32 %v4924, %v4925
    %v4927 = vshll.u32 920167782, %v4912
    %v4928 = vshrl.u32 1326507024, %v4913
    %v4929 = vor.u32 %v4927, %v4928
    %vm4930 = vcmp.lt.s32.totalorder %v4911, 1
    %vm4931 = vcmp.lt.s32.totalorder %v4911, 2
    %vm4932 = vcmp.lt.s32.totalorder %v4911, 3
    %vm4933 = vcmp.lt.s32.totalorder %v4911, 4
    %v4934 = vsel %vm4930, %v4914, %v4917
    %v4935 = vsel %vm4933, %v4923, 2102212464
    %v4936 = vsel %vm4932, %v4920, %v4935
    %v4937 = vsel %vm4931, %v4934, %v4936
    %v4938 = vsel %vm4930, %v4917, %v4920
    %v4939 = vsel %vm4933, %v4926, 920167782
    %v4940 = vsel %vm4932, %v4923, %v4939
    %v4941 = vsel %vm4931, %v4938, %v4940
    %v4942 = vsel %vm4930, %v4920, %v4923
    %v4943 = vsel %vm4933, %v4929, 1326507024
    %v4944 = vsel %vm4932, %v4926, %v4943
    %v4945 = vsel %vm4931, %v4942, %v4944
    %v4946 = vshll.u32 %v4906, 8
    %v4947 = vmul.u32.u64.compose %v4946, %v4945
    %v4948 = vextract.low.u32 %v4947
    %v4949 = vextract.high.u32 %v4947
    %v4950 = vmul.u32.u64.compose %v4946, %v4941
    %v4951 = vextract.low.u32 %v4950
    %v4952 = vextract.high.u32 %v4950
    %v4953 = vmul.u32 %v4946, %v4937
    %v4954 = vadd.s32 %v4949, %v4951
    %vm4955 = vc.u32 %v4949, %v4951
    %v4956 = vadd.s32 %v4952, 1
    %v4957 = vsel %vm4955, %v4956, %v4952
    %v4958 = vadd.s32 %v4953, %v4957
    %v4959 = vadd.s32 %v4958, 536870912
    %v4960 = vshrl.u32 %v4959, 30
    %v4961 = vshll.u32 %v4960, 30
    %v4962 = vsub.s32 %v4958, %v4961
    %vm4963 = vcmp.lt.s32.totalorder %v4962, 0
    %v4964 = vsub.s32 0, %v4962
    %v4965 = vsel %vm4963, %v4964, %v4962
    %v4966 = vclz %v4965
    %v4967 = vsub.s32 %v4966, 2
    %vm4968 = vcmp.gt.s32.totalorder 0, %v4967
    %v4969 = vsel %vm4968, 0, %v4967
    %v4970 = vsub.s32 32, %v4969
    %v4971 = vshll.u32 %v4962, %v4969
    %v4972 = vshrl.u32 %v4954, %v4970
    %v4973 = vor.u32 %v4971, %v4972
    %v4974 = vsub.s32 4294967266, %v4969
    %v4975 = vadd.s32 %v4974, 127
    %v4976 = vshll.u32 %v4975, 23
    %v4977 = vor.u32 4788187, %v4976
    %v4978 = vand.u32 2147483647, %v4977
    %v4980 = vcvt.s32.f32 %v4973
    %v4981 = vmul.f32 %v4980, %v4978
    %v4982 = vxor.u32 %v4981, 2147483648
    %v4983 = vsel %vm4900, %v4982, %v4981
    %v4984 = vsub.s32 4, %v4960
    %v4985 = vsel %vm4900, %v4984, %v4960
    %v4986 = vsel %vm4899, %v4890, %v4983
    %v4987 = vsel %vm4899, 0, %v4985
    %v4988 = vcosq.f32.pop %v4986
    %v4989 = vsinq.f32.pop %v4986
    %vm4990 = vweird.f32 %v4890
    %v4991 = vand.u32 %v4987, 3
    %vm4992 = vcmp.lt.s32.totalorder %v4991, 2
    %vm4993 = vcmp.eq.s32.totalorder %v4991, 0
    %v4994 = vxor.u32 %v4989, 2147483648
    %v4995 = vsel %vm4993, %v4988, %v4994
    %vm4996 = vcmp.eq.s32.totalorder %v4991, 2
    %v4997 = vxor.u32 %v4988, 2147483648
    %v4998 = vsel %vm4996, %v4997, %v4989
    %v4999 = vsel %vm4992, %v4995, %v4998
    %v5000 = vsel %vm4990, nan, %v4999
    %v5001 = vand.u32 2147483647, %v4895
    %vm5002 = vcmp.le.f32.partialorder %v5001, 0.7853982
    %vm5003 = vcmp.lt.s32.totalorder %v4895, 0
    %v5004 = vand.u32 %v4895, 2139095040
    %v5005 = vshrl.u32 %v5004, 23
    %v5006 = vsub.s32 %v5005, 127
    %v5007 = vand.u32 2147483647, %v4895
    %v5008 = vand.u32 %v5007, 8388607
    %v5009 = vor.u32 %v5008, 8388608
    %v5010 = vsub.s32 0, %v5009
    %v5011 = vadd.s32 %v5006, 1
    %vm5012 = vcmp.gt.s32.totalorder %v5011, 0
    %v5013 = vsel %vm5012, %v5011, 0
    %v5014 = vshrl.u32 %v5013, 5
    %v5015 = vand.u32 %v5013, 31
    %v5016 = vsub.s32 32, %v5015
    %v5017 = vshrl.u32 683565275, %v5016
    %v5018 = vshll.u32 683565275, %v5015
    %v5019 = vshrl.u32 2475754826, %v5016
    %v5020 = vor.u32 %v5018, %v5019
    %v5021 = vshll.u32 2475754826, %v5015
    %v5022 = vshrl.u32 2131351028, %v5016
    %v5023 = vor.u32 %v5021, %v5022
    %v5024 = vshll.u32 2131351028, %v5015
    %v5025 = vshrl.u32 2102212464, %v5016
    %v5026 = vor.u32 %v5024, %v5025
    %v5027 = vshll.u32 2102212464, %v5015
    %v5028 = vshrl.u32 920167782, %v5016
    %v5029 = vor.u32 %v5027, %v5028
    %v5030 = vshll.u32 920167782, %v5015
    %v5031 = vshrl.u32 1326507024, %v5016
    %v5032 = vor.u32 %v5030, %v5031
    %vm5033 = vcmp.lt.s32.totalorder %v5014, 1
    %vm5034 = vcmp.lt.s32.totalorder %v5014, 2
    %vm5035 = vcmp.lt.s32.totalorder %v5014, 3
    %vm5036 = vcmp.lt.s32.totalorder %v5014, 4
    %v5037 = vsel %vm5033, %v5017, %v5020
    %v5038 = vsel %vm5036, %v5026, 2102212464
    %v5039 = vsel %vm5035, %v5023, %v5038
    %v5040 = vsel %vm5034, %v5037, %v5039
    %v5041 = vsel %vm5033, %v5020, %v5023
    %v5042 = vsel %vm5036, %v5029, 920167782
    %v5043 = vsel %vm5035, %v5026, %v5042
    %v5044 = vsel %vm5034, %v5041, %v5043
    %v5045 = vsel %vm5033, %v5023, %v5026
    %v5046 = vsel %vm5036, %v5032, 1326507024
    %v5047 = vsel %vm5035, %v5029, %v5046
    %v5048 = vsel %vm5034, %v5045, %v5047
    %v5049 = vshll.u32 %v5009, 8
    %v5050 = vmul.u32.u64.compose %v5049, %v5048
    %v5051 = vextract.low.u32 %v5050
    %v5052 = vextract.high.u32 %v5050
    %v5053 = vmul.u32.u64.compose %v5049, %v5044
    %v5054 = vextract.low.u32 %v5053
    %v5055 = vextract.high.u32 %v5053
    %v5056 = vmul.u32 %v5049, %v5040
    %v5057 = vadd.s32 %v5052, %v5054
    %vm5058 = vc.u32 %v5052, %v5054
    %v5059 = vadd.s32 %v5055, 1
    %v5060 = vsel %vm5058, %v5059, %v5055
    %v5061 = vadd.s32 %v5056, %v5060
    %v5062 = vadd.s32 %v5061, 536870912
    %v5063 = vshrl.u32 %v5062, 30
    %v5064 = vshll.u32 %v5063, 30
    %v5065 = vsub.s32 %v5061, %v5064
    %vm5066 = vcmp.lt.s32.totalorder %v5065, 0
    %v5067 = vsub.s32 0, %v5065
    %v5068 = vsel %vm5066, %v5067, %v5065
    %v5069 = vclz %v5068
    %v5070 = vsub.s32 %v5069, 2
    %vm5071 = vcmp.gt.s32.totalorder 0, %v5070
    %v5072 = vsel %vm5071, 0, %v5070
    %v5073 = vsub.s32 32, %v5072
    %v5074 = vshll.u32 %v5065, %v5072
    %v5075 = vshrl.u32 %v5057, %v5073
    %v5076 = vor.u32 %v5074, %v5075
    %v5077 = vsub.s32 4294967266, %v5072
    %v5078 = vadd.s32 %v5077, 127
    %v5079 = vshll.u32 %v5078, 23
    %v5080 = vor.u32 4788187, %v5079
    %v5081 = vand.u32 2147483647, %v5080
    %v5083 = vcvt.s32.f32 %v5076
    %v5084 = vmul.f32 %v5083, %v5081
    %v5085 = vxor.u32 %v5084, 2147483648
    %v5086 = vsel %vm5003, %v5085, %v5084
    %v5087 = vsub.s32 4, %v5063
    %v5088 = vsel %vm5003, %v5087, %v5063
    %v5089 = vsel %vm5002, %v4895, %v5086
    %v5090 = vsel %vm5002, 0, %v5088
    %v5091 = vcosq.f32.pop %v5089
    %v5092 = vsinq.f32.pop %v5089
    %vm5093 = vweird.f32 %v4895
    %v5094 = vand.u32 %v5090, 3
    %vm5095 = vcmp.lt.s32.totalorder %v5094, 2
    %vm5096 = vcmp.eq.s32.totalorder %v5094, 0
    %v5097 = vxor.u32 %v5092, 2147483648
    %v5098 = vsel %vm5096, %v5091, %v5097
    %vm5099 = vcmp.eq.s32.totalorder %v5094, 2
    %v5100 = vxor.u32 %v5091, 2147483648
    %v5101 = vsel %vm5099, %v5100, %v5092
    %v5102 = vsel %vm5095, %v5098, %v5101
    %v5103 = vsel %vm5093, nan, %v5102
    %v5105 = vsel %vm225, %v3756, 0
    %v5108 = vsel %vm225, %v3757, 0
    %5110 = vmatprep.subr.mxu0 0.0
    %5111 = vmatpush1.msra.mxu0 %v43
    %5112 = vmatprep.subr.mxu0 0.0
    %5113 = vmatpush1.msra.mxu0 %v44
    %5114 = vmatprep.subr.mxu0 0.0
    %5115 = vmatpush1.msra.mxu0 %v45
    %5116 = vmatprep.subr.mxu0 0.0
    %5117 = vmatpush1.msra.mxu0 %v46
    %5118 = vmatprep.subr.mxu0 0.0
    %5119 = vmatpush1.msra.mxu0 0.0
    %5120 = vmatprep.subr.mxu0 0.0
    %5121 = vmatpush1.msra.mxu0 0.0
    %5122 = vmatprep.subr.mxu0 0.0
    %5123 = vmatpush1.msra.mxu0 0.0
    %5124 = vmatprep.subr.mxu0 0.0
    %5125 = vmatpush1.msra.mxu0 0.0
    %5126 = vmatprep.subr.mxu0 0.0
    %5127 = vmatpush1.msra.mxu0 0.0
    %5128 = vmatprep.subr.mxu0 0.0
    %5129 = vmatpush1.msra.mxu0 0.0
    %5130 = vmatprep.subr.mxu0 0.0
    %5131 = vmatpush1.msra.mxu0 0.0
    %5132 = vmatprep.subr.mxu0 0.0
    %5133 = vmatpush1.msra.mxu0 0.0
    %5134 = vmatprep.subr.mxu0 0.0
    %5135 = vmatpush1.msra.mxu0 0.0
    %5136 = vmatprep.subr.mxu0 0.0
    %5137 = vmatpush1.msra.mxu0 0.0
    %5138 = vmatprep.subr.mxu0 0.0
    %5139 = vmatpush1.msra.mxu0 0.0
    %5140 = vmatprep.subr.mxu0 0.0
    %5141 = vmatpush1.msra.mxu0 0.0
    %5142 = vmatprep.subr.mxu0 0.0
    %5143 = vmatpush1.msra.mxu0 0.0
    %5144 = vmatprep.subr.mxu0 0.0
    %5145 = vmatpush1.msra.mxu0 0.0
    %5146 = vmatprep.subr.mxu0 0.0
    %5147 = vmatpush1.msra.mxu0 0.0
    %5148 = vmatprep.subr.mxu0 0.0
    %5149 = vmatpush1.msra.mxu0 0.0
    %5150 = vmatprep.subr.mxu0 0.0
    %5151 = vmatpush1.msra.mxu0 0.0
    %5152 = vmatprep.subr.mxu0 0.0
    %5153 = vmatpush1.msra.mxu0 0.0
    %5154 = vmatprep.subr.mxu0 0.0
    %5155 = vmatpush1.msra.mxu0 0.0
    %5156 = vmatprep.subr.mxu0 0.0
    %5157 = vmatpush1.msra.mxu0 0.0
    %5158 = vmatprep.subr.mxu0 0.0
    %5159 = vmatpush1.msra.mxu0 0.0
    %5160 = vmatprep.subr.mxu0 0.0
    %5161 = vmatpush1.msra.mxu0 0.0
    %5162 = vmatprep.subr.mxu0 0.0
    %5163 = vmatpush1.msra.mxu0 0.0
    %5164 = vmatprep.subr.mxu0 0.0
    %5165 = vmatpush1.msra.mxu0 0.0
    %5166 = vmatprep.subr.mxu0 0.0
    %5167 = vmatpush1.msra.mxu0 0.0
    %5168 = vmatprep.subr.mxu0 0.0
    %5169 = vmatpush1.msra.mxu0 0.0
    %5170 = vmatprep.subr.mxu0 0.0
    %5171 = vmatpush1.msra.mxu0 0.0
    %5172 = vmatprep.subr.mxu0 0.0
    %5173 = vmatpush1.msra.mxu0 0.0
    %5174 = vmatprep.mubr.f32.mxu0 0.0
    %5175 = vmatmul.mubr.f32.gmra.mrb[0].mxu0 %v5105
    %v5176 = vpop.f32.mrb[0].mxu0
    %v5177 = vadd.f32 %v1650, %v5176
    %v5178 = vpop.f32.mrb[0].mxu0
    %5179 = vmatprep.mubr.f32.mxu0 0.0
    %5180 = vmatmul.mubr.f32.gmra.mrb[0].mxu0 %v5108
    %v5181 = vpop.f32.mrb[0].mxu0
    %v5182 = vadd.f32 %v1650, %v5181
    %v5183 = vpop.f32.mrb[0].mxu0
    %5184 = vdwg.mxu0
    %v5185 = vadd.f32 %v5177, %v1732
    %v5186 = vadd.f32 %v5182, %v1732
    %v5187 = vand.u32 2147483647, %v5185
    %vm5188 = vcmp.le.f32.partialorder %v5187, 0.7853982
    %vm5189 = vcmp.lt.s32.totalorder %v5185, 0
    %v5190 = vand.u32 %v5185, 2139095040
    %v5191 = vshrl.u32 %v5190, 23
    %v5192 = vsub.s32 %v5191, 127
    %v5193 = vand.u32 2147483647, %v5185
    %v5194 = vand.u32 %v5193, 8388607
    %v5195 = vor.u32 %v5194, 8388608
    %v5196 = vsub.s32 0, %v5195
    %v5197 = vadd.s32 %v5192, 1
    %vm5198 = vcmp.gt.s32.totalorder %v5197, 0
    %v5199 = vsel %vm5198, %v5197, 0
    %v5200 = vshrl.u32 %v5199, 5
    %v5201 = vand.u32 %v5199, 31
    %v5202 = vsub.s32 32, %v5201
    %v5203 = vshrl.u32 683565275, %v5202
    %v5204 = vshll.u32 683565275, %v5201
    %v5205 = vshrl.u32 2475754826, %v5202
    %v5206 = vor.u32 %v5204, %v5205
    %v5207 = vshll.u32 2475754826, %v5201
    %v5208 = vshrl.u32 2131351028, %v5202
    %v5209 = vor.u32 %v5207, %v5208
    %v5210 = vshll.u32 2131351028, %v5201
    %v5211 = vshrl.u32 2102212464, %v5202
    %v5212 = vor.u32 %v5210, %v5211
    %v5213 = vshll.u32 2102212464, %v5201
    %v5214 = vshrl.u32 920167782, %v5202
    %v5215 = vor.u32 %v5213, %v5214
    %v5216 = vshll.u32 920167782, %v5201
    %v5217 = vshrl.u32 1326507024, %v5202
    %v5218 = vor.u32 %v5216, %v5217
    %vm5219 = vcmp.lt.s32.totalorder %v5200, 1
    %vm5220 = vcmp.lt.s32.totalorder %v5200, 2
    %vm5221 = vcmp.lt.s32.totalorder %v5200, 3
    %vm5222 = vcmp.lt.s32.totalorder %v5200, 4
    %v5223 = vsel %vm5219, %v5203, %v5206
    %v5224 = vsel %vm5222, %v5212, 2102212464
    %v5225 = vsel %vm5221, %v5209, %v5224
    %v5226 = vsel %vm5220, %v5223, %v5225
    %v5227 = vsel %vm5219, %v5206, %v5209
    %v5228 = vsel %vm5222, %v5215, 920167782
    %v5229 = vsel %vm5221, %v5212, %v5228
    %v5230 = vsel %vm5220, %v5227, %v5229
    %v5231 = vsel %vm5219, %v5209, %v5212
    %v5232 = vsel %vm5222, %v5218, 1326507024
    %v5233 = vsel %vm5221, %v5215, %v5232
    %v5234 = vsel %vm5220, %v5231, %v5233
    %v5235 = vshll.u32 %v5195, 8
    %v5236 = vmul.u32.u64.compose %v5235, %v5234
    %v5237 = vextract.low.u32 %v5236
    %v5238 = vextract.high.u32 %v5236
    %v5239 = vmul.u32.u64.compose %v5235, %v5230
    %v5240 = vextract.low.u32 %v5239
    %v5241 = vextract.high.u32 %v5239
    %v5242 = vmul.u32 %v5235, %v5226
    %v5243 = vadd.s32 %v5238, %v5240
    %vm5244 = vc.u32 %v5238, %v5240
    %v5245 = vadd.s32 %v5241, 1
    %v5246 = vsel %vm5244, %v5245, %v5241
    %v5247 = vadd.s32 %v5242, %v5246
    %v5248 = vadd.s32 %v5247, 536870912
    %v5249 = vshrl.u32 %v5248, 30
    %v5250 = vshll.u32 %v5249, 30
    %v5251 = vsub.s32 %v5247, %v5250
    %vm5252 = vcmp.lt.s32.totalorder %v5251, 0
    %v5253 = vsub.s32 0, %v5251
    %v5254 = vsel %vm5252, %v5253, %v5251
    %v5255 = vclz %v5254
    %v5256 = vsub.s32 %v5255, 2
    %vm5257 = vcmp.gt.s32.totalorder 0, %v5256
    %v5258 = vsel %vm5257, 0, %v5256
    %v5259 = vsub.s32 32, %v5258
    %v5260 = vshll.u32 %v5251, %v5258
    %v5261 = vshrl.u32 %v5243, %v5259
    %v5262 = vor.u32 %v5260, %v5261
    %v5263 = vsub.s32 4294967266, %v5258
    %v5264 = vadd.s32 %v5263, 127
    %v5265 = vshll.u32 %v5264, 23
    %v5266 = vor.u32 4788187, %v5265
    %v5267 = vand.u32 2147483647, %v5266
    %v5269 = vcvt.s32.f32 %v5262
    %v5270 = vmul.f32 %v5269, %v5267
    %v5271 = vxor.u32 %v5270, 2147483648
    %v5272 = vsel %vm5189, %v5271, %v5270
    %v5273 = vsub.s32 4, %v5249
    %v5274 = vsel %vm5189, %v5273, %v5249
    %v5275 = vsel %vm5188, %v5185, %v5272
    %v5276 = vsel %vm5188, 0, %v5274
    %v5277 = vcosq.f32.pop %v5275
    %v5278 = vsinq.f32.pop %v5275
    %vm5279 = vweird.f32 %v5185
    %v5280 = vand.u32 %v5276, 3
    %vm5281 = vcmp.lt.s32.totalorder %v5280, 2
    %vm5282 = vcmp.eq.s32.totalorder %v5280, 0
    %v5283 = vxor.u32 %v5278, 2147483648
    %v5284 = vsel %vm5282, %v5277, %v5283
    %vm5285 = vcmp.eq.s32.totalorder %v5280, 2
    %v5286 = vxor.u32 %v5277, 2147483648
    %v5287 = vsel %vm5285, %v5286, %v5278
    %v5288 = vsel %vm5281, %v5284, %v5287
    %v5289 = vsel %vm5279, nan, %v5288
    %v5290 = vand.u32 2147483647, %v5186
    %vm5291 = vcmp.le.f32.partialorder %v5290, 0.7853982
    %vm5292 = vcmp.lt.s32.totalorder %v5186, 0
    %v5293 = vand.u32 %v5186, 2139095040
    %v5294 = vshrl.u32 %v5293, 23
    %v5295 = vsub.s32 %v5294, 127
    %v5296 = vand.u32 2147483647, %v5186
    %v5297 = vand.u32 %v5296, 8388607
    %v5298 = vor.u32 %v5297, 8388608
    %v5299 = vsub.s32 0, %v5298
    %v5300 = vadd.s32 %v5295, 1
    %vm5301 = vcmp.gt.s32.totalorder %v5300, 0
    %v5302 = vsel %vm5301, %v5300, 0
    %v5303 = vshrl.u32 %v5302, 5
    %v5304 = vand.u32 %v5302, 31
    %v5305 = vsub.s32 32, %v5304
    %v5306 = vshrl.u32 683565275, %v5305
    %v5307 = vshll.u32 683565275, %v5304
    %v5308 = vshrl.u32 2475754826, %v5305
    %v5309 = vor.u32 %v5307, %v5308
    %v5310 = vshll.u32 2475754826, %v5304
    %v5311 = vshrl.u32 2131351028, %v5305
    %v5312 = vor.u32 %v5310, %v5311
    %v5313 = vshll.u32 2131351028, %v5304
    %v5314 = vshrl.u32 2102212464, %v5305
    %v5315 = vor.u32 %v5313, %v5314
    %v5316 = vshll.u32 2102212464, %v5304
    %v5317 = vshrl.u32 920167782, %v5305
    %v5318 = vor.u32 %v5316, %v5317
    %v5319 = vshll.u32 920167782, %v5304
    %v5320 = vshrl.u32 1326507024, %v5305
    %v5321 = vor.u32 %v5319, %v5320
    %vm5322 = vcmp.lt.s32.totalorder %v5303, 1
    %vm5323 = vcmp.lt.s32.totalorder %v5303, 2
    %vm5324 = vcmp.lt.s32.totalorder %v5303, 3
    %vm5325 = vcmp.lt.s32.totalorder %v5303, 4
    %v5326 = vsel %vm5322, %v5306, %v5309
    %v5327 = vsel %vm5325, %v5315, 2102212464
    %v5328 = vsel %vm5324, %v5312, %v5327
    %v5329 = vsel %vm5323, %v5326, %v5328
    %v5330 = vsel %vm5322, %v5309, %v5312
    %v5331 = vsel %vm5325, %v5318, 920167782
    %v5332 = vsel %vm5324, %v5315, %v5331
    %v5333 = vsel %vm5323, %v5330, %v5332
    %v5334 = vsel %vm5322, %v5312, %v5315
    %v5335 = vsel %vm5325, %v5321, 1326507024
    %v5336 = vsel %vm5324, %v5318, %v5335
    %v5337 = vsel %vm5323, %v5334, %v5336
    %v5338 = vshll.u32 %v5298, 8
    %v5339 = vmul.u32.u64.compose %v5338, %v5337
    %v5340 = vextract.low.u32 %v5339
    %v5341 = vextract.high.u32 %v5339
    %v5342 = vmul.u32.u64.compose %v5338, %v5333
    %v5343 = vextract.low.u32 %v5342
    %v5344 = vextract.high.u32 %v5342
    %v5345 = vmul.u32 %v5338, %v5329
    %v5346 = vadd.s32 %v5341, %v5343
    %vm5347 = vc.u32 %v5341, %v5343
    %v5348 = vadd.s32 %v5344, 1
    %v5349 = vsel %vm5347, %v5348, %v5344
    %v5350 = vadd.s32 %v5345, %v5349
    %v5351 = vadd.s32 %v5350, 536870912
    %v5352 = vshrl.u32 %v5351, 30
    %v5353 = vshll.u32 %v5352, 30
    %v5354 = vsub.s32 %v5350, %v5353
    %vm5355 = vcmp.lt.s32.totalorder %v5354, 0
    %v5356 = vsub.s32 0, %v5354
    %v5357 = vsel %vm5355, %v5356, %v5354
    %v5358 = vclz %v5357
    %v5359 = vsub.s32 %v5358, 2
    %vm5360 = vcmp.gt.s32.totalorder 0, %v5359
    %v5361 = vsel %vm5360, 0, %v5359
    %v5362 = vsub.s32 32, %v5361
    %v5363 = vshll.u32 %v5354, %v5361
    %v5364 = vshrl.u32 %v5346, %v5362
    %v5365 = vor.u32 %v5363, %v5364
    %v5366 = vsub.s32 4294967266, %v5361
    %v5367 = vadd.s32 %v5366, 127
    %v5368 = vshll.u32 %v5367, 23
    %v5369 = vor.u32 4788187, %v5368
    %v5370 = vand.u32 2147483647, %v5369
    %v5372 = vcvt.s32.f32 %v5365
    %v5373 = vmul.f32 %v5372, %v5370
    %v5374 = vxor.u32 %v5373, 2147483648
    %v5375 = vsel %vm5292, %v5374, %v5373
    %v5376 = vsub.s32 4, %v5352
    %v5377 = vsel %vm5292, %v5376, %v5352
    %v5378 = vsel %vm5291, %v5186, %v5375
    %v5379 = vsel %vm5291, 0, %v5377
    %v5380 = vcosq.f32.pop %v5378
    %v5381 = vsinq.f32.pop %v5378
    %vm5382 = vweird.f32 %v5186
    %v5383 = vand.u32 %v5379, 3
    %vm5384 = vcmp.lt.s32.totalorder %v5383, 2
    %vm5385 = vcmp.eq.s32.totalorder %v5383, 0
    %v5386 = vxor.u32 %v5381, 2147483648
    %v5387 = vsel %vm5385, %v5380, %v5386
    %vm5388 = vcmp.eq.s32.totalorder %v5383, 2
    %v5389 = vxor.u32 %v5380, 2147483648
    %v5390 = vsel %vm5388, %v5389, %v5381
    %v5391 = vsel %vm5384, %v5387, %v5390
    %v5392 = vsel %vm5382, nan, %v5391
    %v5393 = vmul.f32 %v5289, 0.5
    %v5394 = vmul.f32 %v5392, 0.5
    %v5395 = vmul.f32 %v5289, 0.70710677
    %v5396 = vmul.f32 %v5392, 0.70710677
    %v5397 = verf.f32.pop %v5395
    %v5398 = verf.f32.pop %v5396
    %v5399 = vadd.f32 %v5397, 1.0
    %v5400 = vadd.f32 %v5398, 1.0
    %v5401 = vmul.f32 %v5393, %v5399
    %v5402 = vmul.f32 %v5394, %v5400
    %5403 = vmatprep.subr.mxu0 0.0
    %5404 = vmatpush1.msra.mxu0 %v47
    %5405 = vmatprep.subr.mxu0 0.0
    %5406 = vmatpush1.msra.mxu0 %v48
    %5407 = vmatprep.subr.mxu0 0.0
    %5408 = vmatpush1.msra.mxu0 %v49
    %5409 = vmatprep.subr.mxu0 0.0
    %5410 = vmatpush1.msra.mxu0 %v50
    %5411 = vmatprep.subr.mxu0 0.0
    %5412 = vmatpush1.msra.mxu0 %v51
    %5413 = vmatprep.subr.mxu0 0.0
    %5414 = vmatpush1.msra.mxu0 %v52
    %5415 = vmatprep.subr.mxu0 0.0
    %5416 = vmatpush1.msra.mxu0 %v53
    %5417 = vmatprep.subr.mxu0 0.0
    %5418 = vmatpush1.msra.mxu0 %v54
    %5419 = vmatprep.subr.mxu0 0.0
    %5420 = vmatpush1.msra.mxu0 %v55
    %5421 = vmatprep.subr.mxu0 0.0
    %5422 = vmatpush1.msra.mxu0 %v56
    %5423 = vmatprep.subr.mxu0 0.0
    %5424 = vmatpush1.msra.mxu0 %v57
    %5425 = vmatprep.subr.mxu0 0.0
    %5426 = vmatpush1.msra.mxu0 %v58
    %5427 = vmatprep.subr.mxu0 0.0
    %5428 = vmatpush1.msra.mxu0 %v59
    %5429 = vmatprep.subr.mxu0 0.0
    %5430 = vmatpush1.msra.mxu0 %v60
    %5431 = vmatprep.subr.mxu0 0.0
    %5432 = vmatpush1.msra.mxu0 %v61
    %5433 = vmatprep.subr.mxu0 0.0
    %5434 = vmatpush1.msra.mxu0 %v62
    %5435 = vmatprep.subr.mxu0 0.0
    %5436 = vmatpush1.msra.mxu0 0.0
    %5437 = vmatprep.subr.mxu0 0.0
    %5438 = vmatpush1.msra.mxu0 0.0
    %5439 = vmatprep.subr.mxu0 0.0
    %5440 = vmatpush1.msra.mxu0 0.0
    %5441 = vmatprep.subr.mxu0 0.0
    %5442 = vmatpush1.msra.mxu0 0.0
    %5443 = vmatprep.subr.mxu0 0.0
    %5444 = vmatpush1.msra.mxu0 0.0
    %5445 = vmatprep.subr.mxu0 0.0
    %5446 = vmatpush1.msra.mxu0 0.0
    %5447 = vmatprep.subr.mxu0 0.0
    %5448 = vmatpush1.msra.mxu0 0.0
    %5449 = vmatprep.subr.mxu0 0.0
    %5450 = vmatpush1.msra.mxu0 0.0
    %5451 = vmatprep.subr.mxu0 0.0
    %5452 = vmatpush1.msra.mxu0 0.0
    %5453 = vmatprep.subr.mxu0 0.0
    %5454 = vmatpush1.msra.mxu0 0.0
    %5455 = vmatprep.subr.mxu0 0.0
    %5456 = vmatpush1.msra.mxu0 0.0
    %5457 = vmatprep.subr.mxu0 0.0
    %5458 = vmatpush1.msra.mxu0 0.0
    %5459 = vmatprep.subr.mxu0 0.0
    %5460 = vmatpush1.msra.mxu0 0.0
    %5461 = vmatprep.subr.mxu0 0.0
    %5462 = vmatpush1.msra.mxu0 0.0
    %5463 = vmatprep.subr.mxu0 0.0
    %5464 = vmatpush1.msra.mxu0 0.0
    %5465 = vmatprep.subr.mxu0 0.0
    %5466 = vmatpush1.msra.mxu0 0.0
    %5467 = vmatprep.mubr.f32.mxu0 0.0
    %5468 = vmatmul.mubr.f32.gmra.mrb[0].mxu0 %v5401
    %v5469 = vpop.f32.mrb[0].mxu0
    %v5470 = vadd.f32 %v1954, %v5469
    %v5471 = vpop.f32.mrb[0].mxu0
    %5472 = vmatprep.mubr.f32.mxu0 0.0
    %5473 = vmatmul.mubr.f32.gmra.mrb[0].mxu0 %v5402
    %v5474 = vpop.f32.mrb[0].mxu0
    %v5475 = vadd.f32 %v1954, %v5474
    %v5476 = vpop.f32.mrb[0].mxu0
    %5477 = vdwg.mxu0
    %v5478 = vadd.f32 %v263, %v5000
    %v5479 = vadd.f32 %v264, %v5103
    %v5480 = vadd.f32 %v5478, %v5470
    %v5481 = vadd.f32 %v5479, %v5475
    %v5482 = vadd.f32 %v5480, %v265
    %v5483 = vadd.f32 %v5481, %v265
    %v5484 = vand.u32 2147483647, %v5482
    %vm5485 = vcmp.le.f32.partialorder %v5484, 0.7853982
    %vm5486 = vcmp.lt.s32.totalorder %v5482, 0
    %v5487 = vand.u32 %v5482, 2139095040
    %v5488 = vshrl.u32 %v5487, 23
    %v5489 = vsub.s32 %v5488, 127
    %v5490 = vand.u32 2147483647, %v5482
    %v5491 = vand.u32 %v5490, 8388607
    %v5492 = vor.u32 %v5491, 8388608
    %v5493 = vsub.s32 0, %v5492
    %v5494 = vadd.s32 %v5489, 1
    %vm5495 = vcmp.gt.s32.totalorder %v5494, 0
    %v5496 = vsel %vm5495, %v5494, 0
    %v5497 = vshrl.u32 %v5496, 5
    %v5498 = vand.u32 %v5496, 31
    %v5499 = vsub.s32 32, %v5498
    %v5500 = vshrl.u32 683565275, %v5499
    %v5501 = vshll.u32 683565275, %v5498
    %v5502 = vshrl.u32 2475754826, %v5499
    %v5503 = vor.u32 %v5501, %v5502
    %v5504 = vshll.u32 2475754826, %v5498
    %v5505 = vshrl.u32 2131351028, %v5499
    %v5506 = vor.u32 %v5504, %v5505
    %v5507 = vshll.u32 2131351028, %v5498
    %v5508 = vshrl.u32 2102212464, %v5499
    %v5509 = vor.u32 %v5507, %v5508
    %v5510 = vshll.u32 2102212464, %v5498
    %v5511 = vshrl.u32 920167782, %v5499
    %v5512 = vor.u32 %v5510, %v5511
    %v5513 = vshll.u32 920167782, %v5498
    %v5514 = vshrl.u32 1326507024, %v5499
    %v5515 = vor.u32 %v5513, %v5514
    %vm5516 = vcmp.lt.s32.totalorder %v5497, 1
    %vm5517 = vcmp.lt.s32.totalorder %v5497, 2
    %vm5518 = vcmp.lt.s32.totalorder %v5497, 3
    %vm5519 = vcmp.lt.s32.totalorder %v5497, 4
    %v5520 = vsel %vm5516, %v5500, %v5503
    %v5521 = vsel %vm5519, %v5509, 2102212464
    %v5522 = vsel %vm5518, %v5506, %v5521
    %v5523 = vsel %vm5517, %v5520, %v5522
    %v5524 = vsel %vm5516, %v5503, %v5506
    %v5525 = vsel %vm5519, %v5512, 920167782
    %v5526 = vsel %vm5518, %v5509, %v5525
    %v5527 = vsel %vm5517, %v5524, %v5526
    %v5528 = vsel %vm5516, %v5506, %v5509
    %v5529 = vsel %vm5519, %v5515, 1326507024
    %v5530 = vsel %vm5518, %v5512, %v5529
    %v5531 = vsel %vm5517, %v5528, %v5530
    %v5532 = vshll.u32 %v5492, 8
    %v5533 = vmul.u32.u64.compose %v5532, %v5531
    %v5534 = vextract.low.u32 %v5533
    %v5535 = vextract.high.u32 %v5533
    %v5536 = vmul.u32.u64.compose %v5532, %v5527
    %v5537 = vextract.low.u32 %v5536
    %v5538 = vextract.high.u32 %v5536
    %v5539 = vmul.u32 %v5532, %v5523
    %v5540 = vadd.s32 %v5535, %v5537
    %vm5541 = vc.u32 %v5535, %v5537
    %v5542 = vadd.s32 %v5538, 1
    %v5543 = vsel %vm5541, %v5542, %v5538
    %v5544 = vadd.s32 %v5539, %v5543
    %v5545 = vadd.s32 %v5544, 536870912
    %v5546 = vshrl.u32 %v5545, 30
    %v5547 = vshll.u32 %v5546, 30
    %v5548 = vsub.s32 %v5544, %v5547
    %vm5549 = vcmp.lt.s32.totalorder %v5548, 0
    %v5550 = vsub.s32 0, %v5548
    %v5551 = vsel %vm5549, %v5550, %v5548
    %v5552 = vclz %v5551
    %v5553 = vsub.s32 %v5552, 2
    %vm5554 = vcmp.gt.s32.totalorder 0, %v5553
    %v5555 = vsel %vm5554, 0, %v5553
    %v5556 = vsub.s32 32, %v5555
    %v5557 = vshll.u32 %v5548, %v5555
    %v5558 = vshrl.u32 %v5540, %v5556
    %v5559 = vor.u32 %v5557, %v5558
    %v5560 = vsub.s32 4294967266, %v5555
    %v5561 = vadd.s32 %v5560, 127
    %v5562 = vshll.u32 %v5561, 23
    %v5563 = vor.u32 4788187, %v5562
    %v5564 = vand.u32 2147483647, %v5563
    %v5566 = vcvt.s32.f32 %v5559
    %v5567 = vmul.f32 %v5566, %v5564
    %v5568 = vxor.u32 %v5567, 2147483648
    %v5569 = vsel %vm5486, %v5568, %v5567
    %v5570 = vsub.s32 4, %v5546
    %v5571 = vsel %vm5486, %v5570, %v5546
    %v5572 = vsel %vm5485, %v5482, %v5569
    %v5573 = vsel %vm5485, 0, %v5571
    %v5574 = vcosq.f32.pop %v5572
    %v5575 = vsinq.f32.pop %v5572
    %vm5576 = vweird.f32 %v5482
    %v5577 = vand.u32 %v5573, 3
    %vm5578 = vcmp.lt.s32.totalorder %v5577, 2
    %vm5579 = vcmp.eq.s32.totalorder %v5577, 0
    %v5580 = vxor.u32 %v5575, 2147483648
    %v5581 = vsel %vm5579, %v5574, %v5580
    %vm5582 = vcmp.eq.s32.totalorder %v5577, 2
    %v5583 = vxor.u32 %v5574, 2147483648
    %v5584 = vsel %vm5582, %v5583, %v5575
    %v5585 = vsel %vm5578, %v5581, %v5584
    %v5586 = vsel %vm5576, nan, %v5585
    %v5587 = vand.u32 2147483647, %v5483
    %vm5588 = vcmp.le.f32.partialorder %v5587, 0.7853982
    %vm5589 = vcmp.lt.s32.totalorder %v5483, 0
    %v5590 = vand.u32 %v5483, 2139095040
    %v5591 = vshrl.u32 %v5590, 23
    %v5592 = vsub.s32 %v5591, 127
    %v5593 = vand.u32 2147483647, %v5483
    %v5594 = vand.u32 %v5593, 8388607
    %v5595 = vor.u32 %v5594, 8388608
    %v5596 = vsub.s32 0, %v5595
    %v5597 = vadd.s32 %v5592, 1
    %vm5598 = vcmp.gt.s32.totalorder %v5597, 0
    %v5599 = vsel %vm5598, %v5597, 0
    %v5600 = vshrl.u32 %v5599, 5
    %v5601 = vand.u32 %v5599, 31
    %v5602 = vsub.s32 32, %v5601
    %v5603 = vshrl.u32 683565275, %v5602
    %v5604 = vshll.u32 683565275, %v5601
    %v5605 = vshrl.u32 2475754826, %v5602
    %v5606 = vor.u32 %v5604, %v5605
    %v5607 = vshll.u32 2475754826, %v5601
    %v5608 = vshrl.u32 2131351028, %v5602
    %v5609 = vor.u32 %v5607, %v5608
    %v5610 = vshll.u32 2131351028, %v5601
    %v5611 = vshrl.u32 2102212464, %v5602
    %v5612 = vor.u32 %v5610, %v5611
    %v5613 = vshll.u32 2102212464, %v5601
    %v5614 = vshrl.u32 920167782, %v5602
    %v5615 = vor.u32 %v5613, %v5614
    %v5616 = vshll.u32 920167782, %v5601
    %v5617 = vshrl.u32 1326507024, %v5602
    %v5618 = vor.u32 %v5616, %v5617
    %vm5619 = vcmp.lt.s32.totalorder %v5600, 1
    %vm5620 = vcmp.lt.s32.totalorder %v5600, 2
    %vm5621 = vcmp.lt.s32.totalorder %v5600, 3
    %vm5622 = vcmp.lt.s32.totalorder %v5600, 4
    %v5623 = vsel %vm5619, %v5603, %v5606
    %v5624 = vsel %vm5622, %v5612, 2102212464
    %v5625 = vsel %vm5621, %v5609, %v5624
    %v5626 = vsel %vm5620, %v5623, %v5625
    %v5627 = vsel %vm5619, %v5606, %v5609
    %v5628 = vsel %vm5622, %v5615, 920167782
    %v5629 = vsel %vm5621, %v5612, %v5628
    %v5630 = vsel %vm5620, %v5627, %v5629
    %v5631 = vsel %vm5619, %v5609, %v5612
    %v5632 = vsel %vm5622, %v5618, 1326507024
    %v5633 = vsel %vm5621, %v5615, %v5632
    %v5634 = vsel %vm5620, %v5631, %v5633
    %v5635 = vshll.u32 %v5595, 8
    %v5636 = vmul.u32.u64.compose %v5635, %v5634
    %v5637 = vextract.low.u32 %v5636
    %v5638 = vextract.high.u32 %v5636
    %v5639 = vmul.u32.u64.compose %v5635, %v5630
    %v5640 = vextract.low.u32 %v5639
    %v5641 = vextract.high.u32 %v5639
    %v5642 = vmul.u32 %v5635, %v5626
    %v5643 = vadd.s32 %v5638, %v5640
    %vm5644 = vc.u32 %v5638, %v5640
    %v5645 = vadd.s32 %v5641, 1
    %v5646 = vsel %vm5644, %v5645, %v5641
    %v5647 = vadd.s32 %v5642, %v5646
    %v5648 = vadd.s32 %v5647, 536870912
    %v5649 = vshrl.u32 %v5648, 30
    %v5650 = vshll.u32 %v5649, 30
    %v5651 = vsub.s32 %v5647, %v5650
    %vm5652 = vcmp.lt.s32.totalorder %v5651, 0
    %v5653 = vsub.s32 0, %v5651
    %v5654 = vsel %vm5652, %v5653, %v5651
    %v5655 = vclz %v5654
    %v5656 = vsub.s32 %v5655, 2
    %vm5657 = vcmp.gt.s32.totalorder 0, %v5656
    %v5658 = vsel %vm5657, 0, %v5656
    %v5659 = vsub.s32 32, %v5658
    %v5660 = vshll.u32 %v5651, %v5658
    %v5661 = vshrl.u32 %v5643, %v5659
    %v5662 = vor.u32 %v5660, %v5661
    %v5663 = vsub.s32 4294967266, %v5658
    %v5664 = vadd.s32 %v5663, 127
    %v5665 = vshll.u32 %v5664, 23
    %v5666 = vor.u32 4788187, %v5665
    %v5667 = vand.u32 2147483647, %v5666
    %v5669 = vcvt.s32.f32 %v5662
    %v5670 = vmul.f32 %v5669, %v5667
    %v5671 = vxor.u32 %v5670, 2147483648
    %v5672 = vsel %vm5589, %v5671, %v5670
    %v5673 = vsub.s32 4, %v5649
    %v5674 = vsel %vm5589, %v5673, %v5649
    %v5675 = vsel %vm5588, %v5483, %v5672
    %v5676 = vsel %vm5588, 0, %v5674
    %v5677 = vcosq.f32.pop %v5675
    %v5678 = vsinq.f32.pop %v5675
    %vm5679 = vweird.f32 %v5483
    %v5680 = vand.u32 %v5676, 3
    %vm5681 = vcmp.lt.s32.totalorder %v5680, 2
    %vm5682 = vcmp.eq.s32.totalorder %v5680, 0
    %v5683 = vxor.u32 %v5678, 2147483648
    %v5684 = vsel %vm5682, %v5677, %v5683
    %vm5685 = vcmp.eq.s32.totalorder %v5680, 2
    %v5686 = vxor.u32 %v5677, 2147483648
    %v5687 = vsel %vm5685, %v5686, %v5678
    %v5688 = vsel %vm5681, %v5684, %v5687
    %v5689 = vsel %vm5679, nan, %v5688
    %v5690 = vadd.f32 %v5480, %v474
    %v5691 = vadd.f32 %v5481, %v474
    %v5692 = vand.u32 2147483647, %v5690
    %vm5693 = vcmp.le.f32.partialorder %v5692, 0.7853982
    %vm5694 = vcmp.lt.s32.totalorder %v5690, 0
    %v5695 = vand.u32 %v5690, 2139095040
    %v5696 = vshrl.u32 %v5695, 23
    %v5697 = vsub.s32 %v5696, 127
    %v5698 = vand.u32 2147483647, %v5690
    %v5699 = vand.u32 %v5698, 8388607
    %v5700 = vor.u32 %v5699, 8388608
    %v5701 = vsub.s32 0, %v5700
    %v5702 = vadd.s32 %v5697, 1
    %vm5703 = vcmp.gt.s32.totalorder %v5702, 0
    %v5704 = vsel %vm5703, %v5702, 0
    %v5705 = vshrl.u32 %v5704, 5
    %v5706 = vand.u32 %v5704, 31
    %v5707 = vsub.s32 32, %v5706
    %v5708 = vshrl.u32 683565275, %v5707
    %v5709 = vshll.u32 683565275, %v5706
    %v5710 = vshrl.u32 2475754826, %v5707
    %v5711 = vor.u32 %v5709, %v5710
    %v5712 = vshll.u32 2475754826, %v5706
    %v5713 = vshrl.u32 2131351028, %v5707
    %v5714 = vor.u32 %v5712, %v5713
    %v5715 = vshll.u32 2131351028, %v5706
    %v5716 = vshrl.u32 2102212464, %v5707
    %v5717 = vor.u32 %v5715, %v5716
    %v5718 = vshll.u32 2102212464, %v5706
    %v5719 = vshrl.u32 920167782, %v5707
    %v5720 = vor.u32 %v5718, %v5719
    %v5721 = vshll.u32 920167782, %v5706
    %v5722 = vshrl.u32 1326507024, %v5707
    %v5723 = vor.u32 %v5721, %v5722
    %vm5724 = vcmp.lt.s32.totalorder %v5705, 1
    %vm5725 = vcmp.lt.s32.totalorder %v5705, 2
    %vm5726 = vcmp.lt.s32.totalorder %v5705, 3
    %vm5727 = vcmp.lt.s32.totalorder %v5705, 4
    %v5728 = vsel %vm5724, %v5708, %v5711
    %v5729 = vsel %vm5727, %v5717, 2102212464
    %v5730 = vsel %vm5726, %v5714, %v5729
    %v5731 = vsel %vm5725, %v5728, %v5730
    %v5732 = vsel %vm5724, %v5711, %v5714
    %v5733 = vsel %vm5727, %v5720, 920167782
    %v5734 = vsel %vm5726, %v5717, %v5733
    %v5735 = vsel %vm5725, %v5732, %v5734
    %v5736 = vsel %vm5724, %v5714, %v5717
    %v5737 = vsel %vm5727, %v5723, 1326507024
    %v5738 = vsel %vm5726, %v5720, %v5737
    %v5739 = vsel %vm5725, %v5736, %v5738
    %v5740 = vshll.u32 %v5700, 8
    %v5741 = vmul.u32.u64.compose %v5740, %v5739
    %v5742 = vextract.low.u32 %v5741
    %v5743 = vextract.high.u32 %v5741
    %v5744 = vmul.u32.u64.compose %v5740, %v5735
    %v5745 = vextract.low.u32 %v5744
    %v5746 = vextract.high.u32 %v5744
    %v5747 = vmul.u32 %v5740, %v5731
    %v5748 = vadd.s32 %v5743, %v5745
    %vm5749 = vc.u32 %v5743, %v5745
    %v5750 = vadd.s32 %v5746, 1
    %v5751 = vsel %vm5749, %v5750, %v5746
    %v5752 = vadd.s32 %v5747, %v5751
    %v5753 = vadd.s32 %v5752, 536870912
    %v5754 = vshrl.u32 %v5753, 30
    %v5755 = vshll.u32 %v5754, 30
    %v5756 = vsub.s32 %v5752, %v5755
    %vm5757 = vcmp.lt.s32.totalorder %v5756, 0
    %v5758 = vsub.s32 0, %v5756
    %v5759 = vsel %vm5757, %v5758, %v5756
    %v5760 = vclz %v5759
    %v5761 = vsub.s32 %v5760, 2
    %vm5762 = vcmp.gt.s32.totalorder 0, %v5761
    %v5763 = vsel %vm5762, 0, %v5761
    %v5764 = vsub.s32 32, %v5763
    %v5765 = vshll.u32 %v5756, %v5763
    %v5766 = vshrl.u32 %v5748, %v5764
    %v5767 = vor.u32 %v5765, %v5766
    %v5768 = vsub.s32 4294967266, %v5763
    %v5769 = vadd.s32 %v5768, 127
    %v5770 = vshll.u32 %v5769, 23
    %v5771 = vor.u32 4788187, %v5770
    %v5772 = vand.u32 2147483647, %v5771
    %v5774 = vcvt.s32.f32 %v5767
    %v5775 = vmul.f32 %v5774, %v5772
    %v5776 = vxor.u32 %v5775, 2147483648
    %v5777 = vsel %vm5694, %v5776, %v5775
    %v5778 = vsub.s32 4, %v5754
    %v5779 = vsel %vm5694, %v5778, %v5754
    %v5780 = vsel %vm5693, %v5690, %v5777
    %v5781 = vsel %vm5693, 0, %v5779
    %v5782 = vcosq.f32.pop %v5780
    %v5783 = vsinq.f32.pop %v5780
    %vm5784 = vweird.f32 %v5690
    %v5785 = vand.u32 %v5781, 3
    %vm5786 = vcmp.lt.s32.totalorder %v5785, 2
    %vm5787 = vcmp.eq.s32.totalorder %v5785, 0
    %v5788 = vxor.u32 %v5783, 2147483648
    %v5789 = vsel %vm5787, %v5782, %v5788
    %vm5790 = vcmp.eq.s32.totalorder %v5785, 2
    %v5791 = vxor.u32 %v5782, 2147483648
    %v5792 = vsel %vm5790, %v5791, %v5783
    %v5793 = vsel %vm5786, %v5789, %v5792
    %v5794 = vsel %vm5784, nan, %v5793
    %v5795 = vand.u32 2147483647, %v5691
    %vm5796 = vcmp.le.f32.partialorder %v5795, 0.7853982
    %vm5797 = vcmp.lt.s32.totalorder %v5691, 0
    %v5798 = vand.u32 %v5691, 2139095040
    %v5799 = vshrl.u32 %v5798, 23
    %v5800 = vsub.s32 %v5799, 127
    %v5801 = vand.u32 2147483647, %v5691
    %v5802 = vand.u32 %v5801, 8388607
    %v5803 = vor.u32 %v5802, 8388608
    %v5804 = vsub.s32 0, %v5803
    %v5805 = vadd.s32 %v5800, 1
    %vm5806 = vcmp.gt.s32.totalorder %v5805, 0
    %v5807 = vsel %vm5806, %v5805, 0
    %v5808 = vshrl.u32 %v5807, 5
    %v5809 = vand.u32 %v5807, 31
    %v5810 = vsub.s32 32, %v5809
    %v5811 = vshrl.u32 683565275, %v5810
    %v5812 = vshll.u32 683565275, %v5809
    %v5813 = vshrl.u32 2475754826, %v5810
    %v5814 = vor.u32 %v5812, %v5813
    %v5815 = vshll.u32 2475754826, %v5809
    %v5816 = vshrl.u32 2131351028, %v5810
    %v5817 = vor.u32 %v5815, %v5816
    %v5818 = vshll.u32 2131351028, %v5809
    %v5819 = vshrl.u32 2102212464, %v5810
    %v5820 = vor.u32 %v5818, %v5819
    %v5821 = vshll.u32 2102212464, %v5809
    %v5822 = vshrl.u32 920167782, %v5810
    %v5823 = vor.u32 %v5821, %v5822
    %v5824 = vshll.u32 920167782, %v5809
    %v5825 = vshrl.u32 1326507024, %v5810
    %v5826 = vor.u32 %v5824, %v5825
    %vm5827 = vcmp.lt.s32.totalorder %v5808, 1
    %vm5828 = vcmp.lt.s32.totalorder %v5808, 2
    %vm5829 = vcmp.lt.s32.totalorder %v5808, 3
    %vm5830 = vcmp.lt.s32.totalorder %v5808, 4
    %v5831 = vsel %vm5827, %v5811, %v5814
    %v5832 = vsel %vm5830, %v5820, 2102212464
    %v5833 = vsel %vm5829, %v5817, %v5832
    %v5834 = vsel %vm5828, %v5831, %v5833
    %v5835 = vsel %vm5827, %v5814, %v5817
    %v5836 = vsel %vm5830, %v5823, 920167782
    %v5837 = vsel %vm5829, %v5820, %v5836
    %v5838 = vsel %vm5828, %v5835, %v5837
    %v5839 = vsel %vm5827, %v5817, %v5820
    %v5840 = vsel %vm5830, %v5826, 1326507024
    %v5841 = vsel %vm5829, %v5823, %v5840
    %v5842 = vsel %vm5828, %v5839, %v5841
    %v5843 = vshll.u32 %v5803, 8
    %v5844 = vmul.u32.u64.compose %v5843, %v5842
    %v5845 = vextract.low.u32 %v5844
    %v5846 = vextract.high.u32 %v5844
    %v5847 = vmul.u32.u64.compose %v5843, %v5838
    %v5848 = vextract.low.u32 %v5847
    %v5849 = vextract.high.u32 %v5847
    %v5850 = vmul.u32 %v5843, %v5834
    %v5851 = vadd.s32 %v5846, %v5848
    %vm5852 = vc.u32 %v5846, %v5848
    %v5853 = vadd.s32 %v5849, 1
    %v5854 = vsel %vm5852, %v5853, %v5849
    %v5855 = vadd.s32 %v5850, %v5854
    %v5856 = vadd.s32 %v5855, 536870912
    %v5857 = vshrl.u32 %v5856, 30
    %v5858 = vshll.u32 %v5857, 30
    %v5859 = vsub.s32 %v5855, %v5858
    %vm5860 = vcmp.lt.s32.totalorder %v5859, 0
    %v5861 = vsub.s32 0, %v5859
    %v5862 = vsel %vm5860, %v5861, %v5859
    %v5863 = vclz %v5862
    %v5864 = vsub.s32 %v5863, 2
    %vm5865 = vcmp.gt.s32.totalorder 0, %v5864
    %v5866 = vsel %vm5865, 0, %v5864
    %v5867 = vsub.s32 32, %v5866
    %v5868 = vshll.u32 %v5859, %v5866
    %v5869 = vshrl.u32 %v5851, %v5867
    %v5870 = vor.u32 %v5868, %v5869
    %v5871 = vsub.s32 4294967266, %v5866
    %v5872 = vadd.s32 %v5871, 127
    %v5873 = vshll.u32 %v5872, 23
    %v5874 = vor.u32 4788187, %v5873
    %v5875 = vand.u32 2147483647, %v5874
    %v5877 = vcvt.s32.f32 %v5870
    %v5878 = vmul.f32 %v5877, %v5875
    %v5879 = vxor.u32 %v5878, 2147483648
    %v5880 = vsel %vm5797, %v5879, %v5878
    %v5881 = vsub.s32 4, %v5857
    %v5882 = vsel %vm5797, %v5881, %v5857
    %v5883 = vsel %vm5796, %v5691, %v5880
    %v5884 = vsel %vm5796, 0, %v5882
    %v5885 = vcosq.f32.pop %v5883
    %v5886 = vsinq.f32.pop %v5883
    %vm5887 = vweird.f32 %v5691
    %v5888 = vand.u32 %v5884, 3
    %vm5889 = vcmp.lt.s32.totalorder %v5888, 2
    %vm5890 = vcmp.eq.s32.totalorder %v5888, 0
    %v5891 = vxor.u32 %v5886, 2147483648
    %v5892 = vsel %vm5890, %v5885, %v5891
    %vm5893 = vcmp.eq.s32.totalorder %v5888, 2
    %v5894 = vxor.u32 %v5885, 2147483648
    %v5895 = vsel %vm5893, %v5894, %v5886
    %v5896 = vsel %vm5889, %v5892, %v5895
    %v5897 = vsel %vm5887, nan, %v5896
    %v5898 = vadd.f32 %v5480, %v683
    %v5899 = vadd.f32 %v5481, %v683
    %v5900 = vand.u32 2147483647, %v5898
    %vm5901 = vcmp.le.f32.partialorder %v5900, 0.7853982
    %vm5902 = vcmp.lt.s32.totalorder %v5898, 0
    %v5903 = vand.u32 %v5898, 2139095040
    %v5904 = vshrl.u32 %v5903, 23
    %v5905 = vsub.s32 %v5904, 127
    %v5906 = vand.u32 2147483647, %v5898
    %v5907 = vand.u32 %v5906, 8388607
    %v5908 = vor.u32 %v5907, 8388608
    %v5909 = vsub.s32 0, %v5908
    %v5910 = vadd.s32 %v5905, 1
    %vm5911 = vcmp.gt.s32.totalorder %v5910, 0
    %v5912 = vsel %vm5911, %v5910, 0
    %v5913 = vshrl.u32 %v5912, 5
    %v5914 = vand.u32 %v5912, 31
    %v5915 = vsub.s32 32, %v5914
    %v5916 = vshrl.u32 683565275, %v5915
    %v5917 = vshll.u32 683565275, %v5914
    %v5918 = vshrl.u32 2475754826, %v5915
    %v5919 = vor.u32 %v5917, %v5918
    %v5920 = vshll.u32 2475754826, %v5914
    %v5921 = vshrl.u32 2131351028, %v5915
    %v5922 = vor.u32 %v5920, %v5921
    %v5923 = vshll.u32 2131351028, %v5914
    %v5924 = vshrl.u32 2102212464, %v5915
    %v5925 = vor.u32 %v5923, %v5924
    %v5926 = vshll.u32 2102212464, %v5914
    %v5927 = vshrl.u32 920167782, %v5915
    %v5928 = vor.u32 %v5926, %v5927
    %v5929 = vshll.u32 920167782, %v5914
    %v5930 = vshrl.u32 1326507024, %v5915
    %v5931 = vor.u32 %v5929, %v5930
    %vm5932 = vcmp.lt.s32.totalorder %v5913, 1
    %vm5933 = vcmp.lt.s32.totalorder %v5913, 2
    %vm5934 = vcmp.lt.s32.totalorder %v5913, 3
    %vm5935 = vcmp.lt.s32.totalorder %v5913, 4
    %v5936 = vsel %vm5932, %v5916, %v5919
    %v5937 = vsel %vm5935, %v5925, 2102212464
    %v5938 = vsel %vm5934, %v5922, %v5937
    %v5939 = vsel %vm5933, %v5936, %v5938
    %v5940 = vsel %vm5932, %v5919, %v5922
    %v5941 = vsel %vm5935, %v5928, 920167782
    %v5942 = vsel %vm5934, %v5925, %v5941
    %v5943 = vsel %vm5933, %v5940, %v5942
    %v5944 = vsel %vm5932, %v5922, %v5925
    %v5945 = vsel %vm5935, %v5931, 1326507024
    %v5946 = vsel %vm5934, %v5928, %v5945
    %v5947 = vsel %vm5933, %v5944, %v5946
    %v5948 = vshll.u32 %v5908, 8
    %v5949 = vmul.u32.u64.compose %v5948, %v5947
    %v5950 = vextract.low.u32 %v5949
    %v5951 = vextract.high.u32 %v5949
    %v5952 = vmul.u32.u64.compose %v5948, %v5943
    %v5953 = vextract.low.u32 %v5952
    %v5954 = vextract.high.u32 %v5952
    %v5955 = vmul.u32 %v5948, %v5939
    %v5956 = vadd.s32 %v5951, %v5953
    %vm5957 = vc.u32 %v5951, %v5953
    %v5958 = vadd.s32 %v5954, 1
    %v5959 = vsel %vm5957, %v5958, %v5954
    %v5960 = vadd.s32 %v5955, %v5959
    %v5961 = vadd.s32 %v5960, 536870912
    %v5962 = vshrl.u32 %v5961, 30
    %v5963 = vshll.u32 %v5962, 30
    %v5964 = vsub.s32 %v5960, %v5963
    %vm5965 = vcmp.lt.s32.totalorder %v5964, 0
    %v5966 = vsub.s32 0, %v5964
    %v5967 = vsel %vm5965, %v5966, %v5964
    %v5968 = vclz %v5967
    %v5969 = vsub.s32 %v5968, 2
    %vm5970 = vcmp.gt.s32.totalorder 0, %v5969
    %v5971 = vsel %vm5970, 0, %v5969
    %v5972 = vsub.s32 32, %v5971
    %v5973 = vshll.u32 %v5964, %v5971
    %v5974 = vshrl.u32 %v5956, %v5972
    %v5975 = vor.u32 %v5973, %v5974
    %v5976 = vsub.s32 4294967266, %v5971
    %v5977 = vadd.s32 %v5976, 127
    %v5978 = vshll.u32 %v5977, 23
    %v5979 = vor.u32 4788187, %v5978
    %v5980 = vand.u32 2147483647, %v5979
    %v5982 = vcvt.s32.f32 %v5975
    %v5983 = vmul.f32 %v5982, %v5980
    %v5984 = vxor.u32 %v5983, 2147483648
    %v5985 = vsel %vm5902, %v5984, %v5983
    %v5986 = vsub.s32 4, %v5962
    %v5987 = vsel %vm5902, %v5986, %v5962
    %v5988 = vsel %vm5901, %v5898, %v5985
    %v5989 = vsel %vm5901, 0, %v5987
    %v5990 = vcosq.f32.pop %v5988
    %v5991 = vsinq.f32.pop %v5988
    %vm5992 = vweird.f32 %v5898
    %v5993 = vand.u32 %v5989, 3
    %vm5994 = vcmp.lt.s32.totalorder %v5993, 2
    %vm5995 = vcmp.eq.s32.totalorder %v5993, 0
    %v5996 = vxor.u32 %v5991, 2147483648
    %v5997 = vsel %vm5995, %v5990, %v5996
    %vm5998 = vcmp.eq.s32.totalorder %v5993, 2
    %v5999 = vxor.u32 %v5990, 2147483648
    %v6000 = vsel %vm5998, %v5999, %v5991
    %v6001 = vsel %vm5994, %v5997, %v6000
    %v6002 = vsel %vm5992, nan, %v6001
    %v6003 = vand.u32 2147483647, %v5899
    %vm6004 = vcmp.le.f32.partialorder %v6003, 0.7853982
    %vm6005 = vcmp.lt.s32.totalorder %v5899, 0
    %v6006 = vand.u32 %v5899, 2139095040
    %v6007 = vshrl.u32 %v6006, 23
    %v6008 = vsub.s32 %v6007, 127
    %v6009 = vand.u32 2147483647, %v5899
    %v6010 = vand.u32 %v6009, 8388607
    %v6011 = vor.u32 %v6010, 8388608
    %v6012 = vsub.s32 0, %v6011
    %v6013 = vadd.s32 %v6008, 1
    %vm6014 = vcmp.gt.s32.totalorder %v6013, 0
    %v6015 = vsel %vm6014, %v6013, 0
    %v6016 = vshrl.u32 %v6015, 5
    %v6017 = vand.u32 %v6015, 31
    %v6018 = vsub.s32 32, %v6017
    %v6019 = vshrl.u32 683565275, %v6018
    %v6020 = vshll.u32 683565275, %v6017
    %v6021 = vshrl.u32 2475754826, %v6018
    %v6022 = vor.u32 %v6020, %v6021
    %v6023 = vshll.u32 2475754826, %v6017
    %v6024 = vshrl.u32 2131351028, %v6018
    %v6025 = vor.u32 %v6023, %v6024
    %v6026 = vshll.u32 2131351028, %v6017
    %v6027 = vshrl.u32 2102212464, %v6018
    %v6028 = vor.u32 %v6026, %v6027
    %v6029 = vshll.u32 2102212464, %v6017
    %v6030 = vshrl.u32 920167782, %v6018
    %v6031 = vor.u32 %v6029, %v6030
    %v6032 = vshll.u32 920167782, %v6017
    %v6033 = vshrl.u32 1326507024, %v6018
    %v6034 = vor.u32 %v6032, %v6033
    %vm6035 = vcmp.lt.s32.totalorder %v6016, 1
    %vm6036 = vcmp.lt.s32.totalorder %v6016, 2
    %vm6037 = vcmp.lt.s32.totalorder %v6016, 3
    %vm6038 = vcmp.lt.s32.totalorder %v6016, 4
    %v6039 = vsel %vm6035, %v6019, %v6022
    %v6040 = vsel %vm6038, %v6028, 2102212464
    %v6041 = vsel %vm6037, %v6025, %v6040
    %v6042 = vsel %vm6036, %v6039, %v6041
    %v6043 = vsel %vm6035, %v6022, %v6025
    %v6044 = vsel %vm6038, %v6031, 920167782
    %v6045 = vsel %vm6037, %v6028, %v6044
    %v6046 = vsel %vm6036, %v6043, %v6045
    %v6047 = vsel %vm6035, %v6025, %v6028
    %v6048 = vsel %vm6038, %v6034, 1326507024
    %v6049 = vsel %vm6037, %v6031, %v6048
    %v6050 = vsel %vm6036, %v6047, %v6049
    %v6051 = vshll.u32 %v6011, 8
    %v6052 = vmul.u32.u64.compose %v6051, %v6050
    %v6053 = vextract.low.u32 %v6052
    %v6054 = vextract.high.u32 %v6052
    %v6055 = vmul.u32.u64.compose %v6051, %v6046
    %v6056 = vextract.low.u32 %v6055
    %v6057 = vextract.high.u32 %v6055
    %v6058 = vmul.u32 %v6051, %v6042
    %v6059 = vadd.s32 %v6054, %v6056
    %vm6060 = vc.u32 %v6054, %v6056
    %v6061 = vadd.s32 %v6057, 1
    %v6062 = vsel %vm6060, %v6061, %v6057
    %v6063 = vadd.s32 %v6058, %v6062
    %v6064 = vadd.s32 %v6063, 536870912
    %v6065 = vshrl.u32 %v6064, 30
    %v6066 = vshll.u32 %v6065, 30
    %v6067 = vsub.s32 %v6063, %v6066
    %vm6068 = vcmp.lt.s32.totalorder %v6067, 0
    %v6069 = vsub.s32 0, %v6067
    %v6070 = vsel %vm6068, %v6069, %v6067
    %v6071 = vclz %v6070
    %v6072 = vsub.s32 %v6071, 2
    %vm6073 = vcmp.gt.s32.totalorder 0, %v6072
    %v6074 = vsel %vm6073, 0, %v6072
    %v6075 = vsub.s32 32, %v6074
    %v6076 = vshll.u32 %v6067, %v6074
    %v6077 = vshrl.u32 %v6059, %v6075
    %v6078 = vor.u32 %v6076, %v6077
    %v6079 = vsub.s32 4294967266, %v6074
    %v6080 = vadd.s32 %v6079, 127
    %v6081 = vshll.u32 %v6080, 23
    %v6082 = vor.u32 4788187, %v6081
    %v6083 = vand.u32 2147483647, %v6082
    %v6085 = vcvt.s32.f32 %v6078
    %v6086 = vmul.f32 %v6085, %v6083
    %v6087 = vxor.u32 %v6086, 2147483648
    %v6088 = vsel %vm6005, %v6087, %v6086
    %v6089 = vsub.s32 4, %v6065
    %v6090 = vsel %vm6005, %v6089, %v6065
    %v6091 = vsel %vm6004, %v5899, %v6088
    %v6092 = vsel %vm6004, 0, %v6090
    %v6093 = vcosq.f32.pop %v6091
    %v6094 = vsinq.f32.pop %v6091
    %vm6095 = vweird.f32 %v5899
    %v6096 = vand.u32 %v6092, 3
    %vm6097 = vcmp.lt.s32.totalorder %v6096, 2
    %vm6098 = vcmp.eq.s32.totalorder %v6096, 0
    %v6099 = vxor.u32 %v6094, 2147483648
    %v6100 = vsel %vm6098, %v6093, %v6099
    %vm6101 = vcmp.eq.s32.totalorder %v6096, 2
    %v6102 = vxor.u32 %v6093, 2147483648
    %v6103 = vsel %vm6101, %v6102, %v6094
    %v6104 = vsel %vm6097, %v6100, %v6103
    %v6105 = vsel %vm6095, nan, %v6104
    %6106 = vmatprep.subr.mxu0 0.0
    %6107 = vmatpush1.msra.mxu0 %v5586
    %6108 = vmatprep.subr.mxu0 0.0
    %6109 = vmatpush1.msra.mxu0 %v5689
    %6110 = vmatprep.subr.mxu0 0.0
    %6111 = vmatpush1.msra.mxu0 0.0
    %6112 = vmatprep.subr.mxu0 0.0
    %6113 = vmatpush1.msra.mxu0 0.0
    %6114 = vmatprep.subr.mxu0 0.0
    %6115 = vmatpush1.msra.mxu0 0.0
    %6116 = vmatprep.subr.mxu0 0.0
    %6117 = vmatpush1.msra.mxu0 0.0
    %6118 = vmatprep.subr.mxu0 0.0
    %6119 = vmatpush1.msra.mxu0 0.0
    %6120 = vmatprep.subr.mxu0 0.0
    %6121 = vmatpush1.msra.mxu0 0.0
    %6122 = vmatprep.subr.mxu0 0.0
    %6123 = vmatpush1.msra.mxu0 0.0
    %6124 = vmatprep.subr.mxu0 0.0
    %6125 = vmatpush1.msra.mxu0 0.0
    %6126 = vmatprep.subr.mxu0 0.0
    %6127 = vmatpush1.msra.mxu0 0.0
    %6128 = vmatprep.subr.mxu0 0.0
    %6129 = vmatpush1.msra.mxu0 0.0
    %6130 = vmatprep.subr.mxu0 0.0
    %6131 = vmatpush1.msra.mxu0 0.0
    %6132 = vmatprep.subr.mxu0 0.0
    %6133 = vmatpush1.msra.mxu0 0.0
    %6134 = vmatprep.subr.mxu0 0.0
    %6135 = vmatpush1.msra.mxu0 0.0
    %6136 = vmatprep.subr.mxu0 0.0
    %6137 = vmatpush1.msra.mxu0 0.0
    %6138 = vmatprep.subr.mxu0 0.0
    %6139 = vmatpush1.msra.mxu0 0.0
    %6140 = vmatprep.subr.mxu0 0.0
    %6141 = vmatpush1.msra.mxu0 0.0
    %6142 = vmatprep.subr.mxu0 0.0
    %6143 = vmatpush1.msra.mxu0 0.0
    %6144 = vmatprep.subr.mxu0 0.0
    %6145 = vmatpush1.msra.mxu0 0.0
    %6146 = vmatprep.subr.mxu0 0.0
    %6147 = vmatpush1.msra.mxu0 0.0
    %6148 = vmatprep.subr.mxu0 0.0
    %6149 = vmatpush1.msra.mxu0 0.0
    %6150 = vmatprep.subr.mxu0 0.0
    %6151 = vmatpush1.msra.mxu0 0.0
    %6152 = vmatprep.subr.mxu0 0.0
    %6153 = vmatpush1.msra.mxu0 0.0
    %6154 = vmatprep.subr.mxu0 0.0
    %6155 = vmatpush1.msra.mxu0 0.0
    %6156 = vmatprep.subr.mxu0 0.0
    %6157 = vmatpush1.msra.mxu0 0.0
    %6158 = vmatprep.subr.mxu0 0.0
    %6159 = vmatpush1.msra.mxu0 0.0
    %6160 = vmatprep.subr.mxu0 0.0
    %6161 = vmatpush1.msra.mxu0 0.0
    %6162 = vmatprep.subr.mxu0 0.0
    %6163 = vmatpush1.msra.mxu0 0.0
    %6164 = vmatprep.subr.mxu0 0.0
    %6165 = vmatpush1.msra.mxu0 0.0
    %6166 = vmatprep.subr.mxu0 0.0
    %6167 = vmatpush1.msra.mxu0 0.0
    %6168 = vmatprep.subr.mxu0 0.0
    %6169 = vmatpush1.msra.mxu0 0.0
    %6170 = vmatprep.mubr.f32.mxu0 0.0
    %6171 = vmatmul.mubr.f32.gmra.mrb[0].mxu0 %v894
    %v6172 = vpop.f32.mrb[0].mxu0
    %v6173 = vadd.f32 0.0, %v6172
    %v6174 = vpop.f32.mrb[0].mxu0
    %6175 = vmatprep.mubr.f32.mxu0 0.0
    %6176 = vmatmul.mubr.f32.gmra.mrb[0].mxu0 %v897
    %v6177 = vpop.f32.mrb[0].mxu0
    %v6178 = vadd.f32 0.0, %v6177
    %v6179 = vpop.f32.mrb[0].mxu0
    %6180 = vmatprep.mubr.f32.mxu0 0.0
    %6181 = vmatmul.mubr.f32.gmra.mrb[0].mxu0 %v900
    %v6182 = vpop.f32.mrb[0].mxu0
    %v6183 = vadd.f32 0.0, %v6182
    %v6184 = vpop.f32.mrb[0].mxu0
    %6185 = vmatprep.mubr.f32.mxu0 0.0
    %6186 = vmatmul.mubr.f32.gmra.mrb[0].mxu0 %v903
    %v6187 = vpop.f32.mrb[0].mxu0
    %v6188 = vadd.f32 0.0, %v6187
    %v6189 = vpop.f32.mrb[0].mxu0
    %6190 = vmatprep.mubr.f32.mxu0 0.0
    %6191 = vmatmul.mubr.f32.gmra.mrb[0].mxu0 %v906
    %v6192 = vpop.f32.mrb[0].mxu0
    %v6193 = vadd.f32 0.0, %v6192
    %v6194 = vpop.f32.mrb[0].mxu0
    %6195 = vmatprep.mubr.f32.mxu0 0.0
    %6196 = vmatmul.mubr.f32.gmra.mrb[0].mxu0 %v909
    %v6197 = vpop.f32.mrb[0].mxu0
    %v6198 = vadd.f32 0.0, %v6197
    %v6199 = vpop.f32.mrb[0].mxu0
    %6200 = vmatprep.mubr.f32.mxu0 0.0
    %6201 = vmatmul.mubr.f32.gmra.mrb[0].mxu0 %v912
    %v6202 = vpop.f32.mrb[0].mxu0
    %v6203 = vadd.f32 0.0, %v6202
    %v6204 = vpop.f32.mrb[0].mxu0
    %6205 = vmatprep.mubr.f32.mxu0 0.0
    %6206 = vmatmul.mubr.f32.gmra.mrb[0].mxu0 %v915
    %v6207 = vpop.f32.mrb[0].mxu0
    %v6208 = vadd.f32 0.0, %v6207
    %v6209 = vpop.f32.mrb[0].mxu0
    %6210 = vdwg.mxu0
    %v6211 = vmul.f32 %v6173, %v149
    %v6212 = vmul.f32 %v6178, %v150
    %v6213 = vmul.f32 %v6183, %v151
    %v6214 = vmul.f32 %v6188, %v152
    %v6215 = vmul.f32 %v6193, %v153
    %v6216 = vmul.f32 %v6198, %v154
    %v6217 = vmul.f32 %v6203, %v155
    %v6218 = vmul.f32 %v6208, %v156
    %v6220 = vsel %vm225, %v6211, 0
    %v6223 = vsel %vm225, %v6212, 0
    %v6226 = vsel %vm225, %v6213, 0
    %v6229 = vsel %vm225, %v6214, 0
    %v6232 = vsel %vm225, %v6215, 0
    %v6235 = vsel %vm225, %v6216, 0
    %v6238 = vsel %vm225, %v6217, 0
    %v6241 = vsel %vm225, %v6218, 0
    %v6244 = vsel %vm225, %v5794, 0
    %v6247 = vsel %vm225, %v5897, 0
    %6249 = vmatprep.subr.mxu0 0.0
    %6250 = vmatpush1.xpose.msra.mxu0 %v6244
    %6251 = vmatprep.subr.mxu0 0.0
    %6252 = vmatpush1.xpose.msra.mxu0 %v6247
    %6253 = vmatprep.subr.mxu0 0.0
    %6254 = vmatpush1.xpose.msra.mxu0 0.0
    %6255 = vmatprep.subr.mxu0 0.0
    %6256 = vmatpush1.xpose.msra.mxu0 0.0
    %6257 = vmatprep.subr.mxu0 0.0
    %6258 = vmatpush1.xpose.msra.mxu0 0.0
    %6259 = vmatprep.subr.mxu0 0.0
    %6260 = vmatpush1.xpose.msra.mxu0 0.0
    %6261 = vmatprep.subr.mxu0 0.0
    %6262 = vmatpush1.xpose.msra.mxu0 0.0
    %6263 = vmatprep.subr.mxu0 0.0
    %6264 = vmatpush1.xpose.msra.mxu0 0.0
    %6265 = vmatprep.subr.mxu0 0.0
    %6266 = vmatpush1.xpose.msra.mxu0 0.0
    %6267 = vmatprep.subr.mxu0 0.0
    %6268 = vmatpush1.xpose.msra.mxu0 0.0
    %6269 = vmatprep.subr.mxu0 0.0
    %6270 = vmatpush1.xpose.msra.mxu0 0.0
    %6271 = vmatprep.subr.mxu0 0.0
    %6272 = vmatpush1.xpose.msra.mxu0 0.0
    %6273 = vmatprep.subr.mxu0 0.0
    %6274 = vmatpush1.xpose.msra.mxu0 0.0
    %6275 = vmatprep.subr.mxu0 0.0
    %6276 = vmatpush1.xpose.msra.mxu0 0.0
    %6277 = vmatprep.subr.mxu0 0.0
    %6278 = vmatpush1.xpose.msra.mxu0 0.0
    %6279 = vmatprep.subr.mxu0 0.0
    %6280 = vmatpush1.xpose.msra.mxu0 0.0
    %6281 = vmatprep.subr.mxu0 0.0
    %6282 = vmatpush1.xpose.msra.mxu0 0.0
    %6283 = vmatprep.subr.mxu0 0.0
    %6284 = vmatpush1.xpose.msra.mxu0 0.0
    %6285 = vmatprep.subr.mxu0 0.0
    %6286 = vmatpush1.xpose.msra.mxu0 0.0
    %6287 = vmatprep.subr.mxu0 0.0
    %6288 = vmatpush1.xpose.msra.mxu0 0.0
    %6289 = vmatprep.subr.mxu0 0.0
    %6290 = vmatpush1.xpose.msra.mxu0 0.0
    %6291 = vmatprep.subr.mxu0 0.0
    %6292 = vmatpush1.xpose.msra.mxu0 0.0
    %6293 = vmatprep.subr.mxu0 0.0
    %6294 = vmatpush1.xpose.msra.mxu0 0.0
    %6295 = vmatprep.subr.mxu0 0.0
    %6296 = vmatpush1.xpose.msra.mxu0 0.0
    %6297 = vmatprep.subr.mxu0 0.0
    %6298 = vmatpush1.xpose.msra.mxu0 0.0
    %6299 = vmatprep.subr.mxu0 0.0
    %6300 = vmatpush1.xpose.msra.mxu0 0.0
    %6301 = vmatprep.subr.mxu0 0.0
    %6302 = vmatpush1.xpose.msra.mxu0 0.0
    %6303 = vmatprep.subr.mxu0 0.0
    %6304 = vmatpush1.xpose.msra.mxu0 0.0
    %6305 = vmatprep.subr.mxu0 0.0
    %6306 = vmatpush1.xpose.msra.mxu0 0.0
    %6307 = vmatprep.subr.mxu0 0.0
    %6308 = vmatpush1.xpose.msra.mxu0 0.0
    %6309 = vmatprep.subr.mxu0 0.0
    %6310 = vmatpush1.xpose.msra.mxu0 0.0
    %6311 = vmatprep.subr.mxu0 0.0
    %6312 = vmatpush1.xpose.msra.mxu0 0.0
    %6313 = vmatprep.mubr.f32.mxu0 0.0
    %6314 = vmatmul.mubr.f32.gmra.mrb[0].mxu0 %v6220
    %v6315 = vpop.f32.mrb[0].mxu0
    %v6316 = vadd.f32 %v207, %v6315
    %v6317 = vpop.f32.mrb[0].mxu0
    %6318 = vmatprep.mubr.f32.mxu0 0.0
    %6319 = vmatmul.mubr.f32.gmra.mrb[0].mxu0 %v6223
    %v6320 = vpop.f32.mrb[0].mxu0
    %v6321 = vadd.f32 %v208, %v6320
    %v6322 = vpop.f32.mrb[0].mxu0
    %6323 = vmatprep.mubr.f32.mxu0 0.0
    %6324 = vmatmul.mubr.f32.gmra.mrb[0].mxu0 %v6226
    %v6325 = vpop.f32.mrb[0].mxu0
    %v6326 = vadd.f32 %v209, %v6325
    %v6327 = vpop.f32.mrb[0].mxu0
    %6328 = vmatprep.mubr.f32.mxu0 0.0
    %6329 = vmatmul.mubr.f32.gmra.mrb[0].mxu0 %v6229
    %v6330 = vpop.f32.mrb[0].mxu0
    %v6331 = vadd.f32 %v210, %v6330
    %v6332 = vpop.f32.mrb[0].mxu0
    %6333 = vmatprep.mubr.f32.mxu0 0.0
    %6334 = vmatmul.mubr.f32.gmra.mrb[0].mxu0 %v6232
    %v6335 = vpop.f32.mrb[0].mxu0
    %v6336 = vadd.f32 %v211, %v6335
    %v6337 = vpop.f32.mrb[0].mxu0
    %6338 = vmatprep.mubr.f32.mxu0 0.0
    %6339 = vmatmul.mubr.f32.gmra.mrb[0].mxu0 %v6235
    %v6340 = vpop.f32.mrb[0].mxu0
    %v6341 = vadd.f32 %v212, %v6340
    %v6342 = vpop.f32.mrb[0].mxu0
    %6343 = vmatprep.mubr.f32.mxu0 0.0
    %6344 = vmatmul.mubr.f32.gmra.mrb[0].mxu0 %v6238
    %v6345 = vpop.f32.mrb[0].mxu0
    %v6346 = vadd.f32 %v213, %v6345
    %v6347 = vpop.f32.mrb[0].mxu0
    %6348 = vmatprep.mubr.f32.mxu0 0.0
    %6349 = vmatmul.mubr.f32.gmra.mrb[0].mxu0 %v6241
    %v6350 = vpop.f32.mrb[0].mxu0
    %v6351 = vadd.f32 %v214, %v6350
    %v6352 = vpop.f32.mrb[0].mxu0
    %6353 = vdwg.mxu0
    %v6354 = vmul.f32 %v6316, 1.442695
    %v6355 = vpow.pop %v6354
    %v6356 = vmul.f32 %v6321, 1.442695
    %v6357 = vpow.pop %v6356
    %v6358 = vmul.f32 %v6326, 1.442695
    %v6359 = vpow.pop %v6358
    %v6360 = vmul.f32 %v6331, 1.442695
    %v6361 = vpow.pop %v6360
    %v6362 = vmul.f32 %v6336, 1.442695
    %v6363 = vpow.pop %v6362
    %v6364 = vmul.f32 %v6341, 1.442695
    %v6365 = vpow.pop %v6364
    %v6366 = vmul.f32 %v6346, 1.442695
    %v6367 = vpow.pop %v6366
    %v6368 = vmul.f32 %v6351, 1.442695
    %v6369 = vpow.pop %v6368
    %v6370 = vsel %vm892, %v6355, 0.0
    %6371 = vadd.xlane.f32.xlu0 %v6370
    %v6372 = vpop.xlane.xlu0 %6371
    %v6373 = vsel %vm892, %v6357, 0.0
    %6374 = vadd.xlane.f32.xlu0 %v6373
    %v6375 = vpop.xlane.xlu0 %6374
    %v6376 = vsel %vm892, %v6359, 0.0
    %6377 = vadd.xlane.f32.xlu0 %v6376
    %v6378 = vpop.xlane.xlu0 %6377
    %v6379 = vsel %vm892, %v6361, 0.0
    %6380 = vadd.xlane.f32.xlu0 %v6379
    %v6381 = vpop.xlane.xlu0 %6380
    %v6382 = vsel %vm892, %v6363, 0.0
    %6383 = vadd.xlane.f32.xlu0 %v6382
    %v6384 = vpop.xlane.xlu0 %6383
    %v6385 = vsel %vm892, %v6365, 0.0
    %6386 = vadd.xlane.f32.xlu0 %v6385
    %v6387 = vpop.xlane.xlu0 %6386
    %v6388 = vsel %vm892, %v6367, 0.0
    %6389 = vadd.xlane.f32.xlu0 %v6388
    %v6390 = vpop.xlane.xlu0 %6389
    %v6391 = vsel %vm892, %v6369, 0.0
    %6392 = vadd.xlane.f32.xlu0 %v6391
    %v6393 = vpop.xlane.xlu0 %6392
    %v6394 = vrcp.pop %v6372
    %v6395 = vrcp.pop %v6375
    %v6396 = vrcp.pop %v6378
    %v6397 = vrcp.pop %v6381
    %v6398 = vrcp.pop %v6384
    %v6399 = vrcp.pop %v6387
    %v6400 = vrcp.pop %v6390
    %v6401 = vrcp.pop %v6393
    %v6402 = vmul.f32 %v6355, %v6394
    %v6403 = vmul.f32 %v6357, %v6395
    %v6404 = vmul.f32 %v6359, %v6396
    %v6405 = vmul.f32 %v6361, %v6397
    %v6406 = vmul.f32 %v6363, %v6398
    %v6407 = vmul.f32 %v6365, %v6399
    %v6408 = vmul.f32 %v6367, %v6400
    %v6409 = vmul.f32 %v6369, %v6401
    %v6411 = vsel %vm892, %v6402, 0
    %v6414 = vsel %vm892, %v6403, 0
    %v6417 = vsel %vm892, %v6404, 0
    %v6420 = vsel %vm892, %v6405, 0
    %v6423 = vsel %vm892, %v6406, 0
    %v6426 = vsel %vm892, %v6407, 0
    %v6429 = vsel %vm892, %v6408, 0
    %v6432 = vsel %vm892, %v6409, 0
    %6434 = vmatprep.subr.mxu0 0.0
    %6435 = vmatpush1.msra.mxu0 %v6002
    %6436 = vmatprep.subr.mxu0 0.0
    %6437 = vmatpush1.msra.mxu0 %v6105
    %6438 = vmatprep.subr.mxu0 0.0
    %6439 = vmatpush1.msra.mxu0 0.0
    %6440 = vmatprep.subr.mxu0 0.0
    %6441 = vmatpush1.msra.mxu0 0.0
    %6442 = vmatprep.subr.mxu0 0.0
    %6443 = vmatpush1.msra.mxu0 0.0
    %6444 = vmatprep.subr.mxu0 0.0
    %6445 = vmatpush1.msra.mxu0 0.0
    %6446 = vmatprep.subr.mxu0 0.0
    %6447 = vmatpush1.msra.mxu0 0.0
    %6448 = vmatprep.subr.mxu0 0.0
    %6449 = vmatpush1.msra.mxu0 0.0
    %6450 = vmatprep.subr.mxu0 0.0
    %6451 = vmatpush1.msra.mxu0 0.0
    %6452 = vmatprep.subr.mxu0 0.0
    %6453 = vmatpush1.msra.mxu0 0.0
    %6454 = vmatprep.subr.mxu0 0.0
    %6455 = vmatpush1.msra.mxu0 0.0
    %6456 = vmatprep.subr.mxu0 0.0
    %6457 = vmatpush1.msra.mxu0 0.0
    %6458 = vmatprep.subr.mxu0 0.0
    %6459 = vmatpush1.msra.mxu0 0.0
    %6460 = vmatprep.subr.mxu0 0.0
    %6461 = vmatpush1.msra.mxu0 0.0
    %6462 = vmatprep.subr.mxu0 0.0
    %6463 = vmatpush1.msra.mxu0 0.0
    %6464 = vmatprep.subr.mxu0 0.0
    %6465 = vmatpush1.msra.mxu0 0.0
    %6466 = vmatprep.subr.mxu0 0.0
    %6467 = vmatpush1.msra.mxu0 0.0
    %6468 = vmatprep.subr.mxu0 0.0
    %6469 = vmatpush1.msra.mxu0 0.0
    %6470 = vmatprep.subr.mxu0 0.0
    %6471 = vmatpush1.msra.mxu0 0.0
    %6472 = vmatprep.subr.mxu0 0.0
    %6473 = vmatpush1.msra.mxu0 0.0
    %6474 = vmatprep.subr.mxu0 0.0
    %6475 = vmatpush1.msra.mxu0 0.0
    %6476 = vmatprep.subr.mxu0 0.0
    %6477 = vmatpush1.msra.mxu0 0.0
    %6478 = vmatprep.subr.mxu0 0.0
    %6479 = vmatpush1.msra.mxu0 0.0
    %6480 = vmatprep.subr.mxu0 0.0
    %6481 = vmatpush1.msra.mxu0 0.0
    %6482 = vmatprep.subr.mxu0 0.0
    %6483 = vmatpush1.msra.mxu0 0.0
    %6484 = vmatprep.subr.mxu0 0.0
    %6485 = vmatpush1.msra.mxu0 0.0
    %6486 = vmatprep.subr.mxu0 0.0
    %6487 = vmatpush1.msra.mxu0 0.0
    %6488 = vmatprep.subr.mxu0 0.0
    %6489 = vmatpush1.msra.mxu0 0.0
    %6490 = vmatprep.subr.mxu0 0.0
    %6491 = vmatpush1.msra.mxu0 0.0
    %6492 = vmatprep.subr.mxu0 0.0
    %6493 = vmatpush1.msra.mxu0 0.0
    %6494 = vmatprep.subr.mxu0 0.0
    %6495 = vmatpush1.msra.mxu0 0.0
    %6496 = vmatprep.subr.mxu0 0.0
    %6497 = vmatpush1.msra.mxu0 0.0
    %6498 = vmatprep.mubr.f32.mxu0 0.0
    %6499 = vmatmul.mubr.f32.gmra.mrb[0].mxu0 %v6411
    %v6500 = vpop.f32.mrb[0].mxu0
    %v6501 = vadd.f32 0.0, %v6500
    %v6502 = vpop.f32.mrb[0].mxu0
    %6503 = vmatprep.mubr.f32.mxu0 0.0
    %6504 = vmatmul.mubr.f32.gmra.mrb[0].mxu0 %v6414
    %v6505 = vpop.f32.mrb[0].mxu0
    %v6506 = vadd.f32 0.0, %v6505
    %v6507 = vpop.f32.mrb[0].mxu0
    %6508 = vmatprep.mubr.f32.mxu0 0.0
    %6509 = vmatmul.mubr.f32.gmra.mrb[0].mxu0 %v6417
    %v6510 = vpop.f32.mrb[0].mxu0
    %v6511 = vadd.f32 0.0, %v6510
    %v6512 = vpop.f32.mrb[0].mxu0
    %6513 = vmatprep.mubr.f32.mxu0 0.0
    %6514 = vmatmul.mubr.f32.gmra.mrb[0].mxu0 %v6420
    %v6515 = vpop.f32.mrb[0].mxu0
    %v6516 = vadd.f32 0.0, %v6515
    %v6517 = vpop.f32.mrb[0].mxu0
    %6518 = vmatprep.mubr.f32.mxu0 0.0
    %6519 = vmatmul.mubr.f32.gmra.mrb[0].mxu0 %v6423
    %v6520 = vpop.f32.mrb[0].mxu0
    %v6521 = vadd.f32 0.0, %v6520
    %v6522 = vpop.f32.mrb[0].mxu0
    %6523 = vmatprep.mubr.f32.mxu0 0.0
    %6524 = vmatmul.mubr.f32.gmra.mrb[0].mxu0 %v6426
    %v6525 = vpop.f32.mrb[0].mxu0
    %v6526 = vadd.f32 0.0, %v6525
    %v6527 = vpop.f32.mrb[0].mxu0
    %6528 = vmatprep.mubr.f32.mxu0 0.0
    %6529 = vmatmul.mubr.f32.gmra.mrb[0].mxu0 %v6429
    %v6530 = vpop.f32.mrb[0].mxu0
    %v6531 = vadd.f32 0.0, %v6530
    %v6532 = vpop.f32.mrb[0].mxu0
    %6533 = vmatprep.mubr.f32.mxu0 0.0
    %6534 = vmatmul.mubr.f32.gmra.mrb[0].mxu0 %v6432
    %v6535 = vpop.f32.mrb[0].mxu0
    %v6536 = vadd.f32 0.0, %v6535
    %v6537 = vpop.f32.mrb[0].mxu0
    %6538 = vdwg.mxu0
    %v6539 = vmul.f32 %v6501, %v149
    %v6540 = vmul.f32 %v6506, %v150
    %v6541 = vmul.f32 %v6511, %v151
    %v6542 = vmul.f32 %v6516, %v152
    %v6543 = vmul.f32 %v6521, %v153
    %v6544 = vmul.f32 %v6526, %v154
    %v6545 = vmul.f32 %v6531, %v155
    %v6546 = vmul.f32 %v6536, %v156
    %6547 = vmatprep.subr.mxu0 0.0
    %6548 = vmatpush1.msra.mxu0 %v6539
    %6549 = vmatprep.subr.mxu0 0.0
    %6550 = vmatpush1.msra.mxu0 %v6540
    %6551 = vmatprep.subr.mxu0 0.0
    %6552 = vmatpush1.msra.mxu0 %v6541
    %6553 = vmatprep.subr.mxu0 0.0
    %6554 = vmatpush1.msra.mxu0 %v6542
    %6555 = vmatprep.subr.mxu0 0.0
    %6556 = vmatpush1.msra.mxu0 %v6543
    %6557 = vmatprep.subr.mxu0 0.0
    %6558 = vmatpush1.msra.mxu0 %v6544
    %6559 = vmatprep.subr.mxu0 0.0
    %6560 = vmatpush1.msra.mxu0 %v6545
    %6561 = vmatprep.subr.mxu0 0.0
    %6562 = vmatpush1.msra.mxu0 %v6546
    %6563 = vmatprep.subr.mxu0 0.0
    %6564 = vmatpush1.msra.mxu0 0.0
    %6565 = vmatprep.subr.mxu0 0.0
    %6566 = vmatpush1.msra.mxu0 0.0
    %6567 = vmatprep.subr.mxu0 0.0
    %6568 = vmatpush1.msra.mxu0 0.0
    %6569 = vmatprep.subr.mxu0 0.0
    %6570 = vmatpush1.msra.mxu0 0.0
    %6571 = vmatprep.subr.mxu0 0.0
    %6572 = vmatpush1.msra.mxu0 0.0
    %6573 = vmatprep.subr.mxu0 0.0
    %6574 = vmatpush1.msra.mxu0 0.0
    %6575 = vmatprep.subr.mxu0 0.0
    %6576 = vmatpush1.msra.mxu0 0.0
    %6577 = vmatprep.subr.mxu0 0.0
    %6578 = vmatpush1.msra.mxu0 0.0
    %6579 = vmatprep.subr.mxu0 0.0
    %6580 = vmatpush1.msra.mxu0 0.0
    %6581 = vmatprep.subr.mxu0 0.0
    %6582 = vmatpush1.msra.mxu0 0.0
    %6583 = vmatprep.subr.mxu0 0.0
    %6584 = vmatpush1.msra.mxu0 0.0
    %6585 = vmatprep.subr.mxu0 0.0
    %6586 = vmatpush1.msra.mxu0 0.0
    %6587 = vmatprep.subr.mxu0 0.0
    %6588 = vmatpush1.msra.mxu0 0.0
    %6589 = vmatprep.subr.mxu0 0.0
    %6590 = vmatpush1.msra.mxu0 0.0
    %6591 = vmatprep.subr.mxu0 0.0
    %6592 = vmatpush1.msra.mxu0 0.0
    %6593 = vmatprep.subr.mxu0 0.0
    %6594 = vmatpush1.msra.mxu0 0.0
    %6595 = vmatprep.subr.mxu0 0.0
    %6596 = vmatpush1.msra.mxu0 0.0
    %6597 = vmatprep.subr.mxu0 0.0
    %6598 = vmatpush1.msra.mxu0 0.0
    %6599 = vmatprep.subr.mxu0 0.0
    %6600 = vmatpush1.msra.mxu0 0.0
    %6601 = vmatprep.subr.mxu0 0.0
    %6602 = vmatpush1.msra.mxu0 0.0
    %6603 = vmatprep.subr.mxu0 0.0
    %6604 = vmatpush1.msra.mxu0 0.0
    %6605 = vmatprep.subr.mxu0 0.0
    %6606 = vmatpush1.msra.mxu0 0.0
    %6607 = vmatprep.subr.mxu0 0.0
    %6608 = vmatpush1.msra.mxu0 0.0
    %6609 = vmatprep.subr.mxu0 0.0
    %6610 = vmatpush1.msra.mxu0 0.0
    %6611 = vmatprep.mubr.f32.mxu0 0.0
    %6612 = vmatmul.mubr.f32.gmra.mrb[0].mxu0 %v1361
    %v6613 = vpop.f32.mrb[0].mxu0
    %v6614 = vadd.f32 %v1358, %v6613
    %v6615 = vpop.f32.mrb[0].mxu0
    %6616 = vmatprep.mubr.f32.mxu0 0.0
    %6617 = vmatmul.mubr.f32.gmra.mrb[0].mxu0 %v1364
    %v6618 = vpop.f32.mrb[0].mxu0
    %v6619 = vadd.f32 %v1358, %v6618
    %v6620 = vpop.f32.mrb[0].mxu0
    %6621 = vdwg.mxu0
    %v6622 = vand.u32 2147483647, %v6614
    %vm6623 = vcmp.le.f32.partialorder %v6622, 0.7853982
    %vm6624 = vcmp.lt.s32.totalorder %v6614, 0
    %v6625 = vand.u32 %v6614, 2139095040
    %v6626 = vshrl.u32 %v6625, 23
    %v6627 = vsub.s32 %v6626, 127
    %v6628 = vand.u32 2147483647, %v6614
    %v6629 = vand.u32 %v6628, 8388607
    %v6630 = vor.u32 %v6629, 8388608
    %v6631 = vsub.s32 0, %v6630
    %v6632 = vadd.s32 %v6627, 1
    %vm6633 = vcmp.gt.s32.totalorder %v6632, 0
    %v6634 = vsel %vm6633, %v6632, 0
    %v6635 = vshrl.u32 %v6634, 5
    %v6636 = vand.u32 %v6634, 31
    %v6637 = vsub.s32 32, %v6636
    %v6638 = vshrl.u32 683565275, %v6637
    %v6639 = vshll.u32 683565275, %v6636
    %v6640 = vshrl.u32 2475754826, %v6637
    %v6641 = vor.u32 %v6639, %v6640
    %v6642 = vshll.u32 2475754826, %v6636
    %v6643 = vshrl.u32 2131351028, %v6637
    %v6644 = vor.u32 %v6642, %v6643
    %v6645 = vshll.u32 2131351028, %v6636
    %v6646 = vshrl.u32 2102212464, %v6637
    %v6647 = vor.u32 %v6645, %v6646
    %v6648 = vshll.u32 2102212464, %v6636
    %v6649 = vshrl.u32 920167782, %v6637
    %v6650 = vor.u32 %v6648, %v6649
    %v6651 = vshll.u32 920167782, %v6636
    %v6652 = vshrl.u32 1326507024, %v6637
    %v6653 = vor.u32 %v6651, %v6652
    %vm6654 = vcmp.lt.s32.totalorder %v6635, 1
    %vm6655 = vcmp.lt.s32.totalorder %v6635, 2
    %vm6656 = vcmp.lt.s32.totalorder %v6635, 3
    %vm6657 = vcmp.lt.s32.totalorder %v6635, 4
    %v6658 = vsel %vm6654, %v6638, %v6641
    %v6659 = vsel %vm6657, %v6647, 2102212464
    %v6660 = vsel %vm6656, %v6644, %v6659
    %v6661 = vsel %vm6655, %v6658, %v6660
    %v6662 = vsel %vm6654, %v6641, %v6644
    %v6663 = vsel %vm6657, %v6650, 920167782
    %v6664 = vsel %vm6656, %v6647, %v6663
    %v6665 = vsel %vm6655, %v6662, %v6664
    %v6666 = vsel %vm6654, %v6644, %v6647
    %v6667 = vsel %vm6657, %v6653, 1326507024
    %v6668 = vsel %vm6656, %v6650, %v6667
    %v6669 = vsel %vm6655, %v6666, %v6668
    %v6670 = vshll.u32 %v6630, 8
    %v6671 = vmul.u32.u64.compose %v6670, %v6669
    %v6672 = vextract.low.u32 %v6671
    %v6673 = vextract.high.u32 %v6671
    %v6674 = vmul.u32.u64.compose %v6670, %v6665
    %v6675 = vextract.low.u32 %v6674
    %v6676 = vextract.high.u32 %v6674
    %v6677 = vmul.u32 %v6670, %v6661
    %v6678 = vadd.s32 %v6673, %v6675
    %vm6679 = vc.u32 %v6673, %v6675
    %v6680 = vadd.s32 %v6676, 1
    %v6681 = vsel %vm6679, %v6680, %v6676
    %v6682 = vadd.s32 %v6677, %v6681
    %v6683 = vadd.s32 %v6682, 536870912
    %v6684 = vshrl.u32 %v6683, 30
    %v6685 = vshll.u32 %v6684, 30
    %v6686 = vsub.s32 %v6682, %v6685
    %vm6687 = vcmp.lt.s32.totalorder %v6686, 0
    %v6688 = vsub.s32 0, %v6686
    %v6689 = vsel %vm6687, %v6688, %v6686
    %v6690 = vclz %v6689
    %v6691 = vsub.s32 %v6690, 2
    %vm6692 = vcmp.gt.s32.totalorder 0, %v6691
    %v6693 = vsel %vm6692, 0, %v6691
    %v6694 = vsub.s32 32, %v6693
    %v6695 = vshll.u32 %v6686, %v6693
    %v6696 = vshrl.u32 %v6678, %v6694
    %v6697 = vor.u32 %v6695, %v6696
    %v6698 = vsub.s32 4294967266, %v6693
    %v6699 = vadd.s32 %v6698, 127
    %v6700 = vshll.u32 %v6699, 23
    %v6701 = vor.u32 4788187, %v6700
    %v6702 = vand.u32 2147483647, %v6701
    %v6704 = vcvt.s32.f32 %v6697
    %v6705 = vmul.f32 %v6704, %v6702
    %v6706 = vxor.u32 %v6705, 2147483648
    %v6707 = vsel %vm6624, %v6706, %v6705
    %v6708 = vsub.s32 4, %v6684
    %v6709 = vsel %vm6624, %v6708, %v6684
    %v6710 = vsel %vm6623, %v6614, %v6707
    %v6711 = vsel %vm6623, 0, %v6709
    %v6712 = vcosq.f32.pop %v6710
    %v6713 = vsinq.f32.pop %v6710
    %vm6714 = vweird.f32 %v6614
    %v6715 = vand.u32 %v6711, 3
    %vm6716 = vcmp.lt.s32.totalorder %v6715, 2
    %vm6717 = vcmp.eq.s32.totalorder %v6715, 0
    %v6718 = vxor.u32 %v6713, 2147483648
    %v6719 = vsel %vm6717, %v6712, %v6718
    %vm6720 = vcmp.eq.s32.totalorder %v6715, 2
    %v6721 = vxor.u32 %v6712, 2147483648
    %v6722 = vsel %vm6720, %v6721, %v6713
    %v6723 = vsel %vm6716, %v6719, %v6722
    %v6724 = vsel %vm6714, nan, %v6723
    %v6725 = vand.u32 2147483647, %v6619
    %vm6726 = vcmp.le.f32.partialorder %v6725, 0.7853982
    %vm6727 = vcmp.lt.s32.totalorder %v6619, 0
    %v6728 = vand.u32 %v6619, 2139095040
    %v6729 = vshrl.u32 %v6728, 23
    %v6730 = vsub.s32 %v6729, 127
    %v6731 = vand.u32 2147483647, %v6619
    %v6732 = vand.u32 %v6731, 8388607
    %v6733 = vor.u32 %v6732, 8388608
    %v6734 = vsub.s32 0, %v6733
    %v6735 = vadd.s32 %v6730, 1
    %vm6736 = vcmp.gt.s32.totalorder %v6735, 0
    %v6737 = vsel %vm6736, %v6735, 0
    %v6738 = vshrl.u32 %v6737, 5
    %v6739 = vand.u32 %v6737, 31
    %v6740 = vsub.s32 32, %v6739
    %v6741 = vshrl.u32 683565275, %v6740
    %v6742 = vshll.u32 683565275, %v6739
    %v6743 = vshrl.u32 2475754826, %v6740
    %v6744 = vor.u32 %v6742, %v6743
    %v6745 = vshll.u32 2475754826, %v6739
    %v6746 = vshrl.u32 2131351028, %v6740
    %v6747 = vor.u32 %v6745, %v6746
    %v6748 = vshll.u32 2131351028, %v6739
    %v6749 = vshrl.u32 2102212464, %v6740
    %v6750 = vor.u32 %v6748, %v6749
    %v6751 = vshll.u32 2102212464, %v6739
    %v6752 = vshrl.u32 920167782, %v6740
    %v6753 = vor.u32 %v6751, %v6752
    %v6754 = vshll.u32 920167782, %v6739
    %v6755 = vshrl.u32 1326507024, %v6740
    %v6756 = vor.u32 %v6754, %v6755
    %vm6757 = vcmp.lt.s32.totalorder %v6738, 1
    %vm6758 = vcmp.lt.s32.totalorder %v6738, 2
    %vm6759 = vcmp.lt.s32.totalorder %v6738, 3
    %vm6760 = vcmp.lt.s32.totalorder %v6738, 4
    %v6761 = vsel %vm6757, %v6741, %v6744
    %v6762 = vsel %vm6760, %v6750, 2102212464
    %v6763 = vsel %vm6759, %v6747, %v6762
    %v6764 = vsel %vm6758, %v6761, %v6763
    %v6765 = vsel %vm6757, %v6744, %v6747
    %v6766 = vsel %vm6760, %v6753, 920167782
    %v6767 = vsel %vm6759, %v6750, %v6766
    %v6768 = vsel %vm6758, %v6765, %v6767
    %v6769 = vsel %vm6757, %v6747, %v6750
    %v6770 = vsel %vm6760, %v6756, 1326507024
    %v6771 = vsel %vm6759, %v6753, %v6770
    %v6772 = vsel %vm6758, %v6769, %v6771
    %v6773 = vshll.u32 %v6733, 8
    %v6774 = vmul.u32.u64.compose %v6773, %v6772
    %v6775 = vextract.low.u32 %v6774
    %v6776 = vextract.high.u32 %v6774
    %v6777 = vmul.u32.u64.compose %v6773, %v6768
    %v6778 = vextract.low.u32 %v6777
    %v6779 = vextract.high.u32 %v6777
    %v6780 = vmul.u32 %v6773, %v6764
    %v6781 = vadd.s32 %v6776, %v6778
    %vm6782 = vc.u32 %v6776, %v6778
    %v6783 = vadd.s32 %v6779, 1
    %v6784 = vsel %vm6782, %v6783, %v6779
    %v6785 = vadd.s32 %v6780, %v6784
    %v6786 = vadd.s32 %v6785, 536870912
    %v6787 = vshrl.u32 %v6786, 30
    %v6788 = vshll.u32 %v6787, 30
    %v6789 = vsub.s32 %v6785, %v6788
    %vm6790 = vcmp.lt.s32.totalorder %v6789, 0
    %v6791 = vsub.s32 0, %v6789
    %v6792 = vsel %vm6790, %v6791, %v6789
    %v6793 = vclz %v6792
    %v6794 = vsub.s32 %v6793, 2
    %vm6795 = vcmp.gt.s32.totalorder 0, %v6794
    %v6796 = vsel %vm6795, 0, %v6794
    %v6797 = vsub.s32 32, %v6796
    %v6798 = vshll.u32 %v6789, %v6796
    %v6799 = vshrl.u32 %v6781, %v6797
    %v6800 = vor.u32 %v6798, %v6799
    %v6801 = vsub.s32 4294967266, %v6796
    %v6802 = vadd.s32 %v6801, 127
    %v6803 = vshll.u32 %v6802, 23
    %v6804 = vor.u32 4788187, %v6803
    %v6805 = vand.u32 2147483647, %v6804
    %v6807 = vcvt.s32.f32 %v6800
    %v6808 = vmul.f32 %v6807, %v6805
    %v6809 = vxor.u32 %v6808, 2147483648
    %v6810 = vsel %vm6727, %v6809, %v6808
    %v6811 = vsub.s32 4, %v6787
    %v6812 = vsel %vm6727, %v6811, %v6787
    %v6813 = vsel %vm6726, %v6619, %v6810
    %v6814 = vsel %vm6726, 0, %v6812
    %v6815 = vcosq.f32.pop %v6813
    %v6816 = vsinq.f32.pop %v6813
    %vm6817 = vweird.f32 %v6619
    %v6818 = vand.u32 %v6814, 3
    %vm6819 = vcmp.lt.s32.totalorder %v6818, 2
    %vm6820 = vcmp.eq.s32.totalorder %v6818, 0
    %v6821 = vxor.u32 %v6816, 2147483648
    %v6822 = vsel %vm6820, %v6815, %v6821
    %vm6823 = vcmp.eq.s32.totalorder %v6818, 2
    %v6824 = vxor.u32 %v6815, 2147483648
    %v6825 = vsel %vm6823, %v6824, %v6816
    %v6826 = vsel %vm6819, %v6822, %v6825
    %v6827 = vsel %vm6817, nan, %v6826
    %v6829 = vsel %vm225, %v5480, 0
    %v6832 = vsel %vm225, %v5481, 0
    %6834 = vmatprep.subr.mxu0 0.0
    %6835 = vmatpush1.msra.mxu0 %v43
    %6836 = vmatprep.subr.mxu0 0.0
    %6837 = vmatpush1.msra.mxu0 %v44
    %6838 = vmatprep.subr.mxu0 0.0
    %6839 = vmatpush1.msra.mxu0 %v45
    %6840 = vmatprep.subr.mxu0 0.0
    %6841 = vmatpush1.msra.mxu0 %v46
    %6842 = vmatprep.subr.mxu0 0.0
    %6843 = vmatpush1.msra.mxu0 0.0
    %6844 = vmatprep.subr.mxu0 0.0
    %6845 = vmatpush1.msra.mxu0 0.0
    %6846 = vmatprep.subr.mxu0 0.0
    %6847 = vmatpush1.msra.mxu0 0.0
    %6848 = vmatprep.subr.mxu0 0.0
    %6849 = vmatpush1.msra.mxu0 0.0
    %6850 = vmatprep.subr.mxu0 0.0
    %6851 = vmatpush1.msra.mxu0 0.0
    %6852 = vmatprep.subr.mxu0 0.0
    %6853 = vmatpush1.msra.mxu0 0.0
    %6854 = vmatprep.subr.mxu0 0.0
    %6855 = vmatpush1.msra.mxu0 0.0
    %6856 = vmatprep.subr.mxu0 0.0
    %6857 = vmatpush1.msra.mxu0 0.0
    %6858 = vmatprep.subr.mxu0 0.0
    %6859 = vmatpush1.msra.mxu0 0.0
    %6860 = vmatprep.subr.mxu0 0.0
    %6861 = vmatpush1.msra.mxu0 0.0
    %6862 = vmatprep.subr.mxu0 0.0
    %6863 = vmatpush1.msra.mxu0 0.0
    %6864 = vmatprep.subr.mxu0 0.0
    %6865 = vmatpush1.msra.mxu0 0.0
    %6866 = vmatprep.subr.mxu0 0.0
    %6867 = vmatpush1.msra.mxu0 0.0
    %6868 = vmatprep.subr.mxu0 0.0
    %6869 = vmatpush1.msra.mxu0 0.0
    %6870 = vmatprep.subr.mxu0 0.0
    %6871 = vmatpush1.msra.mxu0 0.0
    %6872 = vmatprep.subr.mxu0 0.0
    %6873 = vmatpush1.msra.mxu0 0.0
    %6874 = vmatprep.subr.mxu0 0.0
    %6875 = vmatpush1.msra.mxu0 0.0
    %6876 = vmatprep.subr.mxu0 0.0
    %6877 = vmatpush1.msra.mxu0 0.0
    %6878 = vmatprep.subr.mxu0 0.0
    %6879 = vmatpush1.msra.mxu0 0.0
    %6880 = vmatprep.subr.mxu0 0.0
    %6881 = vmatpush1.msra.mxu0 0.0
    %6882 = vmatprep.subr.mxu0 0.0
    %6883 = vmatpush1.msra.mxu0 0.0
    %6884 = vmatprep.subr.mxu0 0.0
    %6885 = vmatpush1.msra.mxu0 0.0
    %6886 = vmatprep.subr.mxu0 0.0
    %6887 = vmatpush1.msra.mxu0 0.0
    %6888 = vmatprep.subr.mxu0 0.0
    %6889 = vmatpush1.msra.mxu0 0.0
    %6890 = vmatprep.subr.mxu0 0.0
    %6891 = vmatpush1.msra.mxu0 0.0
    %6892 = vmatprep.subr.mxu0 0.0
    %6893 = vmatpush1.msra.mxu0 0.0
    %6894 = vmatprep.subr.mxu0 0.0
    %6895 = vmatpush1.msra.mxu0 0.0
    %6896 = vmatprep.subr.mxu0 0.0
    %6897 = vmatpush1.msra.mxu0 0.0
    %6898 = vmatprep.mubr.f32.mxu0 0.0
    %6899 = vmatmul.mubr.f32.gmra.mrb[0].mxu0 %v6829
    %v6900 = vpop.f32.mrb[0].mxu0
    %v6901 = vadd.f32 %v1650, %v6900
    %v6902 = vpop.f32.mrb[0].mxu0
    %6903 = vmatprep.mubr.f32.mxu0 0.0
    %6904 = vmatmul.mubr.f32.gmra.mrb[0].mxu0 %v6832
    %v6905 = vpop.f32.mrb[0].mxu0
    %v6906 = vadd.f32 %v1650, %v6905
    %v6907 = vpop.f32.mrb[0].mxu0
    %6908 = vdwg.mxu0
    %v6909 = vadd.f32 %v6901, %v1732
    %v6910 = vadd.f32 %v6906, %v1732
    %v6911 = vand.u32 2147483647, %v6909
    %vm6912 = vcmp.le.f32.partialorder %v6911, 0.7853982
    %vm6913 = vcmp.lt.s32.totalorder %v6909, 0
    %v6914 = vand.u32 %v6909, 2139095040
    %v6915 = vshrl.u32 %v6914, 23
    %v6916 = vsub.s32 %v6915, 127
    %v6917 = vand.u32 2147483647, %v6909
    %v6918 = vand.u32 %v6917, 8388607
    %v6919 = vor.u32 %v6918, 8388608
    %v6920 = vsub.s32 0, %v6919
    %v6921 = vadd.s32 %v6916, 1
    %vm6922 = vcmp.gt.s32.totalorder %v6921, 0
    %v6923 = vsel %vm6922, %v6921, 0
    %v6924 = vshrl.u32 %v6923, 5
    %v6925 = vand.u32 %v6923, 31
    %v6926 = vsub.s32 32, %v6925
    %v6927 = vshrl.u32 683565275, %v6926
    %v6928 = vshll.u32 683565275, %v6925
    %v6929 = vshrl.u32 2475754826, %v6926
    %v6930 = vor.u32 %v6928, %v6929
    %v6931 = vshll.u32 2475754826, %v6925
    %v6932 = vshrl.u32 2131351028, %v6926
    %v6933 = vor.u32 %v6931, %v6932
    %v6934 = vshll.u32 2131351028, %v6925
    %v6935 = vshrl.u32 2102212464, %v6926
    %v6936 = vor.u32 %v6934, %v6935
    %v6937 = vshll.u32 2102212464, %v6925
    %v6938 = vshrl.u32 920167782, %v6926
    %v6939 = vor.u32 %v6937, %v6938
    %v6940 = vshll.u32 920167782, %v6925
    %v6941 = vshrl.u32 1326507024, %v6926
    %v6942 = vor.u32 %v6940, %v6941
    %vm6943 = vcmp.lt.s32.totalorder %v6924, 1
    %vm6944 = vcmp.lt.s32.totalorder %v6924, 2
    %vm6945 = vcmp.lt.s32.totalorder %v6924, 3
    %vm6946 = vcmp.lt.s32.totalorder %v6924, 4
    %v6947 = vsel %vm6943, %v6927, %v6930
    %v6948 = vsel %vm6946, %v6936, 2102212464
    %v6949 = vsel %vm6945, %v6933, %v6948
    %v6950 = vsel %vm6944, %v6947, %v6949
    %v6951 = vsel %vm6943, %v6930, %v6933
    %v6952 = vsel %vm6946, %v6939, 920167782
    %v6953 = vsel %vm6945, %v6936, %v6952
    %v6954 = vsel %vm6944, %v6951, %v6953
    %v6955 = vsel %vm6943, %v6933, %v6936
    %v6956 = vsel %vm6946, %v6942, 1326507024
    %v6957 = vsel %vm6945, %v6939, %v6956
    %v6958 = vsel %vm6944, %v6955, %v6957
    %v6959 = vshll.u32 %v6919, 8
    %v6960 = vmul.u32.u64.compose %v6959, %v6958
    %v6961 = vextract.low.u32 %v6960
    %v6962 = vextract.high.u32 %v6960
    %v6963 = vmul.u32.u64.compose %v6959, %v6954
    %v6964 = vextract.low.u32 %v6963
    %v6965 = vextract.high.u32 %v6963
    %v6966 = vmul.u32 %v6959, %v6950
    %v6967 = vadd.s32 %v6962, %v6964
    %vm6968 = vc.u32 %v6962, %v6964
    %v6969 = vadd.s32 %v6965, 1
    %v6970 = vsel %vm6968, %v6969, %v6965
    %v6971 = vadd.s32 %v6966, %v6970
    %v6972 = vadd.s32 %v6971, 536870912
    %v6973 = vshrl.u32 %v6972, 30
    %v6974 = vshll.u32 %v6973, 30
    %v6975 = vsub.s32 %v6971, %v6974
    %vm6976 = vcmp.lt.s32.totalorder %v6975, 0
    %v6977 = vsub.s32 0, %v6975
    %v6978 = vsel %vm6976, %v6977, %v6975
    %v6979 = vclz %v6978
    %v6980 = vsub.s32 %v6979, 2
    %vm6981 = vcmp.gt.s32.totalorder 0, %v6980
    %v6982 = vsel %vm6981, 0, %v6980
    %v6983 = vsub.s32 32, %v6982
    %v6984 = vshll.u32 %v6975, %v6982
    %v6985 = vshrl.u32 %v6967, %v6983
    %v6986 = vor.u32 %v6984, %v6985
    %v6987 = vsub.s32 4294967266, %v6982
    %v6988 = vadd.s32 %v6987, 127
    %v6989 = vshll.u32 %v6988, 23
    %v6990 = vor.u32 4788187, %v6989
    %v6991 = vand.u32 2147483647, %v6990
    %v6993 = vcvt.s32.f32 %v6986
    %v6994 = vmul.f32 %v6993, %v6991
    %v6995 = vxor.u32 %v6994, 2147483648
    %v6996 = vsel %vm6913, %v6995, %v6994
    %v6997 = vsub.s32 4, %v6973
    %v6998 = vsel %vm6913, %v6997, %v6973
    %v6999 = vsel %vm6912, %v6909, %v6996
    %v7000 = vsel %vm6912, 0, %v6998
    %v7001 = vcosq.f32.pop %v6999
    %v7002 = vsinq.f32.pop %v6999
    %vm7003 = vweird.f32 %v6909
    %v7004 = vand.u32 %v7000, 3
    %vm7005 = vcmp.lt.s32.totalorder %v7004, 2
    %vm7006 = vcmp.eq.s32.totalorder %v7004, 0
    %v7007 = vxor.u32 %v7002, 2147483648
    %v7008 = vsel %vm7006, %v7001, %v7007
    %vm7009 = vcmp.eq.s32.totalorder %v7004, 2
    %v7010 = vxor.u32 %v7001, 2147483648
    %v7011 = vsel %vm7009, %v7010, %v7002
    %v7012 = vsel %vm7005, %v7008, %v7011
    %v7013 = vsel %vm7003, nan, %v7012
    %v7014 = vand.u32 2147483647, %v6910
    %vm7015 = vcmp.le.f32.partialorder %v7014, 0.7853982
    %vm7016 = vcmp.lt.s32.totalorder %v6910, 0
    %v7017 = vand.u32 %v6910, 2139095040
    %v7018 = vshrl.u32 %v7017, 23
    %v7019 = vsub.s32 %v7018, 127
    %v7020 = vand.u32 2147483647, %v6910
    %v7021 = vand.u32 %v7020, 8388607
    %v7022 = vor.u32 %v7021, 8388608
    %v7023 = vsub.s32 0, %v7022
    %v7024 = vadd.s32 %v7019, 1
    %vm7025 = vcmp.gt.s32.totalorder %v7024, 0
    %v7026 = vsel %vm7025, %v7024, 0
    %v7027 = vshrl.u32 %v7026, 5
    %v7028 = vand.u32 %v7026, 31
    %v7029 = vsub.s32 32, %v7028
    %v7030 = vshrl.u32 683565275, %v7029
    %v7031 = vshll.u32 683565275, %v7028
    %v7032 = vshrl.u32 2475754826, %v7029
    %v7033 = vor.u32 %v7031, %v7032
    %v7034 = vshll.u32 2475754826, %v7028
    %v7035 = vshrl.u32 2131351028, %v7029
    %v7036 = vor.u32 %v7034, %v7035
    %v7037 = vshll.u32 2131351028, %v7028
    %v7038 = vshrl.u32 2102212464, %v7029
    %v7039 = vor.u32 %v7037, %v7038
    %v7040 = vshll.u32 2102212464, %v7028
    %v7041 = vshrl.u32 920167782, %v7029
    %v7042 = vor.u32 %v7040, %v7041
    %v7043 = vshll.u32 920167782, %v7028
    %v7044 = vshrl.u32 1326507024, %v7029
    %v7045 = vor.u32 %v7043, %v7044
    %vm7046 = vcmp.lt.s32.totalorder %v7027, 1
    %vm7047 = vcmp.lt.s32.totalorder %v7027, 2
    %vm7048 = vcmp.lt.s32.totalorder %v7027, 3
    %vm7049 = vcmp.lt.s32.totalorder %v7027, 4
    %v7050 = vsel %vm7046, %v7030, %v7033
    %v7051 = vsel %vm7049, %v7039, 2102212464
    %v7052 = vsel %vm7048, %v7036, %v7051
    %v7053 = vsel %vm7047, %v7050, %v7052
    %v7054 = vsel %vm7046, %v7033, %v7036
    %v7055 = vsel %vm7049, %v7042, 920167782
    %v7056 = vsel %vm7048, %v7039, %v7055
    %v7057 = vsel %vm7047, %v7054, %v7056
    %v7058 = vsel %vm7046, %v7036, %v7039
    %v7059 = vsel %vm7049, %v7045, 1326507024
    %v7060 = vsel %vm7048, %v7042, %v7059
    %v7061 = vsel %vm7047, %v7058, %v7060
    %v7062 = vshll.u32 %v7022, 8
    %v7063 = vmul.u32.u64.compose %v7062, %v7061
    %v7064 = vextract.low.u32 %v7063
    %v7065 = vextract.high.u32 %v7063
    %v7066 = vmul.u32.u64.compose %v7062, %v7057
    %v7067 = vextract.low.u32 %v7066
    %v7068 = vextract.high.u32 %v7066
    %v7069 = vmul.u32 %v7062, %v7053
    %v7070 = vadd.s32 %v7065, %v7067
    %vm7071 = vc.u32 %v7065, %v7067
    %v7072 = vadd.s32 %v7068, 1
    %v7073 = vsel %vm7071, %v7072, %v7068
    %v7074 = vadd.s32 %v7069, %v7073
    %v7075 = vadd.s32 %v7074, 536870912
    %v7076 = vshrl.u32 %v7075, 30
    %v7077 = vshll.u32 %v7076, 30
    %v7078 = vsub.s32 %v7074, %v7077
    %vm7079 = vcmp.lt.s32.totalorder %v7078, 0
    %v7080 = vsub.s32 0, %v7078
    %v7081 = vsel %vm7079, %v7080, %v7078
    %v7082 = vclz %v7081
    %v7083 = vsub.s32 %v7082, 2
    %vm7084 = vcmp.gt.s32.totalorder 0, %v7083
    %v7085 = vsel %vm7084, 0, %v7083
    %v7086 = vsub.s32 32, %v7085
    %v7087 = vshll.u32 %v7078, %v7085
    %v7088 = vshrl.u32 %v7070, %v7086
    %v7089 = vor.u32 %v7087, %v7088
    %v7090 = vsub.s32 4294967266, %v7085
    %v7091 = vadd.s32 %v7090, 127
    %v7092 = vshll.u32 %v7091, 23
    %v7093 = vor.u32 4788187, %v7092
    %v7094 = vand.u32 2147483647, %v7093
    %v7096 = vcvt.s32.f32 %v7089
    %v7097 = vmul.f32 %v7096, %v7094
    %v7098 = vxor.u32 %v7097, 2147483648
    %v7099 = vsel %vm7016, %v7098, %v7097
    %v7100 = vsub.s32 4, %v7076
    %v7101 = vsel %vm7016, %v7100, %v7076
    %v7102 = vsel %vm7015, %v6910, %v7099
    %v7103 = vsel %vm7015, 0, %v7101
    %v7104 = vcosq.f32.pop %v7102
    %v7105 = vsinq.f32.pop %v7102
    %vm7106 = vweird.f32 %v6910
    %v7107 = vand.u32 %v7103, 3
    %vm7108 = vcmp.lt.s32.totalorder %v7107, 2
    %vm7109 = vcmp.eq.s32.totalorder %v7107, 0
    %v7110 = vxor.u32 %v7105, 2147483648
    %v7111 = vsel %vm7109, %v7104, %v7110
    %vm7112 = vcmp.eq.s32.totalorder %v7107, 2
    %v7113 = vxor.u32 %v7104, 2147483648
    %v7114 = vsel %vm7112, %v7113, %v7105
    %v7115 = vsel %vm7108, %v7111, %v7114
    %v7116 = vsel %vm7106, nan, %v7115
    %v7117 = vmul.f32 %v7013, 0.5
    %v7118 = vmul.f32 %v7116, 0.5
    %v7119 = vmul.f32 %v7013, 0.70710677
    %v7120 = vmul.f32 %v7116, 0.70710677
    %v7121 = verf.f32.pop %v7119
    %v7122 = verf.f32.pop %v7120
    %v7123 = vadd.f32 %v7121, 1.0
    %v7124 = vadd.f32 %v7122, 1.0
    %v7125 = vmul.f32 %v7117, %v7123
    %v7126 = vmul.f32 %v7118, %v7124
    %7127 = vmatprep.subr.mxu0 0.0
    %7128 = vmatpush1.msra.mxu0 %v47
    %7129 = vmatprep.subr.mxu0 0.0
    %7130 = vmatpush1.msra.mxu0 %v48
    %7131 = vmatprep.subr.mxu0 0.0
    %7132 = vmatpush1.msra.mxu0 %v49
    %7133 = vmatprep.subr.mxu0 0.0
    %7134 = vmatpush1.msra.mxu0 %v50
    %7135 = vmatprep.subr.mxu0 0.0
    %7136 = vmatpush1.msra.mxu0 %v51
    %7137 = vmatprep.subr.mxu0 0.0
    %7138 = vmatpush1.msra.mxu0 %v52
    %7139 = vmatprep.subr.mxu0 0.0
    %7140 = vmatpush1.msra.mxu0 %v53
    %7141 = vmatprep.subr.mxu0 0.0
    %7142 = vmatpush1.msra.mxu0 %v54
    %7143 = vmatprep.subr.mxu0 0.0
    %7144 = vmatpush1.msra.mxu0 %v55
    %7145 = vmatprep.subr.mxu0 0.0
    %7146 = vmatpush1.msra.mxu0 %v56
    %7147 = vmatprep.subr.mxu0 0.0
    %7148 = vmatpush1.msra.mxu0 %v57
    %7149 = vmatprep.subr.mxu0 0.0
    %7150 = vmatpush1.msra.mxu0 %v58
    %7151 = vmatprep.subr.mxu0 0.0
    %7152 = vmatpush1.msra.mxu0 %v59
    %7153 = vmatprep.subr.mxu0 0.0
    %7154 = vmatpush1.msra.mxu0 %v60
    %7155 = vmatprep.subr.mxu0 0.0
    %7156 = vmatpush1.msra.mxu0 %v61
    %7157 = vmatprep.subr.mxu0 0.0
    %7158 = vmatpush1.msra.mxu0 %v62
    %7159 = vmatprep.subr.mxu0 0.0
    %7160 = vmatpush1.msra.mxu0 0.0
    %7161 = vmatprep.subr.mxu0 0.0
    %7162 = vmatpush1.msra.mxu0 0.0
    %7163 = vmatprep.subr.mxu0 0.0
    %7164 = vmatpush1.msra.mxu0 0.0
    %7165 = vmatprep.subr.mxu0 0.0
    %7166 = vmatpush1.msra.mxu0 0.0
    %7167 = vmatprep.subr.mxu0 0.0
    %7168 = vmatpush1.msra.mxu0 0.0
    %7169 = vmatprep.subr.mxu0 0.0
    %7170 = vmatpush1.msra.mxu0 0.0
    %7171 = vmatprep.subr.mxu0 0.0
    %7172 = vmatpush1.msra.mxu0 0.0
    %7173 = vmatprep.subr.mxu0 0.0
    %7174 = vmatpush1.msra.mxu0 0.0
    %7175 = vmatprep.subr.mxu0 0.0
    %7176 = vmatpush1.msra.mxu0 0.0
    %7177 = vmatprep.subr.mxu0 0.0
    %7178 = vmatpush1.msra.mxu0 0.0
    %7179 = vmatprep.subr.mxu0 0.0
    %7180 = vmatpush1.msra.mxu0 0.0
    %7181 = vmatprep.subr.mxu0 0.0
    %7182 = vmatpush1.msra.mxu0 0.0
    %7183 = vmatprep.subr.mxu0 0.0
    %7184 = vmatpush1.msra.mxu0 0.0
    %7185 = vmatprep.subr.mxu0 0.0
    %7186 = vmatpush1.msra.mxu0 0.0
    %7187 = vmatprep.subr.mxu0 0.0
    %7188 = vmatpush1.msra.mxu0 0.0
    %7189 = vmatprep.subr.mxu0 0.0
    %7190 = vmatpush1.msra.mxu0 0.0
    %7191 = vmatprep.mubr.f32.mxu0 0.0
    %7192 = vmatmul.mubr.f32.gmra.mrb[0].mxu0 %v7125
    %v7193 = vpop.f32.mrb[0].mxu0
    %v7194 = vadd.f32 %v1954, %v7193
    %v7195 = vpop.f32.mrb[0].mxu0
    %7196 = vmatprep.mubr.f32.mxu0 0.0
    %7197 = vmatmul.mubr.f32.gmra.mrb[0].mxu0 %v7126
    %v7198 = vpop.f32.mrb[0].mxu0
    %v7199 = vadd.f32 %v1954, %v7198
    %v7200 = vpop.f32.mrb[0].mxu0
    %7201 = vdwg.mxu0
    %v7202 = vadd.f32 %v2032, %v6724
    %v7203 = vadd.f32 %v2033, %v6827
    %v7204 = vadd.f32 %v7202, %v7194
    %v7205 = vadd.f32 %v7203, %v7199
    %7206 = vst.msk [vmem:[#allocation5] sm:$0xff] %vm225, %v7204
    %7207 = vst.msk [vmem:[#allocation5 + $0x8] sm:$0xff] %vm225, %v7205
    // Predicated region
    $region26: #{rk4_enh_block.1} parent=1 // pred_check
      _
    $region27: #{rk4_enh_block.1} parent=1 // pred_check_branch
      %7209 = sbr.rel (0) target = $region29
    $region28: #{rk4_enh_block.1} parent=1 // pred_region
      %s7211 = ssub.s32 256, 256
      %7212 = vsyncadd [#allocation3], %s7211
      %s7213 = sshll.u32 [#allocation5], 4
      %s7214 = int_to_ptr.vmem [resolvable:$true] %s7213
      %7219 = dma.vmem_to_hbm [thread:$0]  %s7214, 256, %s5, [#allocation3], 128, 128, 8
    $region29: #{rk4_enh_block.1} parent=1 // pred_fallthru
      _
    // Predicated region
    $region30: #{rk4_enh_block.1} parent=1 // pred_check
      _
    $region31: #{rk4_enh_block.1} parent=1 // pred_check_branch
      %7221 = sbr.rel (0) target = $region33
    $region32: #{rk4_enh_block.1} parent=1 // pred_region
      %7222 = dma.done [#allocation3], 256
    $region33: #{rk4_enh_block.1} parent=1 // pred_fallthru
      _
    %7223 = vsyncpa [#allocation3], 1
    %7224 = vsyncpa [#allocation4], 1

</llo_original>
